<compile_context>
chip_gen: v7x
topology: tpu7x:2x2x1
jax: 0.10.0
libtpu: 0.0.40
codegen_flags: <defaults>
</compile_context>

<pallas_src>
import functools

import jax
import jax.numpy as jnp
import numpy as np
from jax.experimental import pallas as pl
from jax.experimental.pallas import tpu as pltpu

EPS = 1e-5


# ----------------------------- in-kernel helpers -----------------------------

def _stack2(a, b):
    """Stack two (1, N) rows into a (2, N) value without sublane concat."""
    n = a.shape[1]
    row = jax.lax.broadcasted_iota(jnp.int32, (2, n), 0)
    return jnp.where(row == 0,
                     jnp.broadcast_to(a, (2, n)),
                     jnp.broadcast_to(b, (2, n)))


def _bn_relu(s, gb_ref, sel_ref, bc_ref, cnt, eps):
    """Single-pass BatchNorm (batch stats, biased var) + ReLU on slab `s`.

    Channels are the minor lane group; `sel` (NL, C) reduces lanes -> channels,
    `bc` (C, NL) broadcasts channels -> lanes (tiny constant matmuls).
    """
    colsum = jnp.sum(s, axis=0, keepdims=True)            # (1, NL)
    sqsum = jnp.sum(s * s, axis=0, keepdims=True)         # (1, NL)
    stats_c = jnp.dot(_stack2(colsum, sqsum), sel_ref[...],
                      preferred_element_type=jnp.float32) * (1.0 / cnt)
    mean_c = stats_c[0:1, :]
    var_c = stats_c[1:2, :] - mean_c * mean_c              # E[x^2] - mean^2
    scale_c = gb_ref[0:1, :] * jax.lax.rsqrt(var_c + eps)
    shift_c = gb_ref[1:2, :] - mean_c * scale_c
    ss_l = jnp.dot(_stack2(scale_c, shift_c), bc_ref[...],
                   preferred_element_type=jnp.float32)     # (2, NL)
    return jnp.maximum(s * ss_l[0:1, :] + ss_l[1:2, :], 0.0)


def _conv_stage(xpad, cat, gs_ref, gb_ref, sel_ref, bc_ref, bsz, eps):
    """ConvTranspose(k4,s2,p1) + BN + ReLU, batch-folded, one MXU matmul.

    xpad: scratch (B*(H+2), W*Cin) zero-row-padded input slab.
    cat : scratch (B*H, 3*W*Cin) lane-concatenated shifted row windows.
    gs  : (3*W*Cin, 2*Wout*Cout) stacked band matrices for shifts -1/0/+1.
    Returns super-row slab (B*H, 2*Wout*Cout); super-row j packs output rows
    (2j, 2j+1) in its lanes.
    """
    hin = cat.shape[0] // bsz
    wc = xpad.shape[1]
    for b in range(bsz):
        src = b * (hin + 2)
        dst = b * hin
        cat[dst:dst + hin, 0 * wc:1 * wc] = xpad[src + 0:src + hin, :]
        cat[dst:dst + hin, 1 * wc:2 * wc] = xpad[src + 1:src + hin + 1, :]
        cat[dst:dst + hin, 2 * wc:3 * wc] = xpad[src + 2:src + hin + 2, :]
    s = jnp.dot(cat[...], gs_ref[...], preferred_element_type=jnp.float32)
    cout = gb_ref.shape[1]
    cnt = float(bsz * hin * (s.shape[1] // cout))          # B * Hout * Wout
    return _bn_relu(s, gb_ref, sel_ref, bc_ref, cnt, eps)


def _interleave(y, xpad_next, bsz, hin):
    """Super-row slab (B*H, 2*W*C) -> zero-row-padded row slab (B*(2H+2), W*C)."""
    wc = xpad_next.shape[1]
    hout = 2 * hin
    xpad_next[...] = jnp.zeros_like(xpad_next)
    for b in range(bsz):
        for j in range(hin):
            r = b * hin + j
            d = b * (hout + 2) + 1 + 2 * j
            xpad_next[d:d + 1, :] = y[r:r + 1, 0:wc]        # even output row 2j
            xpad_next[d + 1:d + 2, :] = y[r:r + 1, wc:2 * wc]  # odd row 2j+1


# --------------------------------- kernel ------------------------------------

def dcgan_kernel(z_ref, w1_ref, gb1_ref, sel1_ref, bc1_ref,
                 g2_ref, gb2_ref, sel2_ref, bc2_ref,
                 g3_ref, gb3_ref, sel3_ref, bc3_ref,
                 g4_ref, gb4_ref, sel4_ref, bc4_ref,
                 w5_ref,
                 img_ref,
                 xpad2, cat2, xpad3, cat3, xpad4, cat4, head, *, eps):
    bsz = z_ref.shape[0]

    # ---- layer 1: 1x1 -> 4x4 ConvTranspose (== matmul) + BN + ReLU ----------
    y1 = jnp.dot(z_ref[...], w1_ref[...], preferred_element_type=jnp.float32)
    c1 = gb1_ref.shape[1]
    y1 = _bn_relu(y1, gb1_ref, sel1_ref, bc1_ref,
                  float(bsz * (y1.shape[1] // c1)), eps)

    # scatter (h, w, c)-ordered lanes into the padded row slab for layer 2
    wc2 = xpad2.shape[1]
    h1 = y1.shape[1] // wc2                                 # 4 rows
    xpad2[...] = jnp.zeros_like(xpad2)
    for b in range(bsz):
        for h in range(h1):
            d = b * (h1 + 2) + 1 + h
            xpad2[d:d + 1, :] = y1[b:b + 1, h * wc2:(h + 1) * wc2]

    # ---- layers 2..4: ConvT(k4, s2, p1) + BN + ReLU --------------------------
    y2 = _conv_stage(xpad2, cat2, g2_ref, gb2_ref, sel2_ref, bc2_ref, bsz, eps)
    _interleave(y2, xpad3, bsz, cat2.shape[0] // bsz)
    y3 = _conv_stage(xpad3, cat3, g3_ref, gb3_ref, sel3_ref, bc3_ref, bsz, eps)
    _interleave(y3, xpad4, bsz, cat3.shape[0] // bsz)
    y4 = _conv_stage(xpad4, cat4, g4_ref, gb4_ref, sel4_ref, bc4_ref, bsz, eps)

    # ---- layer 5: crop 2 px each side (reuse y4!), 1x1 conv, tanh -----------
    h4 = cat4.shape[0] // bsz                               # 16 super-rows
    nh = h4 - 2                                             # 14 kept
    for b in range(bsz):
        head[b * nh:(b + 1) * nh, :] = y4[b * h4 + 1: b * h4 + 1 + nh, :]
    img = jnp.dot(head[...], w5_ref[...], preferred_element_type=jnp.float32)
    img_ref[...] = jnp.tanh(img)


# ------------------------------- call wrapper ---------------------------------

@functools.partial(jax.jit, static_argnames=("nc",))
def generator_forward(z, pp, *, nc=1):
    """Pallas implementation of DCGAN_Generator.forward (z -> NCHW image)."""
    bsz = z.shape[0]
    z2 = z.reshape(bsz, -1)                                 # view(-1, nz, 1, 1)
    wc2 = pp["G2"].shape[0] // 3
    wc3 = pp["G3"].shape[0] // 3
    wc4 = pp["G4"].shape[0] // 3

    img = pl.pallas_call(
        functools.partial(dcgan_kernel, eps=EPS),
        out_shape=jax.ShapeDtypeStruct((bsz * 14, pp["W5m"].shape[1]),
                                       jnp.float32),
        scratch_shapes=[
            pltpu.VMEM((bsz * 6, wc2), jnp.float32),        # xpad2  (4+2 rows)
            pltpu.VMEM((bsz * 4, 3 * wc2), jnp.float32),    # cat2
            pltpu.VMEM((bsz * 10, wc3), jnp.float32),       # xpad3  (8+2 rows)
            pltpu.VMEM((bsz * 8, 3 * wc3), jnp.float32),    # cat3
            pltpu.VMEM((bsz * 18, wc4), jnp.float32),       # xpad4 (16+2 rows)
            pltpu.VMEM((bsz * 16, 3 * wc4), jnp.float32),   # cat4
            pltpu.VMEM((bsz * 14, pp["G4"].shape[1]), jnp.float32),  # head
        ],
        compiler_params=pltpu.CompilerParams(
            vmem_limit_bytes=32 * 1024 * 1024),
    )(z2, pp["w1m"], pp["gb1"], pp["sel1"], pp["bc1"],
      pp["G2"], pp["gb2"], pp["sel2"], pp["bc2"],
      pp["G3"], pp["gb3"], pp["sel3"], pp["bc3"],
      pp["G4"], pp["gb4"], pp["sel4"], pp["bc4"],
      pp["W5m"])

    # lane layout of img rows: (parity, width, channel); crop zero-padded lanes.
    img = img[:, :56 * nc].reshape(bsz, 14, 2, 28, nc)
    return jnp.transpose(img, (0, 4, 1, 2, 3)).reshape(bsz, nc, 28, 28)


# ------------------------- weight pre-packing (once) --------------------------

def prepare_params(p):
    """Repack PyTorch-layout weights into stacked band matrices (runs once)."""
    nz = p["w1"].shape[0]
    c1 = p["w1"].shape[1]
    ngf = p["w4"].shape[1]
    nc = p["w5"].shape[1]

    w1 = np.asarray(p["w1"], np.float32)                    # (nz, C1, 4, 4)
    # lane order of layer-1 output: (h, w, c) with c minor
    w1m = np.transpose(w1, (0, 2, 3, 1)).reshape(nz, 16 * c1)

    def build_g(w, win):
        """Stacked band matrix (3*Win*Cin, 2*Wout*Cout) for shifts e=-1,0,+1."""
        w = np.asarray(w, np.float32)                        # (Cin, Cout, 4, 4)
        cin, cout = w.shape[0], w.shape[1]
        wout = 2 * win
        gs = np.zeros((3, win * cin, 2 * wout * cout), np.float32)
        for ei, e in enumerate((-1, 0, 1)):
            for ph in (0, 1):                                # output row parity
                kh = ph - 2 * e + 1
                if not 0 <= kh <= 3:
                    continue
                for iw in range(win):
                    for kw in range(4):
                        ow = 2 * iw - 1 + kw
                        if 0 <= ow < wout:
                            r0 = iw * cin
                            c0 = ph * wout * cout + ow * cout
                            gs[ei, r0:r0 + cin, c0:c0 + cout] = w[:, :, kh, kw]
        return gs.reshape(3 * win * cin, 2 * wout * cout)

    g2 = build_g(p["w2"], 4)
    g3 = build_g(p["w3"], 8)
    g4 = build_g(p["w4"], 16)

    # Layer 5: 1x1 conv + crop 2px each side, over super-rows (2 rows / vec),
    # output zero-padded to a lane-dense multiple of 128.
    w5 = np.asarray(p["w5"], np.float32)[:, :, 0, 0]         # (ngf, nc)
    ocols = max(128, ((2 * 28 * nc + 127) // 128) * 128)
    w5m = np.zeros((2 * 32 * ngf, ocols), np.float32)
    for ph in (0, 1):
        for ow in range(28):
            iw = ow + 2
            w5m[ph * 32 * ngf + iw * ngf: ph * 32 * ngf + (iw + 1) * ngf,
                ph * 28 * nc + ow * nc: ph * 28 * nc + (ow + 1) * nc] = w5

    def sel_bc(cc, total):
        reps = total // cc
        sel = np.tile(np.eye(cc, dtype=np.float32), (reps, 1))   # (total, cc)
        bc = np.tile(np.eye(cc, dtype=np.float32), (1, reps))    # (cc, total)
        return jnp.asarray(sel), jnp.asarray(bc)

    def gb(g, b):
        return jnp.asarray(np.stack([np.asarray(g, np.float32),
                                     np.asarray(b, np.float32)], axis=0))

    sel1, bc1 = sel_bc(c1, 16 * c1)
    c2 = p["w2"].shape[1]
    sel2, bc2 = sel_bc(c2, 2 * 8 * c2)
    c3 = p["w3"].shape[1]
    sel3, bc3 = sel_bc(c3, 2 * 16 * c3)
    sel4, bc4 = sel_bc(ngf, 2 * 32 * ngf)

    return {
        "w1m": jnp.asarray(w1m),
        "G2": jnp.asarray(g2), "G3": jnp.asarray(g3), "G4": jnp.asarray(g4),
        "W5m": jnp.asarray(w5m),
        "gb1": gb(p["g1"], p["b1"]), "gb2": gb(p["g2"], p["b2"]),
        "gb3": gb(p["g3"], p["b3"]), "gb4": gb(p["g4"], p["b4"]),
        "sel1": sel1, "bc1": bc1, "sel2": sel2, "bc2": bc2,
        "sel3": sel3, "bc3": bc3, "sel4": sel4, "bc4": bc4,
    }


# --------------------------- plain-JAX reference ------------------------------

def reference_forward(z, p, eps=1e-5):
    B = z.shape[0]
    x = z.reshape(B, -1, 1, 1)

    def convT(x, w, s, pad):
        k = w.shape[2]
        return jax.lax.conv_general_dilated(
            x, jnp.transpose(jnp.flip(w, (2, 3)), (1, 0, 2, 3)),
            window_strides=(1, 1), padding=[(k - 1 - pad, k - 1 - pad)] * 2,
            lhs_dilation=(s, s), dimension_numbers=("NCHW", "OIHW", "NCHW"),
            precision=jax.lax.Precision.HIGHEST)

    def bn_relu(x, g, b):
        m = x.mean(axis=(0, 2, 3), keepdims=True)
        v = ((x - m) ** 2).mean(axis=(0, 2, 3), keepdims=True)
        y = (x - m) * jax.lax.rsqrt(v + eps) * g[None, :, None, None] \
            + b[None, :, None, None]
        return jnp.maximum(y, 0.0)

    x = bn_relu(convT(x, p["w1"], 1, 0), p["g1"], p["b1"])
    x = bn_relu(convT(x, p["w2"], 2, 1), p["g2"], p["b2"])
    x = bn_relu(convT(x, p["w3"], 2, 1), p["g3"], p["b3"])
    x = bn_relu(convT(x, p["w4"], 2, 1), p["g4"], p["b4"])
    xc = x[:, :, 2:-2, 2:-2]
    y = jnp.einsum("bchw,co->bohw", xc, p["w5"][:, :, 0, 0])
    return jnp.tanh(y)


# ----------------------------------- main --------------------------------------

if __name__ == "__main__":
    # Small shapes consistent with the module: nz=16, ngf=8, nc=1, batch=2.
    B, nz, ngf, nc = 2, 16, 8, 1
    key = jax.random.PRNGKey(0)
    ks = jax.random.split(key, 16)

    def w_init(k, shape):
        return 0.02 * jax.random.normal(k, shape, jnp.float32)

    params = {
        "w1": w_init(ks[0], (nz, ngf * 8, 4, 4)),
        "w2": w_init(ks[1], (ngf * 8, ngf * 4, 4, 4)),
        "w3": w_init(ks[2], (ngf * 4, ngf * 2, 4, 4)),
        "w4": w_init(ks[3], (ngf * 2, ngf, 4, 4)),
        "w5": w_init(ks[4], (ngf, nc, 1, 1)),
        "g1": 1.0 + 0.1 * jax.random.normal(ks[5], (ngf * 8,), jnp.float32),
        "b1": 0.1 * jax.random.normal(ks[6], (ngf * 8,), jnp.float32),
        "g2": 1.0 + 0.1 * jax.random.normal(ks[7], (ngf * 4,), jnp.float32),
        "b2": 0.1 * jax.random.normal(ks[8], (ngf * 4,), jnp.float32),
        "g3": 1.0 + 0.1 * jax.random.normal(ks[9], (ngf * 2,), jnp.float32),
        "b3": 0.1 * jax.random.normal(ks[10], (ngf * 2,), jnp.float32),
        "g4": 1.0 + 0.1 * jax.random.normal(ks[11], (ngf,), jnp.float32),
        "b4": 0.1 * jax.random.normal(ks[12], (ngf,), jnp.float32),
    }
    z = jax.random.normal(ks[13], (B, nz, 1, 1), jnp.float32)

    prepped = prepare_params(params)       # one-time weight repacking (host)

    out = jax.block_until_ready(generator_forward(z, prepped, nc=nc))
    ref = jax.block_until_ready(reference_forward(z, params))

    assert out.shape == (B, nc, 28, 28), out.shape
    err = float(np.max(np.abs(np.asarray(out) - np.asarray(ref))))
    assert np.allclose(np.asarray(out), np.asarray(ref), atol=2e-2, rtol=2e-2), err
    print("KERNEL_OK")
</pallas_src>

<mosaic_0001>
module attributes {stable_mosaic.version = 11 : i64} {
  func.func @dcgan_kernel(%arg0: memref<2x16xf32, #tpu.memory_space<vmem>>, %arg1: memref<16x1024xf32, #tpu.memory_space<vmem>>, %arg2: memref<2x64xf32, #tpu.memory_space<vmem>>, %arg3: memref<1024x64xf32, #tpu.memory_space<vmem>>, %arg4: memref<64x1024xf32, #tpu.memory_space<vmem>>, %arg5: memref<768x512xf32, #tpu.memory_space<vmem>>, %arg6: memref<2x32xf32, #tpu.memory_space<vmem>>, %arg7: memref<512x32xf32, #tpu.memory_space<vmem>>, %arg8: memref<32x512xf32, #tpu.memory_space<vmem>>, %arg9: memref<768x512xf32, #tpu.memory_space<vmem>>, %arg10: memref<2x16xf32, #tpu.memory_space<vmem>>, %arg11: memref<512x16xf32, #tpu.memory_space<vmem>>, %arg12: memref<16x512xf32, #tpu.memory_space<vmem>>, %arg13: memref<768x512xf32, #tpu.memory_space<vmem>>, %arg14: memref<2x8xf32, #tpu.memory_space<vmem>>, %arg15: memref<512x8xf32, #tpu.memory_space<vmem>>, %arg16: memref<8x512xf32, #tpu.memory_space<vmem>>, %arg17: memref<512x128xf32, #tpu.memory_space<vmem>>, %arg18: memref<28x128xf32, #tpu.memory_space<vmem>>, %arg19: memref<12x256xf32, #tpu.memory_space<vmem>>, %arg20: memref<8x768xf32, #tpu.memory_space<vmem>>, %arg21: memref<20x256xf32, #tpu.memory_space<vmem>>, %arg22: memref<16x768xf32, #tpu.memory_space<vmem>>, %arg23: memref<36x256xf32, #tpu.memory_space<vmem>>, %arg24: memref<32x768xf32, #tpu.memory_space<vmem>>, %arg25: memref<28x512xf32, #tpu.memory_space<vmem>>) attributes {dimension_semantics = [], scalar_prefetch = 0 : i64, scratch_operands = 7 : i64, tpu.core_type = #tpu.core_type<tc>} {
    %c0 = arith.constant 0 : index
    %c0_0 = arith.constant 0 : index
    %0 = vector.load %arg0[%c0, %c0_0] : memref<2x16xf32, #tpu.memory_space<vmem>>, vector<2x16xf32>
    %c0_1 = arith.constant 0 : index
    %c0_2 = arith.constant 0 : index
    %1 = vector.load %arg1[%c0_1, %c0_2] : memref<16x1024xf32, #tpu.memory_space<vmem>>, vector<16x1024xf32>
    %cst = arith.constant dense<0.000000e+00> : vector<2x1024xf32>
    %2 = tpu.matmul %0, %1, %cst {dimension_numbers = #tpu.dot_dimension_numbers<[1], [0], [0], [1], [0, 0, 1, 1], [], []>} : vector<2x16xf32>, vector<16x1024xf32>, vector<2x1024xf32> -> vector<2x1024xf32>
    %cst_3 = arith.constant dense<0.000000e+00> : vector<1024xf32>
    %3 = vector.multi_reduction <add>, %2, %cst_3 [0] : vector<2x1024xf32> to vector<1024xf32>
    %4 = vector.shape_cast %3 : vector<1024xf32> to vector<1x1024xf32>
    %5 = arith.mulf %2, %2 : vector<2x1024xf32>
    %cst_4 = arith.constant dense<0.000000e+00> : vector<1024xf32>
    %6 = vector.multi_reduction <add>, %5, %cst_4 [0] : vector<2x1024xf32> to vector<1024xf32>
    %7 = vector.shape_cast %6 : vector<1024xf32> to vector<1x1024xf32>
    %8 = tpu.iota {dimensions = array<i32: 0>} : vector<2x1024xi32>
    %c0_i32 = arith.constant 0 : i32
    %9 = vector.broadcast %c0_i32 : i32 to vector<2x1024xi32>
    %10 = arith.cmpi eq, %8, %9 : vector<2x1024xi32>
    %11 = vector.shape_cast %4 : vector<1x1024xf32> to vector<1x1024xf32>
    %12 = vector.broadcast %11 : vector<1x1024xf32> to vector<2x1024xf32>
    %13 = vector.shape_cast %7 : vector<1x1024xf32> to vector<1x1024xf32>
    %14 = vector.broadcast %13 : vector<1x1024xf32> to vector<2x1024xf32>
    %15 = arith.select %10, %12, %14 : vector<2x1024xi1>, vector<2x1024xf32>
    %c0_5 = arith.constant 0 : index
    %c0_6 = arith.constant 0 : index
    %16 = vector.load %arg3[%c0_5, %c0_6] : memref<1024x64xf32, #tpu.memory_space<vmem>>, vector<1024x64xf32>
    %cst_7 = arith.constant dense<0.000000e+00> : vector<2x64xf32>
    %17 = tpu.matmul %15, %16, %cst_7 {dimension_numbers = #tpu.dot_dimension_numbers<[1], [0], [0], [1], [0, 0, 1, 1], [], []>} : vector<2x1024xf32>, vector<1024x64xf32>, vector<2x64xf32> -> vector<2x64xf32>
    %cst_8 = arith.constant 3.125000e-02 : f32
    %18 = vector.broadcast %cst_8 : f32 to vector<2x64xf32>
    %19 = arith.mulf %17, %18 : vector<2x64xf32>
    %20 = vector.extract_strided_slice %19 {offsets = [0, 0], sizes = [1, 64], strides = [1, 1]} : vector<2x64xf32> to vector<1x64xf32>
    %21 = vector.extract_strided_slice %19 {offsets = [1, 0], sizes = [1, 64], strides = [1, 1]} : vector<2x64xf32> to vector<1x64xf32>
    %22 = arith.mulf %20, %20 : vector<1x64xf32>
    %23 = arith.subf %21, %22 : vector<1x64xf32>
    %c0_9 = arith.constant 0 : index
    %c0_10 = arith.constant 0 : index
    %24 = vector.load %arg2[%c0_9, %c0_10] : memref<2x64xf32, #tpu.memory_space<vmem>>, vector<1x64xf32>
    %cst_11 = arith.constant 9.99999974E-6 : f32
    %25 = vector.broadcast %cst_11 : f32 to vector<1x64xf32>
    %26 = arith.addf %23, %25 : vector<1x64xf32>
    %27 = math.rsqrt %26 : vector<1x64xf32>
    %28 = arith.mulf %24, %27 : vector<1x64xf32>
    %c1 = arith.constant 1 : index
    %c0_12 = arith.constant 0 : index
    %29 = vector.load %arg2[%c1, %c0_12] : memref<2x64xf32, #tpu.memory_space<vmem>>, vector<1x64xf32>
    %30 = arith.mulf %20, %28 : vector<1x64xf32>
    %31 = arith.subf %29, %30 : vector<1x64xf32>
    %32 = tpu.iota {dimensions = array<i32: 0>} : vector<2x64xi32>
    %c0_i32_13 = arith.constant 0 : i32
    %33 = vector.broadcast %c0_i32_13 : i32 to vector<2x64xi32>
    %34 = arith.cmpi eq, %32, %33 : vector<2x64xi32>
    %35 = vector.shape_cast %28 : vector<1x64xf32> to vector<1x64xf32>
    %36 = vector.broadcast %35 : vector<1x64xf32> to vector<2x64xf32>
    %37 = vector.shape_cast %31 : vector<1x64xf32> to vector<1x64xf32>
    %38 = vector.broadcast %37 : vector<1x64xf32> to vector<2x64xf32>
    %39 = arith.select %34, %36, %38 : vector<2x64xi1>, vector<2x64xf32>
    %c0_14 = arith.constant 0 : index
    %c0_15 = arith.constant 0 : index
    %40 = vector.load %arg4[%c0_14, %c0_15] : memref<64x1024xf32, #tpu.memory_space<vmem>>, vector<64x1024xf32>
    %cst_16 = arith.constant dense<0.000000e+00> : vector<2x1024xf32>
    %41 = tpu.matmul %39, %40, %cst_16 {dimension_numbers = #tpu.dot_dimension_numbers<[1], [0], [0], [1], [0, 0, 1, 1], [], []>} : vector<2x64xf32>, vector<64x1024xf32>, vector<2x1024xf32> -> vector<2x1024xf32>
    %42 = vector.extract_strided_slice %41 {offsets = [0, 0], sizes = [1, 1024], strides = [1, 1]} : vector<2x1024xf32> to vector<1x1024xf32>
    %43 = vector.broadcast %42 : vector<1x1024xf32> to vector<2x1024xf32>
    %44 = arith.mulf %2, %43 : vector<2x1024xf32>
    %45 = vector.extract_strided_slice %41 {offsets = [1, 0], sizes = [1, 1024], strides = [1, 1]} : vector<2x1024xf32> to vector<1x1024xf32>
    %46 = vector.broadcast %45 : vector<1x1024xf32> to vector<2x1024xf32>
    %47 = arith.addf %44, %46 : vector<2x1024xf32>
    %cst_17 = arith.constant 0.000000e+00 : f32
    %48 = vector.broadcast %cst_17 : f32 to vector<2x1024xf32>
    %49 = arith.maximumf %47, %48 : vector<2x1024xf32>
    %cst_18 = arith.constant 0.000000e+00 : f32
    %50 = vector.broadcast %cst_18 : f32 to vector<12x256xf32>
    %c0_19 = arith.constant 0 : index
    %c0_20 = arith.constant 0 : index
    %51 = vector.load %arg19[%c0_19, %c0_20] : memref<12x256xf32, #tpu.memory_space<vmem>>, vector<12x256xf32>
    tpu.vector_store %arg19[%c0_19, %c0_20], %50 {strides = array<i32>} : memref<12x256xf32, #tpu.memory_space<vmem>>, vector<12x256xf32>,
    %52 = vector.extract_strided_slice %49 {offsets = [0, 0], sizes = [1, 256], strides = [1, 1]} : vector<2x1024xf32> to vector<1x256xf32>
    %c1_21 = arith.constant 1 : index
    %c0_22 = arith.constant 0 : index
    %53 = vector.load %arg19[%c1_21, %c0_22] : memref<12x256xf32, #tpu.memory_space<vmem>>, vector<1x256xf32>
    tpu.vector_store %arg19[%c1_21, %c0_22], %52 {strides = array<i32>} : memref<12x256xf32, #tpu.memory_space<vmem>>, vector<1x256xf32>,
    %54 = vector.extract_strided_slice %49 {offsets = [0, 256], sizes = [1, 256], strides = [1, 1]} : vector<2x1024xf32> to vector<1x256xf32>
    %c2 = arith.constant 2 : index
    %c0_23 = arith.constant 0 : index
    %55 = vector.load %arg19[%c2, %c0_23] : memref<12x256xf32, #tpu.memory_space<vmem>>, vector<1x256xf32>
    tpu.vector_store %arg19[%c2, %c0_23], %54 {strides = array<i32>} : memref<12x256xf32, #tpu.memory_space<vmem>>, vector<1x256xf32>,
    %56 = vector.extract_strided_slice %49 {offsets = [0, 512], sizes = [1, 256], strides = [1, 1]} : vector<2x1024xf32> to vector<1x256xf32>
    %c3 = arith.constant 3 : index
    %c0_24 = arith.constant 0 : index
    %57 = vector.load %arg19[%c3, %c0_24] : memref<12x256xf32, #tpu.memory_space<vmem>>, vector<1x256xf32>
    tpu.vector_store %arg19[%c3, %c0_24], %56 {strides = array<i32>} : memref<12x256xf32, #tpu.memory_space<vmem>>, vector<1x256xf32>,
    %58 = vector.extract_strided_slice %49 {offsets = [0, 768], sizes = [1, 256], strides = [1, 1]} : vector<2x1024xf32> to vector<1x256xf32>
    %c4 = arith.constant 4 : index
    %c0_25 = arith.constant 0 : index
    %59 = vector.load %arg19[%c4, %c0_25] : memref<12x256xf32, #tpu.memory_space<vmem>>, vector<1x256xf32>
    tpu.vector_store %arg19[%c4, %c0_25], %58 {strides = array<i32>} : memref<12x256xf32, #tpu.memory_space<vmem>>, vector<1x256xf32>,
    %60 = vector.extract_strided_slice %49 {offsets = [1, 0], sizes = [1, 256], strides = [1, 1]} : vector<2x1024xf32> to vector<1x256xf32>
    %c7 = arith.constant 7 : index
    %c0_26 = arith.constant 0 : index
    %61 = vector.load %arg19[%c7, %c0_26] : memref<12x256xf32, #tpu.memory_space<vmem>>, vector<1x256xf32>
    tpu.vector_store %arg19[%c7, %c0_26], %60 {strides = array<i32>} : memref<12x256xf32, #tpu.memory_space<vmem>>, vector<1x256xf32>,
    %62 = vector.extract_strided_slice %49 {offsets = [1, 256], sizes = [1, 256], strides = [1, 1]} : vector<2x1024xf32> to vector<1x256xf32>
    %c8 = arith.constant 8 : index
    %c0_27 = arith.constant 0 : index
    %63 = vector.load %arg19[%c8, %c0_27] : memref<12x256xf32, #tpu.memory_space<vmem>>, vector<1x256xf32>
    tpu.vector_store %arg19[%c8, %c0_27], %62 {strides = array<i32>} : memref<12x256xf32, #tpu.memory_space<vmem>>, vector<1x256xf32>,
    %64 = vector.extract_strided_slice %49 {offsets = [1, 512], sizes = [1, 256], strides = [1, 1]} : vector<2x1024xf32> to vector<1x256xf32>
    %c9 = arith.constant 9 : index
    %c0_28 = arith.constant 0 : index
    %65 = vector.load %arg19[%c9, %c0_28] : memref<12x256xf32, #tpu.memory_space<vmem>>, vector<1x256xf32>
    tpu.vector_store %arg19[%c9, %c0_28], %64 {strides = array<i32>} : memref<12x256xf32, #tpu.memory_space<vmem>>, vector<1x256xf32>,
    %66 = vector.extract_strided_slice %49 {offsets = [1, 768], sizes = [1, 256], strides = [1, 1]} : vector<2x1024xf32> to vector<1x256xf32>
    %c10 = arith.constant 10 : index
    %c0_29 = arith.constant 0 : index
    %67 = vector.load %arg19[%c10, %c0_29] : memref<12x256xf32, #tpu.memory_space<vmem>>, vector<1x256xf32>
    tpu.vector_store %arg19[%c10, %c0_29], %66 {strides = array<i32>} : memref<12x256xf32, #tpu.memory_space<vmem>>, vector<1x256xf32>,
    %c0_30 = arith.constant 0 : index
    %c0_31 = arith.constant 0 : index
    %68 = vector.load %arg19[%c0_30, %c0_31] : memref<12x256xf32, #tpu.memory_space<vmem>>, vector<4x256xf32>
    %c0_32 = arith.constant 0 : index
    %c0_33 = arith.constant 0 : index
    %69 = vector.load %arg20[%c0_32, %c0_33] : memref<8x768xf32, #tpu.memory_space<vmem>>, vector<4x256xf32>
    tpu.vector_store %arg20[%c0_32, %c0_33], %68 {strides = array<i32>} : memref<8x768xf32, #tpu.memory_space<vmem>>, vector<4x256xf32>,
    %c1_34 = arith.constant 1 : index
    %c0_35 = arith.constant 0 : index
    %70 = vector.load %arg19[%c1_34, %c0_35] : memref<12x256xf32, #tpu.memory_space<vmem>>, vector<4x256xf32>
    %c0_36 = arith.constant 0 : index
    %c256 = arith.constant 256 : index
    %71 = vector.load %arg20[%c0_36, %c256] : memref<8x768xf32, #tpu.memory_space<vmem>>, vector<4x256xf32>
    tpu.vector_store %arg20[%c0_36, %c256], %70 {strides = array<i32>} : memref<8x768xf32, #tpu.memory_space<vmem>>, vector<4x256xf32>,
    %c2_37 = arith.constant 2 : index
    %c0_38 = arith.constant 0 : index
    %72 = vector.load %arg19[%c2_37, %c0_38] : memref<12x256xf32, #tpu.memory_space<vmem>>, vector<4x256xf32>
    %c0_39 = arith.constant 0 : index
    %c512 = arith.constant 512 : index
    %73 = vector.load %arg20[%c0_39, %c512] : memref<8x768xf32, #tpu.memory_space<vmem>>, vector<4x256xf32>
    tpu.vector_store %arg20[%c0_39, %c512], %72 {strides = array<i32>} : memref<8x768xf32, #tpu.memory_space<vmem>>, vector<4x256xf32>,
    %c6 = arith.constant 6 : index
    %c0_40 = arith.constant 0 : index
    %74 = vector.load %arg19[%c6, %c0_40] : memref<12x256xf32, #tpu.memory_space<vmem>>, vector<4x256xf32>
    %c4_41 = arith.constant 4 : index
    %c0_42 = arith.constant 0 : index
    %75 = vector.load %arg20[%c4_41, %c0_42] : memref<8x768xf32, #tpu.memory_space<vmem>>, vector<4x256xf32>
    tpu.vector_store %arg20[%c4_41, %c0_42], %74 {strides = array<i32>} : memref<8x768xf32, #tpu.memory_space<vmem>>, vector<4x256xf32>,
    %c7_43 = arith.constant 7 : index
    %c0_44 = arith.constant 0 : index
    %76 = vector.load %arg19[%c7_43, %c0_44] : memref<12x256xf32, #tpu.memory_space<vmem>>, vector<4x256xf32>
    %c4_45 = arith.constant 4 : index
    %c256_46 = arith.constant 256 : index
    %77 = vector.load %arg20[%c4_45, %c256_46] : memref<8x768xf32, #tpu.memory_space<vmem>>, vector<4x256xf32>
    tpu.vector_store %arg20[%c4_45, %c256_46], %76 {strides = array<i32>} : memref<8x768xf32, #tpu.memory_space<vmem>>, vector<4x256xf32>,
    %c8_47 = arith.constant 8 : index
    %c0_48 = arith.constant 0 : index
    %78 = vector.load %arg19[%c8_47, %c0_48] : memref<12x256xf32, #tpu.memory_space<vmem>>, vector<4x256xf32>
    %c4_49 = arith.constant 4 : index
    %c512_50 = arith.constant 512 : index
    %79 = vector.load %arg20[%c4_49, %c512_50] : memref<8x768xf32, #tpu.memory_space<vmem>>, vector<4x256xf32>
    tpu.vector_store %arg20[%c4_49, %c512_50], %78 {strides = array<i32>} : memref<8x768xf32, #tpu.memory_space<vmem>>, vector<4x256xf32>,
    %c0_51 = arith.constant 0 : index
    %c0_52 = arith.constant 0 : index
    %80 = vector.load %arg20[%c0_51, %c0_52] : memref<8x768xf32, #tpu.memory_space<vmem>>, vector<8x768xf32>
    %c0_53 = arith.constant 0 : index
    %c0_54 = arith.constant 0 : index
    %81 = vector.load %arg5[%c0_53, %c0_54] : memref<768x512xf32, #tpu.memory_space<vmem>>, vector<768x512xf32>
    %cst_55 = arith.constant dense<0.000000e+00> : vector<8x512xf32>
    %82 = tpu.matmul %80, %81, %cst_55 {dimension_numbers = #tpu.dot_dimension_numbers<[1], [0], [0], [1], [0, 0, 1, 1], [], []>} : vector<8x768xf32>, vector<768x512xf32>, vector<8x512xf32> -> vector<8x512xf32>
    %cst_56 = arith.constant dense<0.000000e+00> : vector<512xf32>
    %83 = vector.multi_reduction <add>, %82, %cst_56 [0] : vector<8x512xf32> to vector<512xf32>
    %84 = vector.shape_cast %83 : vector<512xf32> to vector<1x512xf32>
    %85 = arith.mulf %82, %82 : vector<8x512xf32>
    %cst_57 = arith.constant dense<0.000000e+00> : vector<512xf32>
    %86 = vector.multi_reduction <add>, %85, %cst_57 [0] : vector<8x512xf32> to vector<512xf32>
    %87 = vector.shape_cast %86 : vector<512xf32> to vector<1x512xf32>
    %88 = tpu.iota {dimensions = array<i32: 0>} : vector<2x512xi32>
    %c0_i32_58 = arith.constant 0 : i32
    %89 = vector.broadcast %c0_i32_58 : i32 to vector<2x512xi32>
    %90 = arith.cmpi eq, %88, %89 : vector<2x512xi32>
    %91 = vector.shape_cast %84 : vector<1x512xf32> to vector<1x512xf32>
    %92 = vector.broadcast %91 : vector<1x512xf32> to vector<2x512xf32>
    %93 = vector.shape_cast %87 : vector<1x512xf32> to vector<1x512xf32>
    %94 = vector.broadcast %93 : vector<1x512xf32> to vector<2x512xf32>
    %95 = arith.select %90, %92, %94 : vector<2x512xi1>, vector<2x512xf32>
    %c0_59 = arith.constant 0 : index
    %c0_60 = arith.constant 0 : index
    %96 = vector.load %arg7[%c0_59, %c0_60] : memref<512x32xf32, #tpu.memory_space<vmem>>, vector<512x32xf32>
    %cst_61 = arith.constant dense<0.000000e+00> : vector<2x32xf32>
    %97 = tpu.matmul %95, %96, %cst_61 {dimension_numbers = #tpu.dot_dimension_numbers<[1], [0], [0], [1], [0, 0, 1, 1], [], []>} : vector<2x512xf32>, vector<512x32xf32>, vector<2x32xf32> -> vector<2x32xf32>
    %cst_62 = arith.constant 7.812500e-03 : f32
    %98 = vector.broadcast %cst_62 : f32 to vector<2x32xf32>
    %99 = arith.mulf %97, %98 : vector<2x32xf32>
    %100 = vector.extract_strided_slice %99 {offsets = [0, 0], sizes = [1, 32], strides = [1, 1]} : vector<2x32xf32> to vector<1x32xf32>
    %101 = vector.extract_strided_slice %99 {offsets = [1, 0], sizes = [1, 32], strides = [1, 1]} : vector<2x32xf32> to vector<1x32xf32>
    %102 = arith.mulf %100, %100 : vector<1x32xf32>
    %103 = arith.subf %101, %102 : vector<1x32xf32>
    %c0_63 = arith.constant 0 : index
    %c0_64 = arith.constant 0 : index
    %104 = vector.load %arg6[%c0_63, %c0_64] : memref<2x32xf32, #tpu.memory_space<vmem>>, vector<1x32xf32>
    %cst_65 = arith.constant 9.99999974E-6 : f32
    %105 = vector.broadcast %cst_65 : f32 to vector<1x32xf32>
    %106 = arith.addf %103, %105 : vector<1x32xf32>
    %107 = math.rsqrt %106 : vector<1x32xf32>
    %108 = arith.mulf %104, %107 : vector<1x32xf32>
    %c1_66 = arith.constant 1 : index
    %c0_67 = arith.constant 0 : index
    %109 = vector.load %arg6[%c1_66, %c0_67] : memref<2x32xf32, #tpu.memory_space<vmem>>, vector<1x32xf32>
    %110 = arith.mulf %100, %108 : vector<1x32xf32>
    %111 = arith.subf %109, %110 : vector<1x32xf32>
    %112 = tpu.iota {dimensions = array<i32: 0>} : vector<2x32xi32>
    %c0_i32_68 = arith.constant 0 : i32
    %113 = vector.broadcast %c0_i32_68 : i32 to vector<2x32xi32>
    %114 = arith.cmpi eq, %112, %113 : vector<2x32xi32>
    %115 = vector.shape_cast %108 : vector<1x32xf32> to vector<1x32xf32>
    %116 = vector.broadcast %115 : vector<1x32xf32> to vector<2x32xf32>
    %117 = vector.shape_cast %111 : vector<1x32xf32> to vector<1x32xf32>
    %118 = vector.broadcast %117 : vector<1x32xf32> to vector<2x32xf32>
    %119 = arith.select %114, %116, %118 : vector<2x32xi1>, vector<2x32xf32>
    %c0_69 = arith.constant 0 : index
    %c0_70 = arith.constant 0 : index
    %120 = vector.load %arg8[%c0_69, %c0_70] : memref<32x512xf32, #tpu.memory_space<vmem>>, vector<32x512xf32>
    %cst_71 = arith.constant dense<0.000000e+00> : vector<2x512xf32>
    %121 = tpu.matmul %119, %120, %cst_71 {dimension_numbers = #tpu.dot_dimension_numbers<[1], [0], [0], [1], [0, 0, 1, 1], [], []>} : vector<2x32xf32>, vector<32x512xf32>, vector<2x512xf32> -> vector<2x512xf32>
    %122 = vector.extract_strided_slice %121 {offsets = [0, 0], sizes = [1, 512], strides = [1, 1]} : vector<2x512xf32> to vector<1x512xf32>
    %123 = vector.broadcast %122 : vector<1x512xf32> to vector<8x512xf32>
    %124 = arith.mulf %82, %123 : vector<8x512xf32>
    %125 = vector.extract_strided_slice %121 {offsets = [1, 0], sizes = [1, 512], strides = [1, 1]} : vector<2x512xf32> to vector<1x512xf32>
    %126 = vector.broadcast %125 : vector<1x512xf32> to vector<8x512xf32>
    %127 = arith.addf %124, %126 : vector<8x512xf32>
    %cst_72 = arith.constant 0.000000e+00 : f32
    %128 = vector.broadcast %cst_72 : f32 to vector<8x512xf32>
    %129 = arith.maximumf %127, %128 : vector<8x512xf32>
    %cst_73 = arith.constant 0.000000e+00 : f32
    %130 = vector.broadcast %cst_73 : f32 to vector<20x256xf32>
    %c0_74 = arith.constant 0 : index
    %c0_75 = arith.constant 0 : index
    %131 = vector.load %arg21[%c0_74, %c0_75] : memref<20x256xf32, #tpu.memory_space<vmem>>, vector<20x256xf32>
    tpu.vector_store %arg21[%c0_74, %c0_75], %130 {strides = array<i32>} : memref<20x256xf32, #tpu.memory_space<vmem>>, vector<20x256xf32>,
    %132 = vector.extract_strided_slice %129 {offsets = [0, 0], sizes = [1, 256], strides = [1, 1]} : vector<8x512xf32> to vector<1x256xf32>
    %c1_76 = arith.constant 1 : index
    %c0_77 = arith.constant 0 : index
    %133 = vector.load %arg21[%c1_76, %c0_77] : memref<20x256xf32, #tpu.memory_space<vmem>>, vector<1x256xf32>
    tpu.vector_store %arg21[%c1_76, %c0_77], %132 {strides = array<i32>} : memref<20x256xf32, #tpu.memory_space<vmem>>, vector<1x256xf32>,
    %134 = vector.extract_strided_slice %129 {offsets = [0, 256], sizes = [1, 256], strides = [1, 1]} : vector<8x512xf32> to vector<1x256xf32>
    %c2_78 = arith.constant 2 : index
    %c0_79 = arith.constant 0 : index
    %135 = vector.load %arg21[%c2_78, %c0_79] : memref<20x256xf32, #tpu.memory_space<vmem>>, vector<1x256xf32>
    tpu.vector_store %arg21[%c2_78, %c0_79], %134 {strides = array<i32>} : memref<20x256xf32, #tpu.memory_space<vmem>>, vector<1x256xf32>,
    %136 = vector.extract_strided_slice %129 {offsets = [1, 0], sizes = [1, 256], strides = [1, 1]} : vector<8x512xf32> to vector<1x256xf32>
    %c3_80 = arith.constant 3 : index
    %c0_81 = arith.constant 0 : index
    %137 = vector.load %arg21[%c3_80, %c0_81] : memref<20x256xf32, #tpu.memory_space<vmem>>, vector<1x256xf32>
    tpu.vector_store %arg21[%c3_80, %c0_81], %136 {strides = array<i32>} : memref<20x256xf32, #tpu.memory_space<vmem>>, vector<1x256xf32>,
    %138 = vector.extract_strided_slice %129 {offsets = [1, 256], sizes = [1, 256], strides = [1, 1]} : vector<8x512xf32> to vector<1x256xf32>
    %c4_82 = arith.constant 4 : index
    %c0_83 = arith.constant 0 : index
    %139 = vector.load %arg21[%c4_82, %c0_83] : memref<20x256xf32, #tpu.memory_space<vmem>>, vector<1x256xf32>
    tpu.vector_store %arg21[%c4_82, %c0_83], %138 {strides = array<i32>} : memref<20x256xf32, #tpu.memory_space<vmem>>, vector<1x256xf32>,
    %140 = vector.extract_strided_slice %129 {offsets = [2, 0], sizes = [1, 256], strides = [1, 1]} : vector<8x512xf32> to vector<1x256xf32>
    %c5 = arith.constant 5 : index
    %c0_84 = arith.constant 0 : index
    %141 = vector.load %arg21[%c5, %c0_84] : memref<20x256xf32, #tpu.memory_space<vmem>>, vector<1x256xf32>
    tpu.vector_store %arg21[%c5, %c0_84], %140 {strides = array<i32>} : memref<20x256xf32, #tpu.memory_space<vmem>>, vector<1x256xf32>,
    %142 = vector.extract_strided_slice %129 {offsets = [2, 256], sizes = [1, 256], strides = [1, 1]} : vector<8x512xf32> to vector<1x256xf32>
    %c6_85 = arith.constant 6 : index
    %c0_86 = arith.constant 0 : index
    %143 = vector.load %arg21[%c6_85, %c0_86] : memref<20x256xf32, #tpu.memory_space<vmem>>, vector<1x256xf32>
    tpu.vector_store %arg21[%c6_85, %c0_86], %142 {strides = array<i32>} : memref<20x256xf32, #tpu.memory_space<vmem>>, vector<1x256xf32>,
    %144 = vector.extract_strided_slice %129 {offsets = [3, 0], sizes = [1, 256], strides = [1, 1]} : vector<8x512xf32> to vector<1x256xf32>
    %c7_87 = arith.constant 7 : index
    %c0_88 = arith.constant 0 : index
    %145 = vector.load %arg21[%c7_87, %c0_88] : memref<20x256xf32, #tpu.memory_space<vmem>>, vector<1x256xf32>
    tpu.vector_store %arg21[%c7_87, %c0_88], %144 {strides = array<i32>} : memref<20x256xf32, #tpu.memory_space<vmem>>, vector<1x256xf32>,
    %146 = vector.extract_strided_slice %129 {offsets = [3, 256], sizes = [1, 256], strides = [1, 1]} : vector<8x512xf32> to vector<1x256xf32>
    %c8_89 = arith.constant 8 : index
    %c0_90 = arith.constant 0 : index
    %147 = vector.load %arg21[%c8_89, %c0_90] : memref<20x256xf32, #tpu.memory_space<vmem>>, vector<1x256xf32>
    tpu.vector_store %arg21[%c8_89, %c0_90], %146 {strides = array<i32>} : memref<20x256xf32, #tpu.memory_space<vmem>>, vector<1x256xf32>,
    %148 = vector.extract_strided_slice %129 {offsets = [4, 0], sizes = [1, 256], strides = [1, 1]} : vector<8x512xf32> to vector<1x256xf32>
    %c11 = arith.constant 11 : index
    %c0_91 = arith.constant 0 : index
    %149 = vector.load %arg21[%c11, %c0_91] : memref<20x256xf32, #tpu.memory_space<vmem>>, vector<1x256xf32>
    tpu.vector_store %arg21[%c11, %c0_91], %148 {strides = array<i32>} : memref<20x256xf32, #tpu.memory_space<vmem>>, vector<1x256xf32>,
    %150 = vector.extract_strided_slice %129 {offsets = [4, 256], sizes = [1, 256], strides = [1, 1]} : vector<8x512xf32> to vector<1x256xf32>
    %c12 = arith.constant 12 : index
    %c0_92 = arith.constant 0 : index
    %151 = vector.load %arg21[%c12, %c0_92] : memref<20x256xf32, #tpu.memory_space<vmem>>, vector<1x256xf32>
    tpu.vector_store %arg21[%c12, %c0_92], %150 {strides = array<i32>} : memref<20x256xf32, #tpu.memory_space<vmem>>, vector<1x256xf32>,
    %152 = vector.extract_strided_slice %129 {offsets = [5, 0], sizes = [1, 256], strides = [1, 1]} : vector<8x512xf32> to vector<1x256xf32>
    %c13 = arith.constant 13 : index
    %c0_93 = arith.constant 0 : index
    %153 = vector.load %arg21[%c13, %c0_93] : memref<20x256xf32, #tpu.memory_space<vmem>>, vector<1x256xf32>
    tpu.vector_store %arg21[%c13, %c0_93], %152 {strides = array<i32>} : memref<20x256xf32, #tpu.memory_space<vmem>>, vector<1x256xf32>,
    %154 = vector.extract_strided_slice %129 {offsets = [5, 256], sizes = [1, 256], strides = [1, 1]} : vector<8x512xf32> to vector<1x256xf32>
    %c14 = arith.constant 14 : index
    %c0_94 = arith.constant 0 : index
    %155 = vector.load %arg21[%c14, %c0_94] : memref<20x256xf32, #tpu.memory_space<vmem>>, vector<1x256xf32>
    tpu.vector_store %arg21[%c14, %c0_94], %154 {strides = array<i32>} : memref<20x256xf32, #tpu.memory_space<vmem>>, vector<1x256xf32>,
    %156 = vector.extract_strided_slice %129 {offsets = [6, 0], sizes = [1, 256], strides = [1, 1]} : vector<8x512xf32> to vector<1x256xf32>
    %c15 = arith.constant 15 : index
    %c0_95 = arith.constant 0 : index
    %157 = vector.load %arg21[%c15, %c0_95] : memref<20x256xf32, #tpu.memory_space<vmem>>, vector<1x256xf32>
    tpu.vector_store %arg21[%c15, %c0_95], %156 {strides = array<i32>} : memref<20x256xf32, #tpu.memory_space<vmem>>, vector<1x256xf32>,
    %158 = vector.extract_strided_slice %129 {offsets = [6, 256], sizes = [1, 256], strides = [1, 1]} : vector<8x512xf32> to vector<1x256xf32>
    %c16 = arith.constant 16 : index
    %c0_96 = arith.constant 0 : index
    %159 = vector.load %arg21[%c16, %c0_96] : memref<20x256xf32, #tpu.memory_space<vmem>>, vector<1x256xf32>
    tpu.vector_store %arg21[%c16, %c0_96], %158 {strides = array<i32>} : memref<20x256xf32, #tpu.memory_space<vmem>>, vector<1x256xf32>,
    %160 = vector.extract_strided_slice %129 {offsets = [7, 0], sizes = [1, 256], strides = [1, 1]} : vector<8x512xf32> to vector<1x256xf32>
    %c17 = arith.constant 17 : index
    %c0_97 = arith.constant 0 : index
    %161 = vector.load %arg21[%c17, %c0_97] : memref<20x256xf32, #tpu.memory_space<vmem>>, vector<1x256xf32>
    tpu.vector_store %arg21[%c17, %c0_97], %160 {strides = array<i32>} : memref<20x256xf32, #tpu.memory_space<vmem>>, vector<1x256xf32>,
    %162 = vector.extract_strided_slice %129 {offsets = [7, 256], sizes = [1, 256], strides = [1, 1]} : vector<8x512xf32> to vector<1x256xf32>
    %c18 = arith.constant 18 : index
    %c0_98 = arith.constant 0 : index
    %163 = vector.load %arg21[%c18, %c0_98] : memref<20x256xf32, #tpu.memory_space<vmem>>, vector<1x256xf32>
    tpu.vector_store %arg21[%c18, %c0_98], %162 {strides = array<i32>} : memref<20x256xf32, #tpu.memory_space<vmem>>, vector<1x256xf32>,
    %c0_99 = arith.constant 0 : index
    %c0_100 = arith.constant 0 : index
    %164 = vector.load %arg21[%c0_99, %c0_100] : memref<20x256xf32, #tpu.memory_space<vmem>>, vector<8x256xf32>
    %c0_101 = arith.constant 0 : index
    %c0_102 = arith.constant 0 : index
    %165 = vector.load %arg22[%c0_101, %c0_102] : memref<16x768xf32, #tpu.memory_space<vmem>>, vector<8x256xf32>
    tpu.vector_store %arg22[%c0_101, %c0_102], %164 {strides = array<i32>} : memref<16x768xf32, #tpu.memory_space<vmem>>, vector<8x256xf32>,
    %c1_103 = arith.constant 1 : index
    %c0_104 = arith.constant 0 : index
    %166 = vector.load %arg21[%c1_103, %c0_104] : memref<20x256xf32, #tpu.memory_space<vmem>>, vector<8x256xf32>
    %c0_105 = arith.constant 0 : index
    %c256_106 = arith.constant 256 : index
    %167 = vector.load %arg22[%c0_105, %c256_106] : memref<16x768xf32, #tpu.memory_space<vmem>>, vector<8x256xf32>
    tpu.vector_store %arg22[%c0_105, %c256_106], %166 {strides = array<i32>} : memref<16x768xf32, #tpu.memory_space<vmem>>, vector<8x256xf32>,
    %c2_107 = arith.constant 2 : index
    %c0_108 = arith.constant 0 : index
    %168 = vector.load %arg21[%c2_107, %c0_108] : memref<20x256xf32, #tpu.memory_space<vmem>>, vector<8x256xf32>
    %c0_109 = arith.constant 0 : index
    %c512_110 = arith.constant 512 : index
    %169 = vector.load %arg22[%c0_109, %c512_110] : memref<16x768xf32, #tpu.memory_space<vmem>>, vector<8x256xf32>
    tpu.vector_store %arg22[%c0_109, %c512_110], %168 {strides = array<i32>} : memref<16x768xf32, #tpu.memory_space<vmem>>, vector<8x256xf32>,
    %c10_111 = arith.constant 10 : index
    %c0_112 = arith.constant 0 : index
    %170 = vector.load %arg21[%c10_111, %c0_112] : memref<20x256xf32, #tpu.memory_space<vmem>>, vector<8x256xf32>
    %c8_113 = arith.constant 8 : index
    %c0_114 = arith.constant 0 : index
    %171 = vector.load %arg22[%c8_113, %c0_114] : memref<16x768xf32, #tpu.memory_space<vmem>>, vector<8x256xf32>
    tpu.vector_store %arg22[%c8_113, %c0_114], %170 {strides = array<i32>} : memref<16x768xf32, #tpu.memory_space<vmem>>, vector<8x256xf32>,
    %c11_115 = arith.constant 11 : index
    %c0_116 = arith.constant 0 : index
    %172 = vector.load %arg21[%c11_115, %c0_116] : memref<20x256xf32, #tpu.memory_space<vmem>>, vector<8x256xf32>
    %c8_117 = arith.constant 8 : index
    %c256_118 = arith.constant 256 : index
    %173 = vector.load %arg22[%c8_117, %c256_118] : memref<16x768xf32, #tpu.memory_space<vmem>>, vector<8x256xf32>
    tpu.vector_store %arg22[%c8_117, %c256_118], %172 {strides = array<i32>} : memref<16x768xf32, #tpu.memory_space<vmem>>, vector<8x256xf32>,
    %c12_119 = arith.constant 12 : index
    %c0_120 = arith.constant 0 : index
    %174 = vector.load %arg21[%c12_119, %c0_120] : memref<20x256xf32, #tpu.memory_space<vmem>>, vector<8x256xf32>
    %c8_121 = arith.constant 8 : index
    %c512_122 = arith.constant 512 : index
    %175 = vector.load %arg22[%c8_121, %c512_122] : memref<16x768xf32, #tpu.memory_space<vmem>>, vector<8x256xf32>
    tpu.vector_store %arg22[%c8_121, %c512_122], %174 {strides = array<i32>} : memref<16x768xf32, #tpu.memory_space<vmem>>, vector<8x256xf32>,
    %c0_123 = arith.constant 0 : index
    %c0_124 = arith.constant 0 : index
    %176 = vector.load %arg22[%c0_123, %c0_124] : memref<16x768xf32, #tpu.memory_space<vmem>>, vector<16x768xf32>
    %c0_125 = arith.constant 0 : index
    %c0_126 = arith.constant 0 : index
    %177 = vector.load %arg9[%c0_125, %c0_126] : memref<768x512xf32, #tpu.memory_space<vmem>>, vector<768x512xf32>
    %cst_127 = arith.constant dense<0.000000e+00> : vector<16x512xf32>
    %178 = tpu.matmul %176, %177, %cst_127 {dimension_numbers = #tpu.dot_dimension_numbers<[1], [0], [0], [1], [0, 0, 1, 1], [], []>} : vector<16x768xf32>, vector<768x512xf32>, vector<16x512xf32> -> vector<16x512xf32>
    %cst_128 = arith.constant dense<0.000000e+00> : vector<512xf32>
    %179 = vector.multi_reduction <add>, %178, %cst_128 [0] : vector<16x512xf32> to vector<512xf32>
    %180 = vector.shape_cast %179 : vector<512xf32> to vector<1x512xf32>
    %181 = arith.mulf %178, %178 : vector<16x512xf32>
    %cst_129 = arith.constant dense<0.000000e+00> : vector<512xf32>
    %182 = vector.multi_reduction <add>, %181, %cst_129 [0] : vector<16x512xf32> to vector<512xf32>
    %183 = vector.shape_cast %182 : vector<512xf32> to vector<1x512xf32>
    %184 = tpu.iota {dimensions = array<i32: 0>} : vector<2x512xi32>
    %c0_i32_130 = arith.constant 0 : i32
    %185 = vector.broadcast %c0_i32_130 : i32 to vector<2x512xi32>
    %186 = arith.cmpi eq, %184, %185 : vector<2x512xi32>
    %187 = vector.shape_cast %180 : vector<1x512xf32> to vector<1x512xf32>
    %188 = vector.broadcast %187 : vector<1x512xf32> to vector<2x512xf32>
    %189 = vector.shape_cast %183 : vector<1x512xf32> to vector<1x512xf32>
    %190 = vector.broadcast %189 : vector<1x512xf32> to vector<2x512xf32>
    %191 = arith.select %186, %188, %190 : vector<2x512xi1>, vector<2x512xf32>
    %c0_131 = arith.constant 0 : index
    %c0_132 = arith.constant 0 : index
    %192 = vector.load %arg11[%c0_131, %c0_132] : memref<512x16xf32, #tpu.memory_space<vmem>>, vector<512x16xf32>
    %cst_133 = arith.constant dense<0.000000e+00> : vector<2x16xf32>
    %193 = tpu.matmul %191, %192, %cst_133 {dimension_numbers = #tpu.dot_dimension_numbers<[1], [0], [0], [1], [0, 0, 1, 1], [], []>} : vector<2x512xf32>, vector<512x16xf32>, vector<2x16xf32> -> vector<2x16xf32>
    %cst_134 = arith.constant 0.001953125 : f32
    %194 = vector.broadcast %cst_134 : f32 to vector<2x16xf32>
    %195 = arith.mulf %193, %194 : vector<2x16xf32>
    %196 = vector.extract_strided_slice %195 {offsets = [0, 0], sizes = [1, 16], strides = [1, 1]} : vector<2x16xf32> to vector<1x16xf32>
    %197 = vector.extract_strided_slice %195 {offsets = [1, 0], sizes = [1, 16], strides = [1, 1]} : vector<2x16xf32> to vector<1x16xf32>
    %198 = arith.mulf %196, %196 : vector<1x16xf32>
    %199 = arith.subf %197, %198 : vector<1x16xf32>
    %c0_135 = arith.constant 0 : index
    %c0_136 = arith.constant 0 : index
    %200 = vector.load %arg10[%c0_135, %c0_136] : memref<2x16xf32, #tpu.memory_space<vmem>>, vector<1x16xf32>
    %cst_137 = arith.constant 9.99999974E-6 : f32
    %201 = vector.broadcast %cst_137 : f32 to vector<1x16xf32>
    %202 = arith.addf %199, %201 : vector<1x16xf32>
    %203 = math.rsqrt %202 : vector<1x16xf32>
    %204 = arith.mulf %200, %203 : vector<1x16xf32>
    %c1_138 = arith.constant 1 : index
    %c0_139 = arith.constant 0 : index
    %205 = vector.load %arg10[%c1_138, %c0_139] : memref<2x16xf32, #tpu.memory_space<vmem>>, vector<1x16xf32>
    %206 = arith.mulf %196, %204 : vector<1x16xf32>
    %207 = arith.subf %205, %206 : vector<1x16xf32>
    %208 = tpu.iota {dimensions = array<i32: 0>} : vector<2x16xi32>
    %c0_i32_140 = arith.constant 0 : i32
    %209 = vector.broadcast %c0_i32_140 : i32 to vector<2x16xi32>
    %210 = arith.cmpi eq, %208, %209 : vector<2x16xi32>
    %211 = vector.shape_cast %204 : vector<1x16xf32> to vector<1x16xf32>
    %212 = vector.broadcast %211 : vector<1x16xf32> to vector<2x16xf32>
    %213 = vector.shape_cast %207 : vector<1x16xf32> to vector<1x16xf32>
    %214 = vector.broadcast %213 : vector<1x16xf32> to vector<2x16xf32>
    %215 = arith.select %210, %212, %214 : vector<2x16xi1>, vector<2x16xf32>
    %c0_141 = arith.constant 0 : index
    %c0_142 = arith.constant 0 : index
    %216 = vector.load %arg12[%c0_141, %c0_142] : memref<16x512xf32, #tpu.memory_space<vmem>>, vector<16x512xf32>
    %cst_143 = arith.constant dense<0.000000e+00> : vector<2x512xf32>
    %217 = tpu.matmul %215, %216, %cst_143 {dimension_numbers = #tpu.dot_dimension_numbers<[1], [0], [0], [1], [0, 0, 1, 1], [], []>} : vector<2x16xf32>, vector<16x512xf32>, vector<2x512xf32> -> vector<2x512xf32>
    %218 = vector.extract_strided_slice %217 {offsets = [0, 0], sizes = [1, 512], strides = [1, 1]} : vector<2x512xf32> to vector<1x512xf32>
    %219 = vector.broadcast %218 : vector<1x512xf32> to vector<16x512xf32>
    %220 = arith.mulf %178, %219 : vector<16x512xf32>
    %221 = vector.extract_strided_slice %217 {offsets = [1, 0], sizes = [1, 512], strides = [1, 1]} : vector<2x512xf32> to vector<1x512xf32>
    %222 = vector.broadcast %221 : vector<1x512xf32> to vector<16x512xf32>
    %223 = arith.addf %220, %222 : vector<16x512xf32>
    %cst_144 = arith.constant 0.000000e+00 : f32
    %224 = vector.broadcast %cst_144 : f32 to vector<16x512xf32>
    %225 = arith.maximumf %223, %224 : vector<16x512xf32>
    %cst_145 = arith.constant 0.000000e+00 : f32
    %226 = vector.broadcast %cst_145 : f32 to vector<36x256xf32>
    %c0_146 = arith.constant 0 : index
    %c0_147 = arith.constant 0 : index
    %227 = vector.load %arg23[%c0_146, %c0_147] : memref<36x256xf32, #tpu.memory_space<vmem>>, vector<36x256xf32>
    tpu.vector_store %arg23[%c0_146, %c0_147], %226 {strides = array<i32>} : memref<36x256xf32, #tpu.memory_space<vmem>>, vector<36x256xf32>,
    %228 = vector.extract_strided_slice %225 {offsets = [0, 0], sizes = [1, 256], strides = [1, 1]} : vector<16x512xf32> to vector<1x256xf32>
    %c1_148 = arith.constant 1 : index
    %c0_149 = arith.constant 0 : index
    %229 = vector.load %arg23[%c1_148, %c0_149] : memref<36x256xf32, #tpu.memory_space<vmem>>, vector<1x256xf32>
    tpu.vector_store %arg23[%c1_148, %c0_149], %228 {strides = array<i32>} : memref<36x256xf32, #tpu.memory_space<vmem>>, vector<1x256xf32>,
    %230 = vector.extract_strided_slice %225 {offsets = [0, 256], sizes = [1, 256], strides = [1, 1]} : vector<16x512xf32> to vector<1x256xf32>
    %c2_150 = arith.constant 2 : index
    %c0_151 = arith.constant 0 : index
    %231 = vector.load %arg23[%c2_150, %c0_151] : memref<36x256xf32, #tpu.memory_space<vmem>>, vector<1x256xf32>
    tpu.vector_store %arg23[%c2_150, %c0_151], %230 {strides = array<i32>} : memref<36x256xf32, #tpu.memory_space<vmem>>, vector<1x256xf32>,
    %232 = vector.extract_strided_slice %225 {offsets = [1, 0], sizes = [1, 256], strides = [1, 1]} : vector<16x512xf32> to vector<1x256xf32>
    %c3_152 = arith.constant 3 : index
    %c0_153 = arith.constant 0 : index
    %233 = vector.load %arg23[%c3_152, %c0_153] : memref<36x256xf32, #tpu.memory_space<vmem>>, vector<1x256xf32>
    tpu.vector_store %arg23[%c3_152, %c0_153], %232 {strides = array<i32>} : memref<36x256xf32, #tpu.memory_space<vmem>>, vector<1x256xf32>,
    %234 = vector.extract_strided_slice %225 {offsets = [1, 256], sizes = [1, 256], strides = [1, 1]} : vector<16x512xf32> to vector<1x256xf32>
    %c4_154 = arith.constant 4 : index
    %c0_155 = arith.constant 0 : index
    %235 = vector.load %arg23[%c4_154, %c0_155] : memref<36x256xf32, #tpu.memory_space<vmem>>, vector<1x256xf32>
    tpu.vector_store %arg23[%c4_154, %c0_155], %234 {strides = array<i32>} : memref<36x256xf32, #tpu.memory_space<vmem>>, vector<1x256xf32>,
    %236 = vector.extract_strided_slice %225 {offsets = [2, 0], sizes = [1, 256], strides = [1, 1]} : vector<16x512xf32> to vector<1x256xf32>
    %c5_156 = arith.constant 5 : index
    %c0_157 = arith.constant 0 : index
    %237 = vector.load %arg23[%c5_156, %c0_157] : memref<36x256xf32, #tpu.memory_space<vmem>>, vector<1x256xf32>
    tpu.vector_store %arg23[%c5_156, %c0_157], %236 {strides = array<i32>} : memref<36x256xf32, #tpu.memory_space<vmem>>, vector<1x256xf32>,
    %238 = vector.extract_strided_slice %225 {offsets = [2, 256], sizes = [1, 256], strides = [1, 1]} : vector<16x512xf32> to vector<1x256xf32>
    %c6_158 = arith.constant 6 : index
    %c0_159 = arith.constant 0 : index
    %239 = vector.load %arg23[%c6_158, %c0_159] : memref<36x256xf32, #tpu.memory_space<vmem>>, vector<1x256xf32>
    tpu.vector_store %arg23[%c6_158, %c0_159], %238 {strides = array<i32>} : memref<36x256xf32, #tpu.memory_space<vmem>>, vector<1x256xf32>,
    %240 = vector.extract_strided_slice %225 {offsets = [3, 0], sizes = [1, 256], strides = [1, 1]} : vector<16x512xf32> to vector<1x256xf32>
    %c7_160 = arith.constant 7 : index
    %c0_161 = arith.constant 0 : index
    %241 = vector.load %arg23[%c7_160, %c0_161] : memref<36x256xf32, #tpu.memory_space<vmem>>, vector<1x256xf32>
    tpu.vector_store %arg23[%c7_160, %c0_161], %240 {strides = array<i32>} : memref<36x256xf32, #tpu.memory_space<vmem>>, vector<1x256xf32>,
    %242 = vector.extract_strided_slice %225 {offsets = [3, 256], sizes = [1, 256], strides = [1, 1]} : vector<16x512xf32> to vector<1x256xf32>
    %c8_162 = arith.constant 8 : index
    %c0_163 = arith.constant 0 : index
    %243 = vector.load %arg23[%c8_162, %c0_163] : memref<36x256xf32, #tpu.memory_space<vmem>>, vector<1x256xf32>
    tpu.vector_store %arg23[%c8_162, %c0_163], %242 {strides = array<i32>} : memref<36x256xf32, #tpu.memory_space<vmem>>, vector<1x256xf32>,
    %244 = vector.extract_strided_slice %225 {offsets = [4, 0], sizes = [1, 256], strides = [1, 1]} : vector<16x512xf32> to vector<1x256xf32>
    %c9_164 = arith.constant 9 : index
    %c0_165 = arith.constant 0 : index
    %245 = vector.load %arg23[%c9_164, %c0_165] : memref<36x256xf32, #tpu.memory_space<vmem>>, vector<1x256xf32>
    tpu.vector_store %arg23[%c9_164, %c0_165], %244 {strides = array<i32>} : memref<36x256xf32, #tpu.memory_space<vmem>>, vector<1x256xf32>,
    %246 = vector.extract_strided_slice %225 {offsets = [4, 256], sizes = [1, 256], strides = [1, 1]} : vector<16x512xf32> to vector<1x256xf32>
    %c10_166 = arith.constant 10 : index
    %c0_167 = arith.constant 0 : index
    %247 = vector.load %arg23[%c10_166, %c0_167] : memref<36x256xf32, #tpu.memory_space<vmem>>, vector<1x256xf32>
    tpu.vector_store %arg23[%c10_166, %c0_167], %246 {strides = array<i32>} : memref<36x256xf32, #tpu.memory_space<vmem>>, vector<1x256xf32>,
    %248 = vector.extract_strided_slice %225 {offsets = [5, 0], sizes = [1, 256], strides = [1, 1]} : vector<16x512xf32> to vector<1x256xf32>
    %c11_168 = arith.constant 11 : index
    %c0_169 = arith.constant 0 : index
    %249 = vector.load %arg23[%c11_168, %c0_169] : memref<36x256xf32, #tpu.memory_space<vmem>>, vector<1x256xf32>
    tpu.vector_store %arg23[%c11_168, %c0_169], %248 {strides = array<i32>} : memref<36x256xf32, #tpu.memory_space<vmem>>, vector<1x256xf32>,
    %250 = vector.extract_strided_slice %225 {offsets = [5, 256], sizes = [1, 256], strides = [1, 1]} : vector<16x512xf32> to vector<1x256xf32>
    %c12_170 = arith.constant 12 : index
    %c0_171 = arith.constant 0 : index
    %251 = vector.load %arg23[%c12_170, %c0_171] : memref<36x256xf32, #tpu.memory_space<vmem>>, vector<1x256xf32>
    tpu.vector_store %arg23[%c12_170, %c0_171], %250 {strides = array<i32>} : memref<36x256xf32, #tpu.memory_space<vmem>>, vector<1x256xf32>,
    %252 = vector.extract_strided_slice %225 {offsets = [6, 0], sizes = [1, 256], strides = [1, 1]} : vector<16x512xf32> to vector<1x256xf32>
    %c13_172 = arith.constant 13 : index
    %c0_173 = arith.constant 0 : index
    %253 = vector.load %arg23[%c13_172, %c0_173] : memref<36x256xf32, #tpu.memory_space<vmem>>, vector<1x256xf32>
    tpu.vector_store %arg23[%c13_172, %c0_173], %252 {strides = array<i32>} : memref<36x256xf32, #tpu.memory_space<vmem>>, vector<1x256xf32>,
    %254 = vector.extract_strided_slice %225 {offsets = [6, 256], sizes = [1, 256], strides = [1, 1]} : vector<16x512xf32> to vector<1x256xf32>
    %c14_174 = arith.constant 14 : index
    %c0_175 = arith.constant 0 : index
    %255 = vector.load %arg23[%c14_174, %c0_175] : memref<36x256xf32, #tpu.memory_space<vmem>>, vector<1x256xf32>
    tpu.vector_store %arg23[%c14_174, %c0_175], %254 {strides = array<i32>} : memref<36x256xf32, #tpu.memory_space<vmem>>, vector<1x256xf32>,
    %256 = vector.extract_strided_slice %225 {offsets = [7, 0], sizes = [1, 256], strides = [1, 1]} : vector<16x512xf32> to vector<1x256xf32>
    %c15_176 = arith.constant 15 : index
    %c0_177 = arith.constant 0 : index
    %257 = vector.load %arg23[%c15_176, %c0_177] : memref<36x256xf32, #tpu.memory_space<vmem>>, vector<1x256xf32>
    tpu.vector_store %arg23[%c15_176, %c0_177], %256 {strides = array<i32>} : memref<36x256xf32, #tpu.memory_space<vmem>>, vector<1x256xf32>,
    %258 = vector.extract_strided_slice %225 {offsets = [7, 256], sizes = [1, 256], strides = [1, 1]} : vector<16x512xf32> to vector<1x256xf32>
    %c16_178 = arith.constant 16 : index
    %c0_179 = arith.constant 0 : index
    %259 = vector.load %arg23[%c16_178, %c0_179] : memref<36x256xf32, #tpu.memory_space<vmem>>, vector<1x256xf32>
    tpu.vector_store %arg23[%c16_178, %c0_179], %258 {strides = array<i32>} : memref<36x256xf32, #tpu.memory_space<vmem>>, vector<1x256xf32>,
    %260 = vector.extract_strided_slice %225 {offsets = [8, 0], sizes = [1, 256], strides = [1, 1]} : vector<16x512xf32> to vector<1x256xf32>
    %c19 = arith.constant 19 : index
    %c0_180 = arith.constant 0 : index
    %261 = vector.load %arg23[%c19, %c0_180] : memref<36x256xf32, #tpu.memory_space<vmem>>, vector<1x256xf32>
    tpu.vector_store %arg23[%c19, %c0_180], %260 {strides = array<i32>} : memref<36x256xf32, #tpu.memory_space<vmem>>, vector<1x256xf32>,
    %262 = vector.extract_strided_slice %225 {offsets = [8, 256], sizes = [1, 256], strides = [1, 1]} : vector<16x512xf32> to vector<1x256xf32>
    %c20 = arith.constant 20 : index
    %c0_181 = arith.constant 0 : index
    %263 = vector.load %arg23[%c20, %c0_181] : memref<36x256xf32, #tpu.memory_space<vmem>>, vector<1x256xf32>
    tpu.vector_store %arg23[%c20, %c0_181], %262 {strides = array<i32>} : memref<36x256xf32, #tpu.memory_space<vmem>>, vector<1x256xf32>,
    %264 = vector.extract_strided_slice %225 {offsets = [9, 0], sizes = [1, 256], strides = [1, 1]} : vector<16x512xf32> to vector<1x256xf32>
    %c21 = arith.constant 21 : index
    %c0_182 = arith.constant 0 : index
    %265 = vector.load %arg23[%c21, %c0_182] : memref<36x256xf32, #tpu.memory_space<vmem>>, vector<1x256xf32>
    tpu.vector_store %arg23[%c21, %c0_182], %264 {strides = array<i32>} : memref<36x256xf32, #tpu.memory_space<vmem>>, vector<1x256xf32>,
    %266 = vector.extract_strided_slice %225 {offsets = [9, 256], sizes = [1, 256], strides = [1, 1]} : vector<16x512xf32> to vector<1x256xf32>
    %c22 = arith.constant 22 : index
    %c0_183 = arith.constant 0 : index
    %267 = vector.load %arg23[%c22, %c0_183] : memref<36x256xf32, #tpu.memory_space<vmem>>, vector<1x256xf32>
    tpu.vector_store %arg23[%c22, %c0_183], %266 {strides = array<i32>} : memref<36x256xf32, #tpu.memory_space<vmem>>, vector<1x256xf32>,
    %268 = vector.extract_strided_slice %225 {offsets = [10, 0], sizes = [1, 256], strides = [1, 1]} : vector<16x512xf32> to vector<1x256xf32>
    %c23 = arith.constant 23 : index
    %c0_184 = arith.constant 0 : index
    %269 = vector.load %arg23[%c23, %c0_184] : memref<36x256xf32, #tpu.memory_space<vmem>>, vector<1x256xf32>
    tpu.vector_store %arg23[%c23, %c0_184], %268 {strides = array<i32>} : memref<36x256xf32, #tpu.memory_space<vmem>>, vector<1x256xf32>,
    %270 = vector.extract_strided_slice %225 {offsets = [10, 256], sizes = [1, 256], strides = [1, 1]} : vector<16x512xf32> to vector<1x256xf32>
    %c24 = arith.constant 24 : index
    %c0_185 = arith.constant 0 : index
    %271 = vector.load %arg23[%c24, %c0_185] : memref<36x256xf32, #tpu.memory_space<vmem>>, vector<1x256xf32>
    tpu.vector_store %arg23[%c24, %c0_185], %270 {strides = array<i32>} : memref<36x256xf32, #tpu.memory_space<vmem>>, vector<1x256xf32>,
    %272 = vector.extract_strided_slice %225 {offsets = [11, 0], sizes = [1, 256], strides = [1, 1]} : vector<16x512xf32> to vector<1x256xf32>
    %c25 = arith.constant 25 : index
    %c0_186 = arith.constant 0 : index
    %273 = vector.load %arg23[%c25, %c0_186] : memref<36x256xf32, #tpu.memory_space<vmem>>, vector<1x256xf32>
    tpu.vector_store %arg23[%c25, %c0_186], %272 {strides = array<i32>} : memref<36x256xf32, #tpu.memory_space<vmem>>, vector<1x256xf32>,
    %274 = vector.extract_strided_slice %225 {offsets = [11, 256], sizes = [1, 256], strides = [1, 1]} : vector<16x512xf32> to vector<1x256xf32>
    %c26 = arith.constant 26 : index
    %c0_187 = arith.constant 0 : index
    %275 = vector.load %arg23[%c26, %c0_187] : memref<36x256xf32, #tpu.memory_space<vmem>>, vector<1x256xf32>
    tpu.vector_store %arg23[%c26, %c0_187], %274 {strides = array<i32>} : memref<36x256xf32, #tpu.memory_space<vmem>>, vector<1x256xf32>,
    %276 = vector.extract_strided_slice %225 {offsets = [12, 0], sizes = [1, 256], strides = [1, 1]} : vector<16x512xf32> to vector<1x256xf32>
    %c27 = arith.constant 27 : index
    %c0_188 = arith.constant 0 : index
    %277 = vector.load %arg23[%c27, %c0_188] : memref<36x256xf32, #tpu.memory_space<vmem>>, vector<1x256xf32>
    tpu.vector_store %arg23[%c27, %c0_188], %276 {strides = array<i32>} : memref<36x256xf32, #tpu.memory_space<vmem>>, vector<1x256xf32>,
    %278 = vector.extract_strided_slice %225 {offsets = [12, 256], sizes = [1, 256], strides = [1, 1]} : vector<16x512xf32> to vector<1x256xf32>
    %c28 = arith.constant 28 : index
    %c0_189 = arith.constant 0 : index
    %279 = vector.load %arg23[%c28, %c0_189] : memref<36x256xf32, #tpu.memory_space<vmem>>, vector<1x256xf32>
    tpu.vector_store %arg23[%c28, %c0_189], %278 {strides = array<i32>} : memref<36x256xf32, #tpu.memory_space<vmem>>, vector<1x256xf32>,
    %280 = vector.extract_strided_slice %225 {offsets = [13, 0], sizes = [1, 256], strides = [1, 1]} : vector<16x512xf32> to vector<1x256xf32>
    %c29 = arith.constant 29 : index
    %c0_190 = arith.constant 0 : index
    %281 = vector.load %arg23[%c29, %c0_190] : memref<36x256xf32, #tpu.memory_space<vmem>>, vector<1x256xf32>
    tpu.vector_store %arg23[%c29, %c0_190], %280 {strides = array<i32>} : memref<36x256xf32, #tpu.memory_space<vmem>>, vector<1x256xf32>,
    %282 = vector.extract_strided_slice %225 {offsets = [13, 256], sizes = [1, 256], strides = [1, 1]} : vector<16x512xf32> to vector<1x256xf32>
    %c30 = arith.constant 30 : index
    %c0_191 = arith.constant 0 : index
    %283 = vector.load %arg23[%c30, %c0_191] : memref<36x256xf32, #tpu.memory_space<vmem>>, vector<1x256xf32>
    tpu.vector_store %arg23[%c30, %c0_191], %282 {strides = array<i32>} : memref<36x256xf32, #tpu.memory_space<vmem>>, vector<1x256xf32>,
    %284 = vector.extract_strided_slice %225 {offsets = [14, 0], sizes = [1, 256], strides = [1, 1]} : vector<16x512xf32> to vector<1x256xf32>
    %c31 = arith.constant 31 : index
    %c0_192 = arith.constant 0 : index
    %285 = vector.load %arg23[%c31, %c0_192] : memref<36x256xf32, #tpu.memory_space<vmem>>, vector<1x256xf32>
    tpu.vector_store %arg23[%c31, %c0_192], %284 {strides = array<i32>} : memref<36x256xf32, #tpu.memory_space<vmem>>, vector<1x256xf32>,
    %286 = vector.extract_strided_slice %225 {offsets = [14, 256], sizes = [1, 256], strides = [1, 1]} : vector<16x512xf32> to vector<1x256xf32>
    %c32 = arith.constant 32 : index
    %c0_193 = arith.constant 0 : index
    %287 = vector.load %arg23[%c32, %c0_193] : memref<36x256xf32, #tpu.memory_space<vmem>>, vector<1x256xf32>
    tpu.vector_store %arg23[%c32, %c0_193], %286 {strides = array<i32>} : memref<36x256xf32, #tpu.memory_space<vmem>>, vector<1x256xf32>,
    %288 = vector.extract_strided_slice %225 {offsets = [15, 0], sizes = [1, 256], strides = [1, 1]} : vector<16x512xf32> to vector<1x256xf32>
    %c33 = arith.constant 33 : index
    %c0_194 = arith.constant 0 : index
    %289 = vector.load %arg23[%c33, %c0_194] : memref<36x256xf32, #tpu.memory_space<vmem>>, vector<1x256xf32>
    tpu.vector_store %arg23[%c33, %c0_194], %288 {strides = array<i32>} : memref<36x256xf32, #tpu.memory_space<vmem>>, vector<1x256xf32>,
    %290 = vector.extract_strided_slice %225 {offsets = [15, 256], sizes = [1, 256], strides = [1, 1]} : vector<16x512xf32> to vector<1x256xf32>
    %c34 = arith.constant 34 : index
    %c0_195 = arith.constant 0 : index
    %291 = vector.load %arg23[%c34, %c0_195] : memref<36x256xf32, #tpu.memory_space<vmem>>, vector<1x256xf32>
    tpu.vector_store %arg23[%c34, %c0_195], %290 {strides = array<i32>} : memref<36x256xf32, #tpu.memory_space<vmem>>, vector<1x256xf32>,
    %c0_196 = arith.constant 0 : index
    %c0_197 = arith.constant 0 : index
    %292 = vector.load %arg23[%c0_196, %c0_197] : memref<36x256xf32, #tpu.memory_space<vmem>>, vector<16x256xf32>
    %c0_198 = arith.constant 0 : index
    %c0_199 = arith.constant 0 : index
    %293 = vector.load %arg24[%c0_198, %c0_199] : memref<32x768xf32, #tpu.memory_space<vmem>>, vector<16x256xf32>
    tpu.vector_store %arg24[%c0_198, %c0_199], %292 {strides = array<i32>} : memref<32x768xf32, #tpu.memory_space<vmem>>, vector<16x256xf32>,
    %c1_200 = arith.constant 1 : index
    %c0_201 = arith.constant 0 : index
    %294 = vector.load %arg23[%c1_200, %c0_201] : memref<36x256xf32, #tpu.memory_space<vmem>>, vector<16x256xf32>
    %c0_202 = arith.constant 0 : index
    %c256_203 = arith.constant 256 : index
    %295 = vector.load %arg24[%c0_202, %c256_203] : memref<32x768xf32, #tpu.memory_space<vmem>>, vector<16x256xf32>
    tpu.vector_store %arg24[%c0_202, %c256_203], %294 {strides = array<i32>} : memref<32x768xf32, #tpu.memory_space<vmem>>, vector<16x256xf32>,
    %c2_204 = arith.constant 2 : index
    %c0_205 = arith.constant 0 : index
    %296 = vector.load %arg23[%c2_204, %c0_205] : memref<36x256xf32, #tpu.memory_space<vmem>>, vector<16x256xf32>
    %c0_206 = arith.constant 0 : index
    %c512_207 = arith.constant 512 : index
    %297 = vector.load %arg24[%c0_206, %c512_207] : memref<32x768xf32, #tpu.memory_space<vmem>>, vector<16x256xf32>
    tpu.vector_store %arg24[%c0_206, %c512_207], %296 {strides = array<i32>} : memref<32x768xf32, #tpu.memory_space<vmem>>, vector<16x256xf32>,
    %c18_208 = arith.constant 18 : index
    %c0_209 = arith.constant 0 : index
    %298 = vector.load %arg23[%c18_208, %c0_209] : memref<36x256xf32, #tpu.memory_space<vmem>>, vector<16x256xf32>
    %c16_210 = arith.constant 16 : index
    %c0_211 = arith.constant 0 : index
    %299 = vector.load %arg24[%c16_210, %c0_211] : memref<32x768xf32, #tpu.memory_space<vmem>>, vector<16x256xf32>
    tpu.vector_store %arg24[%c16_210, %c0_211], %298 {strides = array<i32>} : memref<32x768xf32, #tpu.memory_space<vmem>>, vector<16x256xf32>,
    %c19_212 = arith.constant 19 : index
    %c0_213 = arith.constant 0 : index
    %300 = vector.load %arg23[%c19_212, %c0_213] : memref<36x256xf32, #tpu.memory_space<vmem>>, vector<16x256xf32>
    %c16_214 = arith.constant 16 : index
    %c256_215 = arith.constant 256 : index
    %301 = vector.load %arg24[%c16_214, %c256_215] : memref<32x768xf32, #tpu.memory_space<vmem>>, vector<16x256xf32>
    tpu.vector_store %arg24[%c16_214, %c256_215], %300 {strides = array<i32>} : memref<32x768xf32, #tpu.memory_space<vmem>>, vector<16x256xf32>,
    %c20_216 = arith.constant 20 : index
    %c0_217 = arith.constant 0 : index
    %302 = vector.load %arg23[%c20_216, %c0_217] : memref<36x256xf32, #tpu.memory_space<vmem>>, vector<16x256xf32>
    %c16_218 = arith.constant 16 : index
    %c512_219 = arith.constant 512 : index
    %303 = vector.load %arg24[%c16_218, %c512_219] : memref<32x768xf32, #tpu.memory_space<vmem>>, vector<16x256xf32>
    tpu.vector_store %arg24[%c16_218, %c512_219], %302 {strides = array<i32>} : memref<32x768xf32, #tpu.memory_space<vmem>>, vector<16x256xf32>,
    %c0_220 = arith.constant 0 : index
    %c0_221 = arith.constant 0 : index
    %304 = vector.load %arg24[%c0_220, %c0_221] : memref<32x768xf32, #tpu.memory_space<vmem>>, vector<32x768xf32>
    %c0_222 = arith.constant 0 : index
    %c0_223 = arith.constant 0 : index
    %305 = vector.load %arg13[%c0_222, %c0_223] : memref<768x512xf32, #tpu.memory_space<vmem>>, vector<768x512xf32>
    %cst_224 = arith.constant dense<0.000000e+00> : vector<32x512xf32>
    %306 = tpu.matmul %304, %305, %cst_224 {dimension_numbers = #tpu.dot_dimension_numbers<[1], [0], [0], [1], [0, 0, 1, 1], [], []>} : vector<32x768xf32>, vector<768x512xf32>, vector<32x512xf32> -> vector<32x512xf32>
    %cst_225 = arith.constant dense<0.000000e+00> : vector<512xf32>
    %307 = vector.multi_reduction <add>, %306, %cst_225 [0] : vector<32x512xf32> to vector<512xf32>
    %308 = vector.shape_cast %307 : vector<512xf32> to vector<1x512xf32>
    %309 = arith.mulf %306, %306 : vector<32x512xf32>
    %cst_226 = arith.constant dense<0.000000e+00> : vector<512xf32>
    %310 = vector.multi_reduction <add>, %309, %cst_226 [0] : vector<32x512xf32> to vector<512xf32>
    %311 = vector.shape_cast %310 : vector<512xf32> to vector<1x512xf32>
    %312 = tpu.iota {dimensions = array<i32: 0>} : vector<2x512xi32>
    %c0_i32_227 = arith.constant 0 : i32
    %313 = vector.broadcast %c0_i32_227 : i32 to vector<2x512xi32>
    %314 = arith.cmpi eq, %312, %313 : vector<2x512xi32>
    %315 = vector.shape_cast %308 : vector<1x512xf32> to vector<1x512xf32>
    %316 = vector.broadcast %315 : vector<1x512xf32> to vector<2x512xf32>
    %317 = vector.shape_cast %311 : vector<1x512xf32> to vector<1x512xf32>
    %318 = vector.broadcast %317 : vector<1x512xf32> to vector<2x512xf32>
    %319 = arith.select %314, %316, %318 : vector<2x512xi1>, vector<2x512xf32>
    %c0_228 = arith.constant 0 : index
    %c0_229 = arith.constant 0 : index
    %320 = vector.load %arg15[%c0_228, %c0_229] : memref<512x8xf32, #tpu.memory_space<vmem>>, vector<512x8xf32>
    %cst_230 = arith.constant dense<0.000000e+00> : vector<2x8xf32>
    %321 = tpu.matmul %319, %320, %cst_230 {dimension_numbers = #tpu.dot_dimension_numbers<[1], [0], [0], [1], [0, 0, 1, 1], [], []>} : vector<2x512xf32>, vector<512x8xf32>, vector<2x8xf32> -> vector<2x8xf32>
    %cst_231 = arith.constant 4.8828125E-4 : f32
    %322 = vector.broadcast %cst_231 : f32 to vector<2x8xf32>
    %323 = arith.mulf %321, %322 : vector<2x8xf32>
    %324 = vector.extract_strided_slice %323 {offsets = [0, 0], sizes = [1, 8], strides = [1, 1]} : vector<2x8xf32> to vector<1x8xf32>
    %325 = vector.extract_strided_slice %323 {offsets = [1, 0], sizes = [1, 8], strides = [1, 1]} : vector<2x8xf32> to vector<1x8xf32>
    %326 = arith.mulf %324, %324 : vector<1x8xf32>
    %327 = arith.subf %325, %326 : vector<1x8xf32>
    %c0_232 = arith.constant 0 : index
    %c0_233 = arith.constant 0 : index
    %328 = vector.load %arg14[%c0_232, %c0_233] : memref<2x8xf32, #tpu.memory_space<vmem>>, vector<1x8xf32>
    %cst_234 = arith.constant 9.99999974E-6 : f32
    %329 = vector.broadcast %cst_234 : f32 to vector<1x8xf32>
    %330 = arith.addf %327, %329 : vector<1x8xf32>
    %331 = math.rsqrt %330 : vector<1x8xf32>
    %332 = arith.mulf %328, %331 : vector<1x8xf32>
    %c1_235 = arith.constant 1 : index
    %c0_236 = arith.constant 0 : index
    %333 = vector.load %arg14[%c1_235, %c0_236] : memref<2x8xf32, #tpu.memory_space<vmem>>, vector<1x8xf32>
    %334 = arith.mulf %324, %332 : vector<1x8xf32>
    %335 = arith.subf %333, %334 : vector<1x8xf32>
    %336 = tpu.iota {dimensions = array<i32: 0>} : vector<2x8xi32>
    %c0_i32_237 = arith.constant 0 : i32
    %337 = vector.broadcast %c0_i32_237 : i32 to vector<2x8xi32>
    %338 = arith.cmpi eq, %336, %337 : vector<2x8xi32>
    %339 = vector.shape_cast %332 : vector<1x8xf32> to vector<1x8xf32>
    %340 = vector.broadcast %339 : vector<1x8xf32> to vector<2x8xf32>
    %341 = vector.shape_cast %335 : vector<1x8xf32> to vector<1x8xf32>
    %342 = vector.broadcast %341 : vector<1x8xf32> to vector<2x8xf32>
    %343 = arith.select %338, %340, %342 : vector<2x8xi1>, vector<2x8xf32>
    %c0_238 = arith.constant 0 : index
    %c0_239 = arith.constant 0 : index
    %344 = vector.load %arg16[%c0_238, %c0_239] : memref<8x512xf32, #tpu.memory_space<vmem>>, vector<8x512xf32>
    %cst_240 = arith.constant dense<0.000000e+00> : vector<2x512xf32>
    %345 = tpu.matmul %343, %344, %cst_240 {dimension_numbers = #tpu.dot_dimension_numbers<[1], [0], [0], [1], [0, 0, 1, 1], [], []>} : vector<2x8xf32>, vector<8x512xf32>, vector<2x512xf32> -> vector<2x512xf32>
    %346 = vector.extract_strided_slice %345 {offsets = [0, 0], sizes = [1, 512], strides = [1, 1]} : vector<2x512xf32> to vector<1x512xf32>
    %347 = vector.broadcast %346 : vector<1x512xf32> to vector<32x512xf32>
    %348 = arith.mulf %306, %347 : vector<32x512xf32>
    %349 = vector.extract_strided_slice %345 {offsets = [1, 0], sizes = [1, 512], strides = [1, 1]} : vector<2x512xf32> to vector<1x512xf32>
    %350 = vector.broadcast %349 : vector<1x512xf32> to vector<32x512xf32>
    %351 = arith.addf %348, %350 : vector<32x512xf32>
    %cst_241 = arith.constant 0.000000e+00 : f32
    %352 = vector.broadcast %cst_241 : f32 to vector<32x512xf32>
    %353 = arith.maximumf %351, %352 : vector<32x512xf32>
    %354 = vector.extract_strided_slice %353 {offsets = [1, 0], sizes = [14, 512], strides = [1, 1]} : vector<32x512xf32> to vector<14x512xf32>
    %c0_242 = arith.constant 0 : index
    %c0_243 = arith.constant 0 : index
    %355 = vector.load %arg25[%c0_242, %c0_243] : memref<28x512xf32, #tpu.memory_space<vmem>>, vector<14x512xf32>
    tpu.vector_store %arg25[%c0_242, %c0_243], %354 {strides = array<i32>} : memref<28x512xf32, #tpu.memory_space<vmem>>, vector<14x512xf32>,
    %356 = vector.extract_strided_slice %353 {offsets = [17, 0], sizes = [14, 512], strides = [1, 1]} : vector<32x512xf32> to vector<14x512xf32>
    %c14_244 = arith.constant 14 : index
    %c0_245 = arith.constant 0 : index
    %357 = vector.load %arg25[%c14_244, %c0_245] : memref<28x512xf32, #tpu.memory_space<vmem>>, vector<14x512xf32>
    tpu.vector_store %arg25[%c14_244, %c0_245], %356 {strides = array<i32>} : memref<28x512xf32, #tpu.memory_space<vmem>>, vector<14x512xf32>,
    %c0_246 = arith.constant 0 : index
    %c0_247 = arith.constant 0 : index
    %358 = vector.load %arg25[%c0_246, %c0_247] : memref<28x512xf32, #tpu.memory_space<vmem>>, vector<28x512xf32>
    %c0_248 = arith.constant 0 : index
    %c0_249 = arith.constant 0 : index
    %359 = vector.load %arg17[%c0_248, %c0_249] : memref<512x128xf32, #tpu.memory_space<vmem>>, vector<512x128xf32>
    %cst_250 = arith.constant dense<0.000000e+00> : vector<28x128xf32>
    %360 = tpu.matmul %358, %359, %cst_250 {dimension_numbers = #tpu.dot_dimension_numbers<[1], [0], [0], [1], [0, 0, 1, 1], [], []>} : vector<28x512xf32>, vector<512x128xf32>, vector<28x128xf32> -> vector<28x128xf32>
    %361 = math.tanh %360 : vector<28x128xf32>
    %c0_251 = arith.constant 0 : index
    %c0_252 = arith.constant 0 : index
    %362 = vector.load %arg18[%c0_251, %c0_252] : memref<28x128xf32, #tpu.memory_space<vmem>>, vector<28x128xf32>
    tpu.vector_store %arg18[%c0_251, %c0_252], %361 {strides = array<i32>} : memref<28x128xf32, #tpu.memory_space<vmem>>, vector<28x128xf32>,
    return
  }
}

</mosaic_0001>

<llo_original>
// kernel: generator_forward.1
$region0: #{generator_forward.1}
  #allocation0 [shape = 'u32[]', space=smem, size = 0x4, offset = 0x4, fixed_abs, tag = 'smem constant byte address 0x4 - core index']
  #allocation1 [shape = 'u32[144,128]{1,0:T(1,128)}', space=vmem, size = 0x12000, scoped, tag = 'internal scratch']
  #allocation2 [shape = 'f32[12,256]{1,0:T(8,128)}', space=vmem, size = 0x4000, scoped, tag = 'scratch operand']
  #allocation3 [shape = 'f32[8,768]{1,0:T(8,128)}', space=vmem, size = 0x6000, scoped, tag = 'scratch operand']
  #allocation4 [shape = 'f32[20,256]{1,0:T(8,128)}', space=vmem, size = 0x6000, scoped, tag = 'scratch operand']
  #allocation5 [shape = 'f32[16,768]{1,0:T(8,128)}', space=vmem, size = 0xc000, scoped, tag = 'scratch operand']
  #allocation6 [shape = 'f32[36,256]{1,0:T(8,128)}', space=vmem, size = 0xa000, scoped, tag = 'scratch operand']
  #allocation7 [shape = 'f32[32,768]{1,0:T(8,128)}', space=vmem, size = 0x18000, scoped, tag = 'scratch operand']
  #allocation8 [shape = 'f32[28,512]{1,0:T(8,128)}', space=vmem, size = 0x10000, scoped, tag = 'scratch operand']
  %s0 = inlined_call_operand.vmem [shape: f32[2,16], index: 0, kind: input, shape index: {}]
  %s1 = inlined_call_operand.vmem [shape: f32[16,1024], index: 1, kind: input, shape index: {}]
  %s2 = inlined_call_operand.vmem [shape: f32[2,64], index: 2, kind: input, shape index: {}]
  %s3 = inlined_call_operand.vmem [shape: f32[1024,64], index: 3, kind: input, shape index: {}]
  %s4 = inlined_call_operand.hbm [shape: f32[64,1024], index: 4, kind: input, shape index: {}]
  %s5 = inlined_call_operand.vmem [shape: f32[768,512], index: 5, kind: input, shape index: {}]
  %s6 = inlined_call_operand.hbm [shape: f32[2,32], index: 6, kind: input, shape index: {}]
  %s7 = inlined_call_operand.vmem [shape: f32[512,32], index: 7, kind: input, shape index: {}]
  %s8 = inlined_call_operand.vmem [shape: f32[32,512], index: 8, kind: input, shape index: {}]
  %s9 = inlined_call_operand.hbm [shape: f32[768,512], index: 9, kind: input, shape index: {}]
  %s10 = inlined_call_operand.hbm [shape: f32[2,16], index: 10, kind: input, shape index: {}]
  %s11 = inlined_call_operand.vmem [shape: f32[512,16], index: 11, kind: input, shape index: {}]
  %s12 = inlined_call_operand.hbm [shape: f32[16,512], index: 12, kind: input, shape index: {}]
  %s13 = inlined_call_operand.hbm [shape: f32[768,512], index: 13, kind: input, shape index: {}]
  %s14 = inlined_call_operand.hbm [shape: f32[2,8], index: 14, kind: input, shape index: {}]
  %s15 = inlined_call_operand.vmem [shape: f32[512,8], index: 15, kind: input, shape index: {}]
  %s16 = inlined_call_operand.vmem [shape: f32[8,512], index: 16, kind: input, shape index: {}]
  %s17 = inlined_call_operand.hbm [shape: f32[512,128], index: 17, kind: input, shape index: {}]
  %s18 = inlined_call_operand.vmem [shape: f32[28,128], index: 18, kind: output, shape index: {}]
  %s19 = sld [smem:[#allocation0]]
  $region114: #{generator_forward.1} parent=0
    _
  %s21 = ssub.s32 1, %s19
  %s22 = scalar_select 0, %s21, %s19
  $region1: #{generator_forward.1} parent=0
    #allocation9 [shape = 'u8[262144]{0}', space=vmem, size = 0x40000, scoped, tag = 'input window, operand 4, single buffered']
    #allocation10 [shape = 's32[1]{0}', space=sflag, size = 0x4, scoped, tag = 'scoped memory for generator_forward.1']
    #allocation11 [shape = 'u8[1024]{0}', space=vmem, size = 0x400, scoped, tag = 'input window, operand 6, single buffered']
    #allocation12 [shape = 's32[1]{0}', space=sflag, size = 0x4, scoped, tag = 'scoped memory for generator_forward.1']
    #allocation13 [shape = 'u8[1572864]{0}', space=vmem, size = 0x180000, scoped, tag = 'input window, operand 9, single buffered']
    #allocation14 [shape = 'u8[1024]{0}', space=vmem, size = 0x400, scoped, tag = 'input window, operand 10, single buffered']
    #allocation15 [shape = 's32[1]{0}', space=sflag, size = 0x4, scoped, tag = 'scoped memory for generator_forward.1']
    #allocation16 [shape = 'u8[32768]{0}', space=vmem, size = 0x8000, scoped, tag = 'input window, operand 12, single buffered']
    #allocation17 [shape = 'u8[1572864]{0}', space=vmem, size = 0x180000, scoped, tag = 'input window, operand 13, single buffered']
    #allocation18 [shape = 's32[1]{0}', space=sflag, size = 0x4, scoped, tag = 'scoped memory for generator_forward.1']
    #allocation19 [shape = 'u8[1024]{0}', space=vmem, size = 0x400, scoped, tag = 'input window, operand 14, single buffered']
    #allocation20 [shape = 'u8[262144]{0}', space=vmem, size = 0x40000, scoped, tag = 'input window, operand 17, single buffered']
    #allocation21 [shape = 's32[1]{0}', space=sflag, size = 0x4, scoped, tag = 'scoped memory for generator_forward.1']
    %23 = vsyncpa [#allocation10], 0
    %24 = vsyncpa [#allocation12], 0
    %25 = vsyncpa [#allocation15], 0
    %26 = vsyncpa [#allocation18], 0
    %27 = vsyncpa [#allocation21], 0
    // Predicated region
    $region2: #{generator_forward.1} parent=1 // pred_check
      _
    $region3: #{generator_forward.1} parent=1 // pred_check_branch
      %29 = sbr.rel (0) target = $region5
    $region4: #{generator_forward.1} parent=1 // pred_region
      _
    $region5: #{generator_forward.1} parent=1 // pred_fallthru
      _
    // Predicated region
    $region6: #{generator_forward.1} parent=1 // pred_check
      _
    $region7: #{generator_forward.1} parent=1 // pred_check_branch
      %31 = sbr.rel (0) target = $region9
    $region8: #{generator_forward.1} parent=1 // pred_region
      _
    $region9: #{generator_forward.1} parent=1 // pred_fallthru
      _
    // Predicated region
    $region10: #{generator_forward.1} parent=1 // pred_check
      _
    $region11: #{generator_forward.1} parent=1 // pred_check_branch
      %33 = sbr.rel (0) target = $region13
    $region12: #{generator_forward.1} parent=1 // pred_region
      _
    $region13: #{generator_forward.1} parent=1 // pred_fallthru
      _
    // Predicated region
    $region14: #{generator_forward.1} parent=1 // pred_check
      _
    $region15: #{generator_forward.1} parent=1 // pred_check_branch
      %35 = sbr.rel (0) target = $region17
    $region16: #{generator_forward.1} parent=1 // pred_region
      _
    $region17: #{generator_forward.1} parent=1 // pred_fallthru
      _
    // Predicated region
    $region18: #{generator_forward.1} parent=1 // pred_check
      _
    $region19: #{generator_forward.1} parent=1 // pred_check_branch
      %37 = sbr.rel (0) target = $region21
    $region20: #{generator_forward.1} parent=1 // pred_region
      %s39 = ssub.s32 8192, 8192
      %40 = vsyncadd [#allocation10], %s39
      %s41 = sshll.u32 [#allocation9], 4
      %s42 = int_to_ptr.vmem [resolvable:$true] %s41
      %47 = dma.hbm_to_vmem [thread:$0]  %s4, 8192, %s42, [#allocation10], 1024, 1024, 64
    $region21: #{generator_forward.1} parent=1 // pred_fallthru
      _
    // Predicated region
    $region22: #{generator_forward.1} parent=1 // pred_check
      _
    $region23: #{generator_forward.1} parent=1 // pred_check_branch
      %49 = sbr.rel (0) target = $region25
    $region24: #{generator_forward.1} parent=1 // pred_region
      _
    $region25: #{generator_forward.1} parent=1 // pred_fallthru
      _
    // Predicated region
    $region26: #{generator_forward.1} parent=1 // pred_check
      _
    $region27: #{generator_forward.1} parent=1 // pred_check_branch
      %51 = sbr.rel (0) target = $region29
    $region28: #{generator_forward.1} parent=1 // pred_region
      %s53 = ssub.s32 32, 32
      %54 = vsyncadd [#allocation12], %s53
      %s56 = sshll.u32 [#allocation11], 4
      %s57 = int_to_ptr.vmem [resolvable:$true] %s56
      %59 = dma.hbm_to_vmem [thread:$0]  %s6, 32, %s57, [#allocation12]
    $region29: #{generator_forward.1} parent=1 // pred_fallthru
      _
    // Predicated region
    $region30: #{generator_forward.1} parent=1 // pred_check
      _
    $region31: #{generator_forward.1} parent=1 // pred_check_branch
      %61 = sbr.rel (0) target = $region33
    $region32: #{generator_forward.1} parent=1 // pred_region
      _
    $region33: #{generator_forward.1} parent=1 // pred_fallthru
      _
    // Predicated region
    $region34: #{generator_forward.1} parent=1 // pred_check
      _
    $region35: #{generator_forward.1} parent=1 // pred_check_branch
      %63 = sbr.rel (0) target = $region37
    $region36: #{generator_forward.1} parent=1 // pred_region
      _
    $region37: #{generator_forward.1} parent=1 // pred_fallthru
      _
    // Predicated region
    $region38: #{generator_forward.1} parent=1 // pred_check
      _
    $region39: #{generator_forward.1} parent=1 // pred_check_branch
      %65 = sbr.rel (0) target = $region41
    $region40: #{generator_forward.1} parent=1 // pred_region
      %s67 = ssub.s32 49152, 49152
      %68 = vsyncadd [#allocation12], %s67
      %s69 = sshll.u32 [#allocation13], 4
      %s70 = int_to_ptr.vmem [resolvable:$true] %s69
      %75 = dma.hbm_to_vmem [thread:$0]  %s9, 49152, %s70, [#allocation12], 512, 512, 32
    $region41: #{generator_forward.1} parent=1 // pred_fallthru
      _
    // Predicated region
    $region42: #{generator_forward.1} parent=1 // pred_check
      _
    $region43: #{generator_forward.1} parent=1 // pred_check_branch
      %77 = sbr.rel (0) target = $region45
    $region44: #{generator_forward.1} parent=1 // pred_region
      %s79 = ssub.s32 32, 32
      %80 = vsyncadd [#allocation15], %s79
      %s82 = sshll.u32 [#allocation14], 4
      %s83 = int_to_ptr.vmem [resolvable:$true] %s82
      %85 = dma.hbm_to_vmem [thread:$0]  %s10, 32, %s83, [#allocation15]
    $region45: #{generator_forward.1} parent=1 // pred_fallthru
      _
    // Predicated region
    $region46: #{generator_forward.1} parent=1 // pred_check
      _
    $region47: #{generator_forward.1} parent=1 // pred_check_branch
      %87 = sbr.rel (0) target = $region49
    $region48: #{generator_forward.1} parent=1 // pred_region
      _
    $region49: #{generator_forward.1} parent=1 // pred_fallthru
      _
    // Predicated region
    $region50: #{generator_forward.1} parent=1 // pred_check
      _
    $region51: #{generator_forward.1} parent=1 // pred_check_branch
      %89 = sbr.rel (0) target = $region53
    $region52: #{generator_forward.1} parent=1 // pred_region
      %s91 = ssub.s32 1024, 1024
      %92 = vsyncadd [#allocation15], %s91
      %s93 = sshll.u32 [#allocation16], 4
      %s94 = int_to_ptr.vmem [resolvable:$true] %s93
      %99 = dma.hbm_to_vmem [thread:$0]  %s12, 1024, %s94, [#allocation15], 512, 512, 32
    $region53: #{generator_forward.1} parent=1 // pred_fallthru
      _
    // Predicated region
    $region54: #{generator_forward.1} parent=1 // pred_check
      _
    $region55: #{generator_forward.1} parent=1 // pred_check_branch
      %101 = sbr.rel (0) target = $region57
    $region56: #{generator_forward.1} parent=1 // pred_region
      %s103 = ssub.s32 49152, 49152
      %104 = vsyncadd [#allocation18], %s103
      %s105 = sshll.u32 [#allocation17], 4
      %s106 = int_to_ptr.vmem [resolvable:$true] %s105
      %111 = dma.hbm_to_vmem [thread:$0]  %s13, 49152, %s106, [#allocation18], 512, 512, 32
    $region57: #{generator_forward.1} parent=1 // pred_fallthru
      _
    // Predicated region
    $region58: #{generator_forward.1} parent=1 // pred_check
      _
    $region59: #{generator_forward.1} parent=1 // pred_check_branch
      %113 = sbr.rel (0) target = $region61
    $region60: #{generator_forward.1} parent=1 // pred_region
      %s115 = ssub.s32 32, 32
      %116 = vsyncadd [#allocation18], %s115
      %s118 = sshll.u32 [#allocation19], 4
      %s119 = int_to_ptr.vmem [resolvable:$true] %s118
      %121 = dma.hbm_to_vmem [thread:$0]  %s14, 32, %s119, [#allocation18]
    $region61: #{generator_forward.1} parent=1 // pred_fallthru
      _
    // Predicated region
    $region62: #{generator_forward.1} parent=1 // pred_check
      _
    $region63: #{generator_forward.1} parent=1 // pred_check_branch
      %123 = sbr.rel (0) target = $region65
    $region64: #{generator_forward.1} parent=1 // pred_region
      _
    $region65: #{generator_forward.1} parent=1 // pred_fallthru
      _
    // Predicated region
    $region66: #{generator_forward.1} parent=1 // pred_check
      _
    $region67: #{generator_forward.1} parent=1 // pred_check_branch
      %125 = sbr.rel (0) target = $region69
    $region68: #{generator_forward.1} parent=1 // pred_region
      _
    $region69: #{generator_forward.1} parent=1 // pred_fallthru
      _
    // Predicated region
    $region70: #{generator_forward.1} parent=1 // pred_check
      _
    $region71: #{generator_forward.1} parent=1 // pred_check_branch
      %127 = sbr.rel (0) target = $region73
    $region72: #{generator_forward.1} parent=1 // pred_region
      %s129 = ssub.s32 8192, 8192
      %130 = vsyncadd [#allocation21], %s129
      %s131 = sshll.u32 [#allocation20], 4
      %s132 = int_to_ptr.vmem [resolvable:$true] %s131
      %137 = dma.hbm_to_vmem [thread:$0]  %s17, 8192, %s132, [#allocation21], 128, 128, 8
    $region73: #{generator_forward.1} parent=1 // pred_fallthru
      _
    // Predicated region
    $region74: #{generator_forward.1} parent=1 // pred_check
      _
    $region75: #{generator_forward.1} parent=1 // pred_check_branch
      %139 = sbr.rel (0) target = $region77
    $region76: #{generator_forward.1} parent=1 // pred_region
      %140 = dma.done [#allocation10], 8192
    $region77: #{generator_forward.1} parent=1 // pred_fallthru
      _
    // Predicated region
    $region78: #{generator_forward.1} parent=1 // pred_check
      _
    $region79: #{generator_forward.1} parent=1 // pred_check_branch
      %142 = sbr.rel (0) target = $region81
    $region80: #{generator_forward.1} parent=1 // pred_region
      %143 = dma.done [#allocation12], 32
    $region81: #{generator_forward.1} parent=1 // pred_fallthru
      _
    // Predicated region
    $region82: #{generator_forward.1} parent=1 // pred_check
      _
    $region83: #{generator_forward.1} parent=1 // pred_check_branch
      %145 = sbr.rel (0) target = $region85
    $region84: #{generator_forward.1} parent=1 // pred_region
      %146 = dma.done [#allocation12], 49152
    $region85: #{generator_forward.1} parent=1 // pred_fallthru
      _
    // Predicated region
    $region86: #{generator_forward.1} parent=1 // pred_check
      _
    $region87: #{generator_forward.1} parent=1 // pred_check_branch
      %148 = sbr.rel (0) target = $region89
    $region88: #{generator_forward.1} parent=1 // pred_region
      %149 = dma.done [#allocation15], 32
    $region89: #{generator_forward.1} parent=1 // pred_fallthru
      _
    // Predicated region
    $region90: #{generator_forward.1} parent=1 // pred_check
      _
    $region91: #{generator_forward.1} parent=1 // pred_check_branch
      %151 = sbr.rel (0) target = $region93
    $region92: #{generator_forward.1} parent=1 // pred_region
      %152 = dma.done [#allocation15], 1024
    $region93: #{generator_forward.1} parent=1 // pred_fallthru
      _
    // Predicated region
    $region94: #{generator_forward.1} parent=1 // pred_check
      _
    $region95: #{generator_forward.1} parent=1 // pred_check_branch
      %154 = sbr.rel (0) target = $region97
    $region96: #{generator_forward.1} parent=1 // pred_region
      %155 = dma.done [#allocation18], 49152
    $region97: #{generator_forward.1} parent=1 // pred_fallthru
      _
    // Predicated region
    $region98: #{generator_forward.1} parent=1 // pred_check
      _
    $region99: #{generator_forward.1} parent=1 // pred_check_branch
      %157 = sbr.rel (0) target = $region101
    $region100: #{generator_forward.1} parent=1 // pred_region
      %158 = dma.done [#allocation18], 32
    $region101: #{generator_forward.1} parent=1 // pred_fallthru
      _
    // Predicated region
    $region102: #{generator_forward.1} parent=1 // pred_check
      _
    $region103: #{generator_forward.1} parent=1 // pred_check_branch
      %160 = sbr.rel (0) target = $region105
    $region104: #{generator_forward.1} parent=1 // pred_region
      %161 = dma.done [#allocation21], 8192
    $region105: #{generator_forward.1} parent=1 // pred_fallthru
      _
    %v162 = vld [vmem:[%s0] sm:$0x3]
    %v163 = vld [vmem:[%s1] sm:$0xff]
    %v164 = vld [vmem:[%s1 + $0x8] sm:$0xff]
    %v165 = vld [vmem:[%s1 + $0x10] sm:$0xff]
    %v166 = vld [vmem:[%s1 + $0x18] sm:$0xff]
    %v167 = vld [vmem:[%s1 + $0x20] sm:$0xff]
    %v168 = vld [vmem:[%s1 + $0x28] sm:$0xff]
    %v169 = vld [vmem:[%s1 + $0x30] sm:$0xff]
    %v170 = vld [vmem:[%s1 + $0x38] sm:$0xff]
    %v171 = vld [vmem:[%s1 + $0x40] sm:$0xff]
    %v172 = vld [vmem:[%s1 + $0x48] sm:$0xff]
    %v173 = vld [vmem:[%s1 + $0x50] sm:$0xff]
    %v174 = vld [vmem:[%s1 + $0x58] sm:$0xff]
    %v175 = vld [vmem:[%s1 + $0x60] sm:$0xff]
    %v176 = vld [vmem:[%s1 + $0x68] sm:$0xff]
    %v177 = vld [vmem:[%s1 + $0x70] sm:$0xff]
    %v178 = vld [vmem:[%s1 + $0x78] sm:$0xff]
    %vm179 = vcmask 130048
    %v181 = vsel %vm179, %v162, 0
    %183 = vmatprep.subr.mxu0 %v164
    %184 = vmatpush1.msra.mxu0 %v163
    %185 = vmatprep.subr.mxu0 %v172
    %186 = vmatpush1.msra.mxu0 %v171
    %187 = vmatprep.subr.mxu0 0.0
    %188 = vmatpush1.msra.mxu0 0.0
    %189 = vmatprep.subr.mxu0 0.0
    %190 = vmatpush1.msra.mxu0 0.0
    %191 = vmatprep.subr.mxu0 0.0
    %192 = vmatpush1.msra.mxu0 0.0
    %193 = vmatprep.subr.mxu0 0.0
    %194 = vmatpush1.msra.mxu0 0.0
    %195 = vmatprep.subr.mxu0 0.0
    %196 = vmatpush1.msra.mxu0 0.0
    %197 = vmatprep.subr.mxu0 0.0
    %198 = vmatpush1.msra.mxu0 0.0
    %199 = vmatprep.subr.mxu0 0.0
    %200 = vmatpush1.msra.mxu0 0.0
    %201 = vmatprep.subr.mxu0 0.0
    %202 = vmatpush1.msra.mxu0 0.0
    %203 = vmatprep.subr.mxu0 0.0
    %204 = vmatpush1.msra.mxu0 0.0
    %205 = vmatprep.subr.mxu0 0.0
    %206 = vmatpush1.msra.mxu0 0.0
    %207 = vmatprep.subr.mxu0 0.0
    %208 = vmatpush1.msra.mxu0 0.0
    %209 = vmatprep.subr.mxu0 0.0
    %210 = vmatpush1.msra.mxu0 0.0
    %211 = vmatprep.subr.mxu0 0.0
    %212 = vmatpush1.msra.mxu0 0.0
    %213 = vmatprep.subr.mxu0 0.0
    %214 = vmatpush1.msra.mxu0 0.0
    %215 = vmatprep.subr.mxu0 0.0
    %216 = vmatpush1.msra.mxu0 0.0
    %217 = vmatprep.subr.mxu0 0.0
    %218 = vmatpush1.msra.mxu0 0.0
    %219 = vmatprep.subr.mxu0 0.0
    %220 = vmatpush1.msra.mxu0 0.0
    %221 = vmatprep.subr.mxu0 0.0
    %222 = vmatpush1.msra.mxu0 0.0
    %223 = vmatprep.subr.mxu0 0.0
    %224 = vmatpush1.msra.mxu0 0.0
    %225 = vmatprep.subr.mxu0 0.0
    %226 = vmatpush1.msra.mxu0 0.0
    %227 = vmatprep.subr.mxu0 0.0
    %228 = vmatpush1.msra.mxu0 0.0
    %229 = vmatprep.subr.mxu0 0.0
    %230 = vmatpush1.msra.mxu0 0.0
    %231 = vmatprep.subr.mxu0 0.0
    %232 = vmatpush1.msra.mxu0 0.0
    %233 = vmatprep.subr.mxu0 0.0
    %234 = vmatpush1.msra.mxu0 0.0
    %235 = vmatprep.subr.mxu0 0.0
    %236 = vmatpush1.msra.mxu0 0.0
    %237 = vmatprep.subr.mxu0 0.0
    %238 = vmatpush1.msra.mxu0 0.0
    %239 = vmatprep.subr.mxu0 0.0
    %240 = vmatpush1.msra.mxu0 0.0
    %241 = vmatprep.subr.mxu0 0.0
    %242 = vmatpush1.msra.mxu0 0.0
    %243 = vmatprep.subr.mxu0 0.0
    %244 = vmatpush1.msra.mxu0 0.0
    %245 = vmatprep.subr.mxu0 0.0
    %246 = vmatpush1.msra.mxu0 0.0
    %247 = vmatprep.mubr.f32.mxu0 0.0
    %248 = vmatmul.mubr.f32.gmra.mrb[0].mxu0 %v181
    %v249 = vpop.f32.mrb[0].mxu0
    %v250 = vadd.f32 0.0, %v249
    %v251 = vpop.f32.mrb[0].mxu0
    %v252 = vadd.f32 0.0, %v251
    %253 = vdwg.mxu0
    %254 = vmatprep.subr.mxu0 %v166
    %255 = vmatpush1.msra.mxu0 %v165
    %256 = vmatprep.subr.mxu0 %v174
    %257 = vmatpush1.msra.mxu0 %v173
    %258 = vmatprep.subr.mxu0 0.0
    %259 = vmatpush1.msra.mxu0 0.0
    %260 = vmatprep.subr.mxu0 0.0
    %261 = vmatpush1.msra.mxu0 0.0
    %262 = vmatprep.subr.mxu0 0.0
    %263 = vmatpush1.msra.mxu0 0.0
    %264 = vmatprep.subr.mxu0 0.0
    %265 = vmatpush1.msra.mxu0 0.0
    %266 = vmatprep.subr.mxu0 0.0
    %267 = vmatpush1.msra.mxu0 0.0
    %268 = vmatprep.subr.mxu0 0.0
    %269 = vmatpush1.msra.mxu0 0.0
    %270 = vmatprep.subr.mxu0 0.0
    %271 = vmatpush1.msra.mxu0 0.0
    %272 = vmatprep.subr.mxu0 0.0
    %273 = vmatpush1.msra.mxu0 0.0
    %274 = vmatprep.subr.mxu0 0.0
    %275 = vmatpush1.msra.mxu0 0.0
    %276 = vmatprep.subr.mxu0 0.0
    %277 = vmatpush1.msra.mxu0 0.0
    %278 = vmatprep.subr.mxu0 0.0
    %279 = vmatpush1.msra.mxu0 0.0
    %280 = vmatprep.subr.mxu0 0.0
    %281 = vmatpush1.msra.mxu0 0.0
    %282 = vmatprep.subr.mxu0 0.0
    %283 = vmatpush1.msra.mxu0 0.0
    %284 = vmatprep.subr.mxu0 0.0
    %285 = vmatpush1.msra.mxu0 0.0
    %286 = vmatprep.subr.mxu0 0.0
    %287 = vmatpush1.msra.mxu0 0.0
    %288 = vmatprep.subr.mxu0 0.0
    %289 = vmatpush1.msra.mxu0 0.0
    %290 = vmatprep.subr.mxu0 0.0
    %291 = vmatpush1.msra.mxu0 0.0
    %292 = vmatprep.subr.mxu0 0.0
    %293 = vmatpush1.msra.mxu0 0.0
    %294 = vmatprep.subr.mxu0 0.0
    %295 = vmatpush1.msra.mxu0 0.0
    %296 = vmatprep.subr.mxu0 0.0
    %297 = vmatpush1.msra.mxu0 0.0
    %298 = vmatprep.subr.mxu0 0.0
    %299 = vmatpush1.msra.mxu0 0.0
    %300 = vmatprep.subr.mxu0 0.0
    %301 = vmatpush1.msra.mxu0 0.0
    %302 = vmatprep.subr.mxu0 0.0
    %303 = vmatpush1.msra.mxu0 0.0
    %304 = vmatprep.subr.mxu0 0.0
    %305 = vmatpush1.msra.mxu0 0.0
    %306 = vmatprep.subr.mxu0 0.0
    %307 = vmatpush1.msra.mxu0 0.0
    %308 = vmatprep.subr.mxu0 0.0
    %309 = vmatpush1.msra.mxu0 0.0
    %310 = vmatprep.subr.mxu0 0.0
    %311 = vmatpush1.msra.mxu0 0.0
    %312 = vmatprep.subr.mxu0 0.0
    %313 = vmatpush1.msra.mxu0 0.0
    %314 = vmatprep.subr.mxu0 0.0
    %315 = vmatpush1.msra.mxu0 0.0
    %316 = vmatprep.subr.mxu0 0.0
    %317 = vmatpush1.msra.mxu0 0.0
    %318 = vmatprep.mubr.f32.mxu0 0.0
    %319 = vmatmul.mubr.f32.gmra.mrb[0].mxu0 %v181
    %v320 = vpop.f32.mrb[0].mxu0
    %v321 = vadd.f32 0.0, %v320
    %v322 = vpop.f32.mrb[0].mxu0
    %v323 = vadd.f32 0.0, %v322
    %324 = vdwg.mxu0
    %325 = vmatprep.subr.mxu0 %v168
    %326 = vmatpush1.msra.mxu0 %v167
    %327 = vmatprep.subr.mxu0 %v176
    %328 = vmatpush1.msra.mxu0 %v175
    %329 = vmatprep.subr.mxu0 0.0
    %330 = vmatpush1.msra.mxu0 0.0
    %331 = vmatprep.subr.mxu0 0.0
    %332 = vmatpush1.msra.mxu0 0.0
    %333 = vmatprep.subr.mxu0 0.0
    %334 = vmatpush1.msra.mxu0 0.0
    %335 = vmatprep.subr.mxu0 0.0
    %336 = vmatpush1.msra.mxu0 0.0
    %337 = vmatprep.subr.mxu0 0.0
    %338 = vmatpush1.msra.mxu0 0.0
    %339 = vmatprep.subr.mxu0 0.0
    %340 = vmatpush1.msra.mxu0 0.0
    %341 = vmatprep.subr.mxu0 0.0
    %342 = vmatpush1.msra.mxu0 0.0
    %343 = vmatprep.subr.mxu0 0.0
    %344 = vmatpush1.msra.mxu0 0.0
    %345 = vmatprep.subr.mxu0 0.0
    %346 = vmatpush1.msra.mxu0 0.0
    %347 = vmatprep.subr.mxu0 0.0
    %348 = vmatpush1.msra.mxu0 0.0
    %349 = vmatprep.subr.mxu0 0.0
    %350 = vmatpush1.msra.mxu0 0.0
    %351 = vmatprep.subr.mxu0 0.0
    %352 = vmatpush1.msra.mxu0 0.0
    %353 = vmatprep.subr.mxu0 0.0
    %354 = vmatpush1.msra.mxu0 0.0
    %355 = vmatprep.subr.mxu0 0.0
    %356 = vmatpush1.msra.mxu0 0.0
    %357 = vmatprep.subr.mxu0 0.0
    %358 = vmatpush1.msra.mxu0 0.0
    %359 = vmatprep.subr.mxu0 0.0
    %360 = vmatpush1.msra.mxu0 0.0
    %361 = vmatprep.subr.mxu0 0.0
    %362 = vmatpush1.msra.mxu0 0.0
    %363 = vmatprep.subr.mxu0 0.0
    %364 = vmatpush1.msra.mxu0 0.0
    %365 = vmatprep.subr.mxu0 0.0
    %366 = vmatpush1.msra.mxu0 0.0
    %367 = vmatprep.subr.mxu0 0.0
    %368 = vmatpush1.msra.mxu0 0.0
    %369 = vmatprep.subr.mxu0 0.0
    %370 = vmatpush1.msra.mxu0 0.0
    %371 = vmatprep.subr.mxu0 0.0
    %372 = vmatpush1.msra.mxu0 0.0
    %373 = vmatprep.subr.mxu0 0.0
    %374 = vmatpush1.msra.mxu0 0.0
    %375 = vmatprep.subr.mxu0 0.0
    %376 = vmatpush1.msra.mxu0 0.0
    %377 = vmatprep.subr.mxu0 0.0
    %378 = vmatpush1.msra.mxu0 0.0
    %379 = vmatprep.subr.mxu0 0.0
    %380 = vmatpush1.msra.mxu0 0.0
    %381 = vmatprep.subr.mxu0 0.0
    %382 = vmatpush1.msra.mxu0 0.0
    %383 = vmatprep.subr.mxu0 0.0
    %384 = vmatpush1.msra.mxu0 0.0
    %385 = vmatprep.subr.mxu0 0.0
    %386 = vmatpush1.msra.mxu0 0.0
    %387 = vmatprep.subr.mxu0 0.0
    %388 = vmatpush1.msra.mxu0 0.0
    %389 = vmatprep.mubr.f32.mxu0 0.0
    %390 = vmatmul.mubr.f32.gmra.mrb[0].mxu0 %v181
    %v391 = vpop.f32.mrb[0].mxu0
    %v392 = vadd.f32 0.0, %v391
    %v393 = vpop.f32.mrb[0].mxu0
    %v394 = vadd.f32 0.0, %v393
    %395 = vdwg.mxu0
    %396 = vmatprep.subr.mxu0 %v170
    %397 = vmatpush1.msra.mxu0 %v169
    %398 = vmatprep.subr.mxu0 %v178
    %399 = vmatpush1.msra.mxu0 %v177
    %400 = vmatprep.subr.mxu0 0.0
    %401 = vmatpush1.msra.mxu0 0.0
    %402 = vmatprep.subr.mxu0 0.0
    %403 = vmatpush1.msra.mxu0 0.0
    %404 = vmatprep.subr.mxu0 0.0
    %405 = vmatpush1.msra.mxu0 0.0
    %406 = vmatprep.subr.mxu0 0.0
    %407 = vmatpush1.msra.mxu0 0.0
    %408 = vmatprep.subr.mxu0 0.0
    %409 = vmatpush1.msra.mxu0 0.0
    %410 = vmatprep.subr.mxu0 0.0
    %411 = vmatpush1.msra.mxu0 0.0
    %412 = vmatprep.subr.mxu0 0.0
    %413 = vmatpush1.msra.mxu0 0.0
    %414 = vmatprep.subr.mxu0 0.0
    %415 = vmatpush1.msra.mxu0 0.0
    %416 = vmatprep.subr.mxu0 0.0
    %417 = vmatpush1.msra.mxu0 0.0
    %418 = vmatprep.subr.mxu0 0.0
    %419 = vmatpush1.msra.mxu0 0.0
    %420 = vmatprep.subr.mxu0 0.0
    %421 = vmatpush1.msra.mxu0 0.0
    %422 = vmatprep.subr.mxu0 0.0
    %423 = vmatpush1.msra.mxu0 0.0
    %424 = vmatprep.subr.mxu0 0.0
    %425 = vmatpush1.msra.mxu0 0.0
    %426 = vmatprep.subr.mxu0 0.0
    %427 = vmatpush1.msra.mxu0 0.0
    %428 = vmatprep.subr.mxu0 0.0
    %429 = vmatpush1.msra.mxu0 0.0
    %430 = vmatprep.subr.mxu0 0.0
    %431 = vmatpush1.msra.mxu0 0.0
    %432 = vmatprep.subr.mxu0 0.0
    %433 = vmatpush1.msra.mxu0 0.0
    %434 = vmatprep.subr.mxu0 0.0
    %435 = vmatpush1.msra.mxu0 0.0
    %436 = vmatprep.subr.mxu0 0.0
    %437 = vmatpush1.msra.mxu0 0.0
    %438 = vmatprep.subr.mxu0 0.0
    %439 = vmatpush1.msra.mxu0 0.0
    %440 = vmatprep.subr.mxu0 0.0
    %441 = vmatpush1.msra.mxu0 0.0
    %442 = vmatprep.subr.mxu0 0.0
    %443 = vmatpush1.msra.mxu0 0.0
    %444 = vmatprep.subr.mxu0 0.0
    %445 = vmatpush1.msra.mxu0 0.0
    %446 = vmatprep.subr.mxu0 0.0
    %447 = vmatpush1.msra.mxu0 0.0
    %448 = vmatprep.subr.mxu0 0.0
    %449 = vmatpush1.msra.mxu0 0.0
    %450 = vmatprep.subr.mxu0 0.0
    %451 = vmatpush1.msra.mxu0 0.0
    %452 = vmatprep.subr.mxu0 0.0
    %453 = vmatpush1.msra.mxu0 0.0
    %454 = vmatprep.subr.mxu0 0.0
    %455 = vmatpush1.msra.mxu0 0.0
    %456 = vmatprep.subr.mxu0 0.0
    %457 = vmatpush1.msra.mxu0 0.0
    %458 = vmatprep.subr.mxu0 0.0
    %459 = vmatpush1.msra.mxu0 0.0
    %460 = vmatprep.mubr.f32.mxu0 0.0
    %461 = vmatmul.mubr.f32.gmra.mrb[0].mxu0 %v181
    %v462 = vpop.f32.mrb[0].mxu0
    %v463 = vadd.f32 0.0, %v462
    %v464 = vpop.f32.mrb[0].mxu0
    %v465 = vadd.f32 0.0, %v464
    %466 = vdwg.mxu0
    %vm467 = vcmask 1041408
    %v468 = vsel %vm467, %v250, 0.0
    %v469 = vrot.slane %v468, 4
    %v470 = vadd.f32 %v468, %v469
    %v471 = vrot.slane %v470, 2
    %v472 = vadd.f32 %v470, %v471
    %v473 = vrot.slane %v472, 1
    %v474 = vadd.f32 %v472, %v473
    %v475 = vsel %vm467, %v252, 0.0
    %v476 = vrot.slane %v475, 4
    %v477 = vadd.f32 %v475, %v476
    %v478 = vrot.slane %v477, 2
    %v479 = vadd.f32 %v477, %v478
    %v480 = vrot.slane %v479, 1
    %v481 = vadd.f32 %v479, %v480
    %v482 = vsel %vm467, %v321, 0.0
    %v483 = vrot.slane %v482, 4
    %v484 = vadd.f32 %v482, %v483
    %v485 = vrot.slane %v484, 2
    %v486 = vadd.f32 %v484, %v485
    %v487 = vrot.slane %v486, 1
    %v488 = vadd.f32 %v486, %v487
    %v489 = vsel %vm467, %v323, 0.0
    %v490 = vrot.slane %v489, 4
    %v491 = vadd.f32 %v489, %v490
    %v492 = vrot.slane %v491, 2
    %v493 = vadd.f32 %v491, %v492
    %v494 = vrot.slane %v493, 1
    %v495 = vadd.f32 %v493, %v494
    %v496 = vsel %vm467, %v392, 0.0
    %v497 = vrot.slane %v496, 4
    %v498 = vadd.f32 %v496, %v497
    %v499 = vrot.slane %v498, 2
    %v500 = vadd.f32 %v498, %v499
    %v501 = vrot.slane %v500, 1
    %v502 = vadd.f32 %v500, %v501
    %v503 = vsel %vm467, %v394, 0.0
    %v504 = vrot.slane %v503, 4
    %v505 = vadd.f32 %v503, %v504
    %v506 = vrot.slane %v505, 2
    %v507 = vadd.f32 %v505, %v506
    %v508 = vrot.slane %v507, 1
    %v509 = vadd.f32 %v507, %v508
    %v510 = vsel %vm467, %v463, 0.0
    %v511 = vrot.slane %v510, 4
    %v512 = vadd.f32 %v510, %v511
    %v513 = vrot.slane %v512, 2
    %v514 = vadd.f32 %v512, %v513
    %v515 = vrot.slane %v514, 1
    %v516 = vadd.f32 %v514, %v515
    %v517 = vsel %vm467, %v465, 0.0
    %v518 = vrot.slane %v517, 4
    %v519 = vadd.f32 %v517, %v518
    %v520 = vrot.slane %v519, 2
    %v521 = vadd.f32 %v519, %v520
    %v522 = vrot.slane %v521, 1
    %v523 = vadd.f32 %v521, %v522
    %v524 = vmul.f32 %v250, %v250
    %v525 = vmul.f32 %v252, %v252
    %v526 = vmul.f32 %v321, %v321
    %v527 = vmul.f32 %v323, %v323
    %v528 = vmul.f32 %v392, %v392
    %v529 = vmul.f32 %v394, %v394
    %v530 = vmul.f32 %v463, %v463
    %v531 = vmul.f32 %v465, %v465
    %v532 = vsel %vm467, %v524, 0.0
    %v533 = vrot.slane %v532, 4
    %v534 = vadd.f32 %v532, %v533
    %v535 = vrot.slane %v534, 2
    %v536 = vadd.f32 %v534, %v535
    %v537 = vrot.slane %v536, 1
    %v538 = vadd.f32 %v536, %v537
    %v539 = vsel %vm467, %v525, 0.0
    %v540 = vrot.slane %v539, 4
    %v541 = vadd.f32 %v539, %v540
    %v542 = vrot.slane %v541, 2
    %v543 = vadd.f32 %v541, %v542
    %v544 = vrot.slane %v543, 1
    %v545 = vadd.f32 %v543, %v544
    %v546 = vsel %vm467, %v526, 0.0
    %v547 = vrot.slane %v546, 4
    %v548 = vadd.f32 %v546, %v547
    %v549 = vrot.slane %v548, 2
    %v550 = vadd.f32 %v548, %v549
    %v551 = vrot.slane %v550, 1
    %v552 = vadd.f32 %v550, %v551
    %v553 = vsel %vm467, %v527, 0.0
    %v554 = vrot.slane %v553, 4
    %v555 = vadd.f32 %v553, %v554
    %v556 = vrot.slane %v555, 2
    %v557 = vadd.f32 %v555, %v556
    %v558 = vrot.slane %v557, 1
    %v559 = vadd.f32 %v557, %v558
    %v560 = vsel %vm467, %v528, 0.0
    %v561 = vrot.slane %v560, 4
    %v562 = vadd.f32 %v560, %v561
    %v563 = vrot.slane %v562, 2
    %v564 = vadd.f32 %v562, %v563
    %v565 = vrot.slane %v564, 1
    %v566 = vadd.f32 %v564, %v565
    %v567 = vsel %vm467, %v529, 0.0
    %v568 = vrot.slane %v567, 4
    %v569 = vadd.f32 %v567, %v568
    %v570 = vrot.slane %v569, 2
    %v571 = vadd.f32 %v569, %v570
    %v572 = vrot.slane %v571, 1
    %v573 = vadd.f32 %v571, %v572
    %v574 = vsel %vm467, %v530, 0.0
    %v575 = vrot.slane %v574, 4
    %v576 = vadd.f32 %v574, %v575
    %v577 = vrot.slane %v576, 2
    %v578 = vadd.f32 %v576, %v577
    %v579 = vrot.slane %v578, 1
    %v580 = vadd.f32 %v578, %v579
    %v581 = vsel %vm467, %v531, 0.0
    %v582 = vrot.slane %v581, 4
    %v583 = vadd.f32 %v581, %v582
    %v584 = vrot.slane %v583, 2
    %v585 = vadd.f32 %v583, %v584
    %v586 = vrot.slane %v585, 1
    %v587 = vadd.f32 %v585, %v586
    %v588 = vlaneseq
    %v589 = vshrl.u32 %v588, 7
    %vm590 = vcmp.eq.s32.totalorder %v589, 0
    %v591 = vsel %vm590, %v474, %v538
    %v592 = vsel %vm590, %v481, %v545
    %v593 = vsel %vm590, %v488, %v552
    %v594 = vsel %vm590, %v495, %v559
    %v595 = vsel %vm590, %v502, %v566
    %v596 = vsel %vm590, %v509, %v573
    %v597 = vsel %vm590, %v516, %v580
    %v598 = vsel %vm590, %v523, %v587
    %v599 = vld [vmem:[%s3] sm:$0xff]
    %v600 = vld [vmem:[%s3 + $0x8] sm:$0xff]
    %v601 = vld [vmem:[%s3 + $0x10] sm:$0xff]
    %v602 = vld [vmem:[%s3 + $0x18] sm:$0xff]
    %v603 = vld [vmem:[%s3 + $0x20] sm:$0xff]
    %v604 = vld [vmem:[%s3 + $0x28] sm:$0xff]
    %v605 = vld [vmem:[%s3 + $0x30] sm:$0xff]
    %v606 = vld [vmem:[%s3 + $0x38] sm:$0xff]
    %v607 = vld [vmem:[%s3 + $0x40] sm:$0xff]
    %v608 = vld [vmem:[%s3 + $0x48] sm:$0xff]
    %v609 = vld [vmem:[%s3 + $0x50] sm:$0xff]
    %v610 = vld [vmem:[%s3 + $0x58] sm:$0xff]
    %v611 = vld [vmem:[%s3 + $0x60] sm:$0xff]
    %v612 = vld [vmem:[%s3 + $0x68] sm:$0xff]
    %v613 = vld [vmem:[%s3 + $0x70] sm:$0xff]
    %v614 = vld [vmem:[%s3 + $0x78] sm:$0xff]
    %v615 = vld [vmem:[%s3 + $0x80] sm:$0xff]
    %v616 = vld [vmem:[%s3 + $0x88] sm:$0xff]
    %v617 = vld [vmem:[%s3 + $0x90] sm:$0xff]
    %v618 = vld [vmem:[%s3 + $0x98] sm:$0xff]
    %v619 = vld [vmem:[%s3 + $0xa0] sm:$0xff]
    %v620 = vld [vmem:[%s3 + $0xa8] sm:$0xff]
    %v621 = vld [vmem:[%s3 + $0xb0] sm:$0xff]
    %v622 = vld [vmem:[%s3 + $0xb8] sm:$0xff]
    %v623 = vld [vmem:[%s3 + $0xc0] sm:$0xff]
    %v624 = vld [vmem:[%s3 + $0xc8] sm:$0xff]
    %v625 = vld [vmem:[%s3 + $0xd0] sm:$0xff]
    %v626 = vld [vmem:[%s3 + $0xd8] sm:$0xff]
    %v627 = vld [vmem:[%s3 + $0xe0] sm:$0xff]
    %v628 = vld [vmem:[%s3 + $0xe8] sm:$0xff]
    %v629 = vld [vmem:[%s3 + $0xf0] sm:$0xff]
    %v630 = vld [vmem:[%s3 + $0xf8] sm:$0xff]
    %v631 = vld [vmem:[%s3 + $0x100] sm:$0xff]
    %v632 = vld [vmem:[%s3 + $0x108] sm:$0xff]
    %v633 = vld [vmem:[%s3 + $0x110] sm:$0xff]
    %v634 = vld [vmem:[%s3 + $0x118] sm:$0xff]
    %v635 = vld [vmem:[%s3 + $0x120] sm:$0xff]
    %v636 = vld [vmem:[%s3 + $0x128] sm:$0xff]
    %v637 = vld [vmem:[%s3 + $0x130] sm:$0xff]
    %v638 = vld [vmem:[%s3 + $0x138] sm:$0xff]
    %v639 = vld [vmem:[%s3 + $0x140] sm:$0xff]
    %v640 = vld [vmem:[%s3 + $0x148] sm:$0xff]
    %v641 = vld [vmem:[%s3 + $0x150] sm:$0xff]
    %v642 = vld [vmem:[%s3 + $0x158] sm:$0xff]
    %v643 = vld [vmem:[%s3 + $0x160] sm:$0xff]
    %v644 = vld [vmem:[%s3 + $0x168] sm:$0xff]
    %v645 = vld [vmem:[%s3 + $0x170] sm:$0xff]
    %v646 = vld [vmem:[%s3 + $0x178] sm:$0xff]
    %v647 = vld [vmem:[%s3 + $0x180] sm:$0xff]
    %v648 = vld [vmem:[%s3 + $0x188] sm:$0xff]
    %v649 = vld [vmem:[%s3 + $0x190] sm:$0xff]
    %v650 = vld [vmem:[%s3 + $0x198] sm:$0xff]
    %v651 = vld [vmem:[%s3 + $0x1a0] sm:$0xff]
    %v652 = vld [vmem:[%s3 + $0x1a8] sm:$0xff]
    %v653 = vld [vmem:[%s3 + $0x1b0] sm:$0xff]
    %v654 = vld [vmem:[%s3 + $0x1b8] sm:$0xff]
    %v655 = vld [vmem:[%s3 + $0x1c0] sm:$0xff]
    %v656 = vld [vmem:[%s3 + $0x1c8] sm:$0xff]
    %v657 = vld [vmem:[%s3 + $0x1d0] sm:$0xff]
    %v658 = vld [vmem:[%s3 + $0x1d8] sm:$0xff]
    %v659 = vld [vmem:[%s3 + $0x1e0] sm:$0xff]
    %v660 = vld [vmem:[%s3 + $0x1e8] sm:$0xff]
    %v661 = vld [vmem:[%s3 + $0x1f0] sm:$0xff]
    %v662 = vld [vmem:[%s3 + $0x1f8] sm:$0xff]
    %v663 = vld [vmem:[%s3 + $0x200] sm:$0xff]
    %v664 = vld [vmem:[%s3 + $0x208] sm:$0xff]
    %v665 = vld [vmem:[%s3 + $0x210] sm:$0xff]
    %v666 = vld [vmem:[%s3 + $0x218] sm:$0xff]
    %v667 = vld [vmem:[%s3 + $0x220] sm:$0xff]
    %v668 = vld [vmem:[%s3 + $0x228] sm:$0xff]
    %v669 = vld [vmem:[%s3 + $0x230] sm:$0xff]
    %v670 = vld [vmem:[%s3 + $0x238] sm:$0xff]
    %v671 = vld [vmem:[%s3 + $0x240] sm:$0xff]
    %v672 = vld [vmem:[%s3 + $0x248] sm:$0xff]
    %v673 = vld [vmem:[%s3 + $0x250] sm:$0xff]
    %v674 = vld [vmem:[%s3 + $0x258] sm:$0xff]
    %v675 = vld [vmem:[%s3 + $0x260] sm:$0xff]
    %v676 = vld [vmem:[%s3 + $0x268] sm:$0xff]
    %v677 = vld [vmem:[%s3 + $0x270] sm:$0xff]
    %v678 = vld [vmem:[%s3 + $0x278] sm:$0xff]
    %v679 = vld [vmem:[%s3 + $0x280] sm:$0xff]
    %v680 = vld [vmem:[%s3 + $0x288] sm:$0xff]
    %v681 = vld [vmem:[%s3 + $0x290] sm:$0xff]
    %v682 = vld [vmem:[%s3 + $0x298] sm:$0xff]
    %v683 = vld [vmem:[%s3 + $0x2a0] sm:$0xff]
    %v684 = vld [vmem:[%s3 + $0x2a8] sm:$0xff]
    %v685 = vld [vmem:[%s3 + $0x2b0] sm:$0xff]
    %v686 = vld [vmem:[%s3 + $0x2b8] sm:$0xff]
    %v687 = vld [vmem:[%s3 + $0x2c0] sm:$0xff]
    %v688 = vld [vmem:[%s3 + $0x2c8] sm:$0xff]
    %v689 = vld [vmem:[%s3 + $0x2d0] sm:$0xff]
    %v690 = vld [vmem:[%s3 + $0x2d8] sm:$0xff]
    %v691 = vld [vmem:[%s3 + $0x2e0] sm:$0xff]
    %v692 = vld [vmem:[%s3 + $0x2e8] sm:$0xff]
    %v693 = vld [vmem:[%s3 + $0x2f0] sm:$0xff]
    %v694 = vld [vmem:[%s3 + $0x2f8] sm:$0xff]
    %v695 = vld [vmem:[%s3 + $0x300] sm:$0xff]
    %v696 = vld [vmem:[%s3 + $0x308] sm:$0xff]
    %v697 = vld [vmem:[%s3 + $0x310] sm:$0xff]
    %v698 = vld [vmem:[%s3 + $0x318] sm:$0xff]
    %v699 = vld [vmem:[%s3 + $0x320] sm:$0xff]
    %v700 = vld [vmem:[%s3 + $0x328] sm:$0xff]
    %v701 = vld [vmem:[%s3 + $0x330] sm:$0xff]
    %v702 = vld [vmem:[%s3 + $0x338] sm:$0xff]
    %v703 = vld [vmem:[%s3 + $0x340] sm:$0xff]
    %v704 = vld [vmem:[%s3 + $0x348] sm:$0xff]
    %v705 = vld [vmem:[%s3 + $0x350] sm:$0xff]
    %v706 = vld [vmem:[%s3 + $0x358] sm:$0xff]
    %v707 = vld [vmem:[%s3 + $0x360] sm:$0xff]
    %v708 = vld [vmem:[%s3 + $0x368] sm:$0xff]
    %v709 = vld [vmem:[%s3 + $0x370] sm:$0xff]
    %v710 = vld [vmem:[%s3 + $0x378] sm:$0xff]
    %v711 = vld [vmem:[%s3 + $0x380] sm:$0xff]
    %v712 = vld [vmem:[%s3 + $0x388] sm:$0xff]
    %v713 = vld [vmem:[%s3 + $0x390] sm:$0xff]
    %v714 = vld [vmem:[%s3 + $0x398] sm:$0xff]
    %v715 = vld [vmem:[%s3 + $0x3a0] sm:$0xff]
    %v716 = vld [vmem:[%s3 + $0x3a8] sm:$0xff]
    %v717 = vld [vmem:[%s3 + $0x3b0] sm:$0xff]
    %v718 = vld [vmem:[%s3 + $0x3b8] sm:$0xff]
    %v719 = vld [vmem:[%s3 + $0x3c0] sm:$0xff]
    %v720 = vld [vmem:[%s3 + $0x3c8] sm:$0xff]
    %v721 = vld [vmem:[%s3 + $0x3d0] sm:$0xff]
    %v722 = vld [vmem:[%s3 + $0x3d8] sm:$0xff]
    %v723 = vld [vmem:[%s3 + $0x3e0] sm:$0xff]
    %v724 = vld [vmem:[%s3 + $0x3e8] sm:$0xff]
    %v725 = vld [vmem:[%s3 + $0x3f0] sm:$0xff]
    %v726 = vld [vmem:[%s3 + $0x3f8] sm:$0xff]
    %727 = vmatprep.subr.mxu0 0.0
    %728 = vmatpush1.msra.mxu0 %v599
    %729 = vmatprep.subr.mxu0 0.0
    %730 = vmatpush1.msra.mxu0 %v600
    %731 = vmatprep.subr.mxu0 0.0
    %732 = vmatpush1.msra.mxu0 %v601
    %733 = vmatprep.subr.mxu0 0.0
    %734 = vmatpush1.msra.mxu0 %v602
    %735 = vmatprep.subr.mxu0 0.0
    %736 = vmatpush1.msra.mxu0 %v603
    %737 = vmatprep.subr.mxu0 0.0
    %738 = vmatpush1.msra.mxu0 %v604
    %739 = vmatprep.subr.mxu0 0.0
    %740 = vmatpush1.msra.mxu0 %v605
    %741 = vmatprep.subr.mxu0 0.0
    %742 = vmatpush1.msra.mxu0 %v606
    %743 = vmatprep.subr.mxu0 0.0
    %744 = vmatpush1.msra.mxu0 %v607
    %745 = vmatprep.subr.mxu0 0.0
    %746 = vmatpush1.msra.mxu0 %v608
    %747 = vmatprep.subr.mxu0 0.0
    %748 = vmatpush1.msra.mxu0 %v609
    %749 = vmatprep.subr.mxu0 0.0
    %750 = vmatpush1.msra.mxu0 %v610
    %751 = vmatprep.subr.mxu0 0.0
    %752 = vmatpush1.msra.mxu0 %v611
    %753 = vmatprep.subr.mxu0 0.0
    %754 = vmatpush1.msra.mxu0 %v612
    %755 = vmatprep.subr.mxu0 0.0
    %756 = vmatpush1.msra.mxu0 %v613
    %757 = vmatprep.subr.mxu0 0.0
    %758 = vmatpush1.msra.mxu0 %v614
    %759 = vmatprep.subr.mxu0 0.0
    %760 = vmatpush1.msra.mxu0 %v615
    %761 = vmatprep.subr.mxu0 0.0
    %762 = vmatpush1.msra.mxu0 %v616
    %763 = vmatprep.subr.mxu0 0.0
    %764 = vmatpush1.msra.mxu0 %v617
    %765 = vmatprep.subr.mxu0 0.0
    %766 = vmatpush1.msra.mxu0 %v618
    %767 = vmatprep.subr.mxu0 0.0
    %768 = vmatpush1.msra.mxu0 %v619
    %769 = vmatprep.subr.mxu0 0.0
    %770 = vmatpush1.msra.mxu0 %v620
    %771 = vmatprep.subr.mxu0 0.0
    %772 = vmatpush1.msra.mxu0 %v621
    %773 = vmatprep.subr.mxu0 0.0
    %774 = vmatpush1.msra.mxu0 %v622
    %775 = vmatprep.subr.mxu0 0.0
    %776 = vmatpush1.msra.mxu0 %v623
    %777 = vmatprep.subr.mxu0 0.0
    %778 = vmatpush1.msra.mxu0 %v624
    %779 = vmatprep.subr.mxu0 0.0
    %780 = vmatpush1.msra.mxu0 %v625
    %781 = vmatprep.subr.mxu0 0.0
    %782 = vmatpush1.msra.mxu0 %v626
    %783 = vmatprep.subr.mxu0 0.0
    %784 = vmatpush1.msra.mxu0 %v627
    %785 = vmatprep.subr.mxu0 0.0
    %786 = vmatpush1.msra.mxu0 %v628
    %787 = vmatprep.subr.mxu0 0.0
    %788 = vmatpush1.msra.mxu0 %v629
    %789 = vmatprep.subr.mxu0 0.0
    %790 = vmatpush1.msra.mxu0 %v630
    %791 = vmatprep.mubr.f32.mxu0 %v592
    %792 = vmatmul.mubr.f32.gmra.mrb[0].mxu0 %v591
    %v793 = vpop.f32.mrb[0].mxu0
    %v794 = vadd.f32 0.0, %v793
    %v795 = vpop.f32.mrb[0].mxu0
    %796 = vdwg.mxu0
    %797 = vmatprep.subr.mxu0 0.0
    %798 = vmatpush1.msra.mxu0 %v631
    %799 = vmatprep.subr.mxu0 0.0
    %800 = vmatpush1.msra.mxu0 %v632
    %801 = vmatprep.subr.mxu0 0.0
    %802 = vmatpush1.msra.mxu0 %v633
    %803 = vmatprep.subr.mxu0 0.0
    %804 = vmatpush1.msra.mxu0 %v634
    %805 = vmatprep.subr.mxu0 0.0
    %806 = vmatpush1.msra.mxu0 %v635
    %807 = vmatprep.subr.mxu0 0.0
    %808 = vmatpush1.msra.mxu0 %v636
    %809 = vmatprep.subr.mxu0 0.0
    %810 = vmatpush1.msra.mxu0 %v637
    %811 = vmatprep.subr.mxu0 0.0
    %812 = vmatpush1.msra.mxu0 %v638
    %813 = vmatprep.subr.mxu0 0.0
    %814 = vmatpush1.msra.mxu0 %v639
    %815 = vmatprep.subr.mxu0 0.0
    %816 = vmatpush1.msra.mxu0 %v640
    %817 = vmatprep.subr.mxu0 0.0
    %818 = vmatpush1.msra.mxu0 %v641
    %819 = vmatprep.subr.mxu0 0.0
    %820 = vmatpush1.msra.mxu0 %v642
    %821 = vmatprep.subr.mxu0 0.0
    %822 = vmatpush1.msra.mxu0 %v643
    %823 = vmatprep.subr.mxu0 0.0
    %824 = vmatpush1.msra.mxu0 %v644
    %825 = vmatprep.subr.mxu0 0.0
    %826 = vmatpush1.msra.mxu0 %v645
    %827 = vmatprep.subr.mxu0 0.0
    %828 = vmatpush1.msra.mxu0 %v646
    %829 = vmatprep.subr.mxu0 0.0
    %830 = vmatpush1.msra.mxu0 %v647
    %831 = vmatprep.subr.mxu0 0.0
    %832 = vmatpush1.msra.mxu0 %v648
    %833 = vmatprep.subr.mxu0 0.0
    %834 = vmatpush1.msra.mxu0 %v649
    %835 = vmatprep.subr.mxu0 0.0
    %836 = vmatpush1.msra.mxu0 %v650
    %837 = vmatprep.subr.mxu0 0.0
    %838 = vmatpush1.msra.mxu0 %v651
    %839 = vmatprep.subr.mxu0 0.0
    %840 = vmatpush1.msra.mxu0 %v652
    %841 = vmatprep.subr.mxu0 0.0
    %842 = vmatpush1.msra.mxu0 %v653
    %843 = vmatprep.subr.mxu0 0.0
    %844 = vmatpush1.msra.mxu0 %v654
    %845 = vmatprep.subr.mxu0 0.0
    %846 = vmatpush1.msra.mxu0 %v655
    %847 = vmatprep.subr.mxu0 0.0
    %848 = vmatpush1.msra.mxu0 %v656
    %849 = vmatprep.subr.mxu0 0.0
    %850 = vmatpush1.msra.mxu0 %v657
    %851 = vmatprep.subr.mxu0 0.0
    %852 = vmatpush1.msra.mxu0 %v658
    %853 = vmatprep.subr.mxu0 0.0
    %854 = vmatpush1.msra.mxu0 %v659
    %855 = vmatprep.subr.mxu0 0.0
    %856 = vmatpush1.msra.mxu0 %v660
    %857 = vmatprep.subr.mxu0 0.0
    %858 = vmatpush1.msra.mxu0 %v661
    %859 = vmatprep.subr.mxu0 0.0
    %860 = vmatpush1.msra.mxu0 %v662
    %861 = vmatprep.mubr.f32.mxu0 %v594
    %862 = vmatmul.mubr.f32.gmra.mrb[0].mxu0 %v593
    %v863 = vpop.f32.mrb[0].mxu0
    %v864 = vadd.f32 %v794, %v863
    %v865 = vpop.f32.mrb[0].mxu0
    %866 = vdwg.mxu0
    %867 = vmatprep.subr.mxu0 0.0
    %868 = vmatpush1.msra.mxu0 %v663
    %869 = vmatprep.subr.mxu0 0.0
    %870 = vmatpush1.msra.mxu0 %v664
    %871 = vmatprep.subr.mxu0 0.0
    %872 = vmatpush1.msra.mxu0 %v665
    %873 = vmatprep.subr.mxu0 0.0
    %874 = vmatpush1.msra.mxu0 %v666
    %875 = vmatprep.subr.mxu0 0.0
    %876 = vmatpush1.msra.mxu0 %v667
    %877 = vmatprep.subr.mxu0 0.0
    %878 = vmatpush1.msra.mxu0 %v668
    %879 = vmatprep.subr.mxu0 0.0
    %880 = vmatpush1.msra.mxu0 %v669
    %881 = vmatprep.subr.mxu0 0.0
    %882 = vmatpush1.msra.mxu0 %v670
    %883 = vmatprep.subr.mxu0 0.0
    %884 = vmatpush1.msra.mxu0 %v671
    %885 = vmatprep.subr.mxu0 0.0
    %886 = vmatpush1.msra.mxu0 %v672
    %887 = vmatprep.subr.mxu0 0.0
    %888 = vmatpush1.msra.mxu0 %v673
    %889 = vmatprep.subr.mxu0 0.0
    %890 = vmatpush1.msra.mxu0 %v674
    %891 = vmatprep.subr.mxu0 0.0
    %892 = vmatpush1.msra.mxu0 %v675
    %893 = vmatprep.subr.mxu0 0.0
    %894 = vmatpush1.msra.mxu0 %v676
    %895 = vmatprep.subr.mxu0 0.0
    %896 = vmatpush1.msra.mxu0 %v677
    %897 = vmatprep.subr.mxu0 0.0
    %898 = vmatpush1.msra.mxu0 %v678
    %899 = vmatprep.subr.mxu0 0.0
    %900 = vmatpush1.msra.mxu0 %v679
    %901 = vmatprep.subr.mxu0 0.0
    %902 = vmatpush1.msra.mxu0 %v680
    %903 = vmatprep.subr.mxu0 0.0
    %904 = vmatpush1.msra.mxu0 %v681
    %905 = vmatprep.subr.mxu0 0.0
    %906 = vmatpush1.msra.mxu0 %v682
    %907 = vmatprep.subr.mxu0 0.0
    %908 = vmatpush1.msra.mxu0 %v683
    %909 = vmatprep.subr.mxu0 0.0
    %910 = vmatpush1.msra.mxu0 %v684
    %911 = vmatprep.subr.mxu0 0.0
    %912 = vmatpush1.msra.mxu0 %v685
    %913 = vmatprep.subr.mxu0 0.0
    %914 = vmatpush1.msra.mxu0 %v686
    %915 = vmatprep.subr.mxu0 0.0
    %916 = vmatpush1.msra.mxu0 %v687
    %917 = vmatprep.subr.mxu0 0.0
    %918 = vmatpush1.msra.mxu0 %v688
    %919 = vmatprep.subr.mxu0 0.0
    %920 = vmatpush1.msra.mxu0 %v689
    %921 = vmatprep.subr.mxu0 0.0
    %922 = vmatpush1.msra.mxu0 %v690
    %923 = vmatprep.subr.mxu0 0.0
    %924 = vmatpush1.msra.mxu0 %v691
    %925 = vmatprep.subr.mxu0 0.0
    %926 = vmatpush1.msra.mxu0 %v692
    %927 = vmatprep.subr.mxu0 0.0
    %928 = vmatpush1.msra.mxu0 %v693
    %929 = vmatprep.subr.mxu0 0.0
    %930 = vmatpush1.msra.mxu0 %v694
    %931 = vmatprep.mubr.f32.mxu0 %v596
    %932 = vmatmul.mubr.f32.gmra.mrb[0].mxu0 %v595
    %v933 = vpop.f32.mrb[0].mxu0
    %v934 = vadd.f32 %v864, %v933
    %v935 = vpop.f32.mrb[0].mxu0
    %936 = vdwg.mxu0
    %937 = vmatprep.subr.mxu0 0.0
    %938 = vmatpush1.msra.mxu0 %v695
    %939 = vmatprep.subr.mxu0 0.0
    %940 = vmatpush1.msra.mxu0 %v696
    %941 = vmatprep.subr.mxu0 0.0
    %942 = vmatpush1.msra.mxu0 %v697
    %943 = vmatprep.subr.mxu0 0.0
    %944 = vmatpush1.msra.mxu0 %v698
    %945 = vmatprep.subr.mxu0 0.0
    %946 = vmatpush1.msra.mxu0 %v699
    %947 = vmatprep.subr.mxu0 0.0
    %948 = vmatpush1.msra.mxu0 %v700
    %949 = vmatprep.subr.mxu0 0.0
    %950 = vmatpush1.msra.mxu0 %v701
    %951 = vmatprep.subr.mxu0 0.0
    %952 = vmatpush1.msra.mxu0 %v702
    %953 = vmatprep.subr.mxu0 0.0
    %954 = vmatpush1.msra.mxu0 %v703
    %955 = vmatprep.subr.mxu0 0.0
    %956 = vmatpush1.msra.mxu0 %v704
    %957 = vmatprep.subr.mxu0 0.0
    %958 = vmatpush1.msra.mxu0 %v705
    %959 = vmatprep.subr.mxu0 0.0
    %960 = vmatpush1.msra.mxu0 %v706
    %961 = vmatprep.subr.mxu0 0.0
    %962 = vmatpush1.msra.mxu0 %v707
    %963 = vmatprep.subr.mxu0 0.0
    %964 = vmatpush1.msra.mxu0 %v708
    %965 = vmatprep.subr.mxu0 0.0
    %966 = vmatpush1.msra.mxu0 %v709
    %967 = vmatprep.subr.mxu0 0.0
    %968 = vmatpush1.msra.mxu0 %v710
    %969 = vmatprep.subr.mxu0 0.0
    %970 = vmatpush1.msra.mxu0 %v711
    %971 = vmatprep.subr.mxu0 0.0
    %972 = vmatpush1.msra.mxu0 %v712
    %973 = vmatprep.subr.mxu0 0.0
    %974 = vmatpush1.msra.mxu0 %v713
    %975 = vmatprep.subr.mxu0 0.0
    %976 = vmatpush1.msra.mxu0 %v714
    %977 = vmatprep.subr.mxu0 0.0
    %978 = vmatpush1.msra.mxu0 %v715
    %979 = vmatprep.subr.mxu0 0.0
    %980 = vmatpush1.msra.mxu0 %v716
    %981 = vmatprep.subr.mxu0 0.0
    %982 = vmatpush1.msra.mxu0 %v717
    %983 = vmatprep.subr.mxu0 0.0
    %984 = vmatpush1.msra.mxu0 %v718
    %985 = vmatprep.subr.mxu0 0.0
    %986 = vmatpush1.msra.mxu0 %v719
    %987 = vmatprep.subr.mxu0 0.0
    %988 = vmatpush1.msra.mxu0 %v720
    %989 = vmatprep.subr.mxu0 0.0
    %990 = vmatpush1.msra.mxu0 %v721
    %991 = vmatprep.subr.mxu0 0.0
    %992 = vmatpush1.msra.mxu0 %v722
    %993 = vmatprep.subr.mxu0 0.0
    %994 = vmatpush1.msra.mxu0 %v723
    %995 = vmatprep.subr.mxu0 0.0
    %996 = vmatpush1.msra.mxu0 %v724
    %997 = vmatprep.subr.mxu0 0.0
    %998 = vmatpush1.msra.mxu0 %v725
    %999 = vmatprep.subr.mxu0 0.0
    %1000 = vmatpush1.msra.mxu0 %v726
    %1001 = vmatprep.mubr.f32.mxu0 %v598
    %1002 = vmatmul.mubr.f32.gmra.mrb[0].mxu0 %v597
    %v1003 = vpop.f32.mrb[0].mxu0
    %v1004 = vadd.f32 %v934, %v1003
    %v1005 = vpop.f32.mrb[0].mxu0
    %1006 = vdwg.mxu0
    %v1007 = vmul.f32 %v1004, 0.03125
    %v1008 = vmul.f32 %v1007, %v1007
    %v1010 = vrot.slane %v1008, 7
    %v1012 = vsub.f32 %v1007, %v1010
    %v1013 = vld [vmem:[%s2] sm:$0x1]
    %v1014 = vadd.f32 %v1012, 1e-05
    %v1015 = vrsqrt.pop %v1014
    %v1017 = vrot.slane %v1015, 1
    %v1019 = vmul.f32 %v1013, %v1017
    %v1020 = vld [vmem:[%s2 + $0x1] sm:$0x1]
    %v1021 = vmul.f32 %v1007, %v1019
    %v1022 = vsub.f32 %v1020, %v1021
    %v1023 = vlaneseq
    %v1024 = vshrl.u32 %v1023, 7
    %v1025 = vsub.s32 0, %v1024
    %v1026 = vrot.slane %v1019, %v1025
    %v1027 = vlaneseq
    %v1028 = vshrl.u32 %v1027, 7
    %v1029 = vsub.s32 0, %v1028
    %v1030 = vrot.slane %v1022, %v1029
    %v1031 = vsel %vm590, %v1026, %v1030
    %v1032 = vld [vmem:[#allocation9] sm:$0xff]
    %v1033 = vld [vmem:[#allocation9 + $0x8] sm:$0xff]
    %v1034 = vld [vmem:[#allocation9 + $0x10] sm:$0xff]
    %v1035 = vld [vmem:[#allocation9 + $0x18] sm:$0xff]
    %v1036 = vld [vmem:[#allocation9 + $0x20] sm:$0xff]
    %v1037 = vld [vmem:[#allocation9 + $0x28] sm:$0xff]
    %v1038 = vld [vmem:[#allocation9 + $0x30] sm:$0xff]
    %v1039 = vld [vmem:[#allocation9 + $0x38] sm:$0xff]
    %v1040 = vld [vmem:[#allocation9 + $0x40] sm:$0xff]
    %v1041 = vld [vmem:[#allocation9 + $0x48] sm:$0xff]
    %v1042 = vld [vmem:[#allocation9 + $0x50] sm:$0xff]
    %v1043 = vld [vmem:[#allocation9 + $0x58] sm:$0xff]
    %v1044 = vld [vmem:[#allocation9 + $0x60] sm:$0xff]
    %v1045 = vld [vmem:[#allocation9 + $0x68] sm:$0xff]
    %v1046 = vld [vmem:[#allocation9 + $0x70] sm:$0xff]
    %v1047 = vld [vmem:[#allocation9 + $0x78] sm:$0xff]
    %v1048 = vld [vmem:[#allocation9 + $0x80] sm:$0xff]
    %v1049 = vld [vmem:[#allocation9 + $0x88] sm:$0xff]
    %v1050 = vld [vmem:[#allocation9 + $0x90] sm:$0xff]
    %v1051 = vld [vmem:[#allocation9 + $0x98] sm:$0xff]
    %v1052 = vld [vmem:[#allocation9 + $0xa0] sm:$0xff]
    %v1053 = vld [vmem:[#allocation9 + $0xa8] sm:$0xff]
    %v1054 = vld [vmem:[#allocation9 + $0xb0] sm:$0xff]
    %v1055 = vld [vmem:[#allocation9 + $0xb8] sm:$0xff]
    %v1056 = vld [vmem:[#allocation9 + $0xc0] sm:$0xff]
    %v1057 = vld [vmem:[#allocation9 + $0xc8] sm:$0xff]
    %v1058 = vld [vmem:[#allocation9 + $0xd0] sm:$0xff]
    %v1059 = vld [vmem:[#allocation9 + $0xd8] sm:$0xff]
    %v1060 = vld [vmem:[#allocation9 + $0xe0] sm:$0xff]
    %v1061 = vld [vmem:[#allocation9 + $0xe8] sm:$0xff]
    %v1062 = vld [vmem:[#allocation9 + $0xf0] sm:$0xff]
    %v1063 = vld [vmem:[#allocation9 + $0xf8] sm:$0xff]
    %v1064 = vld [vmem:[#allocation9 + $0x100] sm:$0xff]
    %v1065 = vld [vmem:[#allocation9 + $0x108] sm:$0xff]
    %v1066 = vld [vmem:[#allocation9 + $0x110] sm:$0xff]
    %v1067 = vld [vmem:[#allocation9 + $0x118] sm:$0xff]
    %v1068 = vld [vmem:[#allocation9 + $0x120] sm:$0xff]
    %v1069 = vld [vmem:[#allocation9 + $0x128] sm:$0xff]
    %v1070 = vld [vmem:[#allocation9 + $0x130] sm:$0xff]
    %v1071 = vld [vmem:[#allocation9 + $0x138] sm:$0xff]
    %v1072 = vld [vmem:[#allocation9 + $0x140] sm:$0xff]
    %v1073 = vld [vmem:[#allocation9 + $0x148] sm:$0xff]
    %v1074 = vld [vmem:[#allocation9 + $0x150] sm:$0xff]
    %v1075 = vld [vmem:[#allocation9 + $0x158] sm:$0xff]
    %v1076 = vld [vmem:[#allocation9 + $0x160] sm:$0xff]
    %v1077 = vld [vmem:[#allocation9 + $0x168] sm:$0xff]
    %v1078 = vld [vmem:[#allocation9 + $0x170] sm:$0xff]
    %v1079 = vld [vmem:[#allocation9 + $0x178] sm:$0xff]
    %v1080 = vld [vmem:[#allocation9 + $0x180] sm:$0xff]
    %v1081 = vld [vmem:[#allocation9 + $0x188] sm:$0xff]
    %v1082 = vld [vmem:[#allocation9 + $0x190] sm:$0xff]
    %v1083 = vld [vmem:[#allocation9 + $0x198] sm:$0xff]
    %v1084 = vld [vmem:[#allocation9 + $0x1a0] sm:$0xff]
    %v1085 = vld [vmem:[#allocation9 + $0x1a8] sm:$0xff]
    %v1086 = vld [vmem:[#allocation9 + $0x1b0] sm:$0xff]
    %v1087 = vld [vmem:[#allocation9 + $0x1b8] sm:$0xff]
    %v1088 = vld [vmem:[#allocation9 + $0x1c0] sm:$0xff]
    %v1089 = vld [vmem:[#allocation9 + $0x1c8] sm:$0xff]
    %v1090 = vld [vmem:[#allocation9 + $0x1d0] sm:$0xff]
    %v1091 = vld [vmem:[#allocation9 + $0x1d8] sm:$0xff]
    %v1092 = vld [vmem:[#allocation9 + $0x1e0] sm:$0xff]
    %v1093 = vld [vmem:[#allocation9 + $0x1e8] sm:$0xff]
    %v1094 = vld [vmem:[#allocation9 + $0x1f0] sm:$0xff]
    %v1095 = vld [vmem:[#allocation9 + $0x1f8] sm:$0xff]
    %vm1096 = vcmask 523264
    %v1098 = vsel %vm1096, %v1031, 0
    %1100 = vmatprep.subr.mxu0 %v1033
    %1101 = vmatpush1.msra.mxu0 %v1032
    %1102 = vmatprep.subr.mxu0 %v1041
    %1103 = vmatpush1.msra.mxu0 %v1040
    %1104 = vmatprep.subr.mxu0 %v1049
    %1105 = vmatpush1.msra.mxu0 %v1048
    %1106 = vmatprep.subr.mxu0 %v1057
    %1107 = vmatpush1.msra.mxu0 %v1056
    %1108 = vmatprep.subr.mxu0 %v1065
    %1109 = vmatpush1.msra.mxu0 %v1064
    %1110 = vmatprep.subr.mxu0 %v1073
    %1111 = vmatpush1.msra.mxu0 %v1072
    %1112 = vmatprep.subr.mxu0 %v1081
    %1113 = vmatpush1.msra.mxu0 %v1080
    %1114 = vmatprep.subr.mxu0 %v1089
    %1115 = vmatpush1.msra.mxu0 %v1088
    %1116 = vmatprep.subr.mxu0 0.0
    %1117 = vmatpush1.msra.mxu0 0.0
    %1118 = vmatprep.subr.mxu0 0.0
    %1119 = vmatpush1.msra.mxu0 0.0
    %1120 = vmatprep.subr.mxu0 0.0
    %1121 = vmatpush1.msra.mxu0 0.0
    %1122 = vmatprep.subr.mxu0 0.0
    %1123 = vmatpush1.msra.mxu0 0.0
    %1124 = vmatprep.subr.mxu0 0.0
    %1125 = vmatpush1.msra.mxu0 0.0
    %1126 = vmatprep.subr.mxu0 0.0
    %1127 = vmatpush1.msra.mxu0 0.0
    %1128 = vmatprep.subr.mxu0 0.0
    %1129 = vmatpush1.msra.mxu0 0.0
    %1130 = vmatprep.subr.mxu0 0.0
    %1131 = vmatpush1.msra.mxu0 0.0
    %1132 = vmatprep.subr.mxu0 0.0
    %1133 = vmatpush1.msra.mxu0 0.0
    %1134 = vmatprep.subr.mxu0 0.0
    %1135 = vmatpush1.msra.mxu0 0.0
    %1136 = vmatprep.subr.mxu0 0.0
    %1137 = vmatpush1.msra.mxu0 0.0
    %1138 = vmatprep.subr.mxu0 0.0
    %1139 = vmatpush1.msra.mxu0 0.0
    %1140 = vmatprep.subr.mxu0 0.0
    %1141 = vmatpush1.msra.mxu0 0.0
    %1142 = vmatprep.subr.mxu0 0.0
    %1143 = vmatpush1.msra.mxu0 0.0
    %1144 = vmatprep.subr.mxu0 0.0
    %1145 = vmatpush1.msra.mxu0 0.0
    %1146 = vmatprep.subr.mxu0 0.0
    %1147 = vmatpush1.msra.mxu0 0.0
    %1148 = vmatprep.subr.mxu0 0.0
    %1149 = vmatpush1.msra.mxu0 0.0
    %1150 = vmatprep.subr.mxu0 0.0
    %1151 = vmatpush1.msra.mxu0 0.0
    %1152 = vmatprep.subr.mxu0 0.0
    %1153 = vmatpush1.msra.mxu0 0.0
    %1154 = vmatprep.subr.mxu0 0.0
    %1155 = vmatpush1.msra.mxu0 0.0
    %1156 = vmatprep.subr.mxu0 0.0
    %1157 = vmatpush1.msra.mxu0 0.0
    %1158 = vmatprep.subr.mxu0 0.0
    %1159 = vmatpush1.msra.mxu0 0.0
    %1160 = vmatprep.subr.mxu0 0.0
    %1161 = vmatpush1.msra.mxu0 0.0
    %1162 = vmatprep.subr.mxu0 0.0
    %1163 = vmatpush1.msra.mxu0 0.0
    %1164 = vmatprep.mubr.f32.mxu0 0.0
    %1165 = vmatmul.mubr.f32.gmra.mrb[0].mxu0 %v1098
    %v1166 = vpop.f32.mrb[0].mxu0
    %v1167 = vadd.f32 0.0, %v1166
    %v1168 = vpop.f32.mrb[0].mxu0
    %v1169 = vadd.f32 0.0, %v1168
    %1170 = vdwg.mxu0
    %1171 = vmatprep.subr.mxu0 %v1035
    %1172 = vmatpush1.msra.mxu0 %v1034
    %1173 = vmatprep.subr.mxu0 %v1043
    %1174 = vmatpush1.msra.mxu0 %v1042
    %1175 = vmatprep.subr.mxu0 %v1051
    %1176 = vmatpush1.msra.mxu0 %v1050
    %1177 = vmatprep.subr.mxu0 %v1059
    %1178 = vmatpush1.msra.mxu0 %v1058
    %1179 = vmatprep.subr.mxu0 %v1067
    %1180 = vmatpush1.msra.mxu0 %v1066
    %1181 = vmatprep.subr.mxu0 %v1075
    %1182 = vmatpush1.msra.mxu0 %v1074
    %1183 = vmatprep.subr.mxu0 %v1083
    %1184 = vmatpush1.msra.mxu0 %v1082
    %1185 = vmatprep.subr.mxu0 %v1091
    %1186 = vmatpush1.msra.mxu0 %v1090
    %1187 = vmatprep.subr.mxu0 0.0
    %1188 = vmatpush1.msra.mxu0 0.0
    %1189 = vmatprep.subr.mxu0 0.0
    %1190 = vmatpush1.msra.mxu0 0.0
    %1191 = vmatprep.subr.mxu0 0.0
    %1192 = vmatpush1.msra.mxu0 0.0
    %1193 = vmatprep.subr.mxu0 0.0
    %1194 = vmatpush1.msra.mxu0 0.0
    %1195 = vmatprep.subr.mxu0 0.0
    %1196 = vmatpush1.msra.mxu0 0.0
    %1197 = vmatprep.subr.mxu0 0.0
    %1198 = vmatpush1.msra.mxu0 0.0
    %1199 = vmatprep.subr.mxu0 0.0
    %1200 = vmatpush1.msra.mxu0 0.0
    %1201 = vmatprep.subr.mxu0 0.0
    %1202 = vmatpush1.msra.mxu0 0.0
    %1203 = vmatprep.subr.mxu0 0.0
    %1204 = vmatpush1.msra.mxu0 0.0
    %1205 = vmatprep.subr.mxu0 0.0
    %1206 = vmatpush1.msra.mxu0 0.0
    %1207 = vmatprep.subr.mxu0 0.0
    %1208 = vmatpush1.msra.mxu0 0.0
    %1209 = vmatprep.subr.mxu0 0.0
    %1210 = vmatpush1.msra.mxu0 0.0
    %1211 = vmatprep.subr.mxu0 0.0
    %1212 = vmatpush1.msra.mxu0 0.0
    %1213 = vmatprep.subr.mxu0 0.0
    %1214 = vmatpush1.msra.mxu0 0.0
    %1215 = vmatprep.subr.mxu0 0.0
    %1216 = vmatpush1.msra.mxu0 0.0
    %1217 = vmatprep.subr.mxu0 0.0
    %1218 = vmatpush1.msra.mxu0 0.0
    %1219 = vmatprep.subr.mxu0 0.0
    %1220 = vmatpush1.msra.mxu0 0.0
    %1221 = vmatprep.subr.mxu0 0.0
    %1222 = vmatpush1.msra.mxu0 0.0
    %1223 = vmatprep.subr.mxu0 0.0
    %1224 = vmatpush1.msra.mxu0 0.0
    %1225 = vmatprep.subr.mxu0 0.0
    %1226 = vmatpush1.msra.mxu0 0.0
    %1227 = vmatprep.subr.mxu0 0.0
    %1228 = vmatpush1.msra.mxu0 0.0
    %1229 = vmatprep.subr.mxu0 0.0
    %1230 = vmatpush1.msra.mxu0 0.0
    %1231 = vmatprep.subr.mxu0 0.0
    %1232 = vmatpush1.msra.mxu0 0.0
    %1233 = vmatprep.subr.mxu0 0.0
    %1234 = vmatpush1.msra.mxu0 0.0
    %1235 = vmatprep.mubr.f32.mxu0 0.0
    %1236 = vmatmul.mubr.f32.gmra.mrb[0].mxu0 %v1098
    %v1237 = vpop.f32.mrb[0].mxu0
    %v1238 = vadd.f32 0.0, %v1237
    %v1239 = vpop.f32.mrb[0].mxu0
    %v1240 = vadd.f32 0.0, %v1239
    %1241 = vdwg.mxu0
    %1242 = vmatprep.subr.mxu0 %v1037
    %1243 = vmatpush1.msra.mxu0 %v1036
    %1244 = vmatprep.subr.mxu0 %v1045
    %1245 = vmatpush1.msra.mxu0 %v1044
    %1246 = vmatprep.subr.mxu0 %v1053
    %1247 = vmatpush1.msra.mxu0 %v1052
    %1248 = vmatprep.subr.mxu0 %v1061
    %1249 = vmatpush1.msra.mxu0 %v1060
    %1250 = vmatprep.subr.mxu0 %v1069
    %1251 = vmatpush1.msra.mxu0 %v1068
    %1252 = vmatprep.subr.mxu0 %v1077
    %1253 = vmatpush1.msra.mxu0 %v1076
    %1254 = vmatprep.subr.mxu0 %v1085
    %1255 = vmatpush1.msra.mxu0 %v1084
    %1256 = vmatprep.subr.mxu0 %v1093
    %1257 = vmatpush1.msra.mxu0 %v1092
    %1258 = vmatprep.subr.mxu0 0.0
    %1259 = vmatpush1.msra.mxu0 0.0
    %1260 = vmatprep.subr.mxu0 0.0
    %1261 = vmatpush1.msra.mxu0 0.0
    %1262 = vmatprep.subr.mxu0 0.0
    %1263 = vmatpush1.msra.mxu0 0.0
    %1264 = vmatprep.subr.mxu0 0.0
    %1265 = vmatpush1.msra.mxu0 0.0
    %1266 = vmatprep.subr.mxu0 0.0
    %1267 = vmatpush1.msra.mxu0 0.0
    %1268 = vmatprep.subr.mxu0 0.0
    %1269 = vmatpush1.msra.mxu0 0.0
    %1270 = vmatprep.subr.mxu0 0.0
    %1271 = vmatpush1.msra.mxu0 0.0
    %1272 = vmatprep.subr.mxu0 0.0
    %1273 = vmatpush1.msra.mxu0 0.0
    %1274 = vmatprep.subr.mxu0 0.0
    %1275 = vmatpush1.msra.mxu0 0.0
    %1276 = vmatprep.subr.mxu0 0.0
    %1277 = vmatpush1.msra.mxu0 0.0
    %1278 = vmatprep.subr.mxu0 0.0
    %1279 = vmatpush1.msra.mxu0 0.0
    %1280 = vmatprep.subr.mxu0 0.0
    %1281 = vmatpush1.msra.mxu0 0.0
    %1282 = vmatprep.subr.mxu0 0.0
    %1283 = vmatpush1.msra.mxu0 0.0
    %1284 = vmatprep.subr.mxu0 0.0
    %1285 = vmatpush1.msra.mxu0 0.0
    %1286 = vmatprep.subr.mxu0 0.0
    %1287 = vmatpush1.msra.mxu0 0.0
    %1288 = vmatprep.subr.mxu0 0.0
    %1289 = vmatpush1.msra.mxu0 0.0
    %1290 = vmatprep.subr.mxu0 0.0
    %1291 = vmatpush1.msra.mxu0 0.0
    %1292 = vmatprep.subr.mxu0 0.0
    %1293 = vmatpush1.msra.mxu0 0.0
    %1294 = vmatprep.subr.mxu0 0.0
    %1295 = vmatpush1.msra.mxu0 0.0
    %1296 = vmatprep.subr.mxu0 0.0
    %1297 = vmatpush1.msra.mxu0 0.0
    %1298 = vmatprep.subr.mxu0 0.0
    %1299 = vmatpush1.msra.mxu0 0.0
    %1300 = vmatprep.subr.mxu0 0.0
    %1301 = vmatpush1.msra.mxu0 0.0
    %1302 = vmatprep.subr.mxu0 0.0
    %1303 = vmatpush1.msra.mxu0 0.0
    %1304 = vmatprep.subr.mxu0 0.0
    %1305 = vmatpush1.msra.mxu0 0.0
    %1306 = vmatprep.mubr.f32.mxu0 0.0
    %1307 = vmatmul.mubr.f32.gmra.mrb[0].mxu0 %v1098
    %v1308 = vpop.f32.mrb[0].mxu0
    %v1309 = vadd.f32 0.0, %v1308
    %v1310 = vpop.f32.mrb[0].mxu0
    %v1311 = vadd.f32 0.0, %v1310
    %1312 = vdwg.mxu0
    %1313 = vmatprep.subr.mxu0 %v1039
    %1314 = vmatpush1.msra.mxu0 %v1038
    %1315 = vmatprep.subr.mxu0 %v1047
    %1316 = vmatpush1.msra.mxu0 %v1046
    %1317 = vmatprep.subr.mxu0 %v1055
    %1318 = vmatpush1.msra.mxu0 %v1054
    %1319 = vmatprep.subr.mxu0 %v1063
    %1320 = vmatpush1.msra.mxu0 %v1062
    %1321 = vmatprep.subr.mxu0 %v1071
    %1322 = vmatpush1.msra.mxu0 %v1070
    %1323 = vmatprep.subr.mxu0 %v1079
    %1324 = vmatpush1.msra.mxu0 %v1078
    %1325 = vmatprep.subr.mxu0 %v1087
    %1326 = vmatpush1.msra.mxu0 %v1086
    %1327 = vmatprep.subr.mxu0 %v1095
    %1328 = vmatpush1.msra.mxu0 %v1094
    %1329 = vmatprep.subr.mxu0 0.0
    %1330 = vmatpush1.msra.mxu0 0.0
    %1331 = vmatprep.subr.mxu0 0.0
    %1332 = vmatpush1.msra.mxu0 0.0
    %1333 = vmatprep.subr.mxu0 0.0
    %1334 = vmatpush1.msra.mxu0 0.0
    %1335 = vmatprep.subr.mxu0 0.0
    %1336 = vmatpush1.msra.mxu0 0.0
    %1337 = vmatprep.subr.mxu0 0.0
    %1338 = vmatpush1.msra.mxu0 0.0
    %1339 = vmatprep.subr.mxu0 0.0
    %1340 = vmatpush1.msra.mxu0 0.0
    %1341 = vmatprep.subr.mxu0 0.0
    %1342 = vmatpush1.msra.mxu0 0.0
    %1343 = vmatprep.subr.mxu0 0.0
    %1344 = vmatpush1.msra.mxu0 0.0
    %1345 = vmatprep.subr.mxu0 0.0
    %1346 = vmatpush1.msra.mxu0 0.0
    %1347 = vmatprep.subr.mxu0 0.0
    %1348 = vmatpush1.msra.mxu0 0.0
    %1349 = vmatprep.subr.mxu0 0.0
    %1350 = vmatpush1.msra.mxu0 0.0
    %1351 = vmatprep.subr.mxu0 0.0
    %1352 = vmatpush1.msra.mxu0 0.0
    %1353 = vmatprep.subr.mxu0 0.0
    %1354 = vmatpush1.msra.mxu0 0.0
    %1355 = vmatprep.subr.mxu0 0.0
    %1356 = vmatpush1.msra.mxu0 0.0
    %1357 = vmatprep.subr.mxu0 0.0
    %1358 = vmatpush1.msra.mxu0 0.0
    %1359 = vmatprep.subr.mxu0 0.0
    %1360 = vmatpush1.msra.mxu0 0.0
    %1361 = vmatprep.subr.mxu0 0.0
    %1362 = vmatpush1.msra.mxu0 0.0
    %1363 = vmatprep.subr.mxu0 0.0
    %1364 = vmatpush1.msra.mxu0 0.0
    %1365 = vmatprep.subr.mxu0 0.0
    %1366 = vmatpush1.msra.mxu0 0.0
    %1367 = vmatprep.subr.mxu0 0.0
    %1368 = vmatpush1.msra.mxu0 0.0
    %1369 = vmatprep.subr.mxu0 0.0
    %1370 = vmatpush1.msra.mxu0 0.0
    %1371 = vmatprep.subr.mxu0 0.0
    %1372 = vmatpush1.msra.mxu0 0.0
    %1373 = vmatprep.subr.mxu0 0.0
    %1374 = vmatpush1.msra.mxu0 0.0
    %1375 = vmatprep.subr.mxu0 0.0
    %1376 = vmatpush1.msra.mxu0 0.0
    %1377 = vmatprep.mubr.f32.mxu0 0.0
    %1378 = vmatmul.mubr.f32.gmra.mrb[0].mxu0 %v1098
    %v1379 = vpop.f32.mrb[0].mxu0
    %v1380 = vadd.f32 0.0, %v1379
    %v1381 = vpop.f32.mrb[0].mxu0
    %v1382 = vadd.f32 0.0, %v1381
    %1383 = vdwg.mxu0
    %v1384 = vlaneseq
    %v1385 = vshrl.u32 %v1384, 7
    %v1386 = vsub.s32 0, %v1385
    %v1387 = vrot.slane %v1167, %v1386
    %v1388 = vlaneseq
    %v1389 = vshrl.u32 %v1388, 7
    %v1390 = vsub.s32 0, %v1389
    %v1391 = vrot.slane %v1169, %v1390
    %v1392 = vlaneseq
    %v1393 = vshrl.u32 %v1392, 7
    %v1394 = vsub.s32 0, %v1393
    %v1395 = vrot.slane %v1238, %v1394
    %v1396 = vlaneseq
    %v1397 = vshrl.u32 %v1396, 7
    %v1398 = vsub.s32 0, %v1397
    %v1399 = vrot.slane %v1240, %v1398
    %v1400 = vlaneseq
    %v1401 = vshrl.u32 %v1400, 7
    %v1402 = vsub.s32 0, %v1401
    %v1403 = vrot.slane %v1309, %v1402
    %v1404 = vlaneseq
    %v1405 = vshrl.u32 %v1404, 7
    %v1406 = vsub.s32 0, %v1405
    %v1407 = vrot.slane %v1311, %v1406
    %v1408 = vlaneseq
    %v1409 = vshrl.u32 %v1408, 7
    %v1410 = vsub.s32 0, %v1409
    %v1411 = vrot.slane %v1380, %v1410
    %v1412 = vlaneseq
    %v1413 = vshrl.u32 %v1412, 7
    %v1414 = vsub.s32 0, %v1413
    %v1415 = vrot.slane %v1382, %v1414
    %v1416 = vmul.f32 %v250, %v1387
    %v1417 = vmul.f32 %v252, %v1391
    %v1418 = vmul.f32 %v321, %v1395
    %v1419 = vmul.f32 %v323, %v1399
    %v1420 = vmul.f32 %v392, %v1403
    %v1421 = vmul.f32 %v394, %v1407
    %v1422 = vmul.f32 %v463, %v1411
    %v1423 = vmul.f32 %v465, %v1415
    %v1424 = vlaneseq
    %v1425 = vshrl.u32 %v1424, 7
    %v1426 = vsub.s32 1, %v1425
    %v1427 = vrot.slane %v1167, %v1426
    %v1428 = vlaneseq
    %v1429 = vshrl.u32 %v1428, 7
    %v1430 = vsub.s32 1, %v1429
    %v1431 = vrot.slane %v1169, %v1430
    %v1432 = vlaneseq
    %v1433 = vshrl.u32 %v1432, 7
    %v1434 = vsub.s32 1, %v1433
    %v1435 = vrot.slane %v1238, %v1434
    %v1436 = vlaneseq
    %v1437 = vshrl.u32 %v1436, 7
    %v1438 = vsub.s32 1, %v1437
    %v1439 = vrot.slane %v1240, %v1438
    %v1440 = vlaneseq
    %v1441 = vshrl.u32 %v1440, 7
    %v1442 = vsub.s32 1, %v1441
    %v1443 = vrot.slane %v1309, %v1442
    %v1444 = vlaneseq
    %v1445 = vshrl.u32 %v1444, 7
    %v1446 = vsub.s32 1, %v1445
    %v1447 = vrot.slane %v1311, %v1446
    %v1448 = vlaneseq
    %v1449 = vshrl.u32 %v1448, 7
    %v1450 = vsub.s32 1, %v1449
    %v1451 = vrot.slane %v1380, %v1450
    %v1452 = vlaneseq
    %v1453 = vshrl.u32 %v1452, 7
    %v1454 = vsub.s32 1, %v1453
    %v1455 = vrot.slane %v1382, %v1454
    %v1456 = vadd.f32 %v1416, %v1427
    %v1457 = vadd.f32 %v1417, %v1431
    %v1458 = vadd.f32 %v1418, %v1435
    %v1459 = vadd.f32 %v1419, %v1439
    %v1460 = vadd.f32 %v1420, %v1443
    %v1461 = vadd.f32 %v1421, %v1447
    %v1462 = vadd.f32 %v1422, %v1451
    %v1463 = vadd.f32 %v1423, %v1455
    %v1464 = vmax.f32 %v1456, 0.0
    %v1465 = vmax.f32 %v1457, 0.0
    %v1466 = vmax.f32 %v1458, 0.0
    %v1467 = vmax.f32 %v1459, 0.0
    %v1468 = vmax.f32 %v1460, 0.0
    %v1469 = vmax.f32 %v1461, 0.0
    %v1470 = vmax.f32 %v1462, 0.0
    %v1471 = vmax.f32 %v1463, 0.0
    %1472 = vst [vmem:[#allocation2] sm:$0xff] 0.0
    %1473 = vst [vmem:[#allocation2 + $0x8] sm:$0xff] 0.0
    %1474 = vst [vmem:[#allocation2 + $0x10] sm:$0xf] 0.0
    %1475 = vst [vmem:[#allocation2 + $0x18] sm:$0xf] 0.0
    %v1478 = vcombine.low %v1464, %v1465
    %v1480 = vunpack.c.l.s4 1966171168
    %v1481 = vunpack.c.0.s8 %v1480
    %v1482 = vlaneseq
    %v1483 = vshrl.u32 %v1482, 7
    %v1484 = vsub.s32 %v1481, %v1483
    %v1485 = vrot.slane %v1478, %v1484
    %v1487 = vunpack.c.l.s4 1966171168
    %v1488 = vunpack.c.0.s8 %v1487
    %v1489 = vlaneseq
    %v1490 = vshrl.u32 %v1489, 7
    %v1491 = vsub.s32 %v1488, %v1490
    %v1492 = vrot.slane %v1485, %v1491
    %v1494 = vlaneseq
    %vm1495 = vcmp.ge.s32.totalorder %v1494, 0
    %vm1496 = vcmp.lt.s32.totalorder %v1494, 256
    %vm1497 = vmand %vm1495, %vm1496
    %s1498 = scalar_lea.vmem [#allocation2], 1
    %1499 = vst.msk [vmem:[%s1498] ss:$8 sm:$0x3] %vm1497, %v1492
    %1500 = vst.msk [vmem:[%s1498] ss:$8 sm:$0x0] %vm1497, %v1492
    %v1503 = vcombine.low %v1466, %v1467
    %v1505 = vunpack.c.l.s4 1966171168
    %v1506 = vunpack.c.0.s8 %v1505
    %v1507 = vlaneseq
    %v1508 = vshrl.u32 %v1507, 7
    %v1509 = vsub.s32 %v1506, %v1508
    %v1510 = vrot.slane %v1503, %v1509
    %v1512 = vunpack.c.l.s4 1966171168
    %v1513 = vunpack.c.0.s8 %v1512
    %v1514 = vlaneseq
    %v1515 = vshrl.u32 %v1514, 7
    %v1516 = vsub.s32 %v1513, %v1515
    %v1517 = vrot.slane %v1510, %v1516
    %s1519 = scalar_lea.vmem [#allocation2], 2
    %1520 = vst.msk [vmem:[%s1519] ss:$8 sm:$0x3] %vm1497, %v1517
    %1521 = vst.msk [vmem:[%s1519] ss:$8 sm:$0x0] %vm1497, %v1517
    %v1524 = vcombine.low %v1468, %v1469
    %v1526 = vunpack.c.l.s4 1966171168
    %v1527 = vunpack.c.0.s8 %v1526
    %v1528 = vlaneseq
    %v1529 = vshrl.u32 %v1528, 7
    %v1530 = vsub.s32 %v1527, %v1529
    %v1531 = vrot.slane %v1524, %v1530
    %v1533 = vunpack.c.l.s4 1966171168
    %v1534 = vunpack.c.0.s8 %v1533
    %v1535 = vlaneseq
    %v1536 = vshrl.u32 %v1535, 7
    %v1537 = vsub.s32 %v1534, %v1536
    %v1538 = vrot.slane %v1531, %v1537
    %s1540 = scalar_lea.vmem [#allocation2], 3
    %1541 = vst.msk [vmem:[%s1540] ss:$8 sm:$0x3] %vm1497, %v1538
    %1542 = vst.msk [vmem:[%s1540] ss:$8 sm:$0x0] %vm1497, %v1538
    %v1545 = vcombine.low %v1470, %v1471
    %v1547 = vunpack.c.l.s4 1966171168
    %v1548 = vunpack.c.0.s8 %v1547
    %v1549 = vlaneseq
    %v1550 = vshrl.u32 %v1549, 7
    %v1551 = vsub.s32 %v1548, %v1550
    %v1552 = vrot.slane %v1545, %v1551
    %v1554 = vunpack.c.l.s4 1966171168
    %v1555 = vunpack.c.0.s8 %v1554
    %v1556 = vlaneseq
    %v1557 = vshrl.u32 %v1556, 7
    %v1558 = vsub.s32 %v1555, %v1557
    %v1559 = vrot.slane %v1552, %v1558
    %s1561 = scalar_lea.vmem [#allocation2], 4
    %1562 = vst.msk [vmem:[%s1561] ss:$8 sm:$0x3] %vm1497, %v1559
    %1563 = vst.msk [vmem:[%s1561] ss:$8 sm:$0x0] %vm1497, %v1559
    %v1564 = vcombine.high %v1485, %v1485
    %v1566 = vunpack.c.l.s4 1966171168
    %v1567 = vunpack.c.0.s8 %v1566
    %v1568 = vlaneseq
    %v1569 = vshrl.u32 %v1568, 7
    %v1570 = vsub.s32 %v1567, %v1569
    %v1571 = vrot.slane %v1564, %v1570
    %s1573 = scalar_lea.vmem [#allocation2], 7
    %1574 = vst.msk [vmem:[%s1573] ss:$8 sm:$0x3] %vm1497, %v1571
    %1575 = vst.msk [vmem:[%s1573] ss:$8 sm:$0x0] %vm1497, %v1571
    %v1576 = vcombine.high %v1510, %v1510
    %v1578 = vunpack.c.l.s4 1966171168
    %v1579 = vunpack.c.0.s8 %v1578
    %v1580 = vlaneseq
    %v1581 = vshrl.u32 %v1580, 7
    %v1582 = vsub.s32 %v1579, %v1581
    %v1583 = vrot.slane %v1576, %v1582
    %s1585 = scalar_lea.vmem [#allocation2], 16
    %1586 = vst.msk [vmem:[%s1585] ss:$8 sm:$0x3] %vm1497, %v1583
    %1587 = vst.msk [vmem:[%s1585] ss:$8 sm:$0x0] %vm1497, %v1583
    %v1588 = vcombine.high %v1531, %v1531
    %v1590 = vunpack.c.l.s4 1966171168
    %v1591 = vunpack.c.0.s8 %v1590
    %v1592 = vlaneseq
    %v1593 = vshrl.u32 %v1592, 7
    %v1594 = vsub.s32 %v1591, %v1593
    %v1595 = vrot.slane %v1588, %v1594
    %s1597 = scalar_lea.vmem [#allocation2], 17
    %1598 = vst.msk [vmem:[%s1597] ss:$8 sm:$0x3] %vm1497, %v1595
    %1599 = vst.msk [vmem:[%s1597] ss:$8 sm:$0x0] %vm1497, %v1595
    %v1600 = vcombine.high %v1552, %v1552
    %v1602 = vunpack.c.l.s4 1966171168
    %v1603 = vunpack.c.0.s8 %v1602
    %v1604 = vlaneseq
    %v1605 = vshrl.u32 %v1604, 7
    %v1606 = vsub.s32 %v1603, %v1605
    %v1607 = vrot.slane %v1600, %v1606
    %s1609 = scalar_lea.vmem [#allocation2], 18
    %1610 = vst.msk [vmem:[%s1609] ss:$8 sm:$0x3] %vm1497, %v1607
    %1611 = vst.msk [vmem:[%s1609] ss:$8 sm:$0x0] %vm1497, %v1607
    %v1612 = vld [vmem:[#allocation2] sm:$0xf]
    %v1613 = vld [vmem:[#allocation2 + $0x8] sm:$0xf]
    %1614 = vst [vmem:[#allocation3] sm:$0xf] %v1612
    %1615 = vst [vmem:[#allocation3 + $0x8] sm:$0xf] %v1613
    %v1616 = vld [vmem:[#allocation2] sm:$0x1e]
    %v1617 = vld [vmem:[#allocation2 + $0x8] sm:$0x1e]
    %v1620 = vrot.slane %v1616, 1
    %v1621 = vrot.slane %v1617, 1
    %1624 = vst [vmem:[#allocation3 + $0x10] sm:$0xf] %v1620
    %1625 = vst [vmem:[#allocation3 + $0x18] sm:$0xf] %v1621
    %v1626 = vld [vmem:[#allocation2] sm:$0x3c]
    %v1627 = vld [vmem:[#allocation2 + $0x8] sm:$0x3c]
    %v1630 = vrot.slane %v1626, 2
    %v1631 = vrot.slane %v1627, 2
    %1634 = vst [vmem:[#allocation3 + $0x20] sm:$0xf] %v1630
    %1635 = vst [vmem:[#allocation3 + $0x28] sm:$0xf] %v1631
    %v1636 = vld [vmem:[#allocation2] sm:$0xc0]
    %v1637 = vld [vmem:[#allocation2 + $0x8] sm:$0xc0]
    %v1638 = vld [vmem:[#allocation2 + $0x10] sm:$0x3]
    %v1639 = vld [vmem:[#allocation2 + $0x18] sm:$0x3]
    %vm1644 = vcmask 1045504
    %v1645 = vrot.slane %v1636, 2
    %v1646 = vrot.slane %v1638, 2
    %v1647 = vsel %vm1644, %v1645, %v1646
    %v1648 = vrot.slane %v1637, 2
    %v1649 = vrot.slane %v1639, 2
    %v1650 = vsel %vm1644, %v1648, %v1649
    %1653 = vst [vmem:[#allocation3] sm:$0xf0] %v1647
    %1654 = vst [vmem:[#allocation3 + $0x8] sm:$0xf0] %v1650
    %v1655 = vld [vmem:[#allocation2] sm:$0x80]
    %v1656 = vld [vmem:[#allocation2 + $0x8] sm:$0x80]
    %v1657 = vld [vmem:[#allocation2 + $0x10] sm:$0x7]
    %v1658 = vld [vmem:[#allocation2 + $0x18] sm:$0x7]
    %vm1663 = vcmask 1044480
    %v1664 = vrot.slane %v1655, 3
    %v1665 = vrot.slane %v1657, 3
    %v1666 = vsel %vm1663, %v1664, %v1665
    %v1667 = vrot.slane %v1656, 3
    %v1668 = vrot.slane %v1658, 3
    %v1669 = vsel %vm1663, %v1667, %v1668
    %1672 = vst [vmem:[#allocation3 + $0x10] sm:$0xf0] %v1666
    %1673 = vst [vmem:[#allocation3 + $0x18] sm:$0xf0] %v1669
    %v1674 = vld [vmem:[#allocation2 + $0x10] sm:$0xf]
    %v1675 = vld [vmem:[#allocation2 + $0x18] sm:$0xf]
    %v1678 = vrot.slane %v1674, 4
    %v1679 = vrot.slane %v1675, 4
    %1682 = vst [vmem:[#allocation3 + $0x20] sm:$0xf0] %v1678
    %1683 = vst [vmem:[#allocation3 + $0x28] sm:$0xf0] %v1679
    %v1684 = vld [vmem:[#allocation3] sm:$0xff]
    %v1685 = vld [vmem:[#allocation3 + $0x8] sm:$0xff]
    %v1686 = vld [vmem:[#allocation3 + $0x10] sm:$0xff]
    %v1687 = vld [vmem:[#allocation3 + $0x18] sm:$0xff]
    %v1688 = vld [vmem:[#allocation3 + $0x20] sm:$0xff]
    %v1689 = vld [vmem:[#allocation3 + $0x28] sm:$0xff]
    %v1690 = vld [vmem:[%s5] sm:$0xff]
    %v1691 = vld [vmem:[%s5 + $0x8] sm:$0xff]
    %v1692 = vld [vmem:[%s5 + $0x10] sm:$0xff]
    %v1693 = vld [vmem:[%s5 + $0x18] sm:$0xff]
    %v1694 = vld [vmem:[%s5 + $0x20] sm:$0xff]
    %v1695 = vld [vmem:[%s5 + $0x28] sm:$0xff]
    %v1696 = vld [vmem:[%s5 + $0x30] sm:$0xff]
    %v1697 = vld [vmem:[%s5 + $0x38] sm:$0xff]
    %v1698 = vld [vmem:[%s5 + $0x40] sm:$0xff]
    %v1699 = vld [vmem:[%s5 + $0x48] sm:$0xff]
    %v1700 = vld [vmem:[%s5 + $0x50] sm:$0xff]
    %v1701 = vld [vmem:[%s5 + $0x58] sm:$0xff]
    %v1702 = vld [vmem:[%s5 + $0x60] sm:$0xff]
    %v1703 = vld [vmem:[%s5 + $0x68] sm:$0xff]
    %v1704 = vld [vmem:[%s5 + $0x70] sm:$0xff]
    %v1705 = vld [vmem:[%s5 + $0x78] sm:$0xff]
    %v1706 = vld [vmem:[%s5 + $0x80] sm:$0xff]
    %v1707 = vld [vmem:[%s5 + $0x88] sm:$0xff]
    %v1708 = vld [vmem:[%s5 + $0x90] sm:$0xff]
    %v1709 = vld [vmem:[%s5 + $0x98] sm:$0xff]
    %v1710 = vld [vmem:[%s5 + $0xa0] sm:$0xff]
    %v1711 = vld [vmem:[%s5 + $0xa8] sm:$0xff]
    %v1712 = vld [vmem:[%s5 + $0xb0] sm:$0xff]
    %v1713 = vld [vmem:[%s5 + $0xb8] sm:$0xff]
    %v1714 = vld [vmem:[%s5 + $0xc0] sm:$0xff]
    %v1715 = vld [vmem:[%s5 + $0xc8] sm:$0xff]
    %v1716 = vld [vmem:[%s5 + $0xd0] sm:$0xff]
    %v1717 = vld [vmem:[%s5 + $0xd8] sm:$0xff]
    %v1718 = vld [vmem:[%s5 + $0xe0] sm:$0xff]
    %v1719 = vld [vmem:[%s5 + $0xe8] sm:$0xff]
    %v1720 = vld [vmem:[%s5 + $0xf0] sm:$0xff]
    %v1721 = vld [vmem:[%s5 + $0xf8] sm:$0xff]
    %v1722 = vld [vmem:[%s5 + $0x100] sm:$0xff]
    %v1723 = vld [vmem:[%s5 + $0x108] sm:$0xff]
    %v1724 = vld [vmem:[%s5 + $0x110] sm:$0xff]
    %v1725 = vld [vmem:[%s5 + $0x118] sm:$0xff]
    %v1726 = vld [vmem:[%s5 + $0x120] sm:$0xff]
    %v1727 = vld [vmem:[%s5 + $0x128] sm:$0xff]
    %v1728 = vld [vmem:[%s5 + $0x130] sm:$0xff]
    %v1729 = vld [vmem:[%s5 + $0x138] sm:$0xff]
    %v1730 = vld [vmem:[%s5 + $0x140] sm:$0xff]
    %v1731 = vld [vmem:[%s5 + $0x148] sm:$0xff]
    %v1732 = vld [vmem:[%s5 + $0x150] sm:$0xff]
    %v1733 = vld [vmem:[%s5 + $0x158] sm:$0xff]
    %v1734 = vld [vmem:[%s5 + $0x160] sm:$0xff]
    %v1735 = vld [vmem:[%s5 + $0x168] sm:$0xff]
    %v1736 = vld [vmem:[%s5 + $0x170] sm:$0xff]
    %v1737 = vld [vmem:[%s5 + $0x178] sm:$0xff]
    %v1738 = vld [vmem:[%s5 + $0x180] sm:$0xff]
    %v1739 = vld [vmem:[%s5 + $0x188] sm:$0xff]
    %v1740 = vld [vmem:[%s5 + $0x190] sm:$0xff]
    %v1741 = vld [vmem:[%s5 + $0x198] sm:$0xff]
    %v1742 = vld [vmem:[%s5 + $0x1a0] sm:$0xff]
    %v1743 = vld [vmem:[%s5 + $0x1a8] sm:$0xff]
    %v1744 = vld [vmem:[%s5 + $0x1b0] sm:$0xff]
    %v1745 = vld [vmem:[%s5 + $0x1b8] sm:$0xff]
    %v1746 = vld [vmem:[%s5 + $0x1c0] sm:$0xff]
    %v1747 = vld [vmem:[%s5 + $0x1c8] sm:$0xff]
    %v1748 = vld [vmem:[%s5 + $0x1d0] sm:$0xff]
    %v1749 = vld [vmem:[%s5 + $0x1d8] sm:$0xff]
    %v1750 = vld [vmem:[%s5 + $0x1e0] sm:$0xff]
    %v1751 = vld [vmem:[%s5 + $0x1e8] sm:$0xff]
    %v1752 = vld [vmem:[%s5 + $0x1f0] sm:$0xff]
    %v1753 = vld [vmem:[%s5 + $0x1f8] sm:$0xff]
    %v1754 = vld [vmem:[%s5 + $0x200] sm:$0xff]
    %v1755 = vld [vmem:[%s5 + $0x208] sm:$0xff]
    %v1756 = vld [vmem:[%s5 + $0x210] sm:$0xff]
    %v1757 = vld [vmem:[%s5 + $0x218] sm:$0xff]
    %v1758 = vld [vmem:[%s5 + $0x220] sm:$0xff]
    %v1759 = vld [vmem:[%s5 + $0x228] sm:$0xff]
    %v1760 = vld [vmem:[%s5 + $0x230] sm:$0xff]
    %v1761 = vld [vmem:[%s5 + $0x238] sm:$0xff]
    %v1762 = vld [vmem:[%s5 + $0x240] sm:$0xff]
    %v1763 = vld [vmem:[%s5 + $0x248] sm:$0xff]
    %v1764 = vld [vmem:[%s5 + $0x250] sm:$0xff]
    %v1765 = vld [vmem:[%s5 + $0x258] sm:$0xff]
    %v1766 = vld [vmem:[%s5 + $0x260] sm:$0xff]
    %v1767 = vld [vmem:[%s5 + $0x268] sm:$0xff]
    %v1768 = vld [vmem:[%s5 + $0x270] sm:$0xff]
    %v1769 = vld [vmem:[%s5 + $0x278] sm:$0xff]
    %v1770 = vld [vmem:[%s5 + $0x280] sm:$0xff]
    %v1771 = vld [vmem:[%s5 + $0x288] sm:$0xff]
    %v1772 = vld [vmem:[%s5 + $0x290] sm:$0xff]
    %v1773 = vld [vmem:[%s5 + $0x298] sm:$0xff]
    %v1774 = vld [vmem:[%s5 + $0x2a0] sm:$0xff]
    %v1775 = vld [vmem:[%s5 + $0x2a8] sm:$0xff]
    %v1776 = vld [vmem:[%s5 + $0x2b0] sm:$0xff]
    %v1777 = vld [vmem:[%s5 + $0x2b8] sm:$0xff]
    %v1778 = vld [vmem:[%s5 + $0x2c0] sm:$0xff]
    %v1779 = vld [vmem:[%s5 + $0x2c8] sm:$0xff]
    %v1780 = vld [vmem:[%s5 + $0x2d0] sm:$0xff]
    %v1781 = vld [vmem:[%s5 + $0x2d8] sm:$0xff]
    %v1782 = vld [vmem:[%s5 + $0x2e0] sm:$0xff]
    %v1783 = vld [vmem:[%s5 + $0x2e8] sm:$0xff]
    %v1784 = vld [vmem:[%s5 + $0x2f0] sm:$0xff]
    %v1785 = vld [vmem:[%s5 + $0x2f8] sm:$0xff]
    %v1786 = vld [vmem:[%s5 + $0x300] sm:$0xff]
    %v1787 = vld [vmem:[%s5 + $0x308] sm:$0xff]
    %v1788 = vld [vmem:[%s5 + $0x310] sm:$0xff]
    %v1789 = vld [vmem:[%s5 + $0x318] sm:$0xff]
    %v1790 = vld [vmem:[%s5 + $0x320] sm:$0xff]
    %v1791 = vld [vmem:[%s5 + $0x328] sm:$0xff]
    %v1792 = vld [vmem:[%s5 + $0x330] sm:$0xff]
    %v1793 = vld [vmem:[%s5 + $0x338] sm:$0xff]
    %v1794 = vld [vmem:[%s5 + $0x340] sm:$0xff]
    %v1795 = vld [vmem:[%s5 + $0x348] sm:$0xff]
    %v1796 = vld [vmem:[%s5 + $0x350] sm:$0xff]
    %v1797 = vld [vmem:[%s5 + $0x358] sm:$0xff]
    %v1798 = vld [vmem:[%s5 + $0x360] sm:$0xff]
    %v1799 = vld [vmem:[%s5 + $0x368] sm:$0xff]
    %v1800 = vld [vmem:[%s5 + $0x370] sm:$0xff]
    %v1801 = vld [vmem:[%s5 + $0x378] sm:$0xff]
    %v1802 = vld [vmem:[%s5 + $0x380] sm:$0xff]
    %v1803 = vld [vmem:[%s5 + $0x388] sm:$0xff]
    %v1804 = vld [vmem:[%s5 + $0x390] sm:$0xff]
    %v1805 = vld [vmem:[%s5 + $0x398] sm:$0xff]
    %v1806 = vld [vmem:[%s5 + $0x3a0] sm:$0xff]
    %v1807 = vld [vmem:[%s5 + $0x3a8] sm:$0xff]
    %v1808 = vld [vmem:[%s5 + $0x3b0] sm:$0xff]
    %v1809 = vld [vmem:[%s5 + $0x3b8] sm:$0xff]
    %v1810 = vld [vmem:[%s5 + $0x3c0] sm:$0xff]
    %v1811 = vld [vmem:[%s5 + $0x3c8] sm:$0xff]
    %v1812 = vld [vmem:[%s5 + $0x3d0] sm:$0xff]
    %v1813 = vld [vmem:[%s5 + $0x3d8] sm:$0xff]
    %v1814 = vld [vmem:[%s5 + $0x3e0] sm:$0xff]
    %v1815 = vld [vmem:[%s5 + $0x3e8] sm:$0xff]
    %v1816 = vld [vmem:[%s5 + $0x3f0] sm:$0xff]
    %v1817 = vld [vmem:[%s5 + $0x3f8] sm:$0xff]
    %v1818 = vld [vmem:[%s5 + $0x400] sm:$0xff]
    %v1819 = vld [vmem:[%s5 + $0x408] sm:$0xff]
    %v1820 = vld [vmem:[%s5 + $0x410] sm:$0xff]
    %v1821 = vld [vmem:[%s5 + $0x418] sm:$0xff]
    %v1822 = vld [vmem:[%s5 + $0x420] sm:$0xff]
    %v1823 = vld [vmem:[%s5 + $0x428] sm:$0xff]
    %v1824 = vld [vmem:[%s5 + $0x430] sm:$0xff]
    %v1825 = vld [vmem:[%s5 + $0x438] sm:$0xff]
    %v1826 = vld [vmem:[%s5 + $0x440] sm:$0xff]
    %v1827 = vld [vmem:[%s5 + $0x448] sm:$0xff]
    %v1828 = vld [vmem:[%s5 + $0x450] sm:$0xff]
    %v1829 = vld [vmem:[%s5 + $0x458] sm:$0xff]
    %v1830 = vld [vmem:[%s5 + $0x460] sm:$0xff]
    %v1831 = vld [vmem:[%s5 + $0x468] sm:$0xff]
    %v1832 = vld [vmem:[%s5 + $0x470] sm:$0xff]
    %v1833 = vld [vmem:[%s5 + $0x478] sm:$0xff]
    %v1834 = vld [vmem:[%s5 + $0x480] sm:$0xff]
    %v1835 = vld [vmem:[%s5 + $0x488] sm:$0xff]
    %v1836 = vld [vmem:[%s5 + $0x490] sm:$0xff]
    %v1837 = vld [vmem:[%s5 + $0x498] sm:$0xff]
    %v1838 = vld [vmem:[%s5 + $0x4a0] sm:$0xff]
    %v1839 = vld [vmem:[%s5 + $0x4a8] sm:$0xff]
    %v1840 = vld [vmem:[%s5 + $0x4b0] sm:$0xff]
    %v1841 = vld [vmem:[%s5 + $0x4b8] sm:$0xff]
    %v1842 = vld [vmem:[%s5 + $0x4c0] sm:$0xff]
    %v1843 = vld [vmem:[%s5 + $0x4c8] sm:$0xff]
    %v1844 = vld [vmem:[%s5 + $0x4d0] sm:$0xff]
    %v1845 = vld [vmem:[%s5 + $0x4d8] sm:$0xff]
    %v1846 = vld [vmem:[%s5 + $0x4e0] sm:$0xff]
    %v1847 = vld [vmem:[%s5 + $0x4e8] sm:$0xff]
    %v1848 = vld [vmem:[%s5 + $0x4f0] sm:$0xff]
    %v1849 = vld [vmem:[%s5 + $0x4f8] sm:$0xff]
    %v1850 = vld [vmem:[%s5 + $0x500] sm:$0xff]
    %v1851 = vld [vmem:[%s5 + $0x508] sm:$0xff]
    %v1852 = vld [vmem:[%s5 + $0x510] sm:$0xff]
    %v1853 = vld [vmem:[%s5 + $0x518] sm:$0xff]
    %v1854 = vld [vmem:[%s5 + $0x520] sm:$0xff]
    %v1855 = vld [vmem:[%s5 + $0x528] sm:$0xff]
    %v1856 = vld [vmem:[%s5 + $0x530] sm:$0xff]
    %v1857 = vld [vmem:[%s5 + $0x538] sm:$0xff]
    %v1858 = vld [vmem:[%s5 + $0x540] sm:$0xff]
    %v1859 = vld [vmem:[%s5 + $0x548] sm:$0xff]
    %v1860 = vld [vmem:[%s5 + $0x550] sm:$0xff]
    %v1861 = vld [vmem:[%s5 + $0x558] sm:$0xff]
    %v1862 = vld [vmem:[%s5 + $0x560] sm:$0xff]
    %v1863 = vld [vmem:[%s5 + $0x568] sm:$0xff]
    %v1864 = vld [vmem:[%s5 + $0x570] sm:$0xff]
    %v1865 = vld [vmem:[%s5 + $0x578] sm:$0xff]
    %v1866 = vld [vmem:[%s5 + $0x580] sm:$0xff]
    %v1867 = vld [vmem:[%s5 + $0x588] sm:$0xff]
    %v1868 = vld [vmem:[%s5 + $0x590] sm:$0xff]
    %v1869 = vld [vmem:[%s5 + $0x598] sm:$0xff]
    %v1870 = vld [vmem:[%s5 + $0x5a0] sm:$0xff]
    %v1871 = vld [vmem:[%s5 + $0x5a8] sm:$0xff]
    %v1872 = vld [vmem:[%s5 + $0x5b0] sm:$0xff]
    %v1873 = vld [vmem:[%s5 + $0x5b8] sm:$0xff]
    %v1874 = vld [vmem:[%s5 + $0x5c0] sm:$0xff]
    %v1875 = vld [vmem:[%s5 + $0x5c8] sm:$0xff]
    %v1876 = vld [vmem:[%s5 + $0x5d0] sm:$0xff]
    %v1877 = vld [vmem:[%s5 + $0x5d8] sm:$0xff]
    %v1878 = vld [vmem:[%s5 + $0x5e0] sm:$0xff]
    %v1879 = vld [vmem:[%s5 + $0x5e8] sm:$0xff]
    %v1880 = vld [vmem:[%s5 + $0x5f0] sm:$0xff]
    %v1881 = vld [vmem:[%s5 + $0x5f8] sm:$0xff]
    %v1882 = vld [vmem:[%s5 + $0x600] sm:$0xff]
    %v1883 = vld [vmem:[%s5 + $0x608] sm:$0xff]
    %v1884 = vld [vmem:[%s5 + $0x610] sm:$0xff]
    %v1885 = vld [vmem:[%s5 + $0x618] sm:$0xff]
    %v1886 = vld [vmem:[%s5 + $0x620] sm:$0xff]
    %v1887 = vld [vmem:[%s5 + $0x628] sm:$0xff]
    %v1888 = vld [vmem:[%s5 + $0x630] sm:$0xff]
    %v1889 = vld [vmem:[%s5 + $0x638] sm:$0xff]
    %v1890 = vld [vmem:[%s5 + $0x640] sm:$0xff]
    %v1891 = vld [vmem:[%s5 + $0x648] sm:$0xff]
    %v1892 = vld [vmem:[%s5 + $0x650] sm:$0xff]
    %v1893 = vld [vmem:[%s5 + $0x658] sm:$0xff]
    %v1894 = vld [vmem:[%s5 + $0x660] sm:$0xff]
    %v1895 = vld [vmem:[%s5 + $0x668] sm:$0xff]
    %v1896 = vld [vmem:[%s5 + $0x670] sm:$0xff]
    %v1897 = vld [vmem:[%s5 + $0x678] sm:$0xff]
    %v1898 = vld [vmem:[%s5 + $0x680] sm:$0xff]
    %v1899 = vld [vmem:[%s5 + $0x688] sm:$0xff]
    %v1900 = vld [vmem:[%s5 + $0x690] sm:$0xff]
    %v1901 = vld [vmem:[%s5 + $0x698] sm:$0xff]
    %v1902 = vld [vmem:[%s5 + $0x6a0] sm:$0xff]
    %v1903 = vld [vmem:[%s5 + $0x6a8] sm:$0xff]
    %v1904 = vld [vmem:[%s5 + $0x6b0] sm:$0xff]
    %v1905 = vld [vmem:[%s5 + $0x6b8] sm:$0xff]
    %v1906 = vld [vmem:[%s5 + $0x6c0] sm:$0xff]
    %v1907 = vld [vmem:[%s5 + $0x6c8] sm:$0xff]
    %v1908 = vld [vmem:[%s5 + $0x6d0] sm:$0xff]
    %v1909 = vld [vmem:[%s5 + $0x6d8] sm:$0xff]
    %v1910 = vld [vmem:[%s5 + $0x6e0] sm:$0xff]
    %v1911 = vld [vmem:[%s5 + $0x6e8] sm:$0xff]
    %v1912 = vld [vmem:[%s5 + $0x6f0] sm:$0xff]
    %v1913 = vld [vmem:[%s5 + $0x6f8] sm:$0xff]
    %v1914 = vld [vmem:[%s5 + $0x700] sm:$0xff]
    %v1915 = vld [vmem:[%s5 + $0x708] sm:$0xff]
    %v1916 = vld [vmem:[%s5 + $0x710] sm:$0xff]
    %v1917 = vld [vmem:[%s5 + $0x718] sm:$0xff]
    %v1918 = vld [vmem:[%s5 + $0x720] sm:$0xff]
    %v1919 = vld [vmem:[%s5 + $0x728] sm:$0xff]
    %v1920 = vld [vmem:[%s5 + $0x730] sm:$0xff]
    %v1921 = vld [vmem:[%s5 + $0x738] sm:$0xff]
    %v1922 = vld [vmem:[%s5 + $0x740] sm:$0xff]
    %v1923 = vld [vmem:[%s5 + $0x748] sm:$0xff]
    %v1924 = vld [vmem:[%s5 + $0x750] sm:$0xff]
    %v1925 = vld [vmem:[%s5 + $0x758] sm:$0xff]
    %v1926 = vld [vmem:[%s5 + $0x760] sm:$0xff]
    %v1927 = vld [vmem:[%s5 + $0x768] sm:$0xff]
    %v1928 = vld [vmem:[%s5 + $0x770] sm:$0xff]
    %v1929 = vld [vmem:[%s5 + $0x778] sm:$0xff]
    %v1930 = vld [vmem:[%s5 + $0x780] sm:$0xff]
    %v1931 = vld [vmem:[%s5 + $0x788] sm:$0xff]
    %v1932 = vld [vmem:[%s5 + $0x790] sm:$0xff]
    %v1933 = vld [vmem:[%s5 + $0x798] sm:$0xff]
    %v1934 = vld [vmem:[%s5 + $0x7a0] sm:$0xff]
    %v1935 = vld [vmem:[%s5 + $0x7a8] sm:$0xff]
    %v1936 = vld [vmem:[%s5 + $0x7b0] sm:$0xff]
    %v1937 = vld [vmem:[%s5 + $0x7b8] sm:$0xff]
    %v1938 = vld [vmem:[%s5 + $0x7c0] sm:$0xff]
    %v1939 = vld [vmem:[%s5 + $0x7c8] sm:$0xff]
    %v1940 = vld [vmem:[%s5 + $0x7d0] sm:$0xff]
    %v1941 = vld [vmem:[%s5 + $0x7d8] sm:$0xff]
    %v1942 = vld [vmem:[%s5 + $0x7e0] sm:$0xff]
    %v1943 = vld [vmem:[%s5 + $0x7e8] sm:$0xff]
    %v1944 = vld [vmem:[%s5 + $0x7f0] sm:$0xff]
    %v1945 = vld [vmem:[%s5 + $0x7f8] sm:$0xff]
    %v1946 = vld [vmem:[%s5 + $0x800] sm:$0xff]
    %v1947 = vld [vmem:[%s5 + $0x808] sm:$0xff]
    %v1948 = vld [vmem:[%s5 + $0x810] sm:$0xff]
    %v1949 = vld [vmem:[%s5 + $0x818] sm:$0xff]
    %v1950 = vld [vmem:[%s5 + $0x820] sm:$0xff]
    %v1951 = vld [vmem:[%s5 + $0x828] sm:$0xff]
    %v1952 = vld [vmem:[%s5 + $0x830] sm:$0xff]
    %v1953 = vld [vmem:[%s5 + $0x838] sm:$0xff]
    %v1954 = vld [vmem:[%s5 + $0x840] sm:$0xff]
    %v1955 = vld [vmem:[%s5 + $0x848] sm:$0xff]
    %v1956 = vld [vmem:[%s5 + $0x850] sm:$0xff]
    %v1957 = vld [vmem:[%s5 + $0x858] sm:$0xff]
    %v1958 = vld [vmem:[%s5 + $0x860] sm:$0xff]
    %v1959 = vld [vmem:[%s5 + $0x868] sm:$0xff]
    %v1960 = vld [vmem:[%s5 + $0x870] sm:$0xff]
    %v1961 = vld [vmem:[%s5 + $0x878] sm:$0xff]
    %v1962 = vld [vmem:[%s5 + $0x880] sm:$0xff]
    %v1963 = vld [vmem:[%s5 + $0x888] sm:$0xff]
    %v1964 = vld [vmem:[%s5 + $0x890] sm:$0xff]
    %v1965 = vld [vmem:[%s5 + $0x898] sm:$0xff]
    %v1966 = vld [vmem:[%s5 + $0x8a0] sm:$0xff]
    %v1967 = vld [vmem:[%s5 + $0x8a8] sm:$0xff]
    %v1968 = vld [vmem:[%s5 + $0x8b0] sm:$0xff]
    %v1969 = vld [vmem:[%s5 + $0x8b8] sm:$0xff]
    %v1970 = vld [vmem:[%s5 + $0x8c0] sm:$0xff]
    %v1971 = vld [vmem:[%s5 + $0x8c8] sm:$0xff]
    %v1972 = vld [vmem:[%s5 + $0x8d0] sm:$0xff]
    %v1973 = vld [vmem:[%s5 + $0x8d8] sm:$0xff]
    %v1974 = vld [vmem:[%s5 + $0x8e0] sm:$0xff]
    %v1975 = vld [vmem:[%s5 + $0x8e8] sm:$0xff]
    %v1976 = vld [vmem:[%s5 + $0x8f0] sm:$0xff]
    %v1977 = vld [vmem:[%s5 + $0x8f8] sm:$0xff]
    %v1978 = vld [vmem:[%s5 + $0x900] sm:$0xff]
    %v1979 = vld [vmem:[%s5 + $0x908] sm:$0xff]
    %v1980 = vld [vmem:[%s5 + $0x910] sm:$0xff]
    %v1981 = vld [vmem:[%s5 + $0x918] sm:$0xff]
    %v1982 = vld [vmem:[%s5 + $0x920] sm:$0xff]
    %v1983 = vld [vmem:[%s5 + $0x928] sm:$0xff]
    %v1984 = vld [vmem:[%s5 + $0x930] sm:$0xff]
    %v1985 = vld [vmem:[%s5 + $0x938] sm:$0xff]
    %v1986 = vld [vmem:[%s5 + $0x940] sm:$0xff]
    %v1987 = vld [vmem:[%s5 + $0x948] sm:$0xff]
    %v1988 = vld [vmem:[%s5 + $0x950] sm:$0xff]
    %v1989 = vld [vmem:[%s5 + $0x958] sm:$0xff]
    %v1990 = vld [vmem:[%s5 + $0x960] sm:$0xff]
    %v1991 = vld [vmem:[%s5 + $0x968] sm:$0xff]
    %v1992 = vld [vmem:[%s5 + $0x970] sm:$0xff]
    %v1993 = vld [vmem:[%s5 + $0x978] sm:$0xff]
    %v1994 = vld [vmem:[%s5 + $0x980] sm:$0xff]
    %v1995 = vld [vmem:[%s5 + $0x988] sm:$0xff]
    %v1996 = vld [vmem:[%s5 + $0x990] sm:$0xff]
    %v1997 = vld [vmem:[%s5 + $0x998] sm:$0xff]
    %v1998 = vld [vmem:[%s5 + $0x9a0] sm:$0xff]
    %v1999 = vld [vmem:[%s5 + $0x9a8] sm:$0xff]
    %v2000 = vld [vmem:[%s5 + $0x9b0] sm:$0xff]
    %v2001 = vld [vmem:[%s5 + $0x9b8] sm:$0xff]
    %v2002 = vld [vmem:[%s5 + $0x9c0] sm:$0xff]
    %v2003 = vld [vmem:[%s5 + $0x9c8] sm:$0xff]
    %v2004 = vld [vmem:[%s5 + $0x9d0] sm:$0xff]
    %v2005 = vld [vmem:[%s5 + $0x9d8] sm:$0xff]
    %v2006 = vld [vmem:[%s5 + $0x9e0] sm:$0xff]
    %v2007 = vld [vmem:[%s5 + $0x9e8] sm:$0xff]
    %v2008 = vld [vmem:[%s5 + $0x9f0] sm:$0xff]
    %v2009 = vld [vmem:[%s5 + $0x9f8] sm:$0xff]
    %v2010 = vld [vmem:[%s5 + $0xa00] sm:$0xff]
    %v2011 = vld [vmem:[%s5 + $0xa08] sm:$0xff]
    %v2012 = vld [vmem:[%s5 + $0xa10] sm:$0xff]
    %v2013 = vld [vmem:[%s5 + $0xa18] sm:$0xff]
    %v2014 = vld [vmem:[%s5 + $0xa20] sm:$0xff]
    %v2015 = vld [vmem:[%s5 + $0xa28] sm:$0xff]
    %v2016 = vld [vmem:[%s5 + $0xa30] sm:$0xff]
    %v2017 = vld [vmem:[%s5 + $0xa38] sm:$0xff]
    %v2018 = vld [vmem:[%s5 + $0xa40] sm:$0xff]
    %v2019 = vld [vmem:[%s5 + $0xa48] sm:$0xff]
    %v2020 = vld [vmem:[%s5 + $0xa50] sm:$0xff]
    %v2021 = vld [vmem:[%s5 + $0xa58] sm:$0xff]
    %v2022 = vld [vmem:[%s5 + $0xa60] sm:$0xff]
    %v2023 = vld [vmem:[%s5 + $0xa68] sm:$0xff]
    %v2024 = vld [vmem:[%s5 + $0xa70] sm:$0xff]
    %v2025 = vld [vmem:[%s5 + $0xa78] sm:$0xff]
    %v2026 = vld [vmem:[%s5 + $0xa80] sm:$0xff]
    %v2027 = vld [vmem:[%s5 + $0xa88] sm:$0xff]
    %v2028 = vld [vmem:[%s5 + $0xa90] sm:$0xff]
    %v2029 = vld [vmem:[%s5 + $0xa98] sm:$0xff]
    %v2030 = vld [vmem:[%s5 + $0xaa0] sm:$0xff]
    %v2031 = vld [vmem:[%s5 + $0xaa8] sm:$0xff]
    %v2032 = vld [vmem:[%s5 + $0xab0] sm:$0xff]
    %v2033 = vld [vmem:[%s5 + $0xab8] sm:$0xff]
    %v2034 = vld [vmem:[%s5 + $0xac0] sm:$0xff]
    %v2035 = vld [vmem:[%s5 + $0xac8] sm:$0xff]
    %v2036 = vld [vmem:[%s5 + $0xad0] sm:$0xff]
    %v2037 = vld [vmem:[%s5 + $0xad8] sm:$0xff]
    %v2038 = vld [vmem:[%s5 + $0xae0] sm:$0xff]
    %v2039 = vld [vmem:[%s5 + $0xae8] sm:$0xff]
    %v2040 = vld [vmem:[%s5 + $0xaf0] sm:$0xff]
    %v2041 = vld [vmem:[%s5 + $0xaf8] sm:$0xff]
    %v2042 = vld [vmem:[%s5 + $0xb00] sm:$0xff]
    %v2043 = vld [vmem:[%s5 + $0xb08] sm:$0xff]
    %v2044 = vld [vmem:[%s5 + $0xb10] sm:$0xff]
    %v2045 = vld [vmem:[%s5 + $0xb18] sm:$0xff]
    %v2046 = vld [vmem:[%s5 + $0xb20] sm:$0xff]
    %v2047 = vld [vmem:[%s5 + $0xb28] sm:$0xff]
    %v2048 = vld [vmem:[%s5 + $0xb30] sm:$0xff]
    %v2049 = vld [vmem:[%s5 + $0xb38] sm:$0xff]
    %v2050 = vld [vmem:[%s5 + $0xb40] sm:$0xff]
    %v2051 = vld [vmem:[%s5 + $0xb48] sm:$0xff]
    %v2052 = vld [vmem:[%s5 + $0xb50] sm:$0xff]
    %v2053 = vld [vmem:[%s5 + $0xb58] sm:$0xff]
    %v2054 = vld [vmem:[%s5 + $0xb60] sm:$0xff]
    %v2055 = vld [vmem:[%s5 + $0xb68] sm:$0xff]
    %v2056 = vld [vmem:[%s5 + $0xb70] sm:$0xff]
    %v2057 = vld [vmem:[%s5 + $0xb78] sm:$0xff]
    %v2058 = vld [vmem:[%s5 + $0xb80] sm:$0xff]
    %v2059 = vld [vmem:[%s5 + $0xb88] sm:$0xff]
    %v2060 = vld [vmem:[%s5 + $0xb90] sm:$0xff]
    %v2061 = vld [vmem:[%s5 + $0xb98] sm:$0xff]
    %v2062 = vld [vmem:[%s5 + $0xba0] sm:$0xff]
    %v2063 = vld [vmem:[%s5 + $0xba8] sm:$0xff]
    %v2064 = vld [vmem:[%s5 + $0xbb0] sm:$0xff]
    %v2065 = vld [vmem:[%s5 + $0xbb8] sm:$0xff]
    %v2066 = vld [vmem:[%s5 + $0xbc0] sm:$0xff]
    %v2067 = vld [vmem:[%s5 + $0xbc8] sm:$0xff]
    %v2068 = vld [vmem:[%s5 + $0xbd0] sm:$0xff]
    %v2069 = vld [vmem:[%s5 + $0xbd8] sm:$0xff]
    %v2070 = vld [vmem:[%s5 + $0xbe0] sm:$0xff]
    %v2071 = vld [vmem:[%s5 + $0xbe8] sm:$0xff]
    %v2072 = vld [vmem:[%s5 + $0xbf0] sm:$0xff]
    %v2073 = vld [vmem:[%s5 + $0xbf8] sm:$0xff]
    %2074 = vmatprep.subr.mxu0 %v1691
    %2075 = vmatpush1.msra.mxu0 %v1690
    %2076 = vmatprep.subr.mxu0 %v1695
    %2077 = vmatpush1.msra.mxu0 %v1694
    %2078 = vmatprep.subr.mxu0 %v1699
    %2079 = vmatpush1.msra.mxu0 %v1698
    %2080 = vmatprep.subr.mxu0 %v1703
    %2081 = vmatpush1.msra.mxu0 %v1702
    %2082 = vmatprep.subr.mxu0 %v1707
    %2083 = vmatpush1.msra.mxu0 %v1706
    %2084 = vmatprep.subr.mxu0 %v1711
    %2085 = vmatpush1.msra.mxu0 %v1710
    %2086 = vmatprep.subr.mxu0 %v1715
    %2087 = vmatpush1.msra.mxu0 %v1714
    %2088 = vmatprep.subr.mxu0 %v1719
    %2089 = vmatpush1.msra.mxu0 %v1718
    %2090 = vmatprep.subr.mxu0 %v1723
    %2091 = vmatpush1.msra.mxu0 %v1722
    %2092 = vmatprep.subr.mxu0 %v1727
    %2093 = vmatpush1.msra.mxu0 %v1726
    %2094 = vmatprep.subr.mxu0 %v1731
    %2095 = vmatpush1.msra.mxu0 %v1730
    %2096 = vmatprep.subr.mxu0 %v1735
    %2097 = vmatpush1.msra.mxu0 %v1734
    %2098 = vmatprep.subr.mxu0 %v1739
    %2099 = vmatpush1.msra.mxu0 %v1738
    %2100 = vmatprep.subr.mxu0 %v1743
    %2101 = vmatpush1.msra.mxu0 %v1742
    %2102 = vmatprep.subr.mxu0 %v1747
    %2103 = vmatpush1.msra.mxu0 %v1746
    %2104 = vmatprep.subr.mxu0 %v1751
    %2105 = vmatpush1.msra.mxu0 %v1750
    %2106 = vmatprep.subr.mxu0 %v1755
    %2107 = vmatpush1.msra.mxu0 %v1754
    %2108 = vmatprep.subr.mxu0 %v1759
    %2109 = vmatpush1.msra.mxu0 %v1758
    %2110 = vmatprep.subr.mxu0 %v1763
    %2111 = vmatpush1.msra.mxu0 %v1762
    %2112 = vmatprep.subr.mxu0 %v1767
    %2113 = vmatpush1.msra.mxu0 %v1766
    %2114 = vmatprep.subr.mxu0 %v1771
    %2115 = vmatpush1.msra.mxu0 %v1770
    %2116 = vmatprep.subr.mxu0 %v1775
    %2117 = vmatpush1.msra.mxu0 %v1774
    %2118 = vmatprep.subr.mxu0 %v1779
    %2119 = vmatpush1.msra.mxu0 %v1778
    %2120 = vmatprep.subr.mxu0 %v1783
    %2121 = vmatpush1.msra.mxu0 %v1782
    %2122 = vmatprep.subr.mxu0 %v1787
    %2123 = vmatpush1.msra.mxu0 %v1786
    %2124 = vmatprep.subr.mxu0 %v1791
    %2125 = vmatpush1.msra.mxu0 %v1790
    %2126 = vmatprep.subr.mxu0 %v1795
    %2127 = vmatpush1.msra.mxu0 %v1794
    %2128 = vmatprep.subr.mxu0 %v1799
    %2129 = vmatpush1.msra.mxu0 %v1798
    %2130 = vmatprep.subr.mxu0 %v1803
    %2131 = vmatpush1.msra.mxu0 %v1802
    %2132 = vmatprep.subr.mxu0 %v1807
    %2133 = vmatpush1.msra.mxu0 %v1806
    %2134 = vmatprep.subr.mxu0 %v1811
    %2135 = vmatpush1.msra.mxu0 %v1810
    %2136 = vmatprep.subr.mxu0 %v1815
    %2137 = vmatpush1.msra.mxu0 %v1814
    %2138 = vmatprep.mubr.f32.mxu0 %v1685
    %2139 = vmatmul.mubr.f32.gmra.mrb[0].mxu0 %v1684
    %v2140 = vpop.f32.mrb[0].mxu0
    %v2141 = vadd.f32 0.0, %v2140
    %v2142 = vpop.f32.mrb[0].mxu0
    %v2143 = vadd.f32 0.0, %v2142
    %2144 = vdwg.mxu0
    %2145 = vmatprep.subr.mxu0 %v1819
    %2146 = vmatpush1.msra.mxu0 %v1818
    %2147 = vmatprep.subr.mxu0 %v1823
    %2148 = vmatpush1.msra.mxu0 %v1822
    %2149 = vmatprep.subr.mxu0 %v1827
    %2150 = vmatpush1.msra.mxu0 %v1826
    %2151 = vmatprep.subr.mxu0 %v1831
    %2152 = vmatpush1.msra.mxu0 %v1830
    %2153 = vmatprep.subr.mxu0 %v1835
    %2154 = vmatpush1.msra.mxu0 %v1834
    %2155 = vmatprep.subr.mxu0 %v1839
    %2156 = vmatpush1.msra.mxu0 %v1838
    %2157 = vmatprep.subr.mxu0 %v1843
    %2158 = vmatpush1.msra.mxu0 %v1842
    %2159 = vmatprep.subr.mxu0 %v1847
    %2160 = vmatpush1.msra.mxu0 %v1846
    %2161 = vmatprep.subr.mxu0 %v1851
    %2162 = vmatpush1.msra.mxu0 %v1850
    %2163 = vmatprep.subr.mxu0 %v1855
    %2164 = vmatpush1.msra.mxu0 %v1854
    %2165 = vmatprep.subr.mxu0 %v1859
    %2166 = vmatpush1.msra.mxu0 %v1858
    %2167 = vmatprep.subr.mxu0 %v1863
    %2168 = vmatpush1.msra.mxu0 %v1862
    %2169 = vmatprep.subr.mxu0 %v1867
    %2170 = vmatpush1.msra.mxu0 %v1866
    %2171 = vmatprep.subr.mxu0 %v1871
    %2172 = vmatpush1.msra.mxu0 %v1870
    %2173 = vmatprep.subr.mxu0 %v1875
    %2174 = vmatpush1.msra.mxu0 %v1874
    %2175 = vmatprep.subr.mxu0 %v1879
    %2176 = vmatpush1.msra.mxu0 %v1878
    %2177 = vmatprep.subr.mxu0 %v1883
    %2178 = vmatpush1.msra.mxu0 %v1882
    %2179 = vmatprep.subr.mxu0 %v1887
    %2180 = vmatpush1.msra.mxu0 %v1886
    %2181 = vmatprep.subr.mxu0 %v1891
    %2182 = vmatpush1.msra.mxu0 %v1890
    %2183 = vmatprep.subr.mxu0 %v1895
    %2184 = vmatpush1.msra.mxu0 %v1894
    %2185 = vmatprep.subr.mxu0 %v1899
    %2186 = vmatpush1.msra.mxu0 %v1898
    %2187 = vmatprep.subr.mxu0 %v1903
    %2188 = vmatpush1.msra.mxu0 %v1902
    %2189 = vmatprep.subr.mxu0 %v1907
    %2190 = vmatpush1.msra.mxu0 %v1906
    %2191 = vmatprep.subr.mxu0 %v1911
    %2192 = vmatpush1.msra.mxu0 %v1910
    %2193 = vmatprep.subr.mxu0 %v1915
    %2194 = vmatpush1.msra.mxu0 %v1914
    %2195 = vmatprep.subr.mxu0 %v1919
    %2196 = vmatpush1.msra.mxu0 %v1918
    %2197 = vmatprep.subr.mxu0 %v1923
    %2198 = vmatpush1.msra.mxu0 %v1922
    %2199 = vmatprep.subr.mxu0 %v1927
    %2200 = vmatpush1.msra.mxu0 %v1926
    %2201 = vmatprep.subr.mxu0 %v1931
    %2202 = vmatpush1.msra.mxu0 %v1930
    %2203 = vmatprep.subr.mxu0 %v1935
    %2204 = vmatpush1.msra.mxu0 %v1934
    %2205 = vmatprep.subr.mxu0 %v1939
    %2206 = vmatpush1.msra.mxu0 %v1938
    %2207 = vmatprep.subr.mxu0 %v1943
    %2208 = vmatpush1.msra.mxu0 %v1942
    %2209 = vmatprep.mubr.f32.mxu0 %v1687
    %2210 = vmatmul.mubr.f32.gmra.mrb[0].mxu0 %v1686
    %v2211 = vpop.f32.mrb[0].mxu0
    %v2212 = vadd.f32 %v2141, %v2211
    %v2213 = vpop.f32.mrb[0].mxu0
    %v2214 = vadd.f32 %v2143, %v2213
    %2215 = vdwg.mxu0
    %2216 = vmatprep.subr.mxu0 %v1947
    %2217 = vmatpush1.msra.mxu0 %v1946
    %2218 = vmatprep.subr.mxu0 %v1951
    %2219 = vmatpush1.msra.mxu0 %v1950
    %2220 = vmatprep.subr.mxu0 %v1955
    %2221 = vmatpush1.msra.mxu0 %v1954
    %2222 = vmatprep.subr.mxu0 %v1959
    %2223 = vmatpush1.msra.mxu0 %v1958
    %2224 = vmatprep.subr.mxu0 %v1963
    %2225 = vmatpush1.msra.mxu0 %v1962
    %2226 = vmatprep.subr.mxu0 %v1967
    %2227 = vmatpush1.msra.mxu0 %v1966
    %2228 = vmatprep.subr.mxu0 %v1971
    %2229 = vmatpush1.msra.mxu0 %v1970
    %2230 = vmatprep.subr.mxu0 %v1975
    %2231 = vmatpush1.msra.mxu0 %v1974
    %2232 = vmatprep.subr.mxu0 %v1979
    %2233 = vmatpush1.msra.mxu0 %v1978
    %2234 = vmatprep.subr.mxu0 %v1983
    %2235 = vmatpush1.msra.mxu0 %v1982
    %2236 = vmatprep.subr.mxu0 %v1987
    %2237 = vmatpush1.msra.mxu0 %v1986
    %2238 = vmatprep.subr.mxu0 %v1991
    %2239 = vmatpush1.msra.mxu0 %v1990
    %2240 = vmatprep.subr.mxu0 %v1995
    %2241 = vmatpush1.msra.mxu0 %v1994
    %2242 = vmatprep.subr.mxu0 %v1999
    %2243 = vmatpush1.msra.mxu0 %v1998
    %2244 = vmatprep.subr.mxu0 %v2003
    %2245 = vmatpush1.msra.mxu0 %v2002
    %2246 = vmatprep.subr.mxu0 %v2007
    %2247 = vmatpush1.msra.mxu0 %v2006
    %2248 = vmatprep.subr.mxu0 %v2011
    %2249 = vmatpush1.msra.mxu0 %v2010
    %2250 = vmatprep.subr.mxu0 %v2015
    %2251 = vmatpush1.msra.mxu0 %v2014
    %2252 = vmatprep.subr.mxu0 %v2019
    %2253 = vmatpush1.msra.mxu0 %v2018
    %2254 = vmatprep.subr.mxu0 %v2023
    %2255 = vmatpush1.msra.mxu0 %v2022
    %2256 = vmatprep.subr.mxu0 %v2027
    %2257 = vmatpush1.msra.mxu0 %v2026
    %2258 = vmatprep.subr.mxu0 %v2031
    %2259 = vmatpush1.msra.mxu0 %v2030
    %2260 = vmatprep.subr.mxu0 %v2035
    %2261 = vmatpush1.msra.mxu0 %v2034
    %2262 = vmatprep.subr.mxu0 %v2039
    %2263 = vmatpush1.msra.mxu0 %v2038
    %2264 = vmatprep.subr.mxu0 %v2043
    %2265 = vmatpush1.msra.mxu0 %v2042
    %2266 = vmatprep.subr.mxu0 %v2047
    %2267 = vmatpush1.msra.mxu0 %v2046
    %2268 = vmatprep.subr.mxu0 %v2051
    %2269 = vmatpush1.msra.mxu0 %v2050
    %2270 = vmatprep.subr.mxu0 %v2055
    %2271 = vmatpush1.msra.mxu0 %v2054
    %2272 = vmatprep.subr.mxu0 %v2059
    %2273 = vmatpush1.msra.mxu0 %v2058
    %2274 = vmatprep.subr.mxu0 %v2063
    %2275 = vmatpush1.msra.mxu0 %v2062
    %2276 = vmatprep.subr.mxu0 %v2067
    %2277 = vmatpush1.msra.mxu0 %v2066
    %2278 = vmatprep.subr.mxu0 %v2071
    %2279 = vmatpush1.msra.mxu0 %v2070
    %2280 = vmatprep.mubr.f32.mxu0 %v1689
    %2281 = vmatmul.mubr.f32.gmra.mrb[0].mxu0 %v1688
    %v2282 = vpop.f32.mrb[0].mxu0
    %v2283 = vadd.f32 %v2212, %v2282
    %v2284 = vpop.f32.mrb[0].mxu0
    %v2285 = vadd.f32 %v2214, %v2284
    %2286 = vdwg.mxu0
    %2287 = vmatprep.subr.mxu0 %v1693
    %2288 = vmatpush1.msra.mxu0 %v1692
    %2289 = vmatprep.subr.mxu0 %v1697
    %2290 = vmatpush1.msra.mxu0 %v1696
    %2291 = vmatprep.subr.mxu0 %v1701
    %2292 = vmatpush1.msra.mxu0 %v1700
    %2293 = vmatprep.subr.mxu0 %v1705
    %2294 = vmatpush1.msra.mxu0 %v1704
    %2295 = vmatprep.subr.mxu0 %v1709
    %2296 = vmatpush1.msra.mxu0 %v1708
    %2297 = vmatprep.subr.mxu0 %v1713
    %2298 = vmatpush1.msra.mxu0 %v1712
    %2299 = vmatprep.subr.mxu0 %v1717
    %2300 = vmatpush1.msra.mxu0 %v1716
    %2301 = vmatprep.subr.mxu0 %v1721
    %2302 = vmatpush1.msra.mxu0 %v1720
    %2303 = vmatprep.subr.mxu0 %v1725
    %2304 = vmatpush1.msra.mxu0 %v1724
    %2305 = vmatprep.subr.mxu0 %v1729
    %2306 = vmatpush1.msra.mxu0 %v1728
    %2307 = vmatprep.subr.mxu0 %v1733
    %2308 = vmatpush1.msra.mxu0 %v1732
    %2309 = vmatprep.subr.mxu0 %v1737
    %2310 = vmatpush1.msra.mxu0 %v1736
    %2311 = vmatprep.subr.mxu0 %v1741
    %2312 = vmatpush1.msra.mxu0 %v1740
    %2313 = vmatprep.subr.mxu0 %v1745
    %2314 = vmatpush1.msra.mxu0 %v1744
    %2315 = vmatprep.subr.mxu0 %v1749
    %2316 = vmatpush1.msra.mxu0 %v1748
    %2317 = vmatprep.subr.mxu0 %v1753
    %2318 = vmatpush1.msra.mxu0 %v1752
    %2319 = vmatprep.subr.mxu0 %v1757
    %2320 = vmatpush1.msra.mxu0 %v1756
    %2321 = vmatprep.subr.mxu0 %v1761
    %2322 = vmatpush1.msra.mxu0 %v1760
    %2323 = vmatprep.subr.mxu0 %v1765
    %2324 = vmatpush1.msra.mxu0 %v1764
    %2325 = vmatprep.subr.mxu0 %v1769
    %2326 = vmatpush1.msra.mxu0 %v1768
    %2327 = vmatprep.subr.mxu0 %v1773
    %2328 = vmatpush1.msra.mxu0 %v1772
    %2329 = vmatprep.subr.mxu0 %v1777
    %2330 = vmatpush1.msra.mxu0 %v1776
    %2331 = vmatprep.subr.mxu0 %v1781
    %2332 = vmatpush1.msra.mxu0 %v1780
    %2333 = vmatprep.subr.mxu0 %v1785
    %2334 = vmatpush1.msra.mxu0 %v1784
    %2335 = vmatprep.subr.mxu0 %v1789
    %2336 = vmatpush1.msra.mxu0 %v1788
    %2337 = vmatprep.subr.mxu0 %v1793
    %2338 = vmatpush1.msra.mxu0 %v1792
    %2339 = vmatprep.subr.mxu0 %v1797
    %2340 = vmatpush1.msra.mxu0 %v1796
    %2341 = vmatprep.subr.mxu0 %v1801
    %2342 = vmatpush1.msra.mxu0 %v1800
    %2343 = vmatprep.subr.mxu0 %v1805
    %2344 = vmatpush1.msra.mxu0 %v1804
    %2345 = vmatprep.subr.mxu0 %v1809
    %2346 = vmatpush1.msra.mxu0 %v1808
    %2347 = vmatprep.subr.mxu0 %v1813
    %2348 = vmatpush1.msra.mxu0 %v1812
    %2349 = vmatprep.subr.mxu0 %v1817
    %2350 = vmatpush1.msra.mxu0 %v1816
    %2351 = vmatprep.mubr.f32.mxu0 %v1685
    %2352 = vmatmul.mubr.f32.gmra.mrb[0].mxu0 %v1684
    %v2353 = vpop.f32.mrb[0].mxu0
    %v2354 = vadd.f32 0.0, %v2353
    %v2355 = vpop.f32.mrb[0].mxu0
    %v2356 = vadd.f32 0.0, %v2355
    %2357 = vdwg.mxu0
    %2358 = vmatprep.subr.mxu0 %v1821
    %2359 = vmatpush1.msra.mxu0 %v1820
    %2360 = vmatprep.subr.mxu0 %v1825
    %2361 = vmatpush1.msra.mxu0 %v1824
    %2362 = vmatprep.subr.mxu0 %v1829
    %2363 = vmatpush1.msra.mxu0 %v1828
    %2364 = vmatprep.subr.mxu0 %v1833
    %2365 = vmatpush1.msra.mxu0 %v1832
    %2366 = vmatprep.subr.mxu0 %v1837
    %2367 = vmatpush1.msra.mxu0 %v1836
    %2368 = vmatprep.subr.mxu0 %v1841
    %2369 = vmatpush1.msra.mxu0 %v1840
    %2370 = vmatprep.subr.mxu0 %v1845
    %2371 = vmatpush1.msra.mxu0 %v1844
    %2372 = vmatprep.subr.mxu0 %v1849
    %2373 = vmatpush1.msra.mxu0 %v1848
    %2374 = vmatprep.subr.mxu0 %v1853
    %2375 = vmatpush1.msra.mxu0 %v1852
    %2376 = vmatprep.subr.mxu0 %v1857
    %2377 = vmatpush1.msra.mxu0 %v1856
    %2378 = vmatprep.subr.mxu0 %v1861
    %2379 = vmatpush1.msra.mxu0 %v1860
    %2380 = vmatprep.subr.mxu0 %v1865
    %2381 = vmatpush1.msra.mxu0 %v1864
    %2382 = vmatprep.subr.mxu0 %v1869
    %2383 = vmatpush1.msra.mxu0 %v1868
    %2384 = vmatprep.subr.mxu0 %v1873
    %2385 = vmatpush1.msra.mxu0 %v1872
    %2386 = vmatprep.subr.mxu0 %v1877
    %2387 = vmatpush1.msra.mxu0 %v1876
    %2388 = vmatprep.subr.mxu0 %v1881
    %2389 = vmatpush1.msra.mxu0 %v1880
    %2390 = vmatprep.subr.mxu0 %v1885
    %2391 = vmatpush1.msra.mxu0 %v1884
    %2392 = vmatprep.subr.mxu0 %v1889
    %2393 = vmatpush1.msra.mxu0 %v1888
    %2394 = vmatprep.subr.mxu0 %v1893
    %2395 = vmatpush1.msra.mxu0 %v1892
    %2396 = vmatprep.subr.mxu0 %v1897
    %2397 = vmatpush1.msra.mxu0 %v1896
    %2398 = vmatprep.subr.mxu0 %v1901
    %2399 = vmatpush1.msra.mxu0 %v1900
    %2400 = vmatprep.subr.mxu0 %v1905
    %2401 = vmatpush1.msra.mxu0 %v1904
    %2402 = vmatprep.subr.mxu0 %v1909
    %2403 = vmatpush1.msra.mxu0 %v1908
    %2404 = vmatprep.subr.mxu0 %v1913
    %2405 = vmatpush1.msra.mxu0 %v1912
    %2406 = vmatprep.subr.mxu0 %v1917
    %2407 = vmatpush1.msra.mxu0 %v1916
    %2408 = vmatprep.subr.mxu0 %v1921
    %2409 = vmatpush1.msra.mxu0 %v1920
    %2410 = vmatprep.subr.mxu0 %v1925
    %2411 = vmatpush1.msra.mxu0 %v1924
    %2412 = vmatprep.subr.mxu0 %v1929
    %2413 = vmatpush1.msra.mxu0 %v1928
    %2414 = vmatprep.subr.mxu0 %v1933
    %2415 = vmatpush1.msra.mxu0 %v1932
    %2416 = vmatprep.subr.mxu0 %v1937
    %2417 = vmatpush1.msra.mxu0 %v1936
    %2418 = vmatprep.subr.mxu0 %v1941
    %2419 = vmatpush1.msra.mxu0 %v1940
    %2420 = vmatprep.subr.mxu0 %v1945
    %2421 = vmatpush1.msra.mxu0 %v1944
    %2422 = vmatprep.mubr.f32.mxu0 %v1687
    %2423 = vmatmul.mubr.f32.gmra.mrb[0].mxu0 %v1686
    %v2424 = vpop.f32.mrb[0].mxu0
    %v2425 = vadd.f32 %v2354, %v2424
    %v2426 = vpop.f32.mrb[0].mxu0
    %v2427 = vadd.f32 %v2356, %v2426
    %2428 = vdwg.mxu0
    %2429 = vmatprep.subr.mxu0 %v1949
    %2430 = vmatpush1.msra.mxu0 %v1948
    %2431 = vmatprep.subr.mxu0 %v1953
    %2432 = vmatpush1.msra.mxu0 %v1952
    %2433 = vmatprep.subr.mxu0 %v1957
    %2434 = vmatpush1.msra.mxu0 %v1956
    %2435 = vmatprep.subr.mxu0 %v1961
    %2436 = vmatpush1.msra.mxu0 %v1960
    %2437 = vmatprep.subr.mxu0 %v1965
    %2438 = vmatpush1.msra.mxu0 %v1964
    %2439 = vmatprep.subr.mxu0 %v1969
    %2440 = vmatpush1.msra.mxu0 %v1968
    %2441 = vmatprep.subr.mxu0 %v1973
    %2442 = vmatpush1.msra.mxu0 %v1972
    %2443 = vmatprep.subr.mxu0 %v1977
    %2444 = vmatpush1.msra.mxu0 %v1976
    %2445 = vmatprep.subr.mxu0 %v1981
    %2446 = vmatpush1.msra.mxu0 %v1980
    %2447 = vmatprep.subr.mxu0 %v1985
    %2448 = vmatpush1.msra.mxu0 %v1984
    %2449 = vmatprep.subr.mxu0 %v1989
    %2450 = vmatpush1.msra.mxu0 %v1988
    %2451 = vmatprep.subr.mxu0 %v1993
    %2452 = vmatpush1.msra.mxu0 %v1992
    %2453 = vmatprep.subr.mxu0 %v1997
    %2454 = vmatpush1.msra.mxu0 %v1996
    %2455 = vmatprep.subr.mxu0 %v2001
    %2456 = vmatpush1.msra.mxu0 %v2000
    %2457 = vmatprep.subr.mxu0 %v2005
    %2458 = vmatpush1.msra.mxu0 %v2004
    %2459 = vmatprep.subr.mxu0 %v2009
    %2460 = vmatpush1.msra.mxu0 %v2008
    %2461 = vmatprep.subr.mxu0 %v2013
    %2462 = vmatpush1.msra.mxu0 %v2012
    %2463 = vmatprep.subr.mxu0 %v2017
    %2464 = vmatpush1.msra.mxu0 %v2016
    %2465 = vmatprep.subr.mxu0 %v2021
    %2466 = vmatpush1.msra.mxu0 %v2020
    %2467 = vmatprep.subr.mxu0 %v2025
    %2468 = vmatpush1.msra.mxu0 %v2024
    %2469 = vmatprep.subr.mxu0 %v2029
    %2470 = vmatpush1.msra.mxu0 %v2028
    %2471 = vmatprep.subr.mxu0 %v2033
    %2472 = vmatpush1.msra.mxu0 %v2032
    %2473 = vmatprep.subr.mxu0 %v2037
    %2474 = vmatpush1.msra.mxu0 %v2036
    %2475 = vmatprep.subr.mxu0 %v2041
    %2476 = vmatpush1.msra.mxu0 %v2040
    %2477 = vmatprep.subr.mxu0 %v2045
    %2478 = vmatpush1.msra.mxu0 %v2044
    %2479 = vmatprep.subr.mxu0 %v2049
    %2480 = vmatpush1.msra.mxu0 %v2048
    %2481 = vmatprep.subr.mxu0 %v2053
    %2482 = vmatpush1.msra.mxu0 %v2052
    %2483 = vmatprep.subr.mxu0 %v2057
    %2484 = vmatpush1.msra.mxu0 %v2056
    %2485 = vmatprep.subr.mxu0 %v2061
    %2486 = vmatpush1.msra.mxu0 %v2060
    %2487 = vmatprep.subr.mxu0 %v2065
    %2488 = vmatpush1.msra.mxu0 %v2064
    %2489 = vmatprep.subr.mxu0 %v2069
    %2490 = vmatpush1.msra.mxu0 %v2068
    %2491 = vmatprep.subr.mxu0 %v2073
    %2492 = vmatpush1.msra.mxu0 %v2072
    %2493 = vmatprep.mubr.f32.mxu0 %v1689
    %2494 = vmatmul.mubr.f32.gmra.mrb[0].mxu0 %v1688
    %v2495 = vpop.f32.mrb[0].mxu0
    %v2496 = vadd.f32 %v2425, %v2495
    %v2497 = vpop.f32.mrb[0].mxu0
    %v2498 = vadd.f32 %v2427, %v2497
    %2499 = vdwg.mxu0
    %v2500 = vrot.slane %v2283, 4
    %v2501 = vadd.f32 %v2283, %v2500
    %v2502 = vrot.slane %v2501, 2
    %v2503 = vadd.f32 %v2501, %v2502
    %v2504 = vrot.slane %v2503, 1
    %v2505 = vadd.f32 %v2503, %v2504
    %v2506 = vrot.slane %v2285, 4
    %v2507 = vadd.f32 %v2285, %v2506
    %v2508 = vrot.slane %v2507, 2
    %v2509 = vadd.f32 %v2507, %v2508
    %v2510 = vrot.slane %v2509, 1
    %v2511 = vadd.f32 %v2509, %v2510
    %v2512 = vrot.slane %v2496, 4
    %v2513 = vadd.f32 %v2496, %v2512
    %v2514 = vrot.slane %v2513, 2
    %v2515 = vadd.f32 %v2513, %v2514
    %v2516 = vrot.slane %v2515, 1
    %v2517 = vadd.f32 %v2515, %v2516
    %v2518 = vrot.slane %v2498, 4
    %v2519 = vadd.f32 %v2498, %v2518
    %v2520 = vrot.slane %v2519, 2
    %v2521 = vadd.f32 %v2519, %v2520
    %v2522 = vrot.slane %v2521, 1
    %v2523 = vadd.f32 %v2521, %v2522
    %v2524 = vmul.f32 %v2283, %v2283
    %v2525 = vmul.f32 %v2285, %v2285
    %v2526 = vmul.f32 %v2496, %v2496
    %v2527 = vmul.f32 %v2498, %v2498
    %v2528 = vrot.slane %v2524, 4
    %v2529 = vadd.f32 %v2524, %v2528
    %v2530 = vrot.slane %v2529, 2
    %v2531 = vadd.f32 %v2529, %v2530
    %v2532 = vrot.slane %v2531, 1
    %v2533 = vadd.f32 %v2531, %v2532
    %v2534 = vrot.slane %v2525, 4
    %v2535 = vadd.f32 %v2525, %v2534
    %v2536 = vrot.slane %v2535, 2
    %v2537 = vadd.f32 %v2535, %v2536
    %v2538 = vrot.slane %v2537, 1
    %v2539 = vadd.f32 %v2537, %v2538
    %v2540 = vrot.slane %v2526, 4
    %v2541 = vadd.f32 %v2526, %v2540
    %v2542 = vrot.slane %v2541, 2
    %v2543 = vadd.f32 %v2541, %v2542
    %v2544 = vrot.slane %v2543, 1
    %v2545 = vadd.f32 %v2543, %v2544
    %v2546 = vrot.slane %v2527, 4
    %v2547 = vadd.f32 %v2527, %v2546
    %v2548 = vrot.slane %v2547, 2
    %v2549 = vadd.f32 %v2547, %v2548
    %v2550 = vrot.slane %v2549, 1
    %v2551 = vadd.f32 %v2549, %v2550
    %v2552 = vsel %vm590, %v2505, %v2533
    %v2553 = vsel %vm590, %v2511, %v2539
    %v2554 = vsel %vm590, %v2517, %v2545
    %v2555 = vsel %vm590, %v2523, %v2551
    %v2556 = vld [vmem:[%s7] sm:$0xff]
    %v2557 = vld [vmem:[%s7 + $0x8] sm:$0xff]
    %v2558 = vld [vmem:[%s7 + $0x10] sm:$0xff]
    %v2559 = vld [vmem:[%s7 + $0x18] sm:$0xff]
    %v2560 = vld [vmem:[%s7 + $0x20] sm:$0xff]
    %v2561 = vld [vmem:[%s7 + $0x28] sm:$0xff]
    %v2562 = vld [vmem:[%s7 + $0x30] sm:$0xff]
    %v2563 = vld [vmem:[%s7 + $0x38] sm:$0xff]
    %v2564 = vld [vmem:[%s7 + $0x40] sm:$0xff]
    %v2565 = vld [vmem:[%s7 + $0x48] sm:$0xff]
    %v2566 = vld [vmem:[%s7 + $0x50] sm:$0xff]
    %v2567 = vld [vmem:[%s7 + $0x58] sm:$0xff]
    %v2568 = vld [vmem:[%s7 + $0x60] sm:$0xff]
    %v2569 = vld [vmem:[%s7 + $0x68] sm:$0xff]
    %v2570 = vld [vmem:[%s7 + $0x70] sm:$0xff]
    %v2571 = vld [vmem:[%s7 + $0x78] sm:$0xff]
    %v2572 = vld [vmem:[%s7 + $0x80] sm:$0xff]
    %v2573 = vld [vmem:[%s7 + $0x88] sm:$0xff]
    %v2574 = vld [vmem:[%s7 + $0x90] sm:$0xff]
    %v2575 = vld [vmem:[%s7 + $0x98] sm:$0xff]
    %v2576 = vld [vmem:[%s7 + $0xa0] sm:$0xff]
    %v2577 = vld [vmem:[%s7 + $0xa8] sm:$0xff]
    %v2578 = vld [vmem:[%s7 + $0xb0] sm:$0xff]
    %v2579 = vld [vmem:[%s7 + $0xb8] sm:$0xff]
    %v2580 = vld [vmem:[%s7 + $0xc0] sm:$0xff]
    %v2581 = vld [vmem:[%s7 + $0xc8] sm:$0xff]
    %v2582 = vld [vmem:[%s7 + $0xd0] sm:$0xff]
    %v2583 = vld [vmem:[%s7 + $0xd8] sm:$0xff]
    %v2584 = vld [vmem:[%s7 + $0xe0] sm:$0xff]
    %v2585 = vld [vmem:[%s7 + $0xe8] sm:$0xff]
    %v2586 = vld [vmem:[%s7 + $0xf0] sm:$0xff]
    %v2587 = vld [vmem:[%s7 + $0xf8] sm:$0xff]
    %v2588 = vld [vmem:[%s7 + $0x100] sm:$0xff]
    %v2589 = vld [vmem:[%s7 + $0x108] sm:$0xff]
    %v2590 = vld [vmem:[%s7 + $0x110] sm:$0xff]
    %v2591 = vld [vmem:[%s7 + $0x118] sm:$0xff]
    %v2592 = vld [vmem:[%s7 + $0x120] sm:$0xff]
    %v2593 = vld [vmem:[%s7 + $0x128] sm:$0xff]
    %v2594 = vld [vmem:[%s7 + $0x130] sm:$0xff]
    %v2595 = vld [vmem:[%s7 + $0x138] sm:$0xff]
    %v2596 = vld [vmem:[%s7 + $0x140] sm:$0xff]
    %v2597 = vld [vmem:[%s7 + $0x148] sm:$0xff]
    %v2598 = vld [vmem:[%s7 + $0x150] sm:$0xff]
    %v2599 = vld [vmem:[%s7 + $0x158] sm:$0xff]
    %v2600 = vld [vmem:[%s7 + $0x160] sm:$0xff]
    %v2601 = vld [vmem:[%s7 + $0x168] sm:$0xff]
    %v2602 = vld [vmem:[%s7 + $0x170] sm:$0xff]
    %v2603 = vld [vmem:[%s7 + $0x178] sm:$0xff]
    %v2604 = vld [vmem:[%s7 + $0x180] sm:$0xff]
    %v2605 = vld [vmem:[%s7 + $0x188] sm:$0xff]
    %v2606 = vld [vmem:[%s7 + $0x190] sm:$0xff]
    %v2607 = vld [vmem:[%s7 + $0x198] sm:$0xff]
    %v2608 = vld [vmem:[%s7 + $0x1a0] sm:$0xff]
    %v2609 = vld [vmem:[%s7 + $0x1a8] sm:$0xff]
    %v2610 = vld [vmem:[%s7 + $0x1b0] sm:$0xff]
    %v2611 = vld [vmem:[%s7 + $0x1b8] sm:$0xff]
    %v2612 = vld [vmem:[%s7 + $0x1c0] sm:$0xff]
    %v2613 = vld [vmem:[%s7 + $0x1c8] sm:$0xff]
    %v2614 = vld [vmem:[%s7 + $0x1d0] sm:$0xff]
    %v2615 = vld [vmem:[%s7 + $0x1d8] sm:$0xff]
    %v2616 = vld [vmem:[%s7 + $0x1e0] sm:$0xff]
    %v2617 = vld [vmem:[%s7 + $0x1e8] sm:$0xff]
    %v2618 = vld [vmem:[%s7 + $0x1f0] sm:$0xff]
    %v2619 = vld [vmem:[%s7 + $0x1f8] sm:$0xff]
    %2620 = vmatprep.subr.mxu0 0.0
    %2621 = vmatpush1.msra.mxu0 %v2556
    %2622 = vmatprep.subr.mxu0 0.0
    %2623 = vmatpush1.msra.mxu0 %v2557
    %2624 = vmatprep.subr.mxu0 0.0
    %2625 = vmatpush1.msra.mxu0 %v2558
    %2626 = vmatprep.subr.mxu0 0.0
    %2627 = vmatpush1.msra.mxu0 %v2559
    %2628 = vmatprep.subr.mxu0 0.0
    %2629 = vmatpush1.msra.mxu0 %v2560
    %2630 = vmatprep.subr.mxu0 0.0
    %2631 = vmatpush1.msra.mxu0 %v2561
    %2632 = vmatprep.subr.mxu0 0.0
    %2633 = vmatpush1.msra.mxu0 %v2562
    %2634 = vmatprep.subr.mxu0 0.0
    %2635 = vmatpush1.msra.mxu0 %v2563
    %2636 = vmatprep.subr.mxu0 0.0
    %2637 = vmatpush1.msra.mxu0 %v2564
    %2638 = vmatprep.subr.mxu0 0.0
    %2639 = vmatpush1.msra.mxu0 %v2565
    %2640 = vmatprep.subr.mxu0 0.0
    %2641 = vmatpush1.msra.mxu0 %v2566
    %2642 = vmatprep.subr.mxu0 0.0
    %2643 = vmatpush1.msra.mxu0 %v2567
    %2644 = vmatprep.subr.mxu0 0.0
    %2645 = vmatpush1.msra.mxu0 %v2568
    %2646 = vmatprep.subr.mxu0 0.0
    %2647 = vmatpush1.msra.mxu0 %v2569
    %2648 = vmatprep.subr.mxu0 0.0
    %2649 = vmatpush1.msra.mxu0 %v2570
    %2650 = vmatprep.subr.mxu0 0.0
    %2651 = vmatpush1.msra.mxu0 %v2571
    %2652 = vmatprep.subr.mxu0 0.0
    %2653 = vmatpush1.msra.mxu0 %v2572
    %2654 = vmatprep.subr.mxu0 0.0
    %2655 = vmatpush1.msra.mxu0 %v2573
    %2656 = vmatprep.subr.mxu0 0.0
    %2657 = vmatpush1.msra.mxu0 %v2574
    %2658 = vmatprep.subr.mxu0 0.0
    %2659 = vmatpush1.msra.mxu0 %v2575
    %2660 = vmatprep.subr.mxu0 0.0
    %2661 = vmatpush1.msra.mxu0 %v2576
    %2662 = vmatprep.subr.mxu0 0.0
    %2663 = vmatpush1.msra.mxu0 %v2577
    %2664 = vmatprep.subr.mxu0 0.0
    %2665 = vmatpush1.msra.mxu0 %v2578
    %2666 = vmatprep.subr.mxu0 0.0
    %2667 = vmatpush1.msra.mxu0 %v2579
    %2668 = vmatprep.subr.mxu0 0.0
    %2669 = vmatpush1.msra.mxu0 %v2580
    %2670 = vmatprep.subr.mxu0 0.0
    %2671 = vmatpush1.msra.mxu0 %v2581
    %2672 = vmatprep.subr.mxu0 0.0
    %2673 = vmatpush1.msra.mxu0 %v2582
    %2674 = vmatprep.subr.mxu0 0.0
    %2675 = vmatpush1.msra.mxu0 %v2583
    %2676 = vmatprep.subr.mxu0 0.0
    %2677 = vmatpush1.msra.mxu0 %v2584
    %2678 = vmatprep.subr.mxu0 0.0
    %2679 = vmatpush1.msra.mxu0 %v2585
    %2680 = vmatprep.subr.mxu0 0.0
    %2681 = vmatpush1.msra.mxu0 %v2586
    %2682 = vmatprep.subr.mxu0 0.0
    %2683 = vmatpush1.msra.mxu0 %v2587
    %2684 = vmatprep.mubr.f32.mxu0 %v2553
    %2685 = vmatmul.mubr.f32.gmra.mrb[0].mxu0 %v2552
    %v2686 = vpop.f32.mrb[0].mxu0
    %v2687 = vadd.f32 0.0, %v2686
    %v2688 = vpop.f32.mrb[0].mxu0
    %2689 = vdwg.mxu0
    %2690 = vmatprep.subr.mxu0 0.0
    %2691 = vmatpush1.msra.mxu0 %v2588
    %2692 = vmatprep.subr.mxu0 0.0
    %2693 = vmatpush1.msra.mxu0 %v2589
    %2694 = vmatprep.subr.mxu0 0.0
    %2695 = vmatpush1.msra.mxu0 %v2590
    %2696 = vmatprep.subr.mxu0 0.0
    %2697 = vmatpush1.msra.mxu0 %v2591
    %2698 = vmatprep.subr.mxu0 0.0
    %2699 = vmatpush1.msra.mxu0 %v2592
    %2700 = vmatprep.subr.mxu0 0.0
    %2701 = vmatpush1.msra.mxu0 %v2593
    %2702 = vmatprep.subr.mxu0 0.0
    %2703 = vmatpush1.msra.mxu0 %v2594
    %2704 = vmatprep.subr.mxu0 0.0
    %2705 = vmatpush1.msra.mxu0 %v2595
    %2706 = vmatprep.subr.mxu0 0.0
    %2707 = vmatpush1.msra.mxu0 %v2596
    %2708 = vmatprep.subr.mxu0 0.0
    %2709 = vmatpush1.msra.mxu0 %v2597
    %2710 = vmatprep.subr.mxu0 0.0
    %2711 = vmatpush1.msra.mxu0 %v2598
    %2712 = vmatprep.subr.mxu0 0.0
    %2713 = vmatpush1.msra.mxu0 %v2599
    %2714 = vmatprep.subr.mxu0 0.0
    %2715 = vmatpush1.msra.mxu0 %v2600
    %2716 = vmatprep.subr.mxu0 0.0
    %2717 = vmatpush1.msra.mxu0 %v2601
    %2718 = vmatprep.subr.mxu0 0.0
    %2719 = vmatpush1.msra.mxu0 %v2602
    %2720 = vmatprep.subr.mxu0 0.0
    %2721 = vmatpush1.msra.mxu0 %v2603
    %2722 = vmatprep.subr.mxu0 0.0
    %2723 = vmatpush1.msra.mxu0 %v2604
    %2724 = vmatprep.subr.mxu0 0.0
    %2725 = vmatpush1.msra.mxu0 %v2605
    %2726 = vmatprep.subr.mxu0 0.0
    %2727 = vmatpush1.msra.mxu0 %v2606
    %2728 = vmatprep.subr.mxu0 0.0
    %2729 = vmatpush1.msra.mxu0 %v2607
    %2730 = vmatprep.subr.mxu0 0.0
    %2731 = vmatpush1.msra.mxu0 %v2608
    %2732 = vmatprep.subr.mxu0 0.0
    %2733 = vmatpush1.msra.mxu0 %v2609
    %2734 = vmatprep.subr.mxu0 0.0
    %2735 = vmatpush1.msra.mxu0 %v2610
    %2736 = vmatprep.subr.mxu0 0.0
    %2737 = vmatpush1.msra.mxu0 %v2611
    %2738 = vmatprep.subr.mxu0 0.0
    %2739 = vmatpush1.msra.mxu0 %v2612
    %2740 = vmatprep.subr.mxu0 0.0
    %2741 = vmatpush1.msra.mxu0 %v2613
    %2742 = vmatprep.subr.mxu0 0.0
    %2743 = vmatpush1.msra.mxu0 %v2614
    %2744 = vmatprep.subr.mxu0 0.0
    %2745 = vmatpush1.msra.mxu0 %v2615
    %2746 = vmatprep.subr.mxu0 0.0
    %2747 = vmatpush1.msra.mxu0 %v2616
    %2748 = vmatprep.subr.mxu0 0.0
    %2749 = vmatpush1.msra.mxu0 %v2617
    %2750 = vmatprep.subr.mxu0 0.0
    %2751 = vmatpush1.msra.mxu0 %v2618
    %2752 = vmatprep.subr.mxu0 0.0
    %2753 = vmatpush1.msra.mxu0 %v2619
    %2754 = vmatprep.mubr.f32.mxu0 %v2555
    %2755 = vmatmul.mubr.f32.gmra.mrb[0].mxu0 %v2554
    %v2756 = vpop.f32.mrb[0].mxu0
    %v2757 = vadd.f32 %v2687, %v2756
    %v2758 = vpop.f32.mrb[0].mxu0
    %2759 = vdwg.mxu0
    %v2760 = vmul.f32 %v2757, 0.0078125
    %v2761 = vmul.f32 %v2760, %v2760
    %v2763 = vrot.slane %v2761, 7
    %v2765 = vsub.f32 %v2760, %v2763
    %v2766 = vld [vmem:[#allocation11] sm:$0x1]
    %v2767 = vadd.f32 %v2765, 1e-05
    %v2768 = vrsqrt.pop %v2767
    %v2770 = vrot.slane %v2768, 1
    %v2772 = vmul.f32 %v2766, %v2770
    %v2773 = vld [vmem:[#allocation11 + $0x1] sm:$0x1]
    %v2774 = vmul.f32 %v2760, %v2772
    %v2775 = vsub.f32 %v2773, %v2774
    %v2776 = vlaneseq
    %v2777 = vshrl.u32 %v2776, 7
    %v2778 = vsub.s32 0, %v2777
    %v2779 = vrot.slane %v2772, %v2778
    %v2780 = vlaneseq
    %v2781 = vshrl.u32 %v2780, 7
    %v2782 = vsub.s32 0, %v2781
    %v2783 = vrot.slane %v2775, %v2782
    %v2784 = vsel %vm590, %v2779, %v2783
    %v2785 = vld [vmem:[%s8] sm:$0xff]
    %v2786 = vld [vmem:[%s8 + $0x8] sm:$0xff]
    %v2787 = vld [vmem:[%s8 + $0x10] sm:$0xff]
    %v2788 = vld [vmem:[%s8 + $0x18] sm:$0xff]
    %v2789 = vld [vmem:[%s8 + $0x20] sm:$0xff]
    %v2790 = vld [vmem:[%s8 + $0x28] sm:$0xff]
    %v2791 = vld [vmem:[%s8 + $0x30] sm:$0xff]
    %v2792 = vld [vmem:[%s8 + $0x38] sm:$0xff]
    %v2793 = vld [vmem:[%s8 + $0x40] sm:$0xff]
    %v2794 = vld [vmem:[%s8 + $0x48] sm:$0xff]
    %v2795 = vld [vmem:[%s8 + $0x50] sm:$0xff]
    %v2796 = vld [vmem:[%s8 + $0x58] sm:$0xff]
    %v2797 = vld [vmem:[%s8 + $0x60] sm:$0xff]
    %v2798 = vld [vmem:[%s8 + $0x68] sm:$0xff]
    %v2799 = vld [vmem:[%s8 + $0x70] sm:$0xff]
    %v2800 = vld [vmem:[%s8 + $0x78] sm:$0xff]
    %vm2801 = vcmask 261120
    %v2803 = vsel %vm2801, %v2784, 0
    %2805 = vmatprep.subr.mxu0 %v2786
    %2806 = vmatpush1.msra.mxu0 %v2785
    %2807 = vmatprep.subr.mxu0 %v2790
    %2808 = vmatpush1.msra.mxu0 %v2789
    %2809 = vmatprep.subr.mxu0 %v2794
    %2810 = vmatpush1.msra.mxu0 %v2793
    %2811 = vmatprep.subr.mxu0 %v2798
    %2812 = vmatpush1.msra.mxu0 %v2797
    %2813 = vmatprep.subr.mxu0 0.0
    %2814 = vmatpush1.msra.mxu0 0.0
    %2815 = vmatprep.subr.mxu0 0.0
    %2816 = vmatpush1.msra.mxu0 0.0
    %2817 = vmatprep.subr.mxu0 0.0
    %2818 = vmatpush1.msra.mxu0 0.0
    %2819 = vmatprep.subr.mxu0 0.0
    %2820 = vmatpush1.msra.mxu0 0.0
    %2821 = vmatprep.subr.mxu0 0.0
    %2822 = vmatpush1.msra.mxu0 0.0
    %2823 = vmatprep.subr.mxu0 0.0
    %2824 = vmatpush1.msra.mxu0 0.0
    %2825 = vmatprep.subr.mxu0 0.0
    %2826 = vmatpush1.msra.mxu0 0.0
    %2827 = vmatprep.subr.mxu0 0.0
    %2828 = vmatpush1.msra.mxu0 0.0
    %2829 = vmatprep.subr.mxu0 0.0
    %2830 = vmatpush1.msra.mxu0 0.0
    %2831 = vmatprep.subr.mxu0 0.0
    %2832 = vmatpush1.msra.mxu0 0.0
    %2833 = vmatprep.subr.mxu0 0.0
    %2834 = vmatpush1.msra.mxu0 0.0
    %2835 = vmatprep.subr.mxu0 0.0
    %2836 = vmatpush1.msra.mxu0 0.0
    %2837 = vmatprep.subr.mxu0 0.0
    %2838 = vmatpush1.msra.mxu0 0.0
    %2839 = vmatprep.subr.mxu0 0.0
    %2840 = vmatpush1.msra.mxu0 0.0
    %2841 = vmatprep.subr.mxu0 0.0
    %2842 = vmatpush1.msra.mxu0 0.0
    %2843 = vmatprep.subr.mxu0 0.0
    %2844 = vmatpush1.msra.mxu0 0.0
    %2845 = vmatprep.subr.mxu0 0.0
    %2846 = vmatpush1.msra.mxu0 0.0
    %2847 = vmatprep.subr.mxu0 0.0
    %2848 = vmatpush1.msra.mxu0 0.0
    %2849 = vmatprep.subr.mxu0 0.0
    %2850 = vmatpush1.msra.mxu0 0.0
    %2851 = vmatprep.subr.mxu0 0.0
    %2852 = vmatpush1.msra.mxu0 0.0
    %2853 = vmatprep.subr.mxu0 0.0
    %2854 = vmatpush1.msra.mxu0 0.0
    %2855 = vmatprep.subr.mxu0 0.0
    %2856 = vmatpush1.msra.mxu0 0.0
    %2857 = vmatprep.subr.mxu0 0.0
    %2858 = vmatpush1.msra.mxu0 0.0
    %2859 = vmatprep.subr.mxu0 0.0
    %2860 = vmatpush1.msra.mxu0 0.0
    %2861 = vmatprep.subr.mxu0 0.0
    %2862 = vmatpush1.msra.mxu0 0.0
    %2863 = vmatprep.subr.mxu0 0.0
    %2864 = vmatpush1.msra.mxu0 0.0
    %2865 = vmatprep.subr.mxu0 0.0
    %2866 = vmatpush1.msra.mxu0 0.0
    %2867 = vmatprep.subr.mxu0 0.0
    %2868 = vmatpush1.msra.mxu0 0.0
    %2869 = vmatprep.mubr.f32.mxu0 0.0
    %2870 = vmatmul.mubr.f32.gmra.mrb[0].mxu0 %v2803
    %v2871 = vpop.f32.mrb[0].mxu0
    %v2872 = vadd.f32 0.0, %v2871
    %v2873 = vpop.f32.mrb[0].mxu0
    %v2874 = vadd.f32 0.0, %v2873
    %2875 = vdwg.mxu0
    %2876 = vmatprep.subr.mxu0 %v2788
    %2877 = vmatpush1.msra.mxu0 %v2787
    %2878 = vmatprep.subr.mxu0 %v2792
    %2879 = vmatpush1.msra.mxu0 %v2791
    %2880 = vmatprep.subr.mxu0 %v2796
    %2881 = vmatpush1.msra.mxu0 %v2795
    %2882 = vmatprep.subr.mxu0 %v2800
    %2883 = vmatpush1.msra.mxu0 %v2799
    %2884 = vmatprep.subr.mxu0 0.0
    %2885 = vmatpush1.msra.mxu0 0.0
    %2886 = vmatprep.subr.mxu0 0.0
    %2887 = vmatpush1.msra.mxu0 0.0
    %2888 = vmatprep.subr.mxu0 0.0
    %2889 = vmatpush1.msra.mxu0 0.0
    %2890 = vmatprep.subr.mxu0 0.0
    %2891 = vmatpush1.msra.mxu0 0.0
    %2892 = vmatprep.subr.mxu0 0.0
    %2893 = vmatpush1.msra.mxu0 0.0
    %2894 = vmatprep.subr.mxu0 0.0
    %2895 = vmatpush1.msra.mxu0 0.0
    %2896 = vmatprep.subr.mxu0 0.0
    %2897 = vmatpush1.msra.mxu0 0.0
    %2898 = vmatprep.subr.mxu0 0.0
    %2899 = vmatpush1.msra.mxu0 0.0
    %2900 = vmatprep.subr.mxu0 0.0
    %2901 = vmatpush1.msra.mxu0 0.0
    %2902 = vmatprep.subr.mxu0 0.0
    %2903 = vmatpush1.msra.mxu0 0.0
    %2904 = vmatprep.subr.mxu0 0.0
    %2905 = vmatpush1.msra.mxu0 0.0
    %2906 = vmatprep.subr.mxu0 0.0
    %2907 = vmatpush1.msra.mxu0 0.0
    %2908 = vmatprep.subr.mxu0 0.0
    %2909 = vmatpush1.msra.mxu0 0.0
    %2910 = vmatprep.subr.mxu0 0.0
    %2911 = vmatpush1.msra.mxu0 0.0
    %2912 = vmatprep.subr.mxu0 0.0
    %2913 = vmatpush1.msra.mxu0 0.0
    %2914 = vmatprep.subr.mxu0 0.0
    %2915 = vmatpush1.msra.mxu0 0.0
    %2916 = vmatprep.subr.mxu0 0.0
    %2917 = vmatpush1.msra.mxu0 0.0
    %2918 = vmatprep.subr.mxu0 0.0
    %2919 = vmatpush1.msra.mxu0 0.0
    %2920 = vmatprep.subr.mxu0 0.0
    %2921 = vmatpush1.msra.mxu0 0.0
    %2922 = vmatprep.subr.mxu0 0.0
    %2923 = vmatpush1.msra.mxu0 0.0
    %2924 = vmatprep.subr.mxu0 0.0
    %2925 = vmatpush1.msra.mxu0 0.0
    %2926 = vmatprep.subr.mxu0 0.0
    %2927 = vmatpush1.msra.mxu0 0.0
    %2928 = vmatprep.subr.mxu0 0.0
    %2929 = vmatpush1.msra.mxu0 0.0
    %2930 = vmatprep.subr.mxu0 0.0
    %2931 = vmatpush1.msra.mxu0 0.0
    %2932 = vmatprep.subr.mxu0 0.0
    %2933 = vmatpush1.msra.mxu0 0.0
    %2934 = vmatprep.subr.mxu0 0.0
    %2935 = vmatpush1.msra.mxu0 0.0
    %2936 = vmatprep.subr.mxu0 0.0
    %2937 = vmatpush1.msra.mxu0 0.0
    %2938 = vmatprep.subr.mxu0 0.0
    %2939 = vmatpush1.msra.mxu0 0.0
    %2940 = vmatprep.mubr.f32.mxu0 0.0
    %2941 = vmatmul.mubr.f32.gmra.mrb[0].mxu0 %v2803
    %v2942 = vpop.f32.mrb[0].mxu0
    %v2943 = vadd.f32 0.0, %v2942
    %v2944 = vpop.f32.mrb[0].mxu0
    %v2945 = vadd.f32 0.0, %v2944
    %2946 = vdwg.mxu0
    %v2947 = vlaneseq
    %v2948 = vshrl.u32 %v2947, 7
    %v2949 = vsub.s32 0, %v2948
    %v2950 = vrot.slane %v2872, %v2949
    %v2951 = vlaneseq
    %v2952 = vshrl.u32 %v2951, 7
    %v2953 = vsub.s32 0, %v2952
    %v2954 = vrot.slane %v2874, %v2953
    %v2955 = vlaneseq
    %v2956 = vshrl.u32 %v2955, 7
    %v2957 = vsub.s32 0, %v2956
    %v2958 = vrot.slane %v2943, %v2957
    %v2959 = vlaneseq
    %v2960 = vshrl.u32 %v2959, 7
    %v2961 = vsub.s32 0, %v2960
    %v2962 = vrot.slane %v2945, %v2961
    %v2963 = vmul.f32 %v2283, %v2950
    %v2964 = vmul.f32 %v2285, %v2954
    %v2965 = vmul.f32 %v2496, %v2958
    %v2966 = vmul.f32 %v2498, %v2962
    %v2967 = vlaneseq
    %v2968 = vshrl.u32 %v2967, 7
    %v2969 = vsub.s32 1, %v2968
    %v2970 = vrot.slane %v2872, %v2969
    %v2971 = vlaneseq
    %v2972 = vshrl.u32 %v2971, 7
    %v2973 = vsub.s32 1, %v2972
    %v2974 = vrot.slane %v2874, %v2973
    %v2975 = vlaneseq
    %v2976 = vshrl.u32 %v2975, 7
    %v2977 = vsub.s32 1, %v2976
    %v2978 = vrot.slane %v2943, %v2977
    %v2979 = vlaneseq
    %v2980 = vshrl.u32 %v2979, 7
    %v2981 = vsub.s32 1, %v2980
    %v2982 = vrot.slane %v2945, %v2981
    %v2983 = vadd.f32 %v2963, %v2970
    %v2984 = vadd.f32 %v2964, %v2974
    %v2985 = vadd.f32 %v2965, %v2978
    %v2986 = vadd.f32 %v2966, %v2982
    %v2987 = vmax.f32 %v2983, 0.0
    %v2988 = vmax.f32 %v2984, 0.0
    %v2989 = vmax.f32 %v2985, 0.0
    %v2990 = vmax.f32 %v2986, 0.0
    %2991 = vst [vmem:[#allocation4] sm:$0xff] 0.0
    %2992 = vst [vmem:[#allocation4 + $0x8] sm:$0xff] 0.0
    %2993 = vst [vmem:[#allocation4 + $0x10] sm:$0xff] 0.0
    %2994 = vst [vmem:[#allocation4 + $0x18] sm:$0xff] 0.0
    %2995 = vst [vmem:[#allocation4 + $0x20] sm:$0xf] 0.0
    %2996 = vst [vmem:[#allocation4 + $0x28] sm:$0xf] 0.0
    %v2999 = vcombine.low %v2987, %v2988
    %v3001 = vunpack.c.l.s4 1966171168
    %v3002 = vunpack.c.0.s8 %v3001
    %v3003 = vlaneseq
    %v3004 = vshrl.u32 %v3003, 7
    %v3005 = vsub.s32 %v3002, %v3004
    %v3006 = vrot.slane %v2999, %v3005
    %v3008 = vunpack.c.l.s4 1966171168
    %v3009 = vunpack.c.0.s8 %v3008
    %v3010 = vlaneseq
    %v3011 = vshrl.u32 %v3010, 7
    %v3012 = vsub.s32 %v3009, %v3011
    %v3013 = vrot.slane %v3006, %v3012
    %s3015 = scalar_lea.vmem [#allocation4], 1
    %3016 = vst.msk [vmem:[%s3015] ss:$8 sm:$0x3] %vm1497, %v3013
    %3017 = vst.msk [vmem:[%s3015] ss:$8 sm:$0x0] %vm1497, %v3013
    %v3020 = vcombine.low %v2989, %v2990
    %v3022 = vunpack.c.l.s4 1966171168
    %v3023 = vunpack.c.0.s8 %v3022
    %v3024 = vlaneseq
    %v3025 = vshrl.u32 %v3024, 7
    %v3026 = vsub.s32 %v3023, %v3025
    %v3027 = vrot.slane %v3020, %v3026
    %v3029 = vunpack.c.l.s4 1966171168
    %v3030 = vunpack.c.0.s8 %v3029
    %v3031 = vlaneseq
    %v3032 = vshrl.u32 %v3031, 7
    %v3033 = vsub.s32 %v3030, %v3032
    %v3034 = vrot.slane %v3027, %v3033
    %s3036 = scalar_lea.vmem [#allocation4], 2
    %3037 = vst.msk [vmem:[%s3036] ss:$8 sm:$0x3] %vm1497, %v3034
    %3038 = vst.msk [vmem:[%s3036] ss:$8 sm:$0x0] %vm1497, %v3034
    %v3039 = vcombine.high %v3006, %v3006
    %v3041 = vunpack.c.l.s4 1966171168
    %v3042 = vunpack.c.0.s8 %v3041
    %v3043 = vlaneseq
    %v3044 = vshrl.u32 %v3043, 7
    %v3045 = vsub.s32 %v3042, %v3044
    %v3046 = vrot.slane %v3039, %v3045
    %s3048 = scalar_lea.vmem [#allocation4], 3
    %3049 = vst.msk [vmem:[%s3048] ss:$8 sm:$0x3] %vm1497, %v3046
    %3050 = vst.msk [vmem:[%s3048] ss:$8 sm:$0x0] %vm1497, %v3046
    %v3051 = vcombine.high %v3027, %v3027
    %v3053 = vunpack.c.l.s4 1966171168
    %v3054 = vunpack.c.0.s8 %v3053
    %v3055 = vlaneseq
    %v3056 = vshrl.u32 %v3055, 7
    %v3057 = vsub.s32 %v3054, %v3056
    %v3058 = vrot.slane %v3051, %v3057
    %s3060 = scalar_lea.vmem [#allocation4], 4
    %3061 = vst.msk [vmem:[%s3060] ss:$8 sm:$0x3] %vm1497, %v3058
    %3062 = vst.msk [vmem:[%s3060] ss:$8 sm:$0x0] %vm1497, %v3058
    %v3063 = vcombine.high %v3013, %v3013
    %s3065 = scalar_lea.vmem [#allocation4], 5
    %3066 = vst.msk [vmem:[%s3065] ss:$8 sm:$0x3] %vm1497, %v3063
    %3067 = vst.msk [vmem:[%s3065] ss:$8 sm:$0x0] %vm1497, %v3063
    %v3068 = vcombine.high %v3034, %v3034
    %s3070 = scalar_lea.vmem [#allocation4], 6
    %3071 = vst.msk [vmem:[%s3070] ss:$8 sm:$0x3] %vm1497, %v3068
    %3072 = vst.msk [vmem:[%s3070] ss:$8 sm:$0x0] %vm1497, %v3068
    %v3073 = vcombine.high %v3046, %v3046
    %s3075 = scalar_lea.vmem [#allocation4], 7
    %3076 = vst.msk [vmem:[%s3075] ss:$8 sm:$0x3] %vm1497, %v3073
    %3077 = vst.msk [vmem:[%s3075] ss:$8 sm:$0x0] %vm1497, %v3073
    %v3078 = vcombine.high %v3058, %v3058
    %s3080 = scalar_lea.vmem [#allocation4], 16
    %3081 = vst.msk [vmem:[%s3080] ss:$8 sm:$0x3] %vm1497, %v3078
    %3082 = vst.msk [vmem:[%s3080] ss:$8 sm:$0x0] %vm1497, %v3078
    %v3083 = vcombine.high %v2987, %v2988
    %v3085 = vunpack.c.l.s4 1966171168
    %v3086 = vunpack.c.0.s8 %v3085
    %v3087 = vlaneseq
    %v3088 = vshrl.u32 %v3087, 7
    %v3089 = vsub.s32 %v3086, %v3088
    %v3090 = vrot.slane %v3083, %v3089
    %v3092 = vunpack.c.l.s4 1966171168
    %v3093 = vunpack.c.0.s8 %v3092
    %v3094 = vlaneseq
    %v3095 = vshrl.u32 %v3094, 7
    %v3096 = vsub.s32 %v3093, %v3095
    %v3097 = vrot.slane %v3090, %v3096
    %s3099 = scalar_lea.vmem [#allocation4], 19
    %3100 = vst.msk [vmem:[%s3099] ss:$8 sm:$0x3] %vm1497, %v3097
    %3101 = vst.msk [vmem:[%s3099] ss:$8 sm:$0x0] %vm1497, %v3097
    %v3102 = vcombine.high %v2989, %v2990
    %v3104 = vunpack.c.l.s4 1966171168
    %v3105 = vunpack.c.0.s8 %v3104
    %v3106 = vlaneseq
    %v3107 = vshrl.u32 %v3106, 7
    %v3108 = vsub.s32 %v3105, %v3107
    %v3109 = vrot.slane %v3102, %v3108
    %v3111 = vunpack.c.l.s4 1966171168
    %v3112 = vunpack.c.0.s8 %v3111
    %v3113 = vlaneseq
    %v3114 = vshrl.u32 %v3113, 7
    %v3115 = vsub.s32 %v3112, %v3114
    %v3116 = vrot.slane %v3109, %v3115
    %s3118 = scalar_lea.vmem [#allocation4], 20
    %3119 = vst.msk [vmem:[%s3118] ss:$8 sm:$0x3] %vm1497, %v3116
    %3120 = vst.msk [vmem:[%s3118] ss:$8 sm:$0x0] %vm1497, %v3116
    %v3121 = vcombine.high %v3090, %v3090
    %v3123 = vunpack.c.l.s4 1966171168
    %v3124 = vunpack.c.0.s8 %v3123
    %v3125 = vlaneseq
    %v3126 = vshrl.u32 %v3125, 7
    %v3127 = vsub.s32 %v3124, %v3126
    %v3128 = vrot.slane %v3121, %v3127
    %s3130 = scalar_lea.vmem [#allocation4], 21
    %3131 = vst.msk [vmem:[%s3130] ss:$8 sm:$0x3] %vm1497, %v3128
    %3132 = vst.msk [vmem:[%s3130] ss:$8 sm:$0x0] %vm1497, %v3128
    %v3133 = vcombine.high %v3109, %v3109
    %v3135 = vunpack.c.l.s4 1966171168
    %v3136 = vunpack.c.0.s8 %v3135
    %v3137 = vlaneseq
    %v3138 = vshrl.u32 %v3137, 7
    %v3139 = vsub.s32 %v3136, %v3138
    %v3140 = vrot.slane %v3133, %v3139
    %s3142 = scalar_lea.vmem [#allocation4], 22
    %3143 = vst.msk [vmem:[%s3142] ss:$8 sm:$0x3] %vm1497, %v3140
    %3144 = vst.msk [vmem:[%s3142] ss:$8 sm:$0x0] %vm1497, %v3140
    %v3145 = vcombine.high %v3097, %v3097
    %s3147 = scalar_lea.vmem [#allocation4], 23
    %3148 = vst.msk [vmem:[%s3147] ss:$8 sm:$0x3] %vm1497, %v3145
    %3149 = vst.msk [vmem:[%s3147] ss:$8 sm:$0x0] %vm1497, %v3145
    %v3150 = vcombine.high %v3116, %v3116
    %s3152 = scalar_lea.vmem [#allocation4], 32
    %3153 = vst.msk [vmem:[%s3152] ss:$8 sm:$0x3] %vm1497, %v3150
    %3154 = vst.msk [vmem:[%s3152] ss:$8 sm:$0x0] %vm1497, %v3150
    %v3155 = vcombine.high %v3128, %v3128
    %s3157 = scalar_lea.vmem [#allocation4], 33
    %3158 = vst.msk [vmem:[%s3157] ss:$8 sm:$0x3] %vm1497, %v3155
    %3159 = vst.msk [vmem:[%s3157] ss:$8 sm:$0x0] %vm1497, %v3155
    %v3160 = vcombine.high %v3140, %v3140
    %s3162 = scalar_lea.vmem [#allocation4], 34
    %3163 = vst.msk [vmem:[%s3162] ss:$8 sm:$0x3] %vm1497, %v3160
    %3164 = vst.msk [vmem:[%s3162] ss:$8 sm:$0x0] %vm1497, %v3160
    %v3165 = vld [vmem:[#allocation4] sm:$0xff]
    %v3166 = vld [vmem:[#allocation4 + $0x8] sm:$0xff]
    %3167 = vst [vmem:[#allocation5] sm:$0xff] %v3165
    %3168 = vst [vmem:[#allocation5 + $0x8] sm:$0xff] %v3166
    %v3169 = vld [vmem:[#allocation4] sm:$0xfe]
    %v3170 = vld [vmem:[#allocation4 + $0x8] sm:$0xfe]
    %v3171 = vld [vmem:[#allocation4 + $0x10] sm:$0x1]
    %v3172 = vld [vmem:[#allocation4 + $0x18] sm:$0x1]
    %vm3177 = vcmask 1046528
    %v3178 = vrot.slane %v3169, 1
    %v3179 = vrot.slane %v3171, 1
    %v3180 = vsel %vm3177, %v3178, %v3179
    %v3181 = vrot.slane %v3170, 1
    %v3182 = vrot.slane %v3172, 1
    %v3183 = vsel %vm3177, %v3181, %v3182
    %3186 = vst [vmem:[#allocation5 + $0x10] sm:$0xff] %v3180
    %3187 = vst [vmem:[#allocation5 + $0x18] sm:$0xff] %v3183
    %v3188 = vld [vmem:[#allocation4] sm:$0xfc]
    %v3189 = vld [vmem:[#allocation4 + $0x8] sm:$0xfc]
    %v3190 = vld [vmem:[#allocation4 + $0x10] sm:$0x3]
    %v3191 = vld [vmem:[#allocation4 + $0x18] sm:$0x3]
    %v3196 = vrot.slane %v3188, 2
    %v3197 = vrot.slane %v3190, 2
    %v3198 = vsel %vm1644, %v3196, %v3197
    %v3199 = vrot.slane %v3189, 2
    %v3200 = vrot.slane %v3191, 2
    %v3201 = vsel %vm1644, %v3199, %v3200
    %3204 = vst [vmem:[#allocation5 + $0x20] sm:$0xff] %v3198
    %3205 = vst [vmem:[#allocation5 + $0x28] sm:$0xff] %v3201
    %v3206 = vld [vmem:[#allocation4 + $0x10] sm:$0xfc]
    %v3207 = vld [vmem:[#allocation4 + $0x18] sm:$0xfc]
    %v3208 = vld [vmem:[#allocation4 + $0x20] sm:$0x3]
    %v3209 = vld [vmem:[#allocation4 + $0x28] sm:$0x3]
    %v3214 = vrot.slane %v3206, 2
    %v3215 = vrot.slane %v3208, 2
    %v3216 = vsel %vm1644, %v3214, %v3215
    %v3217 = vrot.slane %v3207, 2
    %v3218 = vrot.slane %v3209, 2
    %v3219 = vsel %vm1644, %v3217, %v3218
    %3222 = vst [vmem:[#allocation5 + $0x30] sm:$0xff] %v3216
    %3223 = vst [vmem:[#allocation5 + $0x38] sm:$0xff] %v3219
    %v3224 = vld [vmem:[#allocation4 + $0x10] sm:$0xf8]
    %v3225 = vld [vmem:[#allocation4 + $0x18] sm:$0xf8]
    %v3226 = vld [vmem:[#allocation4 + $0x20] sm:$0x7]
    %v3227 = vld [vmem:[#allocation4 + $0x28] sm:$0x7]
    %v3232 = vrot.slane %v3224, 3
    %v3233 = vrot.slane %v3226, 3
    %v3234 = vsel %vm1663, %v3232, %v3233
    %v3235 = vrot.slane %v3225, 3
    %v3236 = vrot.slane %v3227, 3
    %v3237 = vsel %vm1663, %v3235, %v3236
    %3240 = vst [vmem:[#allocation5 + $0x40] sm:$0xff] %v3234
    %3241 = vst [vmem:[#allocation5 + $0x48] sm:$0xff] %v3237
    %v3242 = vld [vmem:[#allocation4 + $0x10] sm:$0xf0]
    %v3243 = vld [vmem:[#allocation4 + $0x18] sm:$0xf0]
    %v3244 = vld [vmem:[#allocation4 + $0x20] sm:$0xf]
    %v3245 = vld [vmem:[#allocation4 + $0x28] sm:$0xf]
    %vm3250 = vcmask 1043456
    %v3251 = vrot.slane %v3242, 4
    %v3252 = vrot.slane %v3244, 4
    %v3253 = vsel %vm3250, %v3251, %v3252
    %v3254 = vrot.slane %v3243, 4
    %v3255 = vrot.slane %v3245, 4
    %v3256 = vsel %vm3250, %v3254, %v3255
    %3259 = vst [vmem:[#allocation5 + $0x50] sm:$0xff] %v3253
    %3260 = vst [vmem:[#allocation5 + $0x58] sm:$0xff] %v3256
    %v3261 = vld [vmem:[#allocation5] sm:$0xff]
    %v3262 = vld [vmem:[#allocation5 + $0x8] sm:$0xff]
    %v3263 = vld [vmem:[#allocation5 + $0x10] sm:$0xff]
    %v3264 = vld [vmem:[#allocation5 + $0x18] sm:$0xff]
    %v3265 = vld [vmem:[#allocation5 + $0x20] sm:$0xff]
    %v3266 = vld [vmem:[#allocation5 + $0x28] sm:$0xff]
    %v3267 = vld [vmem:[#allocation5 + $0x30] sm:$0xff]
    %v3268 = vld [vmem:[#allocation5 + $0x38] sm:$0xff]
    %v3269 = vld [vmem:[#allocation5 + $0x40] sm:$0xff]
    %v3270 = vld [vmem:[#allocation5 + $0x48] sm:$0xff]
    %v3271 = vld [vmem:[#allocation5 + $0x50] sm:$0xff]
    %v3272 = vld [vmem:[#allocation5 + $0x58] sm:$0xff]
    %v3273 = vld [vmem:[#allocation13] sm:$0xff]
    %v3274 = vld [vmem:[#allocation13 + $0x8] sm:$0xff]
    %v3275 = vld [vmem:[#allocation13 + $0x10] sm:$0xff]
    %v3276 = vld [vmem:[#allocation13 + $0x18] sm:$0xff]
    %v3277 = vld [vmem:[#allocation13 + $0x20] sm:$0xff]
    %v3278 = vld [vmem:[#allocation13 + $0x28] sm:$0xff]
    %v3279 = vld [vmem:[#allocation13 + $0x30] sm:$0xff]
    %v3280 = vld [vmem:[#allocation13 + $0x38] sm:$0xff]
    %v3281 = vld [vmem:[#allocation13 + $0x40] sm:$0xff]
    %v3282 = vld [vmem:[#allocation13 + $0x48] sm:$0xff]
    %v3283 = vld [vmem:[#allocation13 + $0x50] sm:$0xff]
    %v3284 = vld [vmem:[#allocation13 + $0x58] sm:$0xff]
    %v3285 = vld [vmem:[#allocation13 + $0x60] sm:$0xff]
    %v3286 = vld [vmem:[#allocation13 + $0x68] sm:$0xff]
    %v3287 = vld [vmem:[#allocation13 + $0x70] sm:$0xff]
    %v3288 = vld [vmem:[#allocation13 + $0x78] sm:$0xff]
    %v3289 = vld [vmem:[#allocation13 + $0x80] sm:$0xff]
    %v3290 = vld [vmem:[#allocation13 + $0x88] sm:$0xff]
    %v3291 = vld [vmem:[#allocation13 + $0x90] sm:$0xff]
    %v3292 = vld [vmem:[#allocation13 + $0x98] sm:$0xff]
    %v3293 = vld [vmem:[#allocation13 + $0xa0] sm:$0xff]
    %v3294 = vld [vmem:[#allocation13 + $0xa8] sm:$0xff]
    %v3295 = vld [vmem:[#allocation13 + $0xb0] sm:$0xff]
    %v3296 = vld [vmem:[#allocation13 + $0xb8] sm:$0xff]
    %v3297 = vld [vmem:[#allocation13 + $0xc0] sm:$0xff]
    %v3298 = vld [vmem:[#allocation13 + $0xc8] sm:$0xff]
    %v3299 = vld [vmem:[#allocation13 + $0xd0] sm:$0xff]
    %v3300 = vld [vmem:[#allocation13 + $0xd8] sm:$0xff]
    %v3301 = vld [vmem:[#allocation13 + $0xe0] sm:$0xff]
    %v3302 = vld [vmem:[#allocation13 + $0xe8] sm:$0xff]
    %v3303 = vld [vmem:[#allocation13 + $0xf0] sm:$0xff]
    %v3304 = vld [vmem:[#allocation13 + $0xf8] sm:$0xff]
    %v3305 = vld [vmem:[#allocation13 + $0x100] sm:$0xff]
    %v3306 = vld [vmem:[#allocation13 + $0x108] sm:$0xff]
    %v3307 = vld [vmem:[#allocation13 + $0x110] sm:$0xff]
    %v3308 = vld [vmem:[#allocation13 + $0x118] sm:$0xff]
    %v3309 = vld [vmem:[#allocation13 + $0x120] sm:$0xff]
    %v3310 = vld [vmem:[#allocation13 + $0x128] sm:$0xff]
    %v3311 = vld [vmem:[#allocation13 + $0x130] sm:$0xff]
    %v3312 = vld [vmem:[#allocation13 + $0x138] sm:$0xff]
    %v3313 = vld [vmem:[#allocation13 + $0x140] sm:$0xff]
    %v3314 = vld [vmem:[#allocation13 + $0x148] sm:$0xff]
    %v3315 = vld [vmem:[#allocation13 + $0x150] sm:$0xff]
    %v3316 = vld [vmem:[#allocation13 + $0x158] sm:$0xff]
    %v3317 = vld [vmem:[#allocation13 + $0x160] sm:$0xff]
    %v3318 = vld [vmem:[#allocation13 + $0x168] sm:$0xff]
    %v3319 = vld [vmem:[#allocation13 + $0x170] sm:$0xff]
    %v3320 = vld [vmem:[#allocation13 + $0x178] sm:$0xff]
    %v3321 = vld [vmem:[#allocation13 + $0x180] sm:$0xff]
    %v3322 = vld [vmem:[#allocation13 + $0x188] sm:$0xff]
    %v3323 = vld [vmem:[#allocation13 + $0x190] sm:$0xff]
    %v3324 = vld [vmem:[#allocation13 + $0x198] sm:$0xff]
    %v3325 = vld [vmem:[#allocation13 + $0x1a0] sm:$0xff]
    %v3326 = vld [vmem:[#allocation13 + $0x1a8] sm:$0xff]
    %v3327 = vld [vmem:[#allocation13 + $0x1b0] sm:$0xff]
    %v3328 = vld [vmem:[#allocation13 + $0x1b8] sm:$0xff]
    %v3329 = vld [vmem:[#allocation13 + $0x1c0] sm:$0xff]
    %v3330 = vld [vmem:[#allocation13 + $0x1c8] sm:$0xff]
    %v3331 = vld [vmem:[#allocation13 + $0x1d0] sm:$0xff]
    %v3332 = vld [vmem:[#allocation13 + $0x1d8] sm:$0xff]
    %v3333 = vld [vmem:[#allocation13 + $0x1e0] sm:$0xff]
    %v3334 = vld [vmem:[#allocation13 + $0x1e8] sm:$0xff]
    %v3335 = vld [vmem:[#allocation13 + $0x1f0] sm:$0xff]
    %v3336 = vld [vmem:[#allocation13 + $0x1f8] sm:$0xff]
    %v3337 = vld [vmem:[#allocation13 + $0x200] sm:$0xff]
    %v3338 = vld [vmem:[#allocation13 + $0x208] sm:$0xff]
    %v3339 = vld [vmem:[#allocation13 + $0x210] sm:$0xff]
    %v3340 = vld [vmem:[#allocation13 + $0x218] sm:$0xff]
    %v3341 = vld [vmem:[#allocation13 + $0x220] sm:$0xff]
    %v3342 = vld [vmem:[#allocation13 + $0x228] sm:$0xff]
    %v3343 = vld [vmem:[#allocation13 + $0x230] sm:$0xff]
    %v3344 = vld [vmem:[#allocation13 + $0x238] sm:$0xff]
    %v3345 = vld [vmem:[#allocation13 + $0x240] sm:$0xff]
    %v3346 = vld [vmem:[#allocation13 + $0x248] sm:$0xff]
    %v3347 = vld [vmem:[#allocation13 + $0x250] sm:$0xff]
    %v3348 = vld [vmem:[#allocation13 + $0x258] sm:$0xff]
    %v3349 = vld [vmem:[#allocation13 + $0x260] sm:$0xff]
    %v3350 = vld [vmem:[#allocation13 + $0x268] sm:$0xff]
    %v3351 = vld [vmem:[#allocation13 + $0x270] sm:$0xff]
    %v3352 = vld [vmem:[#allocation13 + $0x278] sm:$0xff]
    %v3353 = vld [vmem:[#allocation13 + $0x280] sm:$0xff]
    %v3354 = vld [vmem:[#allocation13 + $0x288] sm:$0xff]
    %v3355 = vld [vmem:[#allocation13 + $0x290] sm:$0xff]
    %v3356 = vld [vmem:[#allocation13 + $0x298] sm:$0xff]
    %v3357 = vld [vmem:[#allocation13 + $0x2a0] sm:$0xff]
    %v3358 = vld [vmem:[#allocation13 + $0x2a8] sm:$0xff]
    %v3359 = vld [vmem:[#allocation13 + $0x2b0] sm:$0xff]
    %v3360 = vld [vmem:[#allocation13 + $0x2b8] sm:$0xff]
    %v3361 = vld [vmem:[#allocation13 + $0x2c0] sm:$0xff]
    %v3362 = vld [vmem:[#allocation13 + $0x2c8] sm:$0xff]
    %v3363 = vld [vmem:[#allocation13 + $0x2d0] sm:$0xff]
    %v3364 = vld [vmem:[#allocation13 + $0x2d8] sm:$0xff]
    %v3365 = vld [vmem:[#allocation13 + $0x2e0] sm:$0xff]
    %v3366 = vld [vmem:[#allocation13 + $0x2e8] sm:$0xff]
    %v3367 = vld [vmem:[#allocation13 + $0x2f0] sm:$0xff]
    %v3368 = vld [vmem:[#allocation13 + $0x2f8] sm:$0xff]
    %v3369 = vld [vmem:[#allocation13 + $0x300] sm:$0xff]
    %v3370 = vld [vmem:[#allocation13 + $0x308] sm:$0xff]
    %v3371 = vld [vmem:[#allocation13 + $0x310] sm:$0xff]
    %v3372 = vld [vmem:[#allocation13 + $0x318] sm:$0xff]
    %v3373 = vld [vmem:[#allocation13 + $0x320] sm:$0xff]
    %v3374 = vld [vmem:[#allocation13 + $0x328] sm:$0xff]
    %v3375 = vld [vmem:[#allocation13 + $0x330] sm:$0xff]
    %v3376 = vld [vmem:[#allocation13 + $0x338] sm:$0xff]
    %v3377 = vld [vmem:[#allocation13 + $0x340] sm:$0xff]
    %v3378 = vld [vmem:[#allocation13 + $0x348] sm:$0xff]
    %v3379 = vld [vmem:[#allocation13 + $0x350] sm:$0xff]
    %v3380 = vld [vmem:[#allocation13 + $0x358] sm:$0xff]
    %v3381 = vld [vmem:[#allocation13 + $0x360] sm:$0xff]
    %v3382 = vld [vmem:[#allocation13 + $0x368] sm:$0xff]
    %v3383 = vld [vmem:[#allocation13 + $0x370] sm:$0xff]
    %v3384 = vld [vmem:[#allocation13 + $0x378] sm:$0xff]
    %v3385 = vld [vmem:[#allocation13 + $0x380] sm:$0xff]
    %v3386 = vld [vmem:[#allocation13 + $0x388] sm:$0xff]
    %v3387 = vld [vmem:[#allocation13 + $0x390] sm:$0xff]
    %v3388 = vld [vmem:[#allocation13 + $0x398] sm:$0xff]
    %v3389 = vld [vmem:[#allocation13 + $0x3a0] sm:$0xff]
    %v3390 = vld [vmem:[#allocation13 + $0x3a8] sm:$0xff]
    %v3391 = vld [vmem:[#allocation13 + $0x3b0] sm:$0xff]
    %v3392 = vld [vmem:[#allocation13 + $0x3b8] sm:$0xff]
    %v3393 = vld [vmem:[#allocation13 + $0x3c0] sm:$0xff]
    %v3394 = vld [vmem:[#allocation13 + $0x3c8] sm:$0xff]
    %v3395 = vld [vmem:[#allocation13 + $0x3d0] sm:$0xff]
    %v3396 = vld [vmem:[#allocation13 + $0x3d8] sm:$0xff]
    %v3397 = vld [vmem:[#allocation13 + $0x3e0] sm:$0xff]
    %v3398 = vld [vmem:[#allocation13 + $0x3e8] sm:$0xff]
    %v3399 = vld [vmem:[#allocation13 + $0x3f0] sm:$0xff]
    %v3400 = vld [vmem:[#allocation13 + $0x3f8] sm:$0xff]
    %v3401 = vld [vmem:[#allocation13 + $0x400] sm:$0xff]
    %v3402 = vld [vmem:[#allocation13 + $0x408] sm:$0xff]
    %v3403 = vld [vmem:[#allocation13 + $0x410] sm:$0xff]
    %v3404 = vld [vmem:[#allocation13 + $0x418] sm:$0xff]
    %v3405 = vld [vmem:[#allocation13 + $0x420] sm:$0xff]
    %v3406 = vld [vmem:[#allocation13 + $0x428] sm:$0xff]
    %v3407 = vld [vmem:[#allocation13 + $0x430] sm:$0xff]
    %v3408 = vld [vmem:[#allocation13 + $0x438] sm:$0xff]
    %v3409 = vld [vmem:[#allocation13 + $0x440] sm:$0xff]
    %v3410 = vld [vmem:[#allocation13 + $0x448] sm:$0xff]
    %v3411 = vld [vmem:[#allocation13 + $0x450] sm:$0xff]
    %v3412 = vld [vmem:[#allocation13 + $0x458] sm:$0xff]
    %v3413 = vld [vmem:[#allocation13 + $0x460] sm:$0xff]
    %v3414 = vld [vmem:[#allocation13 + $0x468] sm:$0xff]
    %v3415 = vld [vmem:[#allocation13 + $0x470] sm:$0xff]
    %v3416 = vld [vmem:[#allocation13 + $0x478] sm:$0xff]
    %v3417 = vld [vmem:[#allocation13 + $0x480] sm:$0xff]
    %v3418 = vld [vmem:[#allocation13 + $0x488] sm:$0xff]
    %v3419 = vld [vmem:[#allocation13 + $0x490] sm:$0xff]
    %v3420 = vld [vmem:[#allocation13 + $0x498] sm:$0xff]
    %v3421 = vld [vmem:[#allocation13 + $0x4a0] sm:$0xff]
    %v3422 = vld [vmem:[#allocation13 + $0x4a8] sm:$0xff]
    %v3423 = vld [vmem:[#allocation13 + $0x4b0] sm:$0xff]
    %v3424 = vld [vmem:[#allocation13 + $0x4b8] sm:$0xff]
    %v3425 = vld [vmem:[#allocation13 + $0x4c0] sm:$0xff]
    %v3426 = vld [vmem:[#allocation13 + $0x4c8] sm:$0xff]
    %v3427 = vld [vmem:[#allocation13 + $0x4d0] sm:$0xff]
    %v3428 = vld [vmem:[#allocation13 + $0x4d8] sm:$0xff]
    %v3429 = vld [vmem:[#allocation13 + $0x4e0] sm:$0xff]
    %v3430 = vld [vmem:[#allocation13 + $0x4e8] sm:$0xff]
    %v3431 = vld [vmem:[#allocation13 + $0x4f0] sm:$0xff]
    %v3432 = vld [vmem:[#allocation13 + $0x4f8] sm:$0xff]
    %v3433 = vld [vmem:[#allocation13 + $0x500] sm:$0xff]
    %v3434 = vld [vmem:[#allocation13 + $0x508] sm:$0xff]
    %v3435 = vld [vmem:[#allocation13 + $0x510] sm:$0xff]
    %v3436 = vld [vmem:[#allocation13 + $0x518] sm:$0xff]
    %v3437 = vld [vmem:[#allocation13 + $0x520] sm:$0xff]
    %v3438 = vld [vmem:[#allocation13 + $0x528] sm:$0xff]
    %v3439 = vld [vmem:[#allocation13 + $0x530] sm:$0xff]
    %v3440 = vld [vmem:[#allocation13 + $0x538] sm:$0xff]
    %v3441 = vld [vmem:[#allocation13 + $0x540] sm:$0xff]
    %v3442 = vld [vmem:[#allocation13 + $0x548] sm:$0xff]
    %v3443 = vld [vmem:[#allocation13 + $0x550] sm:$0xff]
    %v3444 = vld [vmem:[#allocation13 + $0x558] sm:$0xff]
    %v3445 = vld [vmem:[#allocation13 + $0x560] sm:$0xff]
    %v3446 = vld [vmem:[#allocation13 + $0x568] sm:$0xff]
    %v3447 = vld [vmem:[#allocation13 + $0x570] sm:$0xff]
    %v3448 = vld [vmem:[#allocation13 + $0x578] sm:$0xff]
    %v3449 = vld [vmem:[#allocation13 + $0x580] sm:$0xff]
    %v3450 = vld [vmem:[#allocation13 + $0x588] sm:$0xff]
    %v3451 = vld [vmem:[#allocation13 + $0x590] sm:$0xff]
    %v3452 = vld [vmem:[#allocation13 + $0x598] sm:$0xff]
    %v3453 = vld [vmem:[#allocation13 + $0x5a0] sm:$0xff]
    %v3454 = vld [vmem:[#allocation13 + $0x5a8] sm:$0xff]
    %v3455 = vld [vmem:[#allocation13 + $0x5b0] sm:$0xff]
    %v3456 = vld [vmem:[#allocation13 + $0x5b8] sm:$0xff]
    %v3457 = vld [vmem:[#allocation13 + $0x5c0] sm:$0xff]
    %v3458 = vld [vmem:[#allocation13 + $0x5c8] sm:$0xff]
    %v3459 = vld [vmem:[#allocation13 + $0x5d0] sm:$0xff]
    %v3460 = vld [vmem:[#allocation13 + $0x5d8] sm:$0xff]
    %v3461 = vld [vmem:[#allocation13 + $0x5e0] sm:$0xff]
    %v3462 = vld [vmem:[#allocation13 + $0x5e8] sm:$0xff]
    %v3463 = vld [vmem:[#allocation13 + $0x5f0] sm:$0xff]
    %v3464 = vld [vmem:[#allocation13 + $0x5f8] sm:$0xff]
    %v3465 = vld [vmem:[#allocation13 + $0x600] sm:$0xff]
    %v3466 = vld [vmem:[#allocation13 + $0x608] sm:$0xff]
    %v3467 = vld [vmem:[#allocation13 + $0x610] sm:$0xff]
    %v3468 = vld [vmem:[#allocation13 + $0x618] sm:$0xff]
    %v3469 = vld [vmem:[#allocation13 + $0x620] sm:$0xff]
    %v3470 = vld [vmem:[#allocation13 + $0x628] sm:$0xff]
    %v3471 = vld [vmem:[#allocation13 + $0x630] sm:$0xff]
    %v3472 = vld [vmem:[#allocation13 + $0x638] sm:$0xff]
    %v3473 = vld [vmem:[#allocation13 + $0x640] sm:$0xff]
    %v3474 = vld [vmem:[#allocation13 + $0x648] sm:$0xff]
    %v3475 = vld [vmem:[#allocation13 + $0x650] sm:$0xff]
    %v3476 = vld [vmem:[#allocation13 + $0x658] sm:$0xff]
    %v3477 = vld [vmem:[#allocation13 + $0x660] sm:$0xff]
    %v3478 = vld [vmem:[#allocation13 + $0x668] sm:$0xff]
    %v3479 = vld [vmem:[#allocation13 + $0x670] sm:$0xff]
    %v3480 = vld [vmem:[#allocation13 + $0x678] sm:$0xff]
    %v3481 = vld [vmem:[#allocation13 + $0x680] sm:$0xff]
    %v3482 = vld [vmem:[#allocation13 + $0x688] sm:$0xff]
    %v3483 = vld [vmem:[#allocation13 + $0x690] sm:$0xff]
    %v3484 = vld [vmem:[#allocation13 + $0x698] sm:$0xff]
    %v3485 = vld [vmem:[#allocation13 + $0x6a0] sm:$0xff]
    %v3486 = vld [vmem:[#allocation13 + $0x6a8] sm:$0xff]
    %v3487 = vld [vmem:[#allocation13 + $0x6b0] sm:$0xff]
    %v3488 = vld [vmem:[#allocation13 + $0x6b8] sm:$0xff]
    %v3489 = vld [vmem:[#allocation13 + $0x6c0] sm:$0xff]
    %v3490 = vld [vmem:[#allocation13 + $0x6c8] sm:$0xff]
    %v3491 = vld [vmem:[#allocation13 + $0x6d0] sm:$0xff]
    %v3492 = vld [vmem:[#allocation13 + $0x6d8] sm:$0xff]
    %v3493 = vld [vmem:[#allocation13 + $0x6e0] sm:$0xff]
    %v3494 = vld [vmem:[#allocation13 + $0x6e8] sm:$0xff]
    %v3495 = vld [vmem:[#allocation13 + $0x6f0] sm:$0xff]
    %v3496 = vld [vmem:[#allocation13 + $0x6f8] sm:$0xff]
    %v3497 = vld [vmem:[#allocation13 + $0x700] sm:$0xff]
    %v3498 = vld [vmem:[#allocation13 + $0x708] sm:$0xff]
    %v3499 = vld [vmem:[#allocation13 + $0x710] sm:$0xff]
    %v3500 = vld [vmem:[#allocation13 + $0x718] sm:$0xff]
    %v3501 = vld [vmem:[#allocation13 + $0x720] sm:$0xff]
    %v3502 = vld [vmem:[#allocation13 + $0x728] sm:$0xff]
    %v3503 = vld [vmem:[#allocation13 + $0x730] sm:$0xff]
    %v3504 = vld [vmem:[#allocation13 + $0x738] sm:$0xff]
    %v3505 = vld [vmem:[#allocation13 + $0x740] sm:$0xff]
    %v3506 = vld [vmem:[#allocation13 + $0x748] sm:$0xff]
    %v3507 = vld [vmem:[#allocation13 + $0x750] sm:$0xff]
    %v3508 = vld [vmem:[#allocation13 + $0x758] sm:$0xff]
    %v3509 = vld [vmem:[#allocation13 + $0x760] sm:$0xff]
    %v3510 = vld [vmem:[#allocation13 + $0x768] sm:$0xff]
    %v3511 = vld [vmem:[#allocation13 + $0x770] sm:$0xff]
    %v3512 = vld [vmem:[#allocation13 + $0x778] sm:$0xff]
    %v3513 = vld [vmem:[#allocation13 + $0x780] sm:$0xff]
    %v3514 = vld [vmem:[#allocation13 + $0x788] sm:$0xff]
    %v3515 = vld [vmem:[#allocation13 + $0x790] sm:$0xff]
    %v3516 = vld [vmem:[#allocation13 + $0x798] sm:$0xff]
    %v3517 = vld [vmem:[#allocation13 + $0x7a0] sm:$0xff]
    %v3518 = vld [vmem:[#allocation13 + $0x7a8] sm:$0xff]
    %v3519 = vld [vmem:[#allocation13 + $0x7b0] sm:$0xff]
    %v3520 = vld [vmem:[#allocation13 + $0x7b8] sm:$0xff]
    %v3521 = vld [vmem:[#allocation13 + $0x7c0] sm:$0xff]
    %v3522 = vld [vmem:[#allocation13 + $0x7c8] sm:$0xff]
    %v3523 = vld [vmem:[#allocation13 + $0x7d0] sm:$0xff]
    %v3524 = vld [vmem:[#allocation13 + $0x7d8] sm:$0xff]
    %v3525 = vld [vmem:[#allocation13 + $0x7e0] sm:$0xff]
    %v3526 = vld [vmem:[#allocation13 + $0x7e8] sm:$0xff]
    %v3527 = vld [vmem:[#allocation13 + $0x7f0] sm:$0xff]
    %v3528 = vld [vmem:[#allocation13 + $0x7f8] sm:$0xff]
    %v3529 = vld [vmem:[#allocation13 + $0x800] sm:$0xff]
    %v3530 = vld [vmem:[#allocation13 + $0x808] sm:$0xff]
    %v3531 = vld [vmem:[#allocation13 + $0x810] sm:$0xff]
    %v3532 = vld [vmem:[#allocation13 + $0x818] sm:$0xff]
    %v3533 = vld [vmem:[#allocation13 + $0x820] sm:$0xff]
    %v3534 = vld [vmem:[#allocation13 + $0x828] sm:$0xff]
    %v3535 = vld [vmem:[#allocation13 + $0x830] sm:$0xff]
    %v3536 = vld [vmem:[#allocation13 + $0x838] sm:$0xff]
    %v3537 = vld [vmem:[#allocation13 + $0x840] sm:$0xff]
    %v3538 = vld [vmem:[#allocation13 + $0x848] sm:$0xff]
    %v3539 = vld [vmem:[#allocation13 + $0x850] sm:$0xff]
    %v3540 = vld [vmem:[#allocation13 + $0x858] sm:$0xff]
    %v3541 = vld [vmem:[#allocation13 + $0x860] sm:$0xff]
    %v3542 = vld [vmem:[#allocation13 + $0x868] sm:$0xff]
    %v3543 = vld [vmem:[#allocation13 + $0x870] sm:$0xff]
    %v3544 = vld [vmem:[#allocation13 + $0x878] sm:$0xff]
    %v3545 = vld [vmem:[#allocation13 + $0x880] sm:$0xff]
    %v3546 = vld [vmem:[#allocation13 + $0x888] sm:$0xff]
    %v3547 = vld [vmem:[#allocation13 + $0x890] sm:$0xff]
    %v3548 = vld [vmem:[#allocation13 + $0x898] sm:$0xff]
    %v3549 = vld [vmem:[#allocation13 + $0x8a0] sm:$0xff]
    %v3550 = vld [vmem:[#allocation13 + $0x8a8] sm:$0xff]
    %v3551 = vld [vmem:[#allocation13 + $0x8b0] sm:$0xff]
    %v3552 = vld [vmem:[#allocation13 + $0x8b8] sm:$0xff]
    %v3553 = vld [vmem:[#allocation13 + $0x8c0] sm:$0xff]
    %v3554 = vld [vmem:[#allocation13 + $0x8c8] sm:$0xff]
    %v3555 = vld [vmem:[#allocation13 + $0x8d0] sm:$0xff]
    %v3556 = vld [vmem:[#allocation13 + $0x8d8] sm:$0xff]
    %v3557 = vld [vmem:[#allocation13 + $0x8e0] sm:$0xff]
    %v3558 = vld [vmem:[#allocation13 + $0x8e8] sm:$0xff]
    %v3559 = vld [vmem:[#allocation13 + $0x8f0] sm:$0xff]
    %v3560 = vld [vmem:[#allocation13 + $0x8f8] sm:$0xff]
    %v3561 = vld [vmem:[#allocation13 + $0x900] sm:$0xff]
    %v3562 = vld [vmem:[#allocation13 + $0x908] sm:$0xff]
    %v3563 = vld [vmem:[#allocation13 + $0x910] sm:$0xff]
    %v3564 = vld [vmem:[#allocation13 + $0x918] sm:$0xff]
    %v3565 = vld [vmem:[#allocation13 + $0x920] sm:$0xff]
    %v3566 = vld [vmem:[#allocation13 + $0x928] sm:$0xff]
    %v3567 = vld [vmem:[#allocation13 + $0x930] sm:$0xff]
    %v3568 = vld [vmem:[#allocation13 + $0x938] sm:$0xff]
    %v3569 = vld [vmem:[#allocation13 + $0x940] sm:$0xff]
    %v3570 = vld [vmem:[#allocation13 + $0x948] sm:$0xff]
    %v3571 = vld [vmem:[#allocation13 + $0x950] sm:$0xff]
    %v3572 = vld [vmem:[#allocation13 + $0x958] sm:$0xff]
    %v3573 = vld [vmem:[#allocation13 + $0x960] sm:$0xff]
    %v3574 = vld [vmem:[#allocation13 + $0x968] sm:$0xff]
    %v3575 = vld [vmem:[#allocation13 + $0x970] sm:$0xff]
    %v3576 = vld [vmem:[#allocation13 + $0x978] sm:$0xff]
    %v3577 = vld [vmem:[#allocation13 + $0x980] sm:$0xff]
    %v3578 = vld [vmem:[#allocation13 + $0x988] sm:$0xff]
    %v3579 = vld [vmem:[#allocation13 + $0x990] sm:$0xff]
    %v3580 = vld [vmem:[#allocation13 + $0x998] sm:$0xff]
    %v3581 = vld [vmem:[#allocation13 + $0x9a0] sm:$0xff]
    %v3582 = vld [vmem:[#allocation13 + $0x9a8] sm:$0xff]
    %v3583 = vld [vmem:[#allocation13 + $0x9b0] sm:$0xff]
    %v3584 = vld [vmem:[#allocation13 + $0x9b8] sm:$0xff]
    %v3585 = vld [vmem:[#allocation13 + $0x9c0] sm:$0xff]
    %v3586 = vld [vmem:[#allocation13 + $0x9c8] sm:$0xff]
    %v3587 = vld [vmem:[#allocation13 + $0x9d0] sm:$0xff]
    %v3588 = vld [vmem:[#allocation13 + $0x9d8] sm:$0xff]
    %v3589 = vld [vmem:[#allocation13 + $0x9e0] sm:$0xff]
    %v3590 = vld [vmem:[#allocation13 + $0x9e8] sm:$0xff]
    %v3591 = vld [vmem:[#allocation13 + $0x9f0] sm:$0xff]
    %v3592 = vld [vmem:[#allocation13 + $0x9f8] sm:$0xff]
    %v3593 = vld [vmem:[#allocation13 + $0xa00] sm:$0xff]
    %v3594 = vld [vmem:[#allocation13 + $0xa08] sm:$0xff]
    %v3595 = vld [vmem:[#allocation13 + $0xa10] sm:$0xff]
    %v3596 = vld [vmem:[#allocation13 + $0xa18] sm:$0xff]
    %v3597 = vld [vmem:[#allocation13 + $0xa20] sm:$0xff]
    %v3598 = vld [vmem:[#allocation13 + $0xa28] sm:$0xff]
    %v3599 = vld [vmem:[#allocation13 + $0xa30] sm:$0xff]
    %v3600 = vld [vmem:[#allocation13 + $0xa38] sm:$0xff]
    %v3601 = vld [vmem:[#allocation13 + $0xa40] sm:$0xff]
    %v3602 = vld [vmem:[#allocation13 + $0xa48] sm:$0xff]
    %v3603 = vld [vmem:[#allocation13 + $0xa50] sm:$0xff]
    %v3604 = vld [vmem:[#allocation13 + $0xa58] sm:$0xff]
    %v3605 = vld [vmem:[#allocation13 + $0xa60] sm:$0xff]
    %v3606 = vld [vmem:[#allocation13 + $0xa68] sm:$0xff]
    %v3607 = vld [vmem:[#allocation13 + $0xa70] sm:$0xff]
    %v3608 = vld [vmem:[#allocation13 + $0xa78] sm:$0xff]
    %v3609 = vld [vmem:[#allocation13 + $0xa80] sm:$0xff]
    %v3610 = vld [vmem:[#allocation13 + $0xa88] sm:$0xff]
    %v3611 = vld [vmem:[#allocation13 + $0xa90] sm:$0xff]
    %v3612 = vld [vmem:[#allocation13 + $0xa98] sm:$0xff]
    %v3613 = vld [vmem:[#allocation13 + $0xaa0] sm:$0xff]
    %v3614 = vld [vmem:[#allocation13 + $0xaa8] sm:$0xff]
    %v3615 = vld [vmem:[#allocation13 + $0xab0] sm:$0xff]
    %v3616 = vld [vmem:[#allocation13 + $0xab8] sm:$0xff]
    %v3617 = vld [vmem:[#allocation13 + $0xac0] sm:$0xff]
    %v3618 = vld [vmem:[#allocation13 + $0xac8] sm:$0xff]
    %v3619 = vld [vmem:[#allocation13 + $0xad0] sm:$0xff]
    %v3620 = vld [vmem:[#allocation13 + $0xad8] sm:$0xff]
    %v3621 = vld [vmem:[#allocation13 + $0xae0] sm:$0xff]
    %v3622 = vld [vmem:[#allocation13 + $0xae8] sm:$0xff]
    %v3623 = vld [vmem:[#allocation13 + $0xaf0] sm:$0xff]
    %v3624 = vld [vmem:[#allocation13 + $0xaf8] sm:$0xff]
    %v3625 = vld [vmem:[#allocation13 + $0xb00] sm:$0xff]
    %v3626 = vld [vmem:[#allocation13 + $0xb08] sm:$0xff]
    %v3627 = vld [vmem:[#allocation13 + $0xb10] sm:$0xff]
    %v3628 = vld [vmem:[#allocation13 + $0xb18] sm:$0xff]
    %v3629 = vld [vmem:[#allocation13 + $0xb20] sm:$0xff]
    %v3630 = vld [vmem:[#allocation13 + $0xb28] sm:$0xff]
    %v3631 = vld [vmem:[#allocation13 + $0xb30] sm:$0xff]
    %v3632 = vld [vmem:[#allocation13 + $0xb38] sm:$0xff]
    %v3633 = vld [vmem:[#allocation13 + $0xb40] sm:$0xff]
    %v3634 = vld [vmem:[#allocation13 + $0xb48] sm:$0xff]
    %v3635 = vld [vmem:[#allocation13 + $0xb50] sm:$0xff]
    %v3636 = vld [vmem:[#allocation13 + $0xb58] sm:$0xff]
    %v3637 = vld [vmem:[#allocation13 + $0xb60] sm:$0xff]
    %v3638 = vld [vmem:[#allocation13 + $0xb68] sm:$0xff]
    %v3639 = vld [vmem:[#allocation13 + $0xb70] sm:$0xff]
    %v3640 = vld [vmem:[#allocation13 + $0xb78] sm:$0xff]
    %v3641 = vld [vmem:[#allocation13 + $0xb80] sm:$0xff]
    %v3642 = vld [vmem:[#allocation13 + $0xb88] sm:$0xff]
    %v3643 = vld [vmem:[#allocation13 + $0xb90] sm:$0xff]
    %v3644 = vld [vmem:[#allocation13 + $0xb98] sm:$0xff]
    %v3645 = vld [vmem:[#allocation13 + $0xba0] sm:$0xff]
    %v3646 = vld [vmem:[#allocation13 + $0xba8] sm:$0xff]
    %v3647 = vld [vmem:[#allocation13 + $0xbb0] sm:$0xff]
    %v3648 = vld [vmem:[#allocation13 + $0xbb8] sm:$0xff]
    %v3649 = vld [vmem:[#allocation13 + $0xbc0] sm:$0xff]
    %v3650 = vld [vmem:[#allocation13 + $0xbc8] sm:$0xff]
    %v3651 = vld [vmem:[#allocation13 + $0xbd0] sm:$0xff]
    %v3652 = vld [vmem:[#allocation13 + $0xbd8] sm:$0xff]
    %v3653 = vld [vmem:[#allocation13 + $0xbe0] sm:$0xff]
    %v3654 = vld [vmem:[#allocation13 + $0xbe8] sm:$0xff]
    %v3655 = vld [vmem:[#allocation13 + $0xbf0] sm:$0xff]
    %v3656 = vld [vmem:[#allocation13 + $0xbf8] sm:$0xff]
    %3657 = vmatprep.subr.mxu0 %v3274
    %3658 = vmatpush1.msra.mxu0 %v3273
    %3659 = vmatprep.subr.mxu0 %v3278
    %3660 = vmatpush1.msra.mxu0 %v3277
    %3661 = vmatprep.subr.mxu0 %v3282
    %3662 = vmatpush1.msra.mxu0 %v3281
    %3663 = vmatprep.subr.mxu0 %v3286
    %3664 = vmatpush1.msra.mxu0 %v3285
    %3665 = vmatprep.subr.mxu0 %v3290
    %3666 = vmatpush1.msra.mxu0 %v3289
    %3667 = vmatprep.subr.mxu0 %v3294
    %3668 = vmatpush1.msra.mxu0 %v3293
    %3669 = vmatprep.subr.mxu0 %v3298
    %3670 = vmatpush1.msra.mxu0 %v3297
    %3671 = vmatprep.subr.mxu0 %v3302
    %3672 = vmatpush1.msra.mxu0 %v3301
    %3673 = vmatprep.subr.mxu0 %v3306
    %3674 = vmatpush1.msra.mxu0 %v3305
    %3675 = vmatprep.subr.mxu0 %v3310
    %3676 = vmatpush1.msra.mxu0 %v3309
    %3677 = vmatprep.subr.mxu0 %v3314
    %3678 = vmatpush1.msra.mxu0 %v3313
    %3679 = vmatprep.subr.mxu0 %v3318
    %3680 = vmatpush1.msra.mxu0 %v3317
    %3681 = vmatprep.subr.mxu0 %v3322
    %3682 = vmatpush1.msra.mxu0 %v3321
    %3683 = vmatprep.subr.mxu0 %v3326
    %3684 = vmatpush1.msra.mxu0 %v3325
    %3685 = vmatprep.subr.mxu0 %v3330
    %3686 = vmatpush1.msra.mxu0 %v3329
    %3687 = vmatprep.subr.mxu0 %v3334
    %3688 = vmatpush1.msra.mxu0 %v3333
    %3689 = vmatprep.subr.mxu0 %v3338
    %3690 = vmatpush1.msra.mxu0 %v3337
    %3691 = vmatprep.subr.mxu0 %v3342
    %3692 = vmatpush1.msra.mxu0 %v3341
    %3693 = vmatprep.subr.mxu0 %v3346
    %3694 = vmatpush1.msra.mxu0 %v3345
    %3695 = vmatprep.subr.mxu0 %v3350
    %3696 = vmatpush1.msra.mxu0 %v3349
    %3697 = vmatprep.subr.mxu0 %v3354
    %3698 = vmatpush1.msra.mxu0 %v3353
    %3699 = vmatprep.subr.mxu0 %v3358
    %3700 = vmatpush1.msra.mxu0 %v3357
    %3701 = vmatprep.subr.mxu0 %v3362
    %3702 = vmatpush1.msra.mxu0 %v3361
    %3703 = vmatprep.subr.mxu0 %v3366
    %3704 = vmatpush1.msra.mxu0 %v3365
    %3705 = vmatprep.subr.mxu0 %v3370
    %3706 = vmatpush1.msra.mxu0 %v3369
    %3707 = vmatprep.subr.mxu0 %v3374
    %3708 = vmatpush1.msra.mxu0 %v3373
    %3709 = vmatprep.subr.mxu0 %v3378
    %3710 = vmatpush1.msra.mxu0 %v3377
    %3711 = vmatprep.subr.mxu0 %v3382
    %3712 = vmatpush1.msra.mxu0 %v3381
    %3713 = vmatprep.subr.mxu0 %v3386
    %3714 = vmatpush1.msra.mxu0 %v3385
    %3715 = vmatprep.subr.mxu0 %v3390
    %3716 = vmatpush1.msra.mxu0 %v3389
    %3717 = vmatprep.subr.mxu0 %v3394
    %3718 = vmatpush1.msra.mxu0 %v3393
    %3719 = vmatprep.subr.mxu0 %v3398
    %3720 = vmatpush1.msra.mxu0 %v3397
    %3721 = vmatprep.mubr.f32.mxu0 %v3262
    %3722 = vmatmul.mubr.f32.gmra.mrb[0].mxu0 %v3261
    %v3723 = vpop.f32.mrb[0].mxu0
    %v3724 = vadd.f32 0.0, %v3723
    %v3725 = vpop.f32.mrb[0].mxu0
    %v3726 = vadd.f32 0.0, %v3725
    %3727 = vmatprep.mubr.f32.mxu0 %v3268
    %3728 = vmatmul.mubr.f32.gmra.mrb[0].mxu0 %v3267
    %v3729 = vpop.f32.mrb[0].mxu0
    %v3730 = vadd.f32 0.0, %v3729
    %v3731 = vpop.f32.mrb[0].mxu0
    %v3732 = vadd.f32 0.0, %v3731
    %3733 = vdwg.mxu0
    %3734 = vmatprep.subr.mxu0 %v3402
    %3735 = vmatpush1.msra.mxu0 %v3401
    %3736 = vmatprep.subr.mxu0 %v3406
    %3737 = vmatpush1.msra.mxu0 %v3405
    %3738 = vmatprep.subr.mxu0 %v3410
    %3739 = vmatpush1.msra.mxu0 %v3409
    %3740 = vmatprep.subr.mxu0 %v3414
    %3741 = vmatpush1.msra.mxu0 %v3413
    %3742 = vmatprep.subr.mxu0 %v3418
    %3743 = vmatpush1.msra.mxu0 %v3417
    %3744 = vmatprep.subr.mxu0 %v3422
    %3745 = vmatpush1.msra.mxu0 %v3421
    %3746 = vmatprep.subr.mxu0 %v3426
    %3747 = vmatpush1.msra.mxu0 %v3425
    %3748 = vmatprep.subr.mxu0 %v3430
    %3749 = vmatpush1.msra.mxu0 %v3429
    %3750 = vmatprep.subr.mxu0 %v3434
    %3751 = vmatpush1.msra.mxu0 %v3433
    %3752 = vmatprep.subr.mxu0 %v3438
    %3753 = vmatpush1.msra.mxu0 %v3437
    %3754 = vmatprep.subr.mxu0 %v3442
    %3755 = vmatpush1.msra.mxu0 %v3441
    %3756 = vmatprep.subr.mxu0 %v3446
    %3757 = vmatpush1.msra.mxu0 %v3445
    %3758 = vmatprep.subr.mxu0 %v3450
    %3759 = vmatpush1.msra.mxu0 %v3449
    %3760 = vmatprep.subr.mxu0 %v3454
    %3761 = vmatpush1.msra.mxu0 %v3453
    %3762 = vmatprep.subr.mxu0 %v3458
    %3763 = vmatpush1.msra.mxu0 %v3457
    %3764 = vmatprep.subr.mxu0 %v3462
    %3765 = vmatpush1.msra.mxu0 %v3461
    %3766 = vmatprep.subr.mxu0 %v3466
    %3767 = vmatpush1.msra.mxu0 %v3465
    %3768 = vmatprep.subr.mxu0 %v3470
    %3769 = vmatpush1.msra.mxu0 %v3469
    %3770 = vmatprep.subr.mxu0 %v3474
    %3771 = vmatpush1.msra.mxu0 %v3473
    %3772 = vmatprep.subr.mxu0 %v3478
    %3773 = vmatpush1.msra.mxu0 %v3477
    %3774 = vmatprep.subr.mxu0 %v3482
    %3775 = vmatpush1.msra.mxu0 %v3481
    %3776 = vmatprep.subr.mxu0 %v3486
    %3777 = vmatpush1.msra.mxu0 %v3485
    %3778 = vmatprep.subr.mxu0 %v3490
    %3779 = vmatpush1.msra.mxu0 %v3489
    %3780 = vmatprep.subr.mxu0 %v3494
    %3781 = vmatpush1.msra.mxu0 %v3493
    %3782 = vmatprep.subr.mxu0 %v3498
    %3783 = vmatpush1.msra.mxu0 %v3497
    %3784 = vmatprep.subr.mxu0 %v3502
    %3785 = vmatpush1.msra.mxu0 %v3501
    %3786 = vmatprep.subr.mxu0 %v3506
    %3787 = vmatpush1.msra.mxu0 %v3505
    %3788 = vmatprep.subr.mxu0 %v3510
    %3789 = vmatpush1.msra.mxu0 %v3509
    %3790 = vmatprep.subr.mxu0 %v3514
    %3791 = vmatpush1.msra.mxu0 %v3513
    %3792 = vmatprep.subr.mxu0 %v3518
    %3793 = vmatpush1.msra.mxu0 %v3517
    %3794 = vmatprep.subr.mxu0 %v3522
    %3795 = vmatpush1.msra.mxu0 %v3521
    %3796 = vmatprep.subr.mxu0 %v3526
    %3797 = vmatpush1.msra.mxu0 %v3525
    %3798 = vmatprep.mubr.f32.mxu0 %v3264
    %3799 = vmatmul.mubr.f32.gmra.mrb[0].mxu0 %v3263
    %v3800 = vpop.f32.mrb[0].mxu0
    %v3801 = vadd.f32 %v3724, %v3800
    %v3802 = vpop.f32.mrb[0].mxu0
    %v3803 = vadd.f32 %v3726, %v3802
    %3804 = vmatprep.mubr.f32.mxu0 %v3270
    %3805 = vmatmul.mubr.f32.gmra.mrb[0].mxu0 %v3269
    %v3806 = vpop.f32.mrb[0].mxu0
    %v3807 = vadd.f32 %v3730, %v3806
    %v3808 = vpop.f32.mrb[0].mxu0
    %v3809 = vadd.f32 %v3732, %v3808
    %3810 = vdwg.mxu0
    %3811 = vmatprep.subr.mxu0 %v3530
    %3812 = vmatpush1.msra.mxu0 %v3529
    %3813 = vmatprep.subr.mxu0 %v3534
    %3814 = vmatpush1.msra.mxu0 %v3533
    %3815 = vmatprep.subr.mxu0 %v3538
    %3816 = vmatpush1.msra.mxu0 %v3537
    %3817 = vmatprep.subr.mxu0 %v3542
    %3818 = vmatpush1.msra.mxu0 %v3541
    %3819 = vmatprep.subr.mxu0 %v3546
    %3820 = vmatpush1.msra.mxu0 %v3545
    %3821 = vmatprep.subr.mxu0 %v3550
    %3822 = vmatpush1.msra.mxu0 %v3549
    %3823 = vmatprep.subr.mxu0 %v3554
    %3824 = vmatpush1.msra.mxu0 %v3553
    %3825 = vmatprep.subr.mxu0 %v3558
    %3826 = vmatpush1.msra.mxu0 %v3557
    %3827 = vmatprep.subr.mxu0 %v3562
    %3828 = vmatpush1.msra.mxu0 %v3561
    %3829 = vmatprep.subr.mxu0 %v3566
    %3830 = vmatpush1.msra.mxu0 %v3565
    %3831 = vmatprep.subr.mxu0 %v3570
    %3832 = vmatpush1.msra.mxu0 %v3569
    %3833 = vmatprep.subr.mxu0 %v3574
    %3834 = vmatpush1.msra.mxu0 %v3573
    %3835 = vmatprep.subr.mxu0 %v3578
    %3836 = vmatpush1.msra.mxu0 %v3577
    %3837 = vmatprep.subr.mxu0 %v3582
    %3838 = vmatpush1.msra.mxu0 %v3581
    %3839 = vmatprep.subr.mxu0 %v3586
    %3840 = vmatpush1.msra.mxu0 %v3585
    %3841 = vmatprep.subr.mxu0 %v3590
    %3842 = vmatpush1.msra.mxu0 %v3589
    %3843 = vmatprep.subr.mxu0 %v3594
    %3844 = vmatpush1.msra.mxu0 %v3593
    %3845 = vmatprep.subr.mxu0 %v3598
    %3846 = vmatpush1.msra.mxu0 %v3597
    %3847 = vmatprep.subr.mxu0 %v3602
    %3848 = vmatpush1.msra.mxu0 %v3601
    %3849 = vmatprep.subr.mxu0 %v3606
    %3850 = vmatpush1.msra.mxu0 %v3605
    %3851 = vmatprep.subr.mxu0 %v3610
    %3852 = vmatpush1.msra.mxu0 %v3609
    %3853 = vmatprep.subr.mxu0 %v3614
    %3854 = vmatpush1.msra.mxu0 %v3613
    %3855 = vmatprep.subr.mxu0 %v3618
    %3856 = vmatpush1.msra.mxu0 %v3617
    %3857 = vmatprep.subr.mxu0 %v3622
    %3858 = vmatpush1.msra.mxu0 %v3621
    %3859 = vmatprep.subr.mxu0 %v3626
    %3860 = vmatpush1.msra.mxu0 %v3625
    %3861 = vmatprep.subr.mxu0 %v3630
    %3862 = vmatpush1.msra.mxu0 %v3629
    %3863 = vmatprep.subr.mxu0 %v3634
    %3864 = vmatpush1.msra.mxu0 %v3633
    %3865 = vmatprep.subr.mxu0 %v3638
    %3866 = vmatpush1.msra.mxu0 %v3637
    %3867 = vmatprep.subr.mxu0 %v3642
    %3868 = vmatpush1.msra.mxu0 %v3641
    %3869 = vmatprep.subr.mxu0 %v3646
    %3870 = vmatpush1.msra.mxu0 %v3645
    %3871 = vmatprep.subr.mxu0 %v3650
    %3872 = vmatpush1.msra.mxu0 %v3649
    %3873 = vmatprep.subr.mxu0 %v3654
    %3874 = vmatpush1.msra.mxu0 %v3653
    %3875 = vmatprep.mubr.f32.mxu0 %v3266
    %3876 = vmatmul.mubr.f32.gmra.mrb[0].mxu0 %v3265
    %v3877 = vpop.f32.mrb[0].mxu0
    %v3878 = vadd.f32 %v3801, %v3877
    %v3879 = vpop.f32.mrb[0].mxu0
    %v3880 = vadd.f32 %v3803, %v3879
    %3881 = vmatprep.mubr.f32.mxu0 %v3272
    %3882 = vmatmul.mubr.f32.gmra.mrb[0].mxu0 %v3271
    %v3883 = vpop.f32.mrb[0].mxu0
    %v3884 = vadd.f32 %v3807, %v3883
    %v3885 = vpop.f32.mrb[0].mxu0
    %v3886 = vadd.f32 %v3809, %v3885
    %3887 = vdwg.mxu0
    %3888 = vmatprep.subr.mxu0 %v3276
    %3889 = vmatpush1.msra.mxu0 %v3275
    %3890 = vmatprep.subr.mxu0 %v3280
    %3891 = vmatpush1.msra.mxu0 %v3279
    %3892 = vmatprep.subr.mxu0 %v3284
    %3893 = vmatpush1.msra.mxu0 %v3283
    %3894 = vmatprep.subr.mxu0 %v3288
    %3895 = vmatpush1.msra.mxu0 %v3287
    %3896 = vmatprep.subr.mxu0 %v3292
    %3897 = vmatpush1.msra.mxu0 %v3291
    %3898 = vmatprep.subr.mxu0 %v3296
    %3899 = vmatpush1.msra.mxu0 %v3295
    %3900 = vmatprep.subr.mxu0 %v3300
    %3901 = vmatpush1.msra.mxu0 %v3299
    %3902 = vmatprep.subr.mxu0 %v3304
    %3903 = vmatpush1.msra.mxu0 %v3303
    %3904 = vmatprep.subr.mxu0 %v3308
    %3905 = vmatpush1.msra.mxu0 %v3307
    %3906 = vmatprep.subr.mxu0 %v3312
    %3907 = vmatpush1.msra.mxu0 %v3311
    %3908 = vmatprep.subr.mxu0 %v3316
    %3909 = vmatpush1.msra.mxu0 %v3315
    %3910 = vmatprep.subr.mxu0 %v3320
    %3911 = vmatpush1.msra.mxu0 %v3319
    %3912 = vmatprep.subr.mxu0 %v3324
    %3913 = vmatpush1.msra.mxu0 %v3323
    %3914 = vmatprep.subr.mxu0 %v3328
    %3915 = vmatpush1.msra.mxu0 %v3327
    %3916 = vmatprep.subr.mxu0 %v3332
    %3917 = vmatpush1.msra.mxu0 %v3331
    %3918 = vmatprep.subr.mxu0 %v3336
    %3919 = vmatpush1.msra.mxu0 %v3335
    %3920 = vmatprep.subr.mxu0 %v3340
    %3921 = vmatpush1.msra.mxu0 %v3339
    %3922 = vmatprep.subr.mxu0 %v3344
    %3923 = vmatpush1.msra.mxu0 %v3343
    %3924 = vmatprep.subr.mxu0 %v3348
    %3925 = vmatpush1.msra.mxu0 %v3347
    %3926 = vmatprep.subr.mxu0 %v3352
    %3927 = vmatpush1.msra.mxu0 %v3351
    %3928 = vmatprep.subr.mxu0 %v3356
    %3929 = vmatpush1.msra.mxu0 %v3355
    %3930 = vmatprep.subr.mxu0 %v3360
    %3931 = vmatpush1.msra.mxu0 %v3359
    %3932 = vmatprep.subr.mxu0 %v3364
    %3933 = vmatpush1.msra.mxu0 %v3363
    %3934 = vmatprep.subr.mxu0 %v3368
    %3935 = vmatpush1.msra.mxu0 %v3367
    %3936 = vmatprep.subr.mxu0 %v3372
    %3937 = vmatpush1.msra.mxu0 %v3371
    %3938 = vmatprep.subr.mxu0 %v3376
    %3939 = vmatpush1.msra.mxu0 %v3375
    %3940 = vmatprep.subr.mxu0 %v3380
    %3941 = vmatpush1.msra.mxu0 %v3379
    %3942 = vmatprep.subr.mxu0 %v3384
    %3943 = vmatpush1.msra.mxu0 %v3383
    %3944 = vmatprep.subr.mxu0 %v3388
    %3945 = vmatpush1.msra.mxu0 %v3387
    %3946 = vmatprep.subr.mxu0 %v3392
    %3947 = vmatpush1.msra.mxu0 %v3391
    %3948 = vmatprep.subr.mxu0 %v3396
    %3949 = vmatpush1.msra.mxu0 %v3395
    %3950 = vmatprep.subr.mxu0 %v3400
    %3951 = vmatpush1.msra.mxu0 %v3399
    %3952 = vmatprep.mubr.f32.mxu0 %v3262
    %3953 = vmatmul.mubr.f32.gmra.mrb[0].mxu0 %v3261
    %v3954 = vpop.f32.mrb[0].mxu0
    %v3955 = vadd.f32 0.0, %v3954
    %v3956 = vpop.f32.mrb[0].mxu0
    %v3957 = vadd.f32 0.0, %v3956
    %3958 = vmatprep.mubr.f32.mxu0 %v3268
    %3959 = vmatmul.mubr.f32.gmra.mrb[0].mxu0 %v3267
    %v3960 = vpop.f32.mrb[0].mxu0
    %v3961 = vadd.f32 0.0, %v3960
    %v3962 = vpop.f32.mrb[0].mxu0
    %v3963 = vadd.f32 0.0, %v3962
    %3964 = vdwg.mxu0
    %3965 = vmatprep.subr.mxu0 %v3404
    %3966 = vmatpush1.msra.mxu0 %v3403
    %3967 = vmatprep.subr.mxu0 %v3408
    %3968 = vmatpush1.msra.mxu0 %v3407
    %3969 = vmatprep.subr.mxu0 %v3412
    %3970 = vmatpush1.msra.mxu0 %v3411
    %3971 = vmatprep.subr.mxu0 %v3416
    %3972 = vmatpush1.msra.mxu0 %v3415
    %3973 = vmatprep.subr.mxu0 %v3420
    %3974 = vmatpush1.msra.mxu0 %v3419
    %3975 = vmatprep.subr.mxu0 %v3424
    %3976 = vmatpush1.msra.mxu0 %v3423
    %3977 = vmatprep.subr.mxu0 %v3428
    %3978 = vmatpush1.msra.mxu0 %v3427
    %3979 = vmatprep.subr.mxu0 %v3432
    %3980 = vmatpush1.msra.mxu0 %v3431
    %3981 = vmatprep.subr.mxu0 %v3436
    %3982 = vmatpush1.msra.mxu0 %v3435
    %3983 = vmatprep.subr.mxu0 %v3440
    %3984 = vmatpush1.msra.mxu0 %v3439
    %3985 = vmatprep.subr.mxu0 %v3444
    %3986 = vmatpush1.msra.mxu0 %v3443
    %3987 = vmatprep.subr.mxu0 %v3448
    %3988 = vmatpush1.msra.mxu0 %v3447
    %3989 = vmatprep.subr.mxu0 %v3452
    %3990 = vmatpush1.msra.mxu0 %v3451
    %3991 = vmatprep.subr.mxu0 %v3456
    %3992 = vmatpush1.msra.mxu0 %v3455
    %3993 = vmatprep.subr.mxu0 %v3460
    %3994 = vmatpush1.msra.mxu0 %v3459
    %3995 = vmatprep.subr.mxu0 %v3464
    %3996 = vmatpush1.msra.mxu0 %v3463
    %3997 = vmatprep.subr.mxu0 %v3468
    %3998 = vmatpush1.msra.mxu0 %v3467
    %3999 = vmatprep.subr.mxu0 %v3472
    %4000 = vmatpush1.msra.mxu0 %v3471
    %4001 = vmatprep.subr.mxu0 %v3476
    %4002 = vmatpush1.msra.mxu0 %v3475
    %4003 = vmatprep.subr.mxu0 %v3480
    %4004 = vmatpush1.msra.mxu0 %v3479
    %4005 = vmatprep.subr.mxu0 %v3484
    %4006 = vmatpush1.msra.mxu0 %v3483
    %4007 = vmatprep.subr.mxu0 %v3488
    %4008 = vmatpush1.msra.mxu0 %v3487
    %4009 = vmatprep.subr.mxu0 %v3492
    %4010 = vmatpush1.msra.mxu0 %v3491
    %4011 = vmatprep.subr.mxu0 %v3496
    %4012 = vmatpush1.msra.mxu0 %v3495
    %4013 = vmatprep.subr.mxu0 %v3500
    %4014 = vmatpush1.msra.mxu0 %v3499
    %4015 = vmatprep.subr.mxu0 %v3504
    %4016 = vmatpush1.msra.mxu0 %v3503
    %4017 = vmatprep.subr.mxu0 %v3508
    %4018 = vmatpush1.msra.mxu0 %v3507
    %4019 = vmatprep.subr.mxu0 %v3512
    %4020 = vmatpush1.msra.mxu0 %v3511
    %4021 = vmatprep.subr.mxu0 %v3516
    %4022 = vmatpush1.msra.mxu0 %v3515
    %4023 = vmatprep.subr.mxu0 %v3520
    %4024 = vmatpush1.msra.mxu0 %v3519
    %4025 = vmatprep.subr.mxu0 %v3524
    %4026 = vmatpush1.msra.mxu0 %v3523
    %4027 = vmatprep.subr.mxu0 %v3528
    %4028 = vmatpush1.msra.mxu0 %v3527
    %4029 = vmatprep.mubr.f32.mxu0 %v3264
    %4030 = vmatmul.mubr.f32.gmra.mrb[0].mxu0 %v3263
    %v4031 = vpop.f32.mrb[0].mxu0
    %v4032 = vadd.f32 %v3955, %v4031
    %v4033 = vpop.f32.mrb[0].mxu0
    %v4034 = vadd.f32 %v3957, %v4033
    %4035 = vmatprep.mubr.f32.mxu0 %v3270
    %4036 = vmatmul.mubr.f32.gmra.mrb[0].mxu0 %v3269
    %v4037 = vpop.f32.mrb[0].mxu0
    %v4038 = vadd.f32 %v3961, %v4037
    %v4039 = vpop.f32.mrb[0].mxu0
    %v4040 = vadd.f32 %v3963, %v4039
    %4041 = vdwg.mxu0
    %4042 = vmatprep.subr.mxu0 %v3532
    %4043 = vmatpush1.msra.mxu0 %v3531
    %4044 = vmatprep.subr.mxu0 %v3536
    %4045 = vmatpush1.msra.mxu0 %v3535
    %4046 = vmatprep.subr.mxu0 %v3540
    %4047 = vmatpush1.msra.mxu0 %v3539
    %4048 = vmatprep.subr.mxu0 %v3544
    %4049 = vmatpush1.msra.mxu0 %v3543
    %4050 = vmatprep.subr.mxu0 %v3548
    %4051 = vmatpush1.msra.mxu0 %v3547
    %4052 = vmatprep.subr.mxu0 %v3552
    %4053 = vmatpush1.msra.mxu0 %v3551
    %4054 = vmatprep.subr.mxu0 %v3556
    %4055 = vmatpush1.msra.mxu0 %v3555
    %4056 = vmatprep.subr.mxu0 %v3560
    %4057 = vmatpush1.msra.mxu0 %v3559
    %4058 = vmatprep.subr.mxu0 %v3564
    %4059 = vmatpush1.msra.mxu0 %v3563
    %4060 = vmatprep.subr.mxu0 %v3568
    %4061 = vmatpush1.msra.mxu0 %v3567
    %4062 = vmatprep.subr.mxu0 %v3572
    %4063 = vmatpush1.msra.mxu0 %v3571
    %4064 = vmatprep.subr.mxu0 %v3576
    %4065 = vmatpush1.msra.mxu0 %v3575
    %4066 = vmatprep.subr.mxu0 %v3580
    %4067 = vmatpush1.msra.mxu0 %v3579
    %4068 = vmatprep.subr.mxu0 %v3584
    %4069 = vmatpush1.msra.mxu0 %v3583
    %4070 = vmatprep.subr.mxu0 %v3588
    %4071 = vmatpush1.msra.mxu0 %v3587
    %4072 = vmatprep.subr.mxu0 %v3592
    %4073 = vmatpush1.msra.mxu0 %v3591
    %4074 = vmatprep.subr.mxu0 %v3596
    %4075 = vmatpush1.msra.mxu0 %v3595
    %4076 = vmatprep.subr.mxu0 %v3600
    %4077 = vmatpush1.msra.mxu0 %v3599
    %4078 = vmatprep.subr.mxu0 %v3604
    %4079 = vmatpush1.msra.mxu0 %v3603
    %4080 = vmatprep.subr.mxu0 %v3608
    %4081 = vmatpush1.msra.mxu0 %v3607
    %4082 = vmatprep.subr.mxu0 %v3612
    %4083 = vmatpush1.msra.mxu0 %v3611
    %4084 = vmatprep.subr.mxu0 %v3616
    %4085 = vmatpush1.msra.mxu0 %v3615
    %4086 = vmatprep.subr.mxu0 %v3620
    %4087 = vmatpush1.msra.mxu0 %v3619
    %4088 = vmatprep.subr.mxu0 %v3624
    %4089 = vmatpush1.msra.mxu0 %v3623
    %4090 = vmatprep.subr.mxu0 %v3628
    %4091 = vmatpush1.msra.mxu0 %v3627
    %4092 = vmatprep.subr.mxu0 %v3632
    %4093 = vmatpush1.msra.mxu0 %v3631
    %4094 = vmatprep.subr.mxu0 %v3636
    %4095 = vmatpush1.msra.mxu0 %v3635
    %4096 = vmatprep.subr.mxu0 %v3640
    %4097 = vmatpush1.msra.mxu0 %v3639
    %4098 = vmatprep.subr.mxu0 %v3644
    %4099 = vmatpush1.msra.mxu0 %v3643
    %4100 = vmatprep.subr.mxu0 %v3648
    %4101 = vmatpush1.msra.mxu0 %v3647
    %4102 = vmatprep.subr.mxu0 %v3652
    %4103 = vmatpush1.msra.mxu0 %v3651
    %4104 = vmatprep.subr.mxu0 %v3656
    %4105 = vmatpush1.msra.mxu0 %v3655
    %4106 = vmatprep.mubr.f32.mxu0 %v3266
    %4107 = vmatmul.mubr.f32.gmra.mrb[0].mxu0 %v3265
    %v4108 = vpop.f32.mrb[0].mxu0
    %v4109 = vadd.f32 %v4032, %v4108
    %v4110 = vpop.f32.mrb[0].mxu0
    %v4111 = vadd.f32 %v4034, %v4110
    %4112 = vmatprep.mubr.f32.mxu0 %v3272
    %4113 = vmatmul.mubr.f32.gmra.mrb[0].mxu0 %v3271
    %v4114 = vpop.f32.mrb[0].mxu0
    %v4115 = vadd.f32 %v4038, %v4114
    %v4116 = vpop.f32.mrb[0].mxu0
    %v4117 = vadd.f32 %v4040, %v4116
    %4118 = vdwg.mxu0
    %v4119 = vadd.f32 %v3878, %v3884
    %v4120 = vrot.slane %v4119, 4
    %v4121 = vadd.f32 %v4119, %v4120
    %v4122 = vrot.slane %v4121, 2
    %v4123 = vadd.f32 %v4121, %v4122
    %v4124 = vrot.slane %v4123, 1
    %v4125 = vadd.f32 %v4123, %v4124
    %v4126 = vadd.f32 %v3880, %v3886
    %v4127 = vrot.slane %v4126, 4
    %v4128 = vadd.f32 %v4126, %v4127
    %v4129 = vrot.slane %v4128, 2
    %v4130 = vadd.f32 %v4128, %v4129
    %v4131 = vrot.slane %v4130, 1
    %v4132 = vadd.f32 %v4130, %v4131
    %v4133 = vadd.f32 %v4109, %v4115
    %v4134 = vrot.slane %v4133, 4
    %v4135 = vadd.f32 %v4133, %v4134
    %v4136 = vrot.slane %v4135, 2
    %v4137 = vadd.f32 %v4135, %v4136
    %v4138 = vrot.slane %v4137, 1
    %v4139 = vadd.f32 %v4137, %v4138
    %v4140 = vadd.f32 %v4111, %v4117
    %v4141 = vrot.slane %v4140, 4
    %v4142 = vadd.f32 %v4140, %v4141
    %v4143 = vrot.slane %v4142, 2
    %v4144 = vadd.f32 %v4142, %v4143
    %v4145 = vrot.slane %v4144, 1
    %v4146 = vadd.f32 %v4144, %v4145
    %v4147 = vmul.f32 %v3878, %v3878
    %v4148 = vmul.f32 %v3880, %v3880
    %v4149 = vmul.f32 %v4109, %v4109
    %v4150 = vmul.f32 %v4111, %v4111
    %v4151 = vmul.f32 %v3884, %v3884
    %v4152 = vmul.f32 %v3886, %v3886
    %v4153 = vmul.f32 %v4115, %v4115
    %v4154 = vmul.f32 %v4117, %v4117
    %v4155 = vadd.f32 %v4147, %v4151
    %v4156 = vrot.slane %v4155, 4
    %v4157 = vadd.f32 %v4155, %v4156
    %v4158 = vrot.slane %v4157, 2
    %v4159 = vadd.f32 %v4157, %v4158
    %v4160 = vrot.slane %v4159, 1
    %v4161 = vadd.f32 %v4159, %v4160
    %v4162 = vadd.f32 %v4148, %v4152
    %v4163 = vrot.slane %v4162, 4
    %v4164 = vadd.f32 %v4162, %v4163
    %v4165 = vrot.slane %v4164, 2
    %v4166 = vadd.f32 %v4164, %v4165
    %v4167 = vrot.slane %v4166, 1
    %v4168 = vadd.f32 %v4166, %v4167
    %v4169 = vadd.f32 %v4149, %v4153
    %v4170 = vrot.slane %v4169, 4
    %v4171 = vadd.f32 %v4169, %v4170
    %v4172 = vrot.slane %v4171, 2
    %v4173 = vadd.f32 %v4171, %v4172
    %v4174 = vrot.slane %v4173, 1
    %v4175 = vadd.f32 %v4173, %v4174
    %v4176 = vadd.f32 %v4150, %v4154
    %v4177 = vrot.slane %v4176, 4
    %v4178 = vadd.f32 %v4176, %v4177
    %v4179 = vrot.slane %v4178, 2
    %v4180 = vadd.f32 %v4178, %v4179
    %v4181 = vrot.slane %v4180, 1
    %v4182 = vadd.f32 %v4180, %v4181
    %v4183 = vsel %vm590, %v4125, %v4161
    %v4184 = vsel %vm590, %v4132, %v4168
    %v4185 = vsel %vm590, %v4139, %v4175
    %v4186 = vsel %vm590, %v4146, %v4182
    %v4187 = vld [vmem:[%s11] sm:$0xff]
    %v4188 = vld [vmem:[%s11 + $0x8] sm:$0xff]
    %v4189 = vld [vmem:[%s11 + $0x10] sm:$0xff]
    %v4190 = vld [vmem:[%s11 + $0x18] sm:$0xff]
    %v4191 = vld [vmem:[%s11 + $0x20] sm:$0xff]
    %v4192 = vld [vmem:[%s11 + $0x28] sm:$0xff]
    %v4193 = vld [vmem:[%s11 + $0x30] sm:$0xff]
    %v4194 = vld [vmem:[%s11 + $0x38] sm:$0xff]
    %v4195 = vld [vmem:[%s11 + $0x40] sm:$0xff]
    %v4196 = vld [vmem:[%s11 + $0x48] sm:$0xff]
    %v4197 = vld [vmem:[%s11 + $0x50] sm:$0xff]
    %v4198 = vld [vmem:[%s11 + $0x58] sm:$0xff]
    %v4199 = vld [vmem:[%s11 + $0x60] sm:$0xff]
    %v4200 = vld [vmem:[%s11 + $0x68] sm:$0xff]
    %v4201 = vld [vmem:[%s11 + $0x70] sm:$0xff]
    %v4202 = vld [vmem:[%s11 + $0x78] sm:$0xff]
    %v4203 = vld [vmem:[%s11 + $0x80] sm:$0xff]
    %v4204 = vld [vmem:[%s11 + $0x88] sm:$0xff]
    %v4205 = vld [vmem:[%s11 + $0x90] sm:$0xff]
    %v4206 = vld [vmem:[%s11 + $0x98] sm:$0xff]
    %v4207 = vld [vmem:[%s11 + $0xa0] sm:$0xff]
    %v4208 = vld [vmem:[%s11 + $0xa8] sm:$0xff]
    %v4209 = vld [vmem:[%s11 + $0xb0] sm:$0xff]
    %v4210 = vld [vmem:[%s11 + $0xb8] sm:$0xff]
    %v4211 = vld [vmem:[%s11 + $0xc0] sm:$0xff]
    %v4212 = vld [vmem:[%s11 + $0xc8] sm:$0xff]
    %v4213 = vld [vmem:[%s11 + $0xd0] sm:$0xff]
    %v4214 = vld [vmem:[%s11 + $0xd8] sm:$0xff]
    %v4215 = vld [vmem:[%s11 + $0xe0] sm:$0xff]
    %v4216 = vld [vmem:[%s11 + $0xe8] sm:$0xff]
    %v4217 = vld [vmem:[%s11 + $0xf0] sm:$0xff]
    %v4218 = vld [vmem:[%s11 + $0xf8] sm:$0xff]
    %v4219 = vld [vmem:[%s11 + $0x100] sm:$0xff]
    %v4220 = vld [vmem:[%s11 + $0x108] sm:$0xff]
    %v4221 = vld [vmem:[%s11 + $0x110] sm:$0xff]
    %v4222 = vld [vmem:[%s11 + $0x118] sm:$0xff]
    %v4223 = vld [vmem:[%s11 + $0x120] sm:$0xff]
    %v4224 = vld [vmem:[%s11 + $0x128] sm:$0xff]
    %v4225 = vld [vmem:[%s11 + $0x130] sm:$0xff]
    %v4226 = vld [vmem:[%s11 + $0x138] sm:$0xff]
    %v4227 = vld [vmem:[%s11 + $0x140] sm:$0xff]
    %v4228 = vld [vmem:[%s11 + $0x148] sm:$0xff]
    %v4229 = vld [vmem:[%s11 + $0x150] sm:$0xff]
    %v4230 = vld [vmem:[%s11 + $0x158] sm:$0xff]
    %v4231 = vld [vmem:[%s11 + $0x160] sm:$0xff]
    %v4232 = vld [vmem:[%s11 + $0x168] sm:$0xff]
    %v4233 = vld [vmem:[%s11 + $0x170] sm:$0xff]
    %v4234 = vld [vmem:[%s11 + $0x178] sm:$0xff]
    %v4235 = vld [vmem:[%s11 + $0x180] sm:$0xff]
    %v4236 = vld [vmem:[%s11 + $0x188] sm:$0xff]
    %v4237 = vld [vmem:[%s11 + $0x190] sm:$0xff]
    %v4238 = vld [vmem:[%s11 + $0x198] sm:$0xff]
    %v4239 = vld [vmem:[%s11 + $0x1a0] sm:$0xff]
    %v4240 = vld [vmem:[%s11 + $0x1a8] sm:$0xff]
    %v4241 = vld [vmem:[%s11 + $0x1b0] sm:$0xff]
    %v4242 = vld [vmem:[%s11 + $0x1b8] sm:$0xff]
    %v4243 = vld [vmem:[%s11 + $0x1c0] sm:$0xff]
    %v4244 = vld [vmem:[%s11 + $0x1c8] sm:$0xff]
    %v4245 = vld [vmem:[%s11 + $0x1d0] sm:$0xff]
    %v4246 = vld [vmem:[%s11 + $0x1d8] sm:$0xff]
    %v4247 = vld [vmem:[%s11 + $0x1e0] sm:$0xff]
    %v4248 = vld [vmem:[%s11 + $0x1e8] sm:$0xff]
    %v4249 = vld [vmem:[%s11 + $0x1f0] sm:$0xff]
    %v4250 = vld [vmem:[%s11 + $0x1f8] sm:$0xff]
    %4251 = vmatprep.subr.mxu0 0.0
    %4252 = vmatpush1.msra.mxu0 %v4187
    %4253 = vmatprep.subr.mxu0 0.0
    %4254 = vmatpush1.msra.mxu0 %v4188
    %4255 = vmatprep.subr.mxu0 0.0
    %4256 = vmatpush1.msra.mxu0 %v4189
    %4257 = vmatprep.subr.mxu0 0.0
    %4258 = vmatpush1.msra.mxu0 %v4190
    %4259 = vmatprep.subr.mxu0 0.0
    %4260 = vmatpush1.msra.mxu0 %v4191
    %4261 = vmatprep.subr.mxu0 0.0
    %4262 = vmatpush1.msra.mxu0 %v4192
    %4263 = vmatprep.subr.mxu0 0.0
    %4264 = vmatpush1.msra.mxu0 %v4193
    %4265 = vmatprep.subr.mxu0 0.0
    %4266 = vmatpush1.msra.mxu0 %v4194
    %4267 = vmatprep.subr.mxu0 0.0
    %4268 = vmatpush1.msra.mxu0 %v4195
    %4269 = vmatprep.subr.mxu0 0.0
    %4270 = vmatpush1.msra.mxu0 %v4196
    %4271 = vmatprep.subr.mxu0 0.0
    %4272 = vmatpush1.msra.mxu0 %v4197
    %4273 = vmatprep.subr.mxu0 0.0
    %4274 = vmatpush1.msra.mxu0 %v4198
    %4275 = vmatprep.subr.mxu0 0.0
    %4276 = vmatpush1.msra.mxu0 %v4199
    %4277 = vmatprep.subr.mxu0 0.0
    %4278 = vmatpush1.msra.mxu0 %v4200
    %4279 = vmatprep.subr.mxu0 0.0
    %4280 = vmatpush1.msra.mxu0 %v4201
    %4281 = vmatprep.subr.mxu0 0.0
    %4282 = vmatpush1.msra.mxu0 %v4202
    %4283 = vmatprep.subr.mxu0 0.0
    %4284 = vmatpush1.msra.mxu0 %v4203
    %4285 = vmatprep.subr.mxu0 0.0
    %4286 = vmatpush1.msra.mxu0 %v4204
    %4287 = vmatprep.subr.mxu0 0.0
    %4288 = vmatpush1.msra.mxu0 %v4205
    %4289 = vmatprep.subr.mxu0 0.0
    %4290 = vmatpush1.msra.mxu0 %v4206
    %4291 = vmatprep.subr.mxu0 0.0
    %4292 = vmatpush1.msra.mxu0 %v4207
    %4293 = vmatprep.subr.mxu0 0.0
    %4294 = vmatpush1.msra.mxu0 %v4208
    %4295 = vmatprep.subr.mxu0 0.0
    %4296 = vmatpush1.msra.mxu0 %v4209
    %4297 = vmatprep.subr.mxu0 0.0
    %4298 = vmatpush1.msra.mxu0 %v4210
    %4299 = vmatprep.subr.mxu0 0.0
    %4300 = vmatpush1.msra.mxu0 %v4211
    %4301 = vmatprep.subr.mxu0 0.0
    %4302 = vmatpush1.msra.mxu0 %v4212
    %4303 = vmatprep.subr.mxu0 0.0
    %4304 = vmatpush1.msra.mxu0 %v4213
    %4305 = vmatprep.subr.mxu0 0.0
    %4306 = vmatpush1.msra.mxu0 %v4214
    %4307 = vmatprep.subr.mxu0 0.0
    %4308 = vmatpush1.msra.mxu0 %v4215
    %4309 = vmatprep.subr.mxu0 0.0
    %4310 = vmatpush1.msra.mxu0 %v4216
    %4311 = vmatprep.subr.mxu0 0.0
    %4312 = vmatpush1.msra.mxu0 %v4217
    %4313 = vmatprep.subr.mxu0 0.0
    %4314 = vmatpush1.msra.mxu0 %v4218
    %4315 = vmatprep.mubr.f32.mxu0 %v4184
    %4316 = vmatmul.mubr.f32.gmra.mrb[0].mxu0 %v4183
    %v4317 = vpop.f32.mrb[0].mxu0
    %v4318 = vadd.f32 0.0, %v4317
    %v4319 = vpop.f32.mrb[0].mxu0
    %4320 = vdwg.mxu0
    %4321 = vmatprep.subr.mxu0 0.0
    %4322 = vmatpush1.msra.mxu0 %v4219
    %4323 = vmatprep.subr.mxu0 0.0
    %4324 = vmatpush1.msra.mxu0 %v4220
    %4325 = vmatprep.subr.mxu0 0.0
    %4326 = vmatpush1.msra.mxu0 %v4221
    %4327 = vmatprep.subr.mxu0 0.0
    %4328 = vmatpush1.msra.mxu0 %v4222
    %4329 = vmatprep.subr.mxu0 0.0
    %4330 = vmatpush1.msra.mxu0 %v4223
    %4331 = vmatprep.subr.mxu0 0.0
    %4332 = vmatpush1.msra.mxu0 %v4224
    %4333 = vmatprep.subr.mxu0 0.0
    %4334 = vmatpush1.msra.mxu0 %v4225
    %4335 = vmatprep.subr.mxu0 0.0
    %4336 = vmatpush1.msra.mxu0 %v4226
    %4337 = vmatprep.subr.mxu0 0.0
    %4338 = vmatpush1.msra.mxu0 %v4227
    %4339 = vmatprep.subr.mxu0 0.0
    %4340 = vmatpush1.msra.mxu0 %v4228
    %4341 = vmatprep.subr.mxu0 0.0
    %4342 = vmatpush1.msra.mxu0 %v4229
    %4343 = vmatprep.subr.mxu0 0.0
    %4344 = vmatpush1.msra.mxu0 %v4230
    %4345 = vmatprep.subr.mxu0 0.0
    %4346 = vmatpush1.msra.mxu0 %v4231
    %4347 = vmatprep.subr.mxu0 0.0
    %4348 = vmatpush1.msra.mxu0 %v4232
    %4349 = vmatprep.subr.mxu0 0.0
    %4350 = vmatpush1.msra.mxu0 %v4233
    %4351 = vmatprep.subr.mxu0 0.0
    %4352 = vmatpush1.msra.mxu0 %v4234
    %4353 = vmatprep.subr.mxu0 0.0
    %4354 = vmatpush1.msra.mxu0 %v4235
    %4355 = vmatprep.subr.mxu0 0.0
    %4356 = vmatpush1.msra.mxu0 %v4236
    %4357 = vmatprep.subr.mxu0 0.0
    %4358 = vmatpush1.msra.mxu0 %v4237
    %4359 = vmatprep.subr.mxu0 0.0
    %4360 = vmatpush1.msra.mxu0 %v4238
    %4361 = vmatprep.subr.mxu0 0.0
    %4362 = vmatpush1.msra.mxu0 %v4239
    %4363 = vmatprep.subr.mxu0 0.0
    %4364 = vmatpush1.msra.mxu0 %v4240
    %4365 = vmatprep.subr.mxu0 0.0
    %4366 = vmatpush1.msra.mxu0 %v4241
    %4367 = vmatprep.subr.mxu0 0.0
    %4368 = vmatpush1.msra.mxu0 %v4242
    %4369 = vmatprep.subr.mxu0 0.0
    %4370 = vmatpush1.msra.mxu0 %v4243
    %4371 = vmatprep.subr.mxu0 0.0
    %4372 = vmatpush1.msra.mxu0 %v4244
    %4373 = vmatprep.subr.mxu0 0.0
    %4374 = vmatpush1.msra.mxu0 %v4245
    %4375 = vmatprep.subr.mxu0 0.0
    %4376 = vmatpush1.msra.mxu0 %v4246
    %4377 = vmatprep.subr.mxu0 0.0
    %4378 = vmatpush1.msra.mxu0 %v4247
    %4379 = vmatprep.subr.mxu0 0.0
    %4380 = vmatpush1.msra.mxu0 %v4248
    %4381 = vmatprep.subr.mxu0 0.0
    %4382 = vmatpush1.msra.mxu0 %v4249
    %4383 = vmatprep.subr.mxu0 0.0
    %4384 = vmatpush1.msra.mxu0 %v4250
    %4385 = vmatprep.mubr.f32.mxu0 %v4186
    %4386 = vmatmul.mubr.f32.gmra.mrb[0].mxu0 %v4185
    %v4387 = vpop.f32.mrb[0].mxu0
    %v4388 = vadd.f32 %v4318, %v4387
    %v4389 = vpop.f32.mrb[0].mxu0
    %4390 = vdwg.mxu0
    %v4391 = vmul.f32 %v4388, 0.001953125
    %v4392 = vmul.f32 %v4391, %v4391
    %v4394 = vrot.slane %v4392, 7
    %v4396 = vsub.f32 %v4391, %v4394
    %v4397 = vld [vmem:[#allocation14] sm:$0x1]
    %v4398 = vadd.f32 %v4396, 1e-05
    %v4399 = vrsqrt.pop %v4398
    %v4401 = vrot.slane %v4399, 1
    %v4403 = vmul.f32 %v4397, %v4401
    %v4404 = vld [vmem:[#allocation14 + $0x1] sm:$0x1]
    %v4405 = vmul.f32 %v4391, %v4403
    %v4406 = vsub.f32 %v4404, %v4405
    %v4407 = vlaneseq
    %v4408 = vshrl.u32 %v4407, 7
    %v4409 = vsub.s32 0, %v4408
    %v4410 = vrot.slane %v4403, %v4409
    %v4411 = vlaneseq
    %v4412 = vshrl.u32 %v4411, 7
    %v4413 = vsub.s32 0, %v4412
    %v4414 = vrot.slane %v4406, %v4413
    %v4415 = vsel %vm590, %v4410, %v4414
    %v4416 = vld [vmem:[#allocation16] sm:$0xff]
    %v4417 = vld [vmem:[#allocation16 + $0x8] sm:$0xff]
    %v4418 = vld [vmem:[#allocation16 + $0x10] sm:$0xff]
    %v4419 = vld [vmem:[#allocation16 + $0x18] sm:$0xff]
    %v4420 = vld [vmem:[#allocation16 + $0x20] sm:$0xff]
    %v4421 = vld [vmem:[#allocation16 + $0x28] sm:$0xff]
    %v4422 = vld [vmem:[#allocation16 + $0x30] sm:$0xff]
    %v4423 = vld [vmem:[#allocation16 + $0x38] sm:$0xff]
    %v4425 = vsel %vm179, %v4415, 0
    %4427 = vmatprep.subr.mxu0 %v4417
    %4428 = vmatpush1.msra.mxu0 %v4416
    %4429 = vmatprep.subr.mxu0 %v4421
    %4430 = vmatpush1.msra.mxu0 %v4420
    %4431 = vmatprep.subr.mxu0 0.0
    %4432 = vmatpush1.msra.mxu0 0.0
    %4433 = vmatprep.subr.mxu0 0.0
    %4434 = vmatpush1.msra.mxu0 0.0
    %4435 = vmatprep.subr.mxu0 0.0
    %4436 = vmatpush1.msra.mxu0 0.0
    %4437 = vmatprep.subr.mxu0 0.0
    %4438 = vmatpush1.msra.mxu0 0.0
    %4439 = vmatprep.subr.mxu0 0.0
    %4440 = vmatpush1.msra.mxu0 0.0
    %4441 = vmatprep.subr.mxu0 0.0
    %4442 = vmatpush1.msra.mxu0 0.0
    %4443 = vmatprep.subr.mxu0 0.0
    %4444 = vmatpush1.msra.mxu0 0.0
    %4445 = vmatprep.subr.mxu0 0.0
    %4446 = vmatpush1.msra.mxu0 0.0
    %4447 = vmatprep.subr.mxu0 0.0
    %4448 = vmatpush1.msra.mxu0 0.0
    %4449 = vmatprep.subr.mxu0 0.0
    %4450 = vmatpush1.msra.mxu0 0.0
    %4451 = vmatprep.subr.mxu0 0.0
    %4452 = vmatpush1.msra.mxu0 0.0
    %4453 = vmatprep.subr.mxu0 0.0
    %4454 = vmatpush1.msra.mxu0 0.0
    %4455 = vmatprep.subr.mxu0 0.0
    %4456 = vmatpush1.msra.mxu0 0.0
    %4457 = vmatprep.subr.mxu0 0.0
    %4458 = vmatpush1.msra.mxu0 0.0
    %4459 = vmatprep.subr.mxu0 0.0
    %4460 = vmatpush1.msra.mxu0 0.0
    %4461 = vmatprep.subr.mxu0 0.0
    %4462 = vmatpush1.msra.mxu0 0.0
    %4463 = vmatprep.subr.mxu0 0.0
    %4464 = vmatpush1.msra.mxu0 0.0
    %4465 = vmatprep.subr.mxu0 0.0
    %4466 = vmatpush1.msra.mxu0 0.0
    %4467 = vmatprep.subr.mxu0 0.0
    %4468 = vmatpush1.msra.mxu0 0.0
    %4469 = vmatprep.subr.mxu0 0.0
    %4470 = vmatpush1.msra.mxu0 0.0
    %4471 = vmatprep.subr.mxu0 0.0
    %4472 = vmatpush1.msra.mxu0 0.0
    %4473 = vmatprep.subr.mxu0 0.0
    %4474 = vmatpush1.msra.mxu0 0.0
    %4475 = vmatprep.subr.mxu0 0.0
    %4476 = vmatpush1.msra.mxu0 0.0
    %4477 = vmatprep.subr.mxu0 0.0
    %4478 = vmatpush1.msra.mxu0 0.0
    %4479 = vmatprep.subr.mxu0 0.0
    %4480 = vmatpush1.msra.mxu0 0.0
    %4481 = vmatprep.subr.mxu0 0.0
    %4482 = vmatpush1.msra.mxu0 0.0
    %4483 = vmatprep.subr.mxu0 0.0
    %4484 = vmatpush1.msra.mxu0 0.0
    %4485 = vmatprep.subr.mxu0 0.0
    %4486 = vmatpush1.msra.mxu0 0.0
    %4487 = vmatprep.subr.mxu0 0.0
    %4488 = vmatpush1.msra.mxu0 0.0
    %4489 = vmatprep.subr.mxu0 0.0
    %4490 = vmatpush1.msra.mxu0 0.0
    %4491 = vmatprep.mubr.f32.mxu0 0.0
    %4492 = vmatmul.mubr.f32.gmra.mrb[0].mxu0 %v4425
    %v4493 = vpop.f32.mrb[0].mxu0
    %v4494 = vadd.f32 0.0, %v4493
    %v4495 = vpop.f32.mrb[0].mxu0
    %v4496 = vadd.f32 0.0, %v4495
    %4497 = vdwg.mxu0
    %4498 = vmatprep.subr.mxu0 %v4419
    %4499 = vmatpush1.msra.mxu0 %v4418
    %4500 = vmatprep.subr.mxu0 %v4423
    %4501 = vmatpush1.msra.mxu0 %v4422
    %4502 = vmatprep.subr.mxu0 0.0
    %4503 = vmatpush1.msra.mxu0 0.0
    %4504 = vmatprep.subr.mxu0 0.0
    %4505 = vmatpush1.msra.mxu0 0.0
    %4506 = vmatprep.subr.mxu0 0.0
    %4507 = vmatpush1.msra.mxu0 0.0
    %4508 = vmatprep.subr.mxu0 0.0
    %4509 = vmatpush1.msra.mxu0 0.0
    %4510 = vmatprep.subr.mxu0 0.0
    %4511 = vmatpush1.msra.mxu0 0.0
    %4512 = vmatprep.subr.mxu0 0.0
    %4513 = vmatpush1.msra.mxu0 0.0
    %4514 = vmatprep.subr.mxu0 0.0
    %4515 = vmatpush1.msra.mxu0 0.0
    %4516 = vmatprep.subr.mxu0 0.0
    %4517 = vmatpush1.msra.mxu0 0.0
    %4518 = vmatprep.subr.mxu0 0.0
    %4519 = vmatpush1.msra.mxu0 0.0
    %4520 = vmatprep.subr.mxu0 0.0
    %4521 = vmatpush1.msra.mxu0 0.0
    %4522 = vmatprep.subr.mxu0 0.0
    %4523 = vmatpush1.msra.mxu0 0.0
    %4524 = vmatprep.subr.mxu0 0.0
    %4525 = vmatpush1.msra.mxu0 0.0
    %4526 = vmatprep.subr.mxu0 0.0
    %4527 = vmatpush1.msra.mxu0 0.0
    %4528 = vmatprep.subr.mxu0 0.0
    %4529 = vmatpush1.msra.mxu0 0.0
    %4530 = vmatprep.subr.mxu0 0.0
    %4531 = vmatpush1.msra.mxu0 0.0
    %4532 = vmatprep.subr.mxu0 0.0
    %4533 = vmatpush1.msra.mxu0 0.0
    %4534 = vmatprep.subr.mxu0 0.0
    %4535 = vmatpush1.msra.mxu0 0.0
    %4536 = vmatprep.subr.mxu0 0.0
    %4537 = vmatpush1.msra.mxu0 0.0
    %4538 = vmatprep.subr.mxu0 0.0
    %4539 = vmatpush1.msra.mxu0 0.0
    %4540 = vmatprep.subr.mxu0 0.0
    %4541 = vmatpush1.msra.mxu0 0.0
    %4542 = vmatprep.subr.mxu0 0.0
    %4543 = vmatpush1.msra.mxu0 0.0
    %4544 = vmatprep.subr.mxu0 0.0
    %4545 = vmatpush1.msra.mxu0 0.0
    %4546 = vmatprep.subr.mxu0 0.0
    %4547 = vmatpush1.msra.mxu0 0.0
    %4548 = vmatprep.subr.mxu0 0.0
    %4549 = vmatpush1.msra.mxu0 0.0
    %4550 = vmatprep.subr.mxu0 0.0
    %4551 = vmatpush1.msra.mxu0 0.0
    %4552 = vmatprep.subr.mxu0 0.0
    %4553 = vmatpush1.msra.mxu0 0.0
    %4554 = vmatprep.subr.mxu0 0.0
    %4555 = vmatpush1.msra.mxu0 0.0
    %4556 = vmatprep.subr.mxu0 0.0
    %4557 = vmatpush1.msra.mxu0 0.0
    %4558 = vmatprep.subr.mxu0 0.0
    %4559 = vmatpush1.msra.mxu0 0.0
    %4560 = vmatprep.subr.mxu0 0.0
    %4561 = vmatpush1.msra.mxu0 0.0
    %4562 = vmatprep.mubr.f32.mxu0 0.0
    %4563 = vmatmul.mubr.f32.gmra.mrb[0].mxu0 %v4425
    %v4564 = vpop.f32.mrb[0].mxu0
    %v4565 = vadd.f32 0.0, %v4564
    %v4566 = vpop.f32.mrb[0].mxu0
    %v4567 = vadd.f32 0.0, %v4566
    %4568 = vdwg.mxu0
    %v4569 = vlaneseq
    %v4570 = vshrl.u32 %v4569, 7
    %v4571 = vsub.s32 0, %v4570
    %v4572 = vrot.slane %v4494, %v4571
    %v4573 = vlaneseq
    %v4574 = vshrl.u32 %v4573, 7
    %v4575 = vsub.s32 0, %v4574
    %v4576 = vrot.slane %v4496, %v4575
    %v4577 = vlaneseq
    %v4578 = vshrl.u32 %v4577, 7
    %v4579 = vsub.s32 0, %v4578
    %v4580 = vrot.slane %v4565, %v4579
    %v4581 = vlaneseq
    %v4582 = vshrl.u32 %v4581, 7
    %v4583 = vsub.s32 0, %v4582
    %v4584 = vrot.slane %v4567, %v4583
    %v4585 = vmul.f32 %v3878, %v4572
    %v4586 = vmul.f32 %v3880, %v4576
    %v4587 = vmul.f32 %v4109, %v4580
    %v4588 = vmul.f32 %v4111, %v4584
    %v4589 = vmul.f32 %v3884, %v4572
    %v4590 = vmul.f32 %v3886, %v4576
    %v4591 = vmul.f32 %v4115, %v4580
    %v4592 = vmul.f32 %v4117, %v4584
    %v4593 = vlaneseq
    %v4594 = vshrl.u32 %v4593, 7
    %v4595 = vsub.s32 1, %v4594
    %v4596 = vrot.slane %v4494, %v4595
    %v4597 = vlaneseq
    %v4598 = vshrl.u32 %v4597, 7
    %v4599 = vsub.s32 1, %v4598
    %v4600 = vrot.slane %v4496, %v4599
    %v4601 = vlaneseq
    %v4602 = vshrl.u32 %v4601, 7
    %v4603 = vsub.s32 1, %v4602
    %v4604 = vrot.slane %v4565, %v4603
    %v4605 = vlaneseq
    %v4606 = vshrl.u32 %v4605, 7
    %v4607 = vsub.s32 1, %v4606
    %v4608 = vrot.slane %v4567, %v4607
    %v4609 = vadd.f32 %v4585, %v4596
    %v4610 = vadd.f32 %v4586, %v4600
    %v4611 = vadd.f32 %v4587, %v4604
    %v4612 = vadd.f32 %v4588, %v4608
    %v4613 = vadd.f32 %v4589, %v4596
    %v4614 = vadd.f32 %v4590, %v4600
    %v4615 = vadd.f32 %v4591, %v4604
    %v4616 = vadd.f32 %v4592, %v4608
    %v4617 = vmax.f32 %v4609, 0.0
    %v4618 = vmax.f32 %v4610, 0.0
    %v4619 = vmax.f32 %v4611, 0.0
    %v4620 = vmax.f32 %v4612, 0.0
    %v4621 = vmax.f32 %v4613, 0.0
    %v4622 = vmax.f32 %v4614, 0.0
    %v4623 = vmax.f32 %v4615, 0.0
    %v4624 = vmax.f32 %v4616, 0.0
    %4625 = vst [vmem:[#allocation6] sm:$0xff] 0.0
    %4626 = vst [vmem:[#allocation6 + $0x8] sm:$0xff] 0.0
    %4627 = vst [vmem:[#allocation6 + $0x10] sm:$0xff] 0.0
    %4628 = vst [vmem:[#allocation6 + $0x18] sm:$0xff] 0.0
    %4629 = vst [vmem:[#allocation6 + $0x20] sm:$0xff] 0.0
    %4630 = vst [vmem:[#allocation6 + $0x28] sm:$0xff] 0.0
    %4631 = vst [vmem:[#allocation6 + $0x30] sm:$0xff] 0.0
    %4632 = vst [vmem:[#allocation6 + $0x38] sm:$0xff] 0.0
    %4633 = vst [vmem:[#allocation6 + $0x40] sm:$0xf] 0.0
    %4634 = vst [vmem:[#allocation6 + $0x48] sm:$0xf] 0.0
    %v4637 = vcombine.low %v4617, %v4618
    %v4639 = vunpack.c.l.s4 1966171168
    %v4640 = vunpack.c.0.s8 %v4639
    %v4641 = vlaneseq
    %v4642 = vshrl.u32 %v4641, 7
    %v4643 = vsub.s32 %v4640, %v4642
    %v4644 = vrot.slane %v4637, %v4643
    %v4646 = vunpack.c.l.s4 1966171168
    %v4647 = vunpack.c.0.s8 %v4646
    %v4648 = vlaneseq
    %v4649 = vshrl.u32 %v4648, 7
    %v4650 = vsub.s32 %v4647, %v4649
    %v4651 = vrot.slane %v4644, %v4650
    %s4653 = scalar_lea.vmem [#allocation6], 1
    %4654 = vst.msk [vmem:[%s4653] ss:$8 sm:$0x3] %vm1497, %v4651
    %4655 = vst.msk [vmem:[%s4653] ss:$8 sm:$0x0] %vm1497, %v4651
    %v4658 = vcombine.low %v4619, %v4620
    %v4660 = vunpack.c.l.s4 1966171168
    %v4661 = vunpack.c.0.s8 %v4660
    %v4662 = vlaneseq
    %v4663 = vshrl.u32 %v4662, 7
    %v4664 = vsub.s32 %v4661, %v4663
    %v4665 = vrot.slane %v4658, %v4664
    %v4667 = vunpack.c.l.s4 1966171168
    %v4668 = vunpack.c.0.s8 %v4667
    %v4669 = vlaneseq
    %v4670 = vshrl.u32 %v4669, 7
    %v4671 = vsub.s32 %v4668, %v4670
    %v4672 = vrot.slane %v4665, %v4671
    %s4674 = scalar_lea.vmem [#allocation6], 2
    %4675 = vst.msk [vmem:[%s4674] ss:$8 sm:$0x3] %vm1497, %v4672
    %4676 = vst.msk [vmem:[%s4674] ss:$8 sm:$0x0] %vm1497, %v4672
    %v4677 = vcombine.high %v4644, %v4644
    %v4679 = vunpack.c.l.s4 1966171168
    %v4680 = vunpack.c.0.s8 %v4679
    %v4681 = vlaneseq
    %v4682 = vshrl.u32 %v4681, 7
    %v4683 = vsub.s32 %v4680, %v4682
    %v4684 = vrot.slane %v4677, %v4683
    %s4686 = scalar_lea.vmem [#allocation6], 3
    %4687 = vst.msk [vmem:[%s4686] ss:$8 sm:$0x3] %vm1497, %v4684
    %4688 = vst.msk [vmem:[%s4686] ss:$8 sm:$0x0] %vm1497, %v4684
    %v4689 = vcombine.high %v4665, %v4665
    %v4691 = vunpack.c.l.s4 1966171168
    %v4692 = vunpack.c.0.s8 %v4691
    %v4693 = vlaneseq
    %v4694 = vshrl.u32 %v4693, 7
    %v4695 = vsub.s32 %v4692, %v4694
    %v4696 = vrot.slane %v4689, %v4695
    %s4698 = scalar_lea.vmem [#allocation6], 4
    %4699 = vst.msk [vmem:[%s4698] ss:$8 sm:$0x3] %vm1497, %v4696
    %4700 = vst.msk [vmem:[%s4698] ss:$8 sm:$0x0] %vm1497, %v4696
    %v4701 = vcombine.high %v4651, %v4651
    %s4703 = scalar_lea.vmem [#allocation6], 5
    %4704 = vst.msk [vmem:[%s4703] ss:$8 sm:$0x3] %vm1497, %v4701
    %4705 = vst.msk [vmem:[%s4703] ss:$8 sm:$0x0] %vm1497, %v4701
    %v4706 = vcombine.high %v4672, %v4672
    %s4708 = scalar_lea.vmem [#allocation6], 6
    %4709 = vst.msk [vmem:[%s4708] ss:$8 sm:$0x3] %vm1497, %v4706
    %4710 = vst.msk [vmem:[%s4708] ss:$8 sm:$0x0] %vm1497, %v4706
    %v4711 = vcombine.high %v4684, %v4684
    %s4713 = scalar_lea.vmem [#allocation6], 7
    %4714 = vst.msk [vmem:[%s4713] ss:$8 sm:$0x3] %vm1497, %v4711
    %4715 = vst.msk [vmem:[%s4713] ss:$8 sm:$0x0] %vm1497, %v4711
    %v4716 = vcombine.high %v4696, %v4696
    %s4718 = scalar_lea.vmem [#allocation6], 16
    %4719 = vst.msk [vmem:[%s4718] ss:$8 sm:$0x3] %vm1497, %v4716
    %4720 = vst.msk [vmem:[%s4718] ss:$8 sm:$0x0] %vm1497, %v4716
    %v4721 = vcombine.high %v4617, %v4618
    %v4723 = vunpack.c.l.s4 1966171168
    %v4724 = vunpack.c.0.s8 %v4723
    %v4725 = vlaneseq
    %v4726 = vshrl.u32 %v4725, 7
    %v4727 = vsub.s32 %v4724, %v4726
    %v4728 = vrot.slane %v4721, %v4727
    %v4730 = vunpack.c.l.s4 1966171168
    %v4731 = vunpack.c.0.s8 %v4730
    %v4732 = vlaneseq
    %v4733 = vshrl.u32 %v4732, 7
    %v4734 = vsub.s32 %v4731, %v4733
    %v4735 = vrot.slane %v4728, %v4734
    %s4737 = scalar_lea.vmem [#allocation6], 17
    %4738 = vst.msk [vmem:[%s4737] ss:$8 sm:$0x3] %vm1497, %v4735
    %4739 = vst.msk [vmem:[%s4737] ss:$8 sm:$0x0] %vm1497, %v4735
    %v4740 = vcombine.high %v4619, %v4620
    %v4742 = vunpack.c.l.s4 1966171168
    %v4743 = vunpack.c.0.s8 %v4742
    %v4744 = vlaneseq
    %v4745 = vshrl.u32 %v4744, 7
    %v4746 = vsub.s32 %v4743, %v4745
    %v4747 = vrot.slane %v4740, %v4746
    %v4749 = vunpack.c.l.s4 1966171168
    %v4750 = vunpack.c.0.s8 %v4749
    %v4751 = vlaneseq
    %v4752 = vshrl.u32 %v4751, 7
    %v4753 = vsub.s32 %v4750, %v4752
    %v4754 = vrot.slane %v4747, %v4753
    %s4756 = scalar_lea.vmem [#allocation6], 18
    %4757 = vst.msk [vmem:[%s4756] ss:$8 sm:$0x3] %vm1497, %v4754
    %4758 = vst.msk [vmem:[%s4756] ss:$8 sm:$0x0] %vm1497, %v4754
    %v4759 = vcombine.high %v4728, %v4728
    %v4761 = vunpack.c.l.s4 1966171168
    %v4762 = vunpack.c.0.s8 %v4761
    %v4763 = vlaneseq
    %v4764 = vshrl.u32 %v4763, 7
    %v4765 = vsub.s32 %v4762, %v4764
    %v4766 = vrot.slane %v4759, %v4765
    %s4768 = scalar_lea.vmem [#allocation6], 19
    %4769 = vst.msk [vmem:[%s4768] ss:$8 sm:$0x3] %vm1497, %v4766
    %4770 = vst.msk [vmem:[%s4768] ss:$8 sm:$0x0] %vm1497, %v4766
    %v4771 = vcombine.high %v4747, %v4747
    %v4773 = vunpack.c.l.s4 1966171168
    %v4774 = vunpack.c.0.s8 %v4773
    %v4775 = vlaneseq
    %v4776 = vshrl.u32 %v4775, 7
    %v4777 = vsub.s32 %v4774, %v4776
    %v4778 = vrot.slane %v4771, %v4777
    %s4780 = scalar_lea.vmem [#allocation6], 20
    %4781 = vst.msk [vmem:[%s4780] ss:$8 sm:$0x3] %vm1497, %v4778
    %4782 = vst.msk [vmem:[%s4780] ss:$8 sm:$0x0] %vm1497, %v4778
    %v4783 = vcombine.high %v4735, %v4735
    %s4785 = scalar_lea.vmem [#allocation6], 21
    %4786 = vst.msk [vmem:[%s4785] ss:$8 sm:$0x3] %vm1497, %v4783
    %4787 = vst.msk [vmem:[%s4785] ss:$8 sm:$0x0] %vm1497, %v4783
    %v4788 = vcombine.high %v4754, %v4754
    %s4790 = scalar_lea.vmem [#allocation6], 22
    %4791 = vst.msk [vmem:[%s4790] ss:$8 sm:$0x3] %vm1497, %v4788
    %4792 = vst.msk [vmem:[%s4790] ss:$8 sm:$0x0] %vm1497, %v4788
    %v4793 = vcombine.high %v4766, %v4766
    %s4795 = scalar_lea.vmem [#allocation6], 23
    %4796 = vst.msk [vmem:[%s4795] ss:$8 sm:$0x3] %vm1497, %v4793
    %4797 = vst.msk [vmem:[%s4795] ss:$8 sm:$0x0] %vm1497, %v4793
    %v4798 = vcombine.high %v4778, %v4778
    %s4800 = scalar_lea.vmem [#allocation6], 32
    %4801 = vst.msk [vmem:[%s4800] ss:$8 sm:$0x3] %vm1497, %v4798
    %4802 = vst.msk [vmem:[%s4800] ss:$8 sm:$0x0] %vm1497, %v4798
    %v4805 = vcombine.low %v4621, %v4622
    %v4807 = vunpack.c.l.s4 1966171168
    %v4808 = vunpack.c.0.s8 %v4807
    %v4809 = vlaneseq
    %v4810 = vshrl.u32 %v4809, 7
    %v4811 = vsub.s32 %v4808, %v4810
    %v4812 = vrot.slane %v4805, %v4811
    %v4814 = vunpack.c.l.s4 1966171168
    %v4815 = vunpack.c.0.s8 %v4814
    %v4816 = vlaneseq
    %v4817 = vshrl.u32 %v4816, 7
    %v4818 = vsub.s32 %v4815, %v4817
    %v4819 = vrot.slane %v4812, %v4818
    %s4821 = scalar_lea.vmem [#allocation6], 35
    %4822 = vst.msk [vmem:[%s4821] ss:$8 sm:$0x3] %vm1497, %v4819
    %4823 = vst.msk [vmem:[%s4821] ss:$8 sm:$0x0] %vm1497, %v4819
    %v4826 = vcombine.low %v4623, %v4624
    %v4828 = vunpack.c.l.s4 1966171168
    %v4829 = vunpack.c.0.s8 %v4828
    %v4830 = vlaneseq
    %v4831 = vshrl.u32 %v4830, 7
    %v4832 = vsub.s32 %v4829, %v4831
    %v4833 = vrot.slane %v4826, %v4832
    %v4835 = vunpack.c.l.s4 1966171168
    %v4836 = vunpack.c.0.s8 %v4835
    %v4837 = vlaneseq
    %v4838 = vshrl.u32 %v4837, 7
    %v4839 = vsub.s32 %v4836, %v4838
    %v4840 = vrot.slane %v4833, %v4839
    %s4842 = scalar_lea.vmem [#allocation6], 36
    %4843 = vst.msk [vmem:[%s4842] ss:$8 sm:$0x3] %vm1497, %v4840
    %4844 = vst.msk [vmem:[%s4842] ss:$8 sm:$0x0] %vm1497, %v4840
    %v4845 = vcombine.high %v4812, %v4812
    %v4847 = vunpack.c.l.s4 1966171168
    %v4848 = vunpack.c.0.s8 %v4847
    %v4849 = vlaneseq
    %v4850 = vshrl.u32 %v4849, 7
    %v4851 = vsub.s32 %v4848, %v4850
    %v4852 = vrot.slane %v4845, %v4851
    %s4854 = scalar_lea.vmem [#allocation6], 37
    %4855 = vst.msk [vmem:[%s4854] ss:$8 sm:$0x3] %vm1497, %v4852
    %4856 = vst.msk [vmem:[%s4854] ss:$8 sm:$0x0] %vm1497, %v4852
    %v4857 = vcombine.high %v4833, %v4833
    %v4859 = vunpack.c.l.s4 1966171168
    %v4860 = vunpack.c.0.s8 %v4859
    %v4861 = vlaneseq
    %v4862 = vshrl.u32 %v4861, 7
    %v4863 = vsub.s32 %v4860, %v4862
    %v4864 = vrot.slane %v4857, %v4863
    %s4866 = scalar_lea.vmem [#allocation6], 38
    %4867 = vst.msk [vmem:[%s4866] ss:$8 sm:$0x3] %vm1497, %v4864
    %4868 = vst.msk [vmem:[%s4866] ss:$8 sm:$0x0] %vm1497, %v4864
    %v4869 = vcombine.high %v4819, %v4819
    %s4871 = scalar_lea.vmem [#allocation6], 39
    %4872 = vst.msk [vmem:[%s4871] ss:$8 sm:$0x3] %vm1497, %v4869
    %4873 = vst.msk [vmem:[%s4871] ss:$8 sm:$0x0] %vm1497, %v4869
    %v4874 = vcombine.high %v4840, %v4840
    %s4876 = scalar_lea.vmem [#allocation6], 48
    %4877 = vst.msk [vmem:[%s4876] ss:$8 sm:$0x3] %vm1497, %v4874
    %4878 = vst.msk [vmem:[%s4876] ss:$8 sm:$0x0] %vm1497, %v4874
    %v4879 = vcombine.high %v4852, %v4852
    %s4881 = scalar_lea.vmem [#allocation6], 49
    %4882 = vst.msk [vmem:[%s4881] ss:$8 sm:$0x3] %vm1497, %v4879
    %4883 = vst.msk [vmem:[%s4881] ss:$8 sm:$0x0] %vm1497, %v4879
    %v4884 = vcombine.high %v4864, %v4864
    %s4886 = scalar_lea.vmem [#allocation6], 50
    %4887 = vst.msk [vmem:[%s4886] ss:$8 sm:$0x3] %vm1497, %v4884
    %4888 = vst.msk [vmem:[%s4886] ss:$8 sm:$0x0] %vm1497, %v4884
    %v4889 = vcombine.high %v4621, %v4622
    %v4891 = vunpack.c.l.s4 1966171168
    %v4892 = vunpack.c.0.s8 %v4891
    %v4893 = vlaneseq
    %v4894 = vshrl.u32 %v4893, 7
    %v4895 = vsub.s32 %v4892, %v4894
    %v4896 = vrot.slane %v4889, %v4895
    %v4898 = vunpack.c.l.s4 1966171168
    %v4899 = vunpack.c.0.s8 %v4898
    %v4900 = vlaneseq
    %v4901 = vshrl.u32 %v4900, 7
    %v4902 = vsub.s32 %v4899, %v4901
    %v4903 = vrot.slane %v4896, %v4902
    %s4905 = scalar_lea.vmem [#allocation6], 51
    %4906 = vst.msk [vmem:[%s4905] ss:$8 sm:$0x3] %vm1497, %v4903
    %4907 = vst.msk [vmem:[%s4905] ss:$8 sm:$0x0] %vm1497, %v4903
    %v4908 = vcombine.high %v4623, %v4624
    %v4910 = vunpack.c.l.s4 1966171168
    %v4911 = vunpack.c.0.s8 %v4910
    %v4912 = vlaneseq
    %v4913 = vshrl.u32 %v4912, 7
    %v4914 = vsub.s32 %v4911, %v4913
    %v4915 = vrot.slane %v4908, %v4914
    %v4917 = vunpack.c.l.s4 1966171168
    %v4918 = vunpack.c.0.s8 %v4917
    %v4919 = vlaneseq
    %v4920 = vshrl.u32 %v4919, 7
    %v4921 = vsub.s32 %v4918, %v4920
    %v4922 = vrot.slane %v4915, %v4921
    %s4924 = scalar_lea.vmem [#allocation6], 52
    %4925 = vst.msk [vmem:[%s4924] ss:$8 sm:$0x3] %vm1497, %v4922
    %4926 = vst.msk [vmem:[%s4924] ss:$8 sm:$0x0] %vm1497, %v4922
    %v4927 = vcombine.high %v4896, %v4896
    %v4929 = vunpack.c.l.s4 1966171168
    %v4930 = vunpack.c.0.s8 %v4929
    %v4931 = vlaneseq
    %v4932 = vshrl.u32 %v4931, 7
    %v4933 = vsub.s32 %v4930, %v4932
    %v4934 = vrot.slane %v4927, %v4933
    %s4936 = scalar_lea.vmem [#allocation6], 53
    %4937 = vst.msk [vmem:[%s4936] ss:$8 sm:$0x3] %vm1497, %v4934
    %4938 = vst.msk [vmem:[%s4936] ss:$8 sm:$0x0] %vm1497, %v4934
    %v4939 = vcombine.high %v4915, %v4915
    %v4941 = vunpack.c.l.s4 1966171168
    %v4942 = vunpack.c.0.s8 %v4941
    %v4943 = vlaneseq
    %v4944 = vshrl.u32 %v4943, 7
    %v4945 = vsub.s32 %v4942, %v4944
    %v4946 = vrot.slane %v4939, %v4945
    %s4948 = scalar_lea.vmem [#allocation6], 54
    %4949 = vst.msk [vmem:[%s4948] ss:$8 sm:$0x3] %vm1497, %v4946
    %4950 = vst.msk [vmem:[%s4948] ss:$8 sm:$0x0] %vm1497, %v4946
    %v4951 = vcombine.high %v4903, %v4903
    %s4953 = scalar_lea.vmem [#allocation6], 55
    %4954 = vst.msk [vmem:[%s4953] ss:$8 sm:$0x3] %vm1497, %v4951
    %4955 = vst.msk [vmem:[%s4953] ss:$8 sm:$0x0] %vm1497, %v4951
    %v4956 = vcombine.high %v4922, %v4922
    %s4958 = scalar_lea.vmem [#allocation6], 64
    %4959 = vst.msk [vmem:[%s4958] ss:$8 sm:$0x3] %vm1497, %v4956
    %4960 = vst.msk [vmem:[%s4958] ss:$8 sm:$0x0] %vm1497, %v4956
    %v4961 = vcombine.high %v4934, %v4934
    %s4963 = scalar_lea.vmem [#allocation6], 65
    %4964 = vst.msk [vmem:[%s4963] ss:$8 sm:$0x3] %vm1497, %v4961
    %4965 = vst.msk [vmem:[%s4963] ss:$8 sm:$0x0] %vm1497, %v4961
    %v4966 = vcombine.high %v4946, %v4946
    %s4968 = scalar_lea.vmem [#allocation6], 66
    %4969 = vst.msk [vmem:[%s4968] ss:$8 sm:$0x3] %vm1497, %v4966
    %4970 = vst.msk [vmem:[%s4968] ss:$8 sm:$0x0] %vm1497, %v4966
    %v4971 = vld [vmem:[#allocation6] sm:$0xff]
    %v4972 = vld [vmem:[#allocation6 + $0x8] sm:$0xff]
    %v4973 = vld [vmem:[#allocation6 + $0x10] sm:$0xff]
    %v4974 = vld [vmem:[#allocation6 + $0x18] sm:$0xff]
    %4975 = vst [vmem:[#allocation7] sm:$0xff] %v4971
    %4976 = vst [vmem:[#allocation7 + $0x8] sm:$0xff] %v4972
    %4977 = vst [vmem:[#allocation7 + $0x30] sm:$0xff] %v4973
    %4978 = vst [vmem:[#allocation7 + $0x38] sm:$0xff] %v4974
    %v4979 = vld [vmem:[#allocation6] sm:$0xfe]
    %v4980 = vld [vmem:[#allocation6 + $0x8] sm:$0xfe]
    %v4981 = vld [vmem:[#allocation6 + $0x10] sm:$0xff]
    %v4982 = vld [vmem:[#allocation6 + $0x18] sm:$0xff]
    %v4983 = vld [vmem:[#allocation6 + $0x20] sm:$0x1]
    %v4984 = vld [vmem:[#allocation6 + $0x28] sm:$0x1]
    %v4991 = vrot.slane %v4979, 1
    %v4992 = vrot.slane %v4981, 1
    %v4993 = vsel %vm3177, %v4991, %v4992
    %v4994 = vrot.slane %v4980, 1
    %v4995 = vrot.slane %v4982, 1
    %v4996 = vsel %vm3177, %v4994, %v4995
    %v4997 = vrot.slane %v4983, 1
    %v4998 = vsel %vm3177, %v4992, %v4997
    %v4999 = vrot.slane %v4984, 1
    %v5000 = vsel %vm3177, %v4995, %v4999
    %5005 = vst [vmem:[#allocation7 + $0x10] sm:$0xff] %v4993
    %5006 = vst [vmem:[#allocation7 + $0x18] sm:$0xff] %v4996
    %5007 = vst [vmem:[#allocation7 + $0x40] sm:$0xff] %v4998
    %5008 = vst [vmem:[#allocation7 + $0x48] sm:$0xff] %v5000
    %v5009 = vld [vmem:[#allocation6] sm:$0xfc]
    %v5010 = vld [vmem:[#allocation6 + $0x8] sm:$0xfc]
    %v5011 = vld [vmem:[#allocation6 + $0x10] sm:$0xff]
    %v5012 = vld [vmem:[#allocation6 + $0x18] sm:$0xff]
    %v5013 = vld [vmem:[#allocation6 + $0x20] sm:$0x3]
    %v5014 = vld [vmem:[#allocation6 + $0x28] sm:$0x3]
    %v5021 = vrot.slane %v5009, 2
    %v5022 = vrot.slane %v5011, 2
    %v5023 = vsel %vm1644, %v5021, %v5022
    %v5024 = vrot.slane %v5010, 2
    %v5025 = vrot.slane %v5012, 2
    %v5026 = vsel %vm1644, %v5024, %v5025
    %v5027 = vrot.slane %v5013, 2
    %v5028 = vsel %vm1644, %v5022, %v5027
    %v5029 = vrot.slane %v5014, 2
    %v5030 = vsel %vm1644, %v5025, %v5029
    %5035 = vst [vmem:[#allocation7 + $0x20] sm:$0xff] %v5023
    %5036 = vst [vmem:[#allocation7 + $0x28] sm:$0xff] %v5026
    %5037 = vst [vmem:[#allocation7 + $0x50] sm:$0xff] %v5028
    %5038 = vst [vmem:[#allocation7 + $0x58] sm:$0xff] %v5030
    %v5039 = vld [vmem:[#allocation6 + $0x20] sm:$0xfc]
    %v5040 = vld [vmem:[#allocation6 + $0x28] sm:$0xfc]
    %v5041 = vld [vmem:[#allocation6 + $0x30] sm:$0xff]
    %v5042 = vld [vmem:[#allocation6 + $0x38] sm:$0xff]
    %v5043 = vld [vmem:[#allocation6 + $0x40] sm:$0x3]
    %v5044 = vld [vmem:[#allocation6 + $0x48] sm:$0x3]
    %v5051 = vrot.slane %v5039, 2
    %v5052 = vrot.slane %v5041, 2
    %v5053 = vsel %vm1644, %v5051, %v5052
    %v5054 = vrot.slane %v5040, 2
    %v5055 = vrot.slane %v5042, 2
    %v5056 = vsel %vm1644, %v5054, %v5055
    %v5057 = vrot.slane %v5043, 2
    %v5058 = vsel %vm1644, %v5052, %v5057
    %v5059 = vrot.slane %v5044, 2
    %v5060 = vsel %vm1644, %v5055, %v5059
    %5065 = vst [vmem:[#allocation7 + $0x60] sm:$0xff] %v5053
    %5066 = vst [vmem:[#allocation7 + $0x68] sm:$0xff] %v5056
    %5067 = vst [vmem:[#allocation7 + $0x90] sm:$0xff] %v5058
    %5068 = vst [vmem:[#allocation7 + $0x98] sm:$0xff] %v5060
    %v5069 = vld [vmem:[#allocation6 + $0x20] sm:$0xf8]
    %v5070 = vld [vmem:[#allocation6 + $0x28] sm:$0xf8]
    %v5071 = vld [vmem:[#allocation6 + $0x30] sm:$0xff]
    %v5072 = vld [vmem:[#allocation6 + $0x38] sm:$0xff]
    %v5073 = vld [vmem:[#allocation6 + $0x40] sm:$0x7]
    %v5074 = vld [vmem:[#allocation6 + $0x48] sm:$0x7]
    %v5081 = vrot.slane %v5069, 3
    %v5082 = vrot.slane %v5071, 3
    %v5083 = vsel %vm1663, %v5081, %v5082
    %v5084 = vrot.slane %v5070, 3
    %v5085 = vrot.slane %v5072, 3
    %v5086 = vsel %vm1663, %v5084, %v5085
    %v5087 = vrot.slane %v5073, 3
    %v5088 = vsel %vm1663, %v5082, %v5087
    %v5089 = vrot.slane %v5074, 3
    %v5090 = vsel %vm1663, %v5085, %v5089
    %5095 = vst [vmem:[#allocation7 + $0x70] sm:$0xff] %v5083
    %5096 = vst [vmem:[#allocation7 + $0x78] sm:$0xff] %v5086
    %5097 = vst [vmem:[#allocation7 + $0xa0] sm:$0xff] %v5088
    %5098 = vst [vmem:[#allocation7 + $0xa8] sm:$0xff] %v5090
    %v5099 = vld [vmem:[#allocation6 + $0x20] sm:$0xf0]
    %v5100 = vld [vmem:[#allocation6 + $0x28] sm:$0xf0]
    %v5101 = vld [vmem:[#allocation6 + $0x30] sm:$0xff]
    %v5102 = vld [vmem:[#allocation6 + $0x38] sm:$0xff]
    %v5103 = vld [vmem:[#allocation6 + $0x40] sm:$0xf]
    %v5104 = vld [vmem:[#allocation6 + $0x48] sm:$0xf]
    %v5111 = vrot.slane %v5099, 4
    %v5112 = vrot.slane %v5101, 4
    %v5113 = vsel %vm3250, %v5111, %v5112
    %v5114 = vrot.slane %v5100, 4
    %v5115 = vrot.slane %v5102, 4
    %v5116 = vsel %vm3250, %v5114, %v5115
    %v5117 = vrot.slane %v5103, 4
    %v5118 = vsel %vm3250, %v5112, %v5117
    %v5119 = vrot.slane %v5104, 4
    %v5120 = vsel %vm3250, %v5115, %v5119
    %5125 = vst [vmem:[#allocation7 + $0x80] sm:$0xff] %v5113
    %5126 = vst [vmem:[#allocation7 + $0x88] sm:$0xff] %v5116
    %5127 = vst [vmem:[#allocation7 + $0xb0] sm:$0xff] %v5118
    %5128 = vst [vmem:[#allocation7 + $0xb8] sm:$0xff] %v5120
    %v5129 = vld [vmem:[#allocation7] sm:$0xff]
    %v5130 = vld [vmem:[#allocation7 + $0x8] sm:$0xff]
    %v5131 = vld [vmem:[#allocation7 + $0x10] sm:$0xff]
    %v5132 = vld [vmem:[#allocation7 + $0x18] sm:$0xff]
    %v5133 = vld [vmem:[#allocation7 + $0x20] sm:$0xff]
    %v5134 = vld [vmem:[#allocation7 + $0x28] sm:$0xff]
    %v5135 = vld [vmem:[#allocation7 + $0x30] sm:$0xff]
    %v5136 = vld [vmem:[#allocation7 + $0x38] sm:$0xff]
    %v5137 = vld [vmem:[#allocation7 + $0x40] sm:$0xff]
    %v5138 = vld [vmem:[#allocation7 + $0x48] sm:$0xff]
    %v5139 = vld [vmem:[#allocation7 + $0x50] sm:$0xff]
    %v5140 = vld [vmem:[#allocation7 + $0x58] sm:$0xff]
    %v5141 = vld [vmem:[#allocation7 + $0x60] sm:$0xff]
    %v5142 = vld [vmem:[#allocation7 + $0x68] sm:$0xff]
    %v5143 = vld [vmem:[#allocation7 + $0x70] sm:$0xff]
    %v5144 = vld [vmem:[#allocation7 + $0x78] sm:$0xff]
    %v5145 = vld [vmem:[#allocation7 + $0x80] sm:$0xff]
    %v5146 = vld [vmem:[#allocation7 + $0x88] sm:$0xff]
    %v5147 = vld [vmem:[#allocation7 + $0x90] sm:$0xff]
    %v5148 = vld [vmem:[#allocation7 + $0x98] sm:$0xff]
    %v5149 = vld [vmem:[#allocation7 + $0xa0] sm:$0xff]
    %v5150 = vld [vmem:[#allocation7 + $0xa8] sm:$0xff]
    %v5151 = vld [vmem:[#allocation7 + $0xb0] sm:$0xff]
    %v5152 = vld [vmem:[#allocation7 + $0xb8] sm:$0xff]
    %v5153 = vld [vmem:[#allocation17] sm:$0xff]
    %v5154 = vld [vmem:[#allocation17 + $0x8] sm:$0xff]
    %v5155 = vld [vmem:[#allocation17 + $0x10] sm:$0xff]
    %v5156 = vld [vmem:[#allocation17 + $0x18] sm:$0xff]
    %v5157 = vld [vmem:[#allocation17 + $0x20] sm:$0xff]
    %v5158 = vld [vmem:[#allocation17 + $0x28] sm:$0xff]
    %v5159 = vld [vmem:[#allocation17 + $0x30] sm:$0xff]
    %v5160 = vld [vmem:[#allocation17 + $0x38] sm:$0xff]
    %v5161 = vld [vmem:[#allocation17 + $0x40] sm:$0xff]
    %v5162 = vld [vmem:[#allocation17 + $0x48] sm:$0xff]
    %v5163 = vld [vmem:[#allocation17 + $0x50] sm:$0xff]
    %v5164 = vld [vmem:[#allocation17 + $0x58] sm:$0xff]
    %v5165 = vld [vmem:[#allocation17 + $0x60] sm:$0xff]
    %v5166 = vld [vmem:[#allocation17 + $0x68] sm:$0xff]
    %v5167 = vld [vmem:[#allocation17 + $0x70] sm:$0xff]
    %v5168 = vld [vmem:[#allocation17 + $0x78] sm:$0xff]
    %v5169 = vld [vmem:[#allocation17 + $0x80] sm:$0xff]
    %v5170 = vld [vmem:[#allocation17 + $0x88] sm:$0xff]
    %v5171 = vld [vmem:[#allocation17 + $0x90] sm:$0xff]
    %v5172 = vld [vmem:[#allocation17 + $0x98] sm:$0xff]
    %v5173 = vld [vmem:[#allocation17 + $0xa0] sm:$0xff]
    %v5174 = vld [vmem:[#allocation17 + $0xa8] sm:$0xff]
    %v5175 = vld [vmem:[#allocation17 + $0xb0] sm:$0xff]
    %v5176 = vld [vmem:[#allocation17 + $0xb8] sm:$0xff]
    %v5177 = vld [vmem:[#allocation17 + $0xc0] sm:$0xff]
    %v5178 = vld [vmem:[#allocation17 + $0xc8] sm:$0xff]
    %v5179 = vld [vmem:[#allocation17 + $0xd0] sm:$0xff]
    %v5180 = vld [vmem:[#allocation17 + $0xd8] sm:$0xff]
    %v5181 = vld [vmem:[#allocation17 + $0xe0] sm:$0xff]
    %v5182 = vld [vmem:[#allocation17 + $0xe8] sm:$0xff]
    %v5183 = vld [vmem:[#allocation17 + $0xf0] sm:$0xff]
    %v5184 = vld [vmem:[#allocation17 + $0xf8] sm:$0xff]
    %v5185 = vld [vmem:[#allocation17 + $0x100] sm:$0xff]
    %v5186 = vld [vmem:[#allocation17 + $0x108] sm:$0xff]
    %v5187 = vld [vmem:[#allocation17 + $0x110] sm:$0xff]
    %v5188 = vld [vmem:[#allocation17 + $0x118] sm:$0xff]
    %v5189 = vld [vmem:[#allocation17 + $0x120] sm:$0xff]
    %v5190 = vld [vmem:[#allocation17 + $0x128] sm:$0xff]
    %v5191 = vld [vmem:[#allocation17 + $0x130] sm:$0xff]
    %v5192 = vld [vmem:[#allocation17 + $0x138] sm:$0xff]
    %v5193 = vld [vmem:[#allocation17 + $0x140] sm:$0xff]
    %v5194 = vld [vmem:[#allocation17 + $0x148] sm:$0xff]
    %v5195 = vld [vmem:[#allocation17 + $0x150] sm:$0xff]
    %v5196 = vld [vmem:[#allocation17 + $0x158] sm:$0xff]
    %v5197 = vld [vmem:[#allocation17 + $0x160] sm:$0xff]
    %v5198 = vld [vmem:[#allocation17 + $0x168] sm:$0xff]
    %v5199 = vld [vmem:[#allocation17 + $0x170] sm:$0xff]
    %v5200 = vld [vmem:[#allocation17 + $0x178] sm:$0xff]
    %v5201 = vld [vmem:[#allocation17 + $0x180] sm:$0xff]
    %v5202 = vld [vmem:[#allocation17 + $0x188] sm:$0xff]
    %v5203 = vld [vmem:[#allocation17 + $0x190] sm:$0xff]
    %v5204 = vld [vmem:[#allocation17 + $0x198] sm:$0xff]
    %v5205 = vld [vmem:[#allocation17 + $0x1a0] sm:$0xff]
    %v5206 = vld [vmem:[#allocation17 + $0x1a8] sm:$0xff]
    %v5207 = vld [vmem:[#allocation17 + $0x1b0] sm:$0xff]
    %v5208 = vld [vmem:[#allocation17 + $0x1b8] sm:$0xff]
    %v5209 = vld [vmem:[#allocation17 + $0x1c0] sm:$0xff]
    %v5210 = vld [vmem:[#allocation17 + $0x1c8] sm:$0xff]
    %v5211 = vld [vmem:[#allocation17 + $0x1d0] sm:$0xff]
    %v5212 = vld [vmem:[#allocation17 + $0x1d8] sm:$0xff]
    %v5213 = vld [vmem:[#allocation17 + $0x1e0] sm:$0xff]
    %v5214 = vld [vmem:[#allocation17 + $0x1e8] sm:$0xff]
    %v5215 = vld [vmem:[#allocation17 + $0x1f0] sm:$0xff]
    %v5216 = vld [vmem:[#allocation17 + $0x1f8] sm:$0xff]
    %v5217 = vld [vmem:[#allocation17 + $0x200] sm:$0xff]
    %v5218 = vld [vmem:[#allocation17 + $0x208] sm:$0xff]
    %v5219 = vld [vmem:[#allocation17 + $0x210] sm:$0xff]
    %v5220 = vld [vmem:[#allocation17 + $0x218] sm:$0xff]
    %v5221 = vld [vmem:[#allocation17 + $0x220] sm:$0xff]
    %v5222 = vld [vmem:[#allocation17 + $0x228] sm:$0xff]
    %v5223 = vld [vmem:[#allocation17 + $0x230] sm:$0xff]
    %v5224 = vld [vmem:[#allocation17 + $0x238] sm:$0xff]
    %v5225 = vld [vmem:[#allocation17 + $0x240] sm:$0xff]
    %v5226 = vld [vmem:[#allocation17 + $0x248] sm:$0xff]
    %v5227 = vld [vmem:[#allocation17 + $0x250] sm:$0xff]
    %v5228 = vld [vmem:[#allocation17 + $0x258] sm:$0xff]
    %v5229 = vld [vmem:[#allocation17 + $0x260] sm:$0xff]
    %v5230 = vld [vmem:[#allocation17 + $0x268] sm:$0xff]
    %v5231 = vld [vmem:[#allocation17 + $0x270] sm:$0xff]
    %v5232 = vld [vmem:[#allocation17 + $0x278] sm:$0xff]
    %v5233 = vld [vmem:[#allocation17 + $0x280] sm:$0xff]
    %v5234 = vld [vmem:[#allocation17 + $0x288] sm:$0xff]
    %v5235 = vld [vmem:[#allocation17 + $0x290] sm:$0xff]
    %v5236 = vld [vmem:[#allocation17 + $0x298] sm:$0xff]
    %v5237 = vld [vmem:[#allocation17 + $0x2a0] sm:$0xff]
    %v5238 = vld [vmem:[#allocation17 + $0x2a8] sm:$0xff]
    %v5239 = vld [vmem:[#allocation17 + $0x2b0] sm:$0xff]
    %v5240 = vld [vmem:[#allocation17 + $0x2b8] sm:$0xff]
    %v5241 = vld [vmem:[#allocation17 + $0x2c0] sm:$0xff]
    %v5242 = vld [vmem:[#allocation17 + $0x2c8] sm:$0xff]
    %v5243 = vld [vmem:[#allocation17 + $0x2d0] sm:$0xff]
    %v5244 = vld [vmem:[#allocation17 + $0x2d8] sm:$0xff]
    %v5245 = vld [vmem:[#allocation17 + $0x2e0] sm:$0xff]
    %v5246 = vld [vmem:[#allocation17 + $0x2e8] sm:$0xff]
    %v5247 = vld [vmem:[#allocation17 + $0x2f0] sm:$0xff]
    %v5248 = vld [vmem:[#allocation17 + $0x2f8] sm:$0xff]
    %v5249 = vld [vmem:[#allocation17 + $0x300] sm:$0xff]
    %v5250 = vld [vmem:[#allocation17 + $0x308] sm:$0xff]
    %v5251 = vld [vmem:[#allocation17 + $0x310] sm:$0xff]
    %v5252 = vld [vmem:[#allocation17 + $0x318] sm:$0xff]
    %v5253 = vld [vmem:[#allocation17 + $0x320] sm:$0xff]
    %v5254 = vld [vmem:[#allocation17 + $0x328] sm:$0xff]
    %v5255 = vld [vmem:[#allocation17 + $0x330] sm:$0xff]
    %v5256 = vld [vmem:[#allocation17 + $0x338] sm:$0xff]
    %v5257 = vld [vmem:[#allocation17 + $0x340] sm:$0xff]
    %v5258 = vld [vmem:[#allocation17 + $0x348] sm:$0xff]
    %v5259 = vld [vmem:[#allocation17 + $0x350] sm:$0xff]
    %v5260 = vld [vmem:[#allocation17 + $0x358] sm:$0xff]
    %v5261 = vld [vmem:[#allocation17 + $0x360] sm:$0xff]
    %v5262 = vld [vmem:[#allocation17 + $0x368] sm:$0xff]
    %v5263 = vld [vmem:[#allocation17 + $0x370] sm:$0xff]
    %v5264 = vld [vmem:[#allocation17 + $0x378] sm:$0xff]
    %v5265 = vld [vmem:[#allocation17 + $0x380] sm:$0xff]
    %v5266 = vld [vmem:[#allocation17 + $0x388] sm:$0xff]
    %v5267 = vld [vmem:[#allocation17 + $0x390] sm:$0xff]
    %v5268 = vld [vmem:[#allocation17 + $0x398] sm:$0xff]
    %v5269 = vld [vmem:[#allocation17 + $0x3a0] sm:$0xff]
    %v5270 = vld [vmem:[#allocation17 + $0x3a8] sm:$0xff]
    %v5271 = vld [vmem:[#allocation17 + $0x3b0] sm:$0xff]
    %v5272 = vld [vmem:[#allocation17 + $0x3b8] sm:$0xff]
    %v5273 = vld [vmem:[#allocation17 + $0x3c0] sm:$0xff]
    %v5274 = vld [vmem:[#allocation17 + $0x3c8] sm:$0xff]
    %v5275 = vld [vmem:[#allocation17 + $0x3d0] sm:$0xff]
    %v5276 = vld [vmem:[#allocation17 + $0x3d8] sm:$0xff]
    %v5277 = vld [vmem:[#allocation17 + $0x3e0] sm:$0xff]
    %v5278 = vld [vmem:[#allocation17 + $0x3e8] sm:$0xff]
    %v5279 = vld [vmem:[#allocation17 + $0x3f0] sm:$0xff]
    %v5280 = vld [vmem:[#allocation17 + $0x3f8] sm:$0xff]
    %v5281 = vld [vmem:[#allocation17 + $0x400] sm:$0xff]
    %v5282 = vld [vmem:[#allocation17 + $0x408] sm:$0xff]
    %v5283 = vld [vmem:[#allocation17 + $0x410] sm:$0xff]
    %v5284 = vld [vmem:[#allocation17 + $0x418] sm:$0xff]
    %v5285 = vld [vmem:[#allocation17 + $0x420] sm:$0xff]
    %v5286 = vld [vmem:[#allocation17 + $0x428] sm:$0xff]
    %v5287 = vld [vmem:[#allocation17 + $0x430] sm:$0xff]
    %v5288 = vld [vmem:[#allocation17 + $0x438] sm:$0xff]
    %v5289 = vld [vmem:[#allocation17 + $0x440] sm:$0xff]
    %v5290 = vld [vmem:[#allocation17 + $0x448] sm:$0xff]
    %v5291 = vld [vmem:[#allocation17 + $0x450] sm:$0xff]
    %v5292 = vld [vmem:[#allocation17 + $0x458] sm:$0xff]
    %v5293 = vld [vmem:[#allocation17 + $0x460] sm:$0xff]
    %v5294 = vld [vmem:[#allocation17 + $0x468] sm:$0xff]
    %v5295 = vld [vmem:[#allocation17 + $0x470] sm:$0xff]
    %v5296 = vld [vmem:[#allocation17 + $0x478] sm:$0xff]
    %v5297 = vld [vmem:[#allocation17 + $0x480] sm:$0xff]
    %v5298 = vld [vmem:[#allocation17 + $0x488] sm:$0xff]
    %v5299 = vld [vmem:[#allocation17 + $0x490] sm:$0xff]
    %v5300 = vld [vmem:[#allocation17 + $0x498] sm:$0xff]
    %v5301 = vld [vmem:[#allocation17 + $0x4a0] sm:$0xff]
    %v5302 = vld [vmem:[#allocation17 + $0x4a8] sm:$0xff]
    %v5303 = vld [vmem:[#allocation17 + $0x4b0] sm:$0xff]
    %v5304 = vld [vmem:[#allocation17 + $0x4b8] sm:$0xff]
    %v5305 = vld [vmem:[#allocation17 + $0x4c0] sm:$0xff]
    %v5306 = vld [vmem:[#allocation17 + $0x4c8] sm:$0xff]
    %v5307 = vld [vmem:[#allocation17 + $0x4d0] sm:$0xff]
    %v5308 = vld [vmem:[#allocation17 + $0x4d8] sm:$0xff]
    %v5309 = vld [vmem:[#allocation17 + $0x4e0] sm:$0xff]
    %v5310 = vld [vmem:[#allocation17 + $0x4e8] sm:$0xff]
    %v5311 = vld [vmem:[#allocation17 + $0x4f0] sm:$0xff]
    %v5312 = vld [vmem:[#allocation17 + $0x4f8] sm:$0xff]
    %v5313 = vld [vmem:[#allocation17 + $0x500] sm:$0xff]
    %v5314 = vld [vmem:[#allocation17 + $0x508] sm:$0xff]
    %v5315 = vld [vmem:[#allocation17 + $0x510] sm:$0xff]
    %v5316 = vld [vmem:[#allocation17 + $0x518] sm:$0xff]
    %v5317 = vld [vmem:[#allocation17 + $0x520] sm:$0xff]
    %v5318 = vld [vmem:[#allocation17 + $0x528] sm:$0xff]
    %v5319 = vld [vmem:[#allocation17 + $0x530] sm:$0xff]
    %v5320 = vld [vmem:[#allocation17 + $0x538] sm:$0xff]
    %v5321 = vld [vmem:[#allocation17 + $0x540] sm:$0xff]
    %v5322 = vld [vmem:[#allocation17 + $0x548] sm:$0xff]
    %v5323 = vld [vmem:[#allocation17 + $0x550] sm:$0xff]
    %v5324 = vld [vmem:[#allocation17 + $0x558] sm:$0xff]
    %v5325 = vld [vmem:[#allocation17 + $0x560] sm:$0xff]
    %v5326 = vld [vmem:[#allocation17 + $0x568] sm:$0xff]
    %v5327 = vld [vmem:[#allocation17 + $0x570] sm:$0xff]
    %v5328 = vld [vmem:[#allocation17 + $0x578] sm:$0xff]
    %v5329 = vld [vmem:[#allocation17 + $0x580] sm:$0xff]
    %v5330 = vld [vmem:[#allocation17 + $0x588] sm:$0xff]
    %v5331 = vld [vmem:[#allocation17 + $0x590] sm:$0xff]
    %v5332 = vld [vmem:[#allocation17 + $0x598] sm:$0xff]
    %v5333 = vld [vmem:[#allocation17 + $0x5a0] sm:$0xff]
    %v5334 = vld [vmem:[#allocation17 + $0x5a8] sm:$0xff]
    %v5335 = vld [vmem:[#allocation17 + $0x5b0] sm:$0xff]
    %v5336 = vld [vmem:[#allocation17 + $0x5b8] sm:$0xff]
    %v5337 = vld [vmem:[#allocation17 + $0x5c0] sm:$0xff]
    %v5338 = vld [vmem:[#allocation17 + $0x5c8] sm:$0xff]
    %v5339 = vld [vmem:[#allocation17 + $0x5d0] sm:$0xff]
    %v5340 = vld [vmem:[#allocation17 + $0x5d8] sm:$0xff]
    %v5341 = vld [vmem:[#allocation17 + $0x5e0] sm:$0xff]
    %v5342 = vld [vmem:[#allocation17 + $0x5e8] sm:$0xff]
    %v5343 = vld [vmem:[#allocation17 + $0x5f0] sm:$0xff]
    %v5344 = vld [vmem:[#allocation17 + $0x5f8] sm:$0xff]
    %v5345 = vld [vmem:[#allocation17 + $0x600] sm:$0xff]
    %v5346 = vld [vmem:[#allocation17 + $0x608] sm:$0xff]
    %v5347 = vld [vmem:[#allocation17 + $0x610] sm:$0xff]
    %v5348 = vld [vmem:[#allocation17 + $0x618] sm:$0xff]
    %v5349 = vld [vmem:[#allocation17 + $0x620] sm:$0xff]
    %v5350 = vld [vmem:[#allocation17 + $0x628] sm:$0xff]
    %v5351 = vld [vmem:[#allocation17 + $0x630] sm:$0xff]
    %v5352 = vld [vmem:[#allocation17 + $0x638] sm:$0xff]
    %v5353 = vld [vmem:[#allocation17 + $0x640] sm:$0xff]
    %v5354 = vld [vmem:[#allocation17 + $0x648] sm:$0xff]
    %v5355 = vld [vmem:[#allocation17 + $0x650] sm:$0xff]
    %v5356 = vld [vmem:[#allocation17 + $0x658] sm:$0xff]
    %v5357 = vld [vmem:[#allocation17 + $0x660] sm:$0xff]
    %v5358 = vld [vmem:[#allocation17 + $0x668] sm:$0xff]
    %v5359 = vld [vmem:[#allocation17 + $0x670] sm:$0xff]
    %v5360 = vld [vmem:[#allocation17 + $0x678] sm:$0xff]
    %v5361 = vld [vmem:[#allocation17 + $0x680] sm:$0xff]
    %v5362 = vld [vmem:[#allocation17 + $0x688] sm:$0xff]
    %v5363 = vld [vmem:[#allocation17 + $0x690] sm:$0xff]
    %v5364 = vld [vmem:[#allocation17 + $0x698] sm:$0xff]
    %v5365 = vld [vmem:[#allocation17 + $0x6a0] sm:$0xff]
    %v5366 = vld [vmem:[#allocation17 + $0x6a8] sm:$0xff]
    %v5367 = vld [vmem:[#allocation17 + $0x6b0] sm:$0xff]
    %v5368 = vld [vmem:[#allocation17 + $0x6b8] sm:$0xff]
    %v5369 = vld [vmem:[#allocation17 + $0x6c0] sm:$0xff]
    %v5370 = vld [vmem:[#allocation17 + $0x6c8] sm:$0xff]
    %v5371 = vld [vmem:[#allocation17 + $0x6d0] sm:$0xff]
    %v5372 = vld [vmem:[#allocation17 + $0x6d8] sm:$0xff]
    %v5373 = vld [vmem:[#allocation17 + $0x6e0] sm:$0xff]
    %v5374 = vld [vmem:[#allocation17 + $0x6e8] sm:$0xff]
    %v5375 = vld [vmem:[#allocation17 + $0x6f0] sm:$0xff]
    %v5376 = vld [vmem:[#allocation17 + $0x6f8] sm:$0xff]
    %v5377 = vld [vmem:[#allocation17 + $0x700] sm:$0xff]
    %v5378 = vld [vmem:[#allocation17 + $0x708] sm:$0xff]
    %v5379 = vld [vmem:[#allocation17 + $0x710] sm:$0xff]
    %v5380 = vld [vmem:[#allocation17 + $0x718] sm:$0xff]
    %v5381 = vld [vmem:[#allocation17 + $0x720] sm:$0xff]
    %v5382 = vld [vmem:[#allocation17 + $0x728] sm:$0xff]
    %v5383 = vld [vmem:[#allocation17 + $0x730] sm:$0xff]
    %v5384 = vld [vmem:[#allocation17 + $0x738] sm:$0xff]
    %v5385 = vld [vmem:[#allocation17 + $0x740] sm:$0xff]
    %v5386 = vld [vmem:[#allocation17 + $0x748] sm:$0xff]
    %v5387 = vld [vmem:[#allocation17 + $0x750] sm:$0xff]
    %v5388 = vld [vmem:[#allocation17 + $0x758] sm:$0xff]
    %v5389 = vld [vmem:[#allocation17 + $0x760] sm:$0xff]
    %v5390 = vld [vmem:[#allocation17 + $0x768] sm:$0xff]
    %v5391 = vld [vmem:[#allocation17 + $0x770] sm:$0xff]
    %v5392 = vld [vmem:[#allocation17 + $0x778] sm:$0xff]
    %v5393 = vld [vmem:[#allocation17 + $0x780] sm:$0xff]
    %v5394 = vld [vmem:[#allocation17 + $0x788] sm:$0xff]
    %v5395 = vld [vmem:[#allocation17 + $0x790] sm:$0xff]
    %v5396 = vld [vmem:[#allocation17 + $0x798] sm:$0xff]
    %v5397 = vld [vmem:[#allocation17 + $0x7a0] sm:$0xff]
    %v5398 = vld [vmem:[#allocation17 + $0x7a8] sm:$0xff]
    %v5399 = vld [vmem:[#allocation17 + $0x7b0] sm:$0xff]
    %v5400 = vld [vmem:[#allocation17 + $0x7b8] sm:$0xff]
    %v5401 = vld [vmem:[#allocation17 + $0x7c0] sm:$0xff]
    %v5402 = vld [vmem:[#allocation17 + $0x7c8] sm:$0xff]
    %v5403 = vld [vmem:[#allocation17 + $0x7d0] sm:$0xff]
    %v5404 = vld [vmem:[#allocation17 + $0x7d8] sm:$0xff]
    %v5405 = vld [vmem:[#allocation17 + $0x7e0] sm:$0xff]
    %v5406 = vld [vmem:[#allocation17 + $0x7e8] sm:$0xff]
    %v5407 = vld [vmem:[#allocation17 + $0x7f0] sm:$0xff]
    %v5408 = vld [vmem:[#allocation17 + $0x7f8] sm:$0xff]
    %v5409 = vld [vmem:[#allocation17 + $0x800] sm:$0xff]
    %v5410 = vld [vmem:[#allocation17 + $0x808] sm:$0xff]
    %v5411 = vld [vmem:[#allocation17 + $0x810] sm:$0xff]
    %v5412 = vld [vmem:[#allocation17 + $0x818] sm:$0xff]
    %v5413 = vld [vmem:[#allocation17 + $0x820] sm:$0xff]
    %v5414 = vld [vmem:[#allocation17 + $0x828] sm:$0xff]
    %v5415 = vld [vmem:[#allocation17 + $0x830] sm:$0xff]
    %v5416 = vld [vmem:[#allocation17 + $0x838] sm:$0xff]
    %v5417 = vld [vmem:[#allocation17 + $0x840] sm:$0xff]
    %v5418 = vld [vmem:[#allocation17 + $0x848] sm:$0xff]
    %v5419 = vld [vmem:[#allocation17 + $0x850] sm:$0xff]
    %v5420 = vld [vmem:[#allocation17 + $0x858] sm:$0xff]
    %v5421 = vld [vmem:[#allocation17 + $0x860] sm:$0xff]
    %v5422 = vld [vmem:[#allocation17 + $0x868] sm:$0xff]
    %v5423 = vld [vmem:[#allocation17 + $0x870] sm:$0xff]
    %v5424 = vld [vmem:[#allocation17 + $0x878] sm:$0xff]
    %v5425 = vld [vmem:[#allocation17 + $0x880] sm:$0xff]
    %v5426 = vld [vmem:[#allocation17 + $0x888] sm:$0xff]
    %v5427 = vld [vmem:[#allocation17 + $0x890] sm:$0xff]
    %v5428 = vld [vmem:[#allocation17 + $0x898] sm:$0xff]
    %v5429 = vld [vmem:[#allocation17 + $0x8a0] sm:$0xff]
    %v5430 = vld [vmem:[#allocation17 + $0x8a8] sm:$0xff]
    %v5431 = vld [vmem:[#allocation17 + $0x8b0] sm:$0xff]
    %v5432 = vld [vmem:[#allocation17 + $0x8b8] sm:$0xff]
    %v5433 = vld [vmem:[#allocation17 + $0x8c0] sm:$0xff]
    %v5434 = vld [vmem:[#allocation17 + $0x8c8] sm:$0xff]
    %v5435 = vld [vmem:[#allocation17 + $0x8d0] sm:$0xff]
    %v5436 = vld [vmem:[#allocation17 + $0x8d8] sm:$0xff]
    %v5437 = vld [vmem:[#allocation17 + $0x8e0] sm:$0xff]
    %v5438 = vld [vmem:[#allocation17 + $0x8e8] sm:$0xff]
    %v5439 = vld [vmem:[#allocation17 + $0x8f0] sm:$0xff]
    %v5440 = vld [vmem:[#allocation17 + $0x8f8] sm:$0xff]
    %v5441 = vld [vmem:[#allocation17 + $0x900] sm:$0xff]
    %v5442 = vld [vmem:[#allocation17 + $0x908] sm:$0xff]
    %v5443 = vld [vmem:[#allocation17 + $0x910] sm:$0xff]
    %v5444 = vld [vmem:[#allocation17 + $0x918] sm:$0xff]
    %v5445 = vld [vmem:[#allocation17 + $0x920] sm:$0xff]
    %v5446 = vld [vmem:[#allocation17 + $0x928] sm:$0xff]
    %v5447 = vld [vmem:[#allocation17 + $0x930] sm:$0xff]
    %v5448 = vld [vmem:[#allocation17 + $0x938] sm:$0xff]
    %v5449 = vld [vmem:[#allocation17 + $0x940] sm:$0xff]
    %v5450 = vld [vmem:[#allocation17 + $0x948] sm:$0xff]
    %v5451 = vld [vmem:[#allocation17 + $0x950] sm:$0xff]
    %v5452 = vld [vmem:[#allocation17 + $0x958] sm:$0xff]
    %v5453 = vld [vmem:[#allocation17 + $0x960] sm:$0xff]
    %v5454 = vld [vmem:[#allocation17 + $0x968] sm:$0xff]
    %v5455 = vld [vmem:[#allocation17 + $0x970] sm:$0xff]
    %v5456 = vld [vmem:[#allocation17 + $0x978] sm:$0xff]
    %v5457 = vld [vmem:[#allocation17 + $0x980] sm:$0xff]
    %v5458 = vld [vmem:[#allocation17 + $0x988] sm:$0xff]
    %v5459 = vld [vmem:[#allocation17 + $0x990] sm:$0xff]
    %v5460 = vld [vmem:[#allocation17 + $0x998] sm:$0xff]
    %v5461 = vld [vmem:[#allocation17 + $0x9a0] sm:$0xff]
    %v5462 = vld [vmem:[#allocation17 + $0x9a8] sm:$0xff]
    %v5463 = vld [vmem:[#allocation17 + $0x9b0] sm:$0xff]
    %v5464 = vld [vmem:[#allocation17 + $0x9b8] sm:$0xff]
    %v5465 = vld [vmem:[#allocation17 + $0x9c0] sm:$0xff]
    %v5466 = vld [vmem:[#allocation17 + $0x9c8] sm:$0xff]
    %v5467 = vld [vmem:[#allocation17 + $0x9d0] sm:$0xff]
    %v5468 = vld [vmem:[#allocation17 + $0x9d8] sm:$0xff]
    %v5469 = vld [vmem:[#allocation17 + $0x9e0] sm:$0xff]
    %v5470 = vld [vmem:[#allocation17 + $0x9e8] sm:$0xff]
    %v5471 = vld [vmem:[#allocation17 + $0x9f0] sm:$0xff]
    %v5472 = vld [vmem:[#allocation17 + $0x9f8] sm:$0xff]
    %v5473 = vld [vmem:[#allocation17 + $0xa00] sm:$0xff]
    %v5474 = vld [vmem:[#allocation17 + $0xa08] sm:$0xff]
    %v5475 = vld [vmem:[#allocation17 + $0xa10] sm:$0xff]
    %v5476 = vld [vmem:[#allocation17 + $0xa18] sm:$0xff]
    %v5477 = vld [vmem:[#allocation17 + $0xa20] sm:$0xff]
    %v5478 = vld [vmem:[#allocation17 + $0xa28] sm:$0xff]
    %v5479 = vld [vmem:[#allocation17 + $0xa30] sm:$0xff]
    %v5480 = vld [vmem:[#allocation17 + $0xa38] sm:$0xff]
    %v5481 = vld [vmem:[#allocation17 + $0xa40] sm:$0xff]
    %v5482 = vld [vmem:[#allocation17 + $0xa48] sm:$0xff]
    %v5483 = vld [vmem:[#allocation17 + $0xa50] sm:$0xff]
    %v5484 = vld [vmem:[#allocation17 + $0xa58] sm:$0xff]
    %v5485 = vld [vmem:[#allocation17 + $0xa60] sm:$0xff]
    %v5486 = vld [vmem:[#allocation17 + $0xa68] sm:$0xff]
    %v5487 = vld [vmem:[#allocation17 + $0xa70] sm:$0xff]
    %v5488 = vld [vmem:[#allocation17 + $0xa78] sm:$0xff]
    %v5489 = vld [vmem:[#allocation17 + $0xa80] sm:$0xff]
    %v5490 = vld [vmem:[#allocation17 + $0xa88] sm:$0xff]
    %v5491 = vld [vmem:[#allocation17 + $0xa90] sm:$0xff]
    %v5492 = vld [vmem:[#allocation17 + $0xa98] sm:$0xff]
    %v5493 = vld [vmem:[#allocation17 + $0xaa0] sm:$0xff]
    %v5494 = vld [vmem:[#allocation17 + $0xaa8] sm:$0xff]
    %v5495 = vld [vmem:[#allocation17 + $0xab0] sm:$0xff]
    %v5496 = vld [vmem:[#allocation17 + $0xab8] sm:$0xff]
    %v5497 = vld [vmem:[#allocation17 + $0xac0] sm:$0xff]
    %v5498 = vld [vmem:[#allocation17 + $0xac8] sm:$0xff]
    %v5499 = vld [vmem:[#allocation17 + $0xad0] sm:$0xff]
    %v5500 = vld [vmem:[#allocation17 + $0xad8] sm:$0xff]
    %v5501 = vld [vmem:[#allocation17 + $0xae0] sm:$0xff]
    %v5502 = vld [vmem:[#allocation17 + $0xae8] sm:$0xff]
    %v5503 = vld [vmem:[#allocation17 + $0xaf0] sm:$0xff]
    %v5504 = vld [vmem:[#allocation17 + $0xaf8] sm:$0xff]
    %v5505 = vld [vmem:[#allocation17 + $0xb00] sm:$0xff]
    %v5506 = vld [vmem:[#allocation17 + $0xb08] sm:$0xff]
    %v5507 = vld [vmem:[#allocation17 + $0xb10] sm:$0xff]
    %v5508 = vld [vmem:[#allocation17 + $0xb18] sm:$0xff]
    %v5509 = vld [vmem:[#allocation17 + $0xb20] sm:$0xff]
    %v5510 = vld [vmem:[#allocation17 + $0xb28] sm:$0xff]
    %v5511 = vld [vmem:[#allocation17 + $0xb30] sm:$0xff]
    %v5512 = vld [vmem:[#allocation17 + $0xb38] sm:$0xff]
    %v5513 = vld [vmem:[#allocation17 + $0xb40] sm:$0xff]
    %v5514 = vld [vmem:[#allocation17 + $0xb48] sm:$0xff]
    %v5515 = vld [vmem:[#allocation17 + $0xb50] sm:$0xff]
    %v5516 = vld [vmem:[#allocation17 + $0xb58] sm:$0xff]
    %v5517 = vld [vmem:[#allocation17 + $0xb60] sm:$0xff]
    %v5518 = vld [vmem:[#allocation17 + $0xb68] sm:$0xff]
    %v5519 = vld [vmem:[#allocation17 + $0xb70] sm:$0xff]
    %v5520 = vld [vmem:[#allocation17 + $0xb78] sm:$0xff]
    %v5521 = vld [vmem:[#allocation17 + $0xb80] sm:$0xff]
    %v5522 = vld [vmem:[#allocation17 + $0xb88] sm:$0xff]
    %v5523 = vld [vmem:[#allocation17 + $0xb90] sm:$0xff]
    %v5524 = vld [vmem:[#allocation17 + $0xb98] sm:$0xff]
    %v5525 = vld [vmem:[#allocation17 + $0xba0] sm:$0xff]
    %v5526 = vld [vmem:[#allocation17 + $0xba8] sm:$0xff]
    %v5527 = vld [vmem:[#allocation17 + $0xbb0] sm:$0xff]
    %v5528 = vld [vmem:[#allocation17 + $0xbb8] sm:$0xff]
    %v5529 = vld [vmem:[#allocation17 + $0xbc0] sm:$0xff]
    %v5530 = vld [vmem:[#allocation17 + $0xbc8] sm:$0xff]
    %v5531 = vld [vmem:[#allocation17 + $0xbd0] sm:$0xff]
    %v5532 = vld [vmem:[#allocation17 + $0xbd8] sm:$0xff]
    %v5533 = vld [vmem:[#allocation17 + $0xbe0] sm:$0xff]
    %v5534 = vld [vmem:[#allocation17 + $0xbe8] sm:$0xff]
    %v5535 = vld [vmem:[#allocation17 + $0xbf0] sm:$0xff]
    %v5536 = vld [vmem:[#allocation17 + $0xbf8] sm:$0xff]
    %5537 = vmatprep.subr.mxu0 %v5154
    %5538 = vmatpush1.msra.mxu0 %v5153
    %5539 = vmatprep.subr.mxu0 %v5158
    %5540 = vmatpush1.msra.mxu0 %v5157
    %5541 = vmatprep.subr.mxu0 %v5162
    %5542 = vmatpush1.msra.mxu0 %v5161
    %5543 = vmatprep.subr.mxu0 %v5166
    %5544 = vmatpush1.msra.mxu0 %v5165
    %5545 = vmatprep.subr.mxu0 %v5170
    %5546 = vmatpush1.msra.mxu0 %v5169
    %5547 = vmatprep.subr.mxu0 %v5174
    %5548 = vmatpush1.msra.mxu0 %v5173
    %5549 = vmatprep.subr.mxu0 %v5178
    %5550 = vmatpush1.msra.mxu0 %v5177
    %5551 = vmatprep.subr.mxu0 %v5182
    %5552 = vmatpush1.msra.mxu0 %v5181
    %5553 = vmatprep.subr.mxu0 %v5186
    %5554 = vmatpush1.msra.mxu0 %v5185
    %5555 = vmatprep.subr.mxu0 %v5190
    %5556 = vmatpush1.msra.mxu0 %v5189
    %5557 = vmatprep.subr.mxu0 %v5194
    %5558 = vmatpush1.msra.mxu0 %v5193
    %5559 = vmatprep.subr.mxu0 %v5198
    %5560 = vmatpush1.msra.mxu0 %v5197
    %5561 = vmatprep.subr.mxu0 %v5202
    %5562 = vmatpush1.msra.mxu0 %v5201
    %5563 = vmatprep.subr.mxu0 %v5206
    %5564 = vmatpush1.msra.mxu0 %v5205
    %5565 = vmatprep.subr.mxu0 %v5210
    %5566 = vmatpush1.msra.mxu0 %v5209
    %5567 = vmatprep.subr.mxu0 %v5214
    %5568 = vmatpush1.msra.mxu0 %v5213
    %5569 = vmatprep.subr.mxu0 %v5218
    %5570 = vmatpush1.msra.mxu0 %v5217
    %5571 = vmatprep.subr.mxu0 %v5222
    %5572 = vmatpush1.msra.mxu0 %v5221
    %5573 = vmatprep.subr.mxu0 %v5226
    %5574 = vmatpush1.msra.mxu0 %v5225
    %5575 = vmatprep.subr.mxu0 %v5230
    %5576 = vmatpush1.msra.mxu0 %v5229
    %5577 = vmatprep.subr.mxu0 %v5234
    %5578 = vmatpush1.msra.mxu0 %v5233
    %5579 = vmatprep.subr.mxu0 %v5238
    %5580 = vmatpush1.msra.mxu0 %v5237
    %5581 = vmatprep.subr.mxu0 %v5242
    %5582 = vmatpush1.msra.mxu0 %v5241
    %5583 = vmatprep.subr.mxu0 %v5246
    %5584 = vmatpush1.msra.mxu0 %v5245
    %5585 = vmatprep.subr.mxu0 %v5250
    %5586 = vmatpush1.msra.mxu0 %v5249
    %5587 = vmatprep.subr.mxu0 %v5254
    %5588 = vmatpush1.msra.mxu0 %v5253
    %5589 = vmatprep.subr.mxu0 %v5258
    %5590 = vmatpush1.msra.mxu0 %v5257
    %5591 = vmatprep.subr.mxu0 %v5262
    %5592 = vmatpush1.msra.mxu0 %v5261
    %5593 = vmatprep.subr.mxu0 %v5266
    %5594 = vmatpush1.msra.mxu0 %v5265
    %5595 = vmatprep.subr.mxu0 %v5270
    %5596 = vmatpush1.msra.mxu0 %v5269
    %5597 = vmatprep.subr.mxu0 %v5274
    %5598 = vmatpush1.msra.mxu0 %v5273
    %5599 = vmatprep.subr.mxu0 %v5278
    %5600 = vmatpush1.msra.mxu0 %v5277
    %5601 = vmatprep.mubr.f32.mxu0 %v5130
    %5602 = vmatmul.mubr.f32.gmra.mrb[0].mxu0 %v5129
    %v5603 = vpop.f32.mrb[0].mxu0
    %v5604 = vadd.f32 0.0, %v5603
    %v5605 = vpop.f32.mrb[0].mxu0
    %v5606 = vadd.f32 0.0, %v5605
    %5607 = vmatprep.mubr.f32.mxu0 %v5136
    %5608 = vmatmul.mubr.f32.gmra.mrb[0].mxu0 %v5135
    %v5609 = vpop.f32.mrb[0].mxu0
    %v5610 = vadd.f32 0.0, %v5609
    %v5611 = vpop.f32.mrb[0].mxu0
    %v5612 = vadd.f32 0.0, %v5611
    %5613 = vmatprep.mubr.f32.mxu0 %v5142
    %5614 = vmatmul.mubr.f32.gmra.mrb[0].mxu0 %v5141
    %v5615 = vpop.f32.mrb[0].mxu0
    %v5616 = vadd.f32 0.0, %v5615
    %v5617 = vpop.f32.mrb[0].mxu0
    %v5618 = vadd.f32 0.0, %v5617
    %5619 = vmatprep.mubr.f32.mxu0 %v5148
    %5620 = vmatmul.mubr.f32.gmra.mrb[0].mxu0 %v5147
    %v5621 = vpop.f32.mrb[0].mxu0
    %v5622 = vadd.f32 0.0, %v5621
    %v5623 = vpop.f32.mrb[0].mxu0
    %v5624 = vadd.f32 0.0, %v5623
    %5625 = vdwg.mxu0
    %5626 = vmatprep.subr.mxu0 %v5282
    %5627 = vmatpush1.msra.mxu0 %v5281
    %5628 = vmatprep.subr.mxu0 %v5286
    %5629 = vmatpush1.msra.mxu0 %v5285
    %5630 = vmatprep.subr.mxu0 %v5290
    %5631 = vmatpush1.msra.mxu0 %v5289
    %5632 = vmatprep.subr.mxu0 %v5294
    %5633 = vmatpush1.msra.mxu0 %v5293
    %5634 = vmatprep.subr.mxu0 %v5298
    %5635 = vmatpush1.msra.mxu0 %v5297
    %5636 = vmatprep.subr.mxu0 %v5302
    %5637 = vmatpush1.msra.mxu0 %v5301
    %5638 = vmatprep.subr.mxu0 %v5306
    %5639 = vmatpush1.msra.mxu0 %v5305
    %5640 = vmatprep.subr.mxu0 %v5310
    %5641 = vmatpush1.msra.mxu0 %v5309
    %5642 = vmatprep.subr.mxu0 %v5314
    %5643 = vmatpush1.msra.mxu0 %v5313
    %5644 = vmatprep.subr.mxu0 %v5318
    %5645 = vmatpush1.msra.mxu0 %v5317
    %5646 = vmatprep.subr.mxu0 %v5322
    %5647 = vmatpush1.msra.mxu0 %v5321
    %5648 = vmatprep.subr.mxu0 %v5326
    %5649 = vmatpush1.msra.mxu0 %v5325
    %5650 = vmatprep.subr.mxu0 %v5330
    %5651 = vmatpush1.msra.mxu0 %v5329
    %5652 = vmatprep.subr.mxu0 %v5334
    %5653 = vmatpush1.msra.mxu0 %v5333
    %5654 = vmatprep.subr.mxu0 %v5338
    %5655 = vmatpush1.msra.mxu0 %v5337
    %5656 = vmatprep.subr.mxu0 %v5342
    %5657 = vmatpush1.msra.mxu0 %v5341
    %5658 = vmatprep.subr.mxu0 %v5346
    %5659 = vmatpush1.msra.mxu0 %v5345
    %5660 = vmatprep.subr.mxu0 %v5350
    %5661 = vmatpush1.msra.mxu0 %v5349
    %5662 = vmatprep.subr.mxu0 %v5354
    %5663 = vmatpush1.msra.mxu0 %v5353
    %5664 = vmatprep.subr.mxu0 %v5358
    %5665 = vmatpush1.msra.mxu0 %v5357
    %5666 = vmatprep.subr.mxu0 %v5362
    %5667 = vmatpush1.msra.mxu0 %v5361
    %5668 = vmatprep.subr.mxu0 %v5366
    %5669 = vmatpush1.msra.mxu0 %v5365
    %5670 = vmatprep.subr.mxu0 %v5370
    %5671 = vmatpush1.msra.mxu0 %v5369
    %5672 = vmatprep.subr.mxu0 %v5374
    %5673 = vmatpush1.msra.mxu0 %v5373
    %5674 = vmatprep.subr.mxu0 %v5378
    %5675 = vmatpush1.msra.mxu0 %v5377
    %5676 = vmatprep.subr.mxu0 %v5382
    %5677 = vmatpush1.msra.mxu0 %v5381
    %5678 = vmatprep.subr.mxu0 %v5386
    %5679 = vmatpush1.msra.mxu0 %v5385
    %5680 = vmatprep.subr.mxu0 %v5390
    %5681 = vmatpush1.msra.mxu0 %v5389
    %5682 = vmatprep.subr.mxu0 %v5394
    %5683 = vmatpush1.msra.mxu0 %v5393
    %5684 = vmatprep.subr.mxu0 %v5398
    %5685 = vmatpush1.msra.mxu0 %v5397
    %5686 = vmatprep.subr.mxu0 %v5402
    %5687 = vmatpush1.msra.mxu0 %v5401
    %5688 = vmatprep.subr.mxu0 %v5406
    %5689 = vmatpush1.msra.mxu0 %v5405
    %5690 = vmatprep.mubr.f32.mxu0 %v5132
    %5691 = vmatmul.mubr.f32.gmra.mrb[0].mxu0 %v5131
    %v5692 = vpop.f32.mrb[0].mxu0
    %v5693 = vadd.f32 %v5604, %v5692
    %v5694 = vpop.f32.mrb[0].mxu0
    %v5695 = vadd.f32 %v5606, %v5694
    %5696 = vmatprep.mubr.f32.mxu0 %v5138
    %5697 = vmatmul.mubr.f32.gmra.mrb[0].mxu0 %v5137
    %v5698 = vpop.f32.mrb[0].mxu0
    %v5699 = vadd.f32 %v5610, %v5698
    %v5700 = vpop.f32.mrb[0].mxu0
    %v5701 = vadd.f32 %v5612, %v5700
    %5702 = vmatprep.mubr.f32.mxu0 %v5144
    %5703 = vmatmul.mubr.f32.gmra.mrb[0].mxu0 %v5143
    %v5704 = vpop.f32.mrb[0].mxu0
    %v5705 = vadd.f32 %v5616, %v5704
    %v5706 = vpop.f32.mrb[0].mxu0
    %v5707 = vadd.f32 %v5618, %v5706
    %5708 = vmatprep.mubr.f32.mxu0 %v5150
    %5709 = vmatmul.mubr.f32.gmra.mrb[0].mxu0 %v5149
    %v5710 = vpop.f32.mrb[0].mxu0
    %v5711 = vadd.f32 %v5622, %v5710
    %v5712 = vpop.f32.mrb[0].mxu0
    %v5713 = vadd.f32 %v5624, %v5712
    %5714 = vdwg.mxu0
    %5715 = vmatprep.subr.mxu0 %v5410
    %5716 = vmatpush1.msra.mxu0 %v5409
    %5717 = vmatprep.subr.mxu0 %v5414
    %5718 = vmatpush1.msra.mxu0 %v5413
    %5719 = vmatprep.subr.mxu0 %v5418
    %5720 = vmatpush1.msra.mxu0 %v5417
    %5721 = vmatprep.subr.mxu0 %v5422
    %5722 = vmatpush1.msra.mxu0 %v5421
    %5723 = vmatprep.subr.mxu0 %v5426
    %5724 = vmatpush1.msra.mxu0 %v5425
    %5725 = vmatprep.subr.mxu0 %v5430
    %5726 = vmatpush1.msra.mxu0 %v5429
    %5727 = vmatprep.subr.mxu0 %v5434
    %5728 = vmatpush1.msra.mxu0 %v5433
    %5729 = vmatprep.subr.mxu0 %v5438
    %5730 = vmatpush1.msra.mxu0 %v5437
    %5731 = vmatprep.subr.mxu0 %v5442
    %5732 = vmatpush1.msra.mxu0 %v5441
    %5733 = vmatprep.subr.mxu0 %v5446
    %5734 = vmatpush1.msra.mxu0 %v5445
    %5735 = vmatprep.subr.mxu0 %v5450
    %5736 = vmatpush1.msra.mxu0 %v5449
    %5737 = vmatprep.subr.mxu0 %v5454
    %5738 = vmatpush1.msra.mxu0 %v5453
    %5739 = vmatprep.subr.mxu0 %v5458
    %5740 = vmatpush1.msra.mxu0 %v5457
    %5741 = vmatprep.subr.mxu0 %v5462
    %5742 = vmatpush1.msra.mxu0 %v5461
    %5743 = vmatprep.subr.mxu0 %v5466
    %5744 = vmatpush1.msra.mxu0 %v5465
    %5745 = vmatprep.subr.mxu0 %v5470
    %5746 = vmatpush1.msra.mxu0 %v5469
    %5747 = vmatprep.subr.mxu0 %v5474
    %5748 = vmatpush1.msra.mxu0 %v5473
    %5749 = vmatprep.subr.mxu0 %v5478
    %5750 = vmatpush1.msra.mxu0 %v5477
    %5751 = vmatprep.subr.mxu0 %v5482
    %5752 = vmatpush1.msra.mxu0 %v5481
    %5753 = vmatprep.subr.mxu0 %v5486
    %5754 = vmatpush1.msra.mxu0 %v5485
    %5755 = vmatprep.subr.mxu0 %v5490
    %5756 = vmatpush1.msra.mxu0 %v5489
    %5757 = vmatprep.subr.mxu0 %v5494
    %5758 = vmatpush1.msra.mxu0 %v5493
    %5759 = vmatprep.subr.mxu0 %v5498
    %5760 = vmatpush1.msra.mxu0 %v5497
    %5761 = vmatprep.subr.mxu0 %v5502
    %5762 = vmatpush1.msra.mxu0 %v5501
    %5763 = vmatprep.subr.mxu0 %v5506
    %5764 = vmatpush1.msra.mxu0 %v5505
    %5765 = vmatprep.subr.mxu0 %v5510
    %5766 = vmatpush1.msra.mxu0 %v5509
    %5767 = vmatprep.subr.mxu0 %v5514
    %5768 = vmatpush1.msra.mxu0 %v5513
    %5769 = vmatprep.subr.mxu0 %v5518
    %5770 = vmatpush1.msra.mxu0 %v5517
    %5771 = vmatprep.subr.mxu0 %v5522
    %5772 = vmatpush1.msra.mxu0 %v5521
    %5773 = vmatprep.subr.mxu0 %v5526
    %5774 = vmatpush1.msra.mxu0 %v5525
    %5775 = vmatprep.subr.mxu0 %v5530
    %5776 = vmatpush1.msra.mxu0 %v5529
    %5777 = vmatprep.subr.mxu0 %v5534
    %5778 = vmatpush1.msra.mxu0 %v5533
    %5779 = vmatprep.mubr.f32.mxu0 %v5134
    %5780 = vmatmul.mubr.f32.gmra.mrb[0].mxu0 %v5133
    %v5781 = vpop.f32.mrb[0].mxu0
    %v5782 = vadd.f32 %v5693, %v5781
    %v5783 = vpop.f32.mrb[0].mxu0
    %v5784 = vadd.f32 %v5695, %v5783
    %5785 = vmatprep.mubr.f32.mxu0 %v5140
    %5786 = vmatmul.mubr.f32.gmra.mrb[0].mxu0 %v5139
    %v5787 = vpop.f32.mrb[0].mxu0
    %v5788 = vadd.f32 %v5699, %v5787
    %v5789 = vpop.f32.mrb[0].mxu0
    %v5790 = vadd.f32 %v5701, %v5789
    %5791 = vmatprep.mubr.f32.mxu0 %v5146
    %5792 = vmatmul.mubr.f32.gmra.mrb[0].mxu0 %v5145
    %v5793 = vpop.f32.mrb[0].mxu0
    %v5794 = vadd.f32 %v5705, %v5793
    %v5795 = vpop.f32.mrb[0].mxu0
    %v5796 = vadd.f32 %v5707, %v5795
    %5797 = vmatprep.mubr.f32.mxu0 %v5152
    %5798 = vmatmul.mubr.f32.gmra.mrb[0].mxu0 %v5151
    %v5799 = vpop.f32.mrb[0].mxu0
    %v5800 = vadd.f32 %v5711, %v5799
    %v5801 = vpop.f32.mrb[0].mxu0
    %v5802 = vadd.f32 %v5713, %v5801
    %5803 = vdwg.mxu0
    %5804 = vmatprep.subr.mxu0 %v5156
    %5805 = vmatpush1.msra.mxu0 %v5155
    %5806 = vmatprep.subr.mxu0 %v5160
    %5807 = vmatpush1.msra.mxu0 %v5159
    %5808 = vmatprep.subr.mxu0 %v5164
    %5809 = vmatpush1.msra.mxu0 %v5163
    %5810 = vmatprep.subr.mxu0 %v5168
    %5811 = vmatpush1.msra.mxu0 %v5167
    %5812 = vmatprep.subr.mxu0 %v5172
    %5813 = vmatpush1.msra.mxu0 %v5171
    %5814 = vmatprep.subr.mxu0 %v5176
    %5815 = vmatpush1.msra.mxu0 %v5175
    %5816 = vmatprep.subr.mxu0 %v5180
    %5817 = vmatpush1.msra.mxu0 %v5179
    %5818 = vmatprep.subr.mxu0 %v5184
    %5819 = vmatpush1.msra.mxu0 %v5183
    %5820 = vmatprep.subr.mxu0 %v5188
    %5821 = vmatpush1.msra.mxu0 %v5187
    %5822 = vmatprep.subr.mxu0 %v5192
    %5823 = vmatpush1.msra.mxu0 %v5191
    %5824 = vmatprep.subr.mxu0 %v5196
    %5825 = vmatpush1.msra.mxu0 %v5195
    %5826 = vmatprep.subr.mxu0 %v5200
    %5827 = vmatpush1.msra.mxu0 %v5199
    %5828 = vmatprep.subr.mxu0 %v5204
    %5829 = vmatpush1.msra.mxu0 %v5203
    %5830 = vmatprep.subr.mxu0 %v5208
    %5831 = vmatpush1.msra.mxu0 %v5207
    %5832 = vmatprep.subr.mxu0 %v5212
    %5833 = vmatpush1.msra.mxu0 %v5211
    %5834 = vmatprep.subr.mxu0 %v5216
    %5835 = vmatpush1.msra.mxu0 %v5215
    %5836 = vmatprep.subr.mxu0 %v5220
    %5837 = vmatpush1.msra.mxu0 %v5219
    %5838 = vmatprep.subr.mxu0 %v5224
    %5839 = vmatpush1.msra.mxu0 %v5223
    %5840 = vmatprep.subr.mxu0 %v5228
    %5841 = vmatpush1.msra.mxu0 %v5227
    %5842 = vmatprep.subr.mxu0 %v5232
    %5843 = vmatpush1.msra.mxu0 %v5231
    %5844 = vmatprep.subr.mxu0 %v5236
    %5845 = vmatpush1.msra.mxu0 %v5235
    %5846 = vmatprep.subr.mxu0 %v5240
    %5847 = vmatpush1.msra.mxu0 %v5239
    %5848 = vmatprep.subr.mxu0 %v5244
    %5849 = vmatpush1.msra.mxu0 %v5243
    %5850 = vmatprep.subr.mxu0 %v5248
    %5851 = vmatpush1.msra.mxu0 %v5247
    %5852 = vmatprep.subr.mxu0 %v5252
    %5853 = vmatpush1.msra.mxu0 %v5251
    %5854 = vmatprep.subr.mxu0 %v5256
    %5855 = vmatpush1.msra.mxu0 %v5255
    %5856 = vmatprep.subr.mxu0 %v5260
    %5857 = vmatpush1.msra.mxu0 %v5259
    %5858 = vmatprep.subr.mxu0 %v5264
    %5859 = vmatpush1.msra.mxu0 %v5263
    %5860 = vmatprep.subr.mxu0 %v5268
    %5861 = vmatpush1.msra.mxu0 %v5267
    %5862 = vmatprep.subr.mxu0 %v5272
    %5863 = vmatpush1.msra.mxu0 %v5271
    %5864 = vmatprep.subr.mxu0 %v5276
    %5865 = vmatpush1.msra.mxu0 %v5275
    %5866 = vmatprep.subr.mxu0 %v5280
    %5867 = vmatpush1.msra.mxu0 %v5279
    %5868 = vmatprep.mubr.f32.mxu0 %v5130
    %5869 = vmatmul.mubr.f32.gmra.mrb[0].mxu0 %v5129
    %v5870 = vpop.f32.mrb[0].mxu0
    %v5871 = vadd.f32 0.0, %v5870
    %v5872 = vpop.f32.mrb[0].mxu0
    %v5873 = vadd.f32 0.0, %v5872
    %5874 = vmatprep.mubr.f32.mxu0 %v5136
    %5875 = vmatmul.mubr.f32.gmra.mrb[0].mxu0 %v5135
    %v5876 = vpop.f32.mrb[0].mxu0
    %v5877 = vadd.f32 0.0, %v5876
    %v5878 = vpop.f32.mrb[0].mxu0
    %v5879 = vadd.f32 0.0, %v5878
    %5880 = vmatprep.mubr.f32.mxu0 %v5142
    %5881 = vmatmul.mubr.f32.gmra.mrb[0].mxu0 %v5141
    %v5882 = vpop.f32.mrb[0].mxu0
    %v5883 = vadd.f32 0.0, %v5882
    %v5884 = vpop.f32.mrb[0].mxu0
    %v5885 = vadd.f32 0.0, %v5884
    %5886 = vmatprep.mubr.f32.mxu0 %v5148
    %5887 = vmatmul.mubr.f32.gmra.mrb[0].mxu0 %v5147
    %v5888 = vpop.f32.mrb[0].mxu0
    %v5889 = vadd.f32 0.0, %v5888
    %v5890 = vpop.f32.mrb[0].mxu0
    %v5891 = vadd.f32 0.0, %v5890
    %5892 = vdwg.mxu0
    %5893 = vmatprep.subr.mxu0 %v5284
    %5894 = vmatpush1.msra.mxu0 %v5283
    %5895 = vmatprep.subr.mxu0 %v5288
    %5896 = vmatpush1.msra.mxu0 %v5287
    %5897 = vmatprep.subr.mxu0 %v5292
    %5898 = vmatpush1.msra.mxu0 %v5291
    %5899 = vmatprep.subr.mxu0 %v5296
    %5900 = vmatpush1.msra.mxu0 %v5295
    %5901 = vmatprep.subr.mxu0 %v5300
    %5902 = vmatpush1.msra.mxu0 %v5299
    %5903 = vmatprep.subr.mxu0 %v5304
    %5904 = vmatpush1.msra.mxu0 %v5303
    %5905 = vmatprep.subr.mxu0 %v5308
    %5906 = vmatpush1.msra.mxu0 %v5307
    %5907 = vmatprep.subr.mxu0 %v5312
    %5908 = vmatpush1.msra.mxu0 %v5311
    %5909 = vmatprep.subr.mxu0 %v5316
    %5910 = vmatpush1.msra.mxu0 %v5315
    %5911 = vmatprep.subr.mxu0 %v5320
    %5912 = vmatpush1.msra.mxu0 %v5319
    %5913 = vmatprep.subr.mxu0 %v5324
    %5914 = vmatpush1.msra.mxu0 %v5323
    %5915 = vmatprep.subr.mxu0 %v5328
    %5916 = vmatpush1.msra.mxu0 %v5327
    %5917 = vmatprep.subr.mxu0 %v5332
    %5918 = vmatpush1.msra.mxu0 %v5331
    %5919 = vmatprep.subr.mxu0 %v5336
    %5920 = vmatpush1.msra.mxu0 %v5335
    %5921 = vmatprep.subr.mxu0 %v5340
    %5922 = vmatpush1.msra.mxu0 %v5339
    %5923 = vmatprep.subr.mxu0 %v5344
    %5924 = vmatpush1.msra.mxu0 %v5343
    %5925 = vmatprep.subr.mxu0 %v5348
    %5926 = vmatpush1.msra.mxu0 %v5347
    %5927 = vmatprep.subr.mxu0 %v5352
    %5928 = vmatpush1.msra.mxu0 %v5351
    %5929 = vmatprep.subr.mxu0 %v5356
    %5930 = vmatpush1.msra.mxu0 %v5355
    %5931 = vmatprep.subr.mxu0 %v5360
    %5932 = vmatpush1.msra.mxu0 %v5359
    %5933 = vmatprep.subr.mxu0 %v5364
    %5934 = vmatpush1.msra.mxu0 %v5363
    %5935 = vmatprep.subr.mxu0 %v5368
    %5936 = vmatpush1.msra.mxu0 %v5367
    %5937 = vmatprep.subr.mxu0 %v5372
    %5938 = vmatpush1.msra.mxu0 %v5371
    %5939 = vmatprep.subr.mxu0 %v5376
    %5940 = vmatpush1.msra.mxu0 %v5375
    %5941 = vmatprep.subr.mxu0 %v5380
    %5942 = vmatpush1.msra.mxu0 %v5379
    %5943 = vmatprep.subr.mxu0 %v5384
    %5944 = vmatpush1.msra.mxu0 %v5383
    %5945 = vmatprep.subr.mxu0 %v5388
    %5946 = vmatpush1.msra.mxu0 %v5387
    %5947 = vmatprep.subr.mxu0 %v5392
    %5948 = vmatpush1.msra.mxu0 %v5391
    %5949 = vmatprep.subr.mxu0 %v5396
    %5950 = vmatpush1.msra.mxu0 %v5395
    %5951 = vmatprep.subr.mxu0 %v5400
    %5952 = vmatpush1.msra.mxu0 %v5399
    %5953 = vmatprep.subr.mxu0 %v5404
    %5954 = vmatpush1.msra.mxu0 %v5403
    %5955 = vmatprep.subr.mxu0 %v5408
    %5956 = vmatpush1.msra.mxu0 %v5407
    %5957 = vmatprep.mubr.f32.mxu0 %v5132
    %5958 = vmatmul.mubr.f32.gmra.mrb[0].mxu0 %v5131
    %v5959 = vpop.f32.mrb[0].mxu0
    %v5960 = vadd.f32 %v5871, %v5959
    %v5961 = vpop.f32.mrb[0].mxu0
    %v5962 = vadd.f32 %v5873, %v5961
    %5963 = vmatprep.mubr.f32.mxu0 %v5138
    %5964 = vmatmul.mubr.f32.gmra.mrb[0].mxu0 %v5137
    %v5965 = vpop.f32.mrb[0].mxu0
    %v5966 = vadd.f32 %v5877, %v5965
    %v5967 = vpop.f32.mrb[0].mxu0
    %v5968 = vadd.f32 %v5879, %v5967
    %5969 = vmatprep.mubr.f32.mxu0 %v5144
    %5970 = vmatmul.mubr.f32.gmra.mrb[0].mxu0 %v5143
    %v5971 = vpop.f32.mrb[0].mxu0
    %v5972 = vadd.f32 %v5883, %v5971
    %v5973 = vpop.f32.mrb[0].mxu0
    %v5974 = vadd.f32 %v5885, %v5973
    %5975 = vmatprep.mubr.f32.mxu0 %v5150
    %5976 = vmatmul.mubr.f32.gmra.mrb[0].mxu0 %v5149
    %v5977 = vpop.f32.mrb[0].mxu0
    %v5978 = vadd.f32 %v5889, %v5977
    %v5979 = vpop.f32.mrb[0].mxu0
    %v5980 = vadd.f32 %v5891, %v5979
    %5981 = vdwg.mxu0
    %5982 = vmatprep.subr.mxu0 %v5412
    %5983 = vmatpush1.msra.mxu0 %v5411
    %5984 = vmatprep.subr.mxu0 %v5416
    %5985 = vmatpush1.msra.mxu0 %v5415
    %5986 = vmatprep.subr.mxu0 %v5420
    %5987 = vmatpush1.msra.mxu0 %v5419
    %5988 = vmatprep.subr.mxu0 %v5424
    %5989 = vmatpush1.msra.mxu0 %v5423
    %5990 = vmatprep.subr.mxu0 %v5428
    %5991 = vmatpush1.msra.mxu0 %v5427
    %5992 = vmatprep.subr.mxu0 %v5432
    %5993 = vmatpush1.msra.mxu0 %v5431
    %5994 = vmatprep.subr.mxu0 %v5436
    %5995 = vmatpush1.msra.mxu0 %v5435
    %5996 = vmatprep.subr.mxu0 %v5440
    %5997 = vmatpush1.msra.mxu0 %v5439
    %5998 = vmatprep.subr.mxu0 %v5444
    %5999 = vmatpush1.msra.mxu0 %v5443
    %6000 = vmatprep.subr.mxu0 %v5448
    %6001 = vmatpush1.msra.mxu0 %v5447
    %6002 = vmatprep.subr.mxu0 %v5452
    %6003 = vmatpush1.msra.mxu0 %v5451
    %6004 = vmatprep.subr.mxu0 %v5456
    %6005 = vmatpush1.msra.mxu0 %v5455
    %6006 = vmatprep.subr.mxu0 %v5460
    %6007 = vmatpush1.msra.mxu0 %v5459
    %6008 = vmatprep.subr.mxu0 %v5464
    %6009 = vmatpush1.msra.mxu0 %v5463
    %6010 = vmatprep.subr.mxu0 %v5468
    %6011 = vmatpush1.msra.mxu0 %v5467
    %6012 = vmatprep.subr.mxu0 %v5472
    %6013 = vmatpush1.msra.mxu0 %v5471
    %6014 = vmatprep.subr.mxu0 %v5476
    %6015 = vmatpush1.msra.mxu0 %v5475
    %6016 = vmatprep.subr.mxu0 %v5480
    %6017 = vmatpush1.msra.mxu0 %v5479
    %6018 = vmatprep.subr.mxu0 %v5484
    %6019 = vmatpush1.msra.mxu0 %v5483
    %6020 = vmatprep.subr.mxu0 %v5488
    %6021 = vmatpush1.msra.mxu0 %v5487
    %6022 = vmatprep.subr.mxu0 %v5492
    %6023 = vmatpush1.msra.mxu0 %v5491
    %6024 = vmatprep.subr.mxu0 %v5496
    %6025 = vmatpush1.msra.mxu0 %v5495
    %6026 = vmatprep.subr.mxu0 %v5500
    %6027 = vmatpush1.msra.mxu0 %v5499
    %6028 = vmatprep.subr.mxu0 %v5504
    %6029 = vmatpush1.msra.mxu0 %v5503
    %6030 = vmatprep.subr.mxu0 %v5508
    %6031 = vmatpush1.msra.mxu0 %v5507
    %6032 = vmatprep.subr.mxu0 %v5512
    %6033 = vmatpush1.msra.mxu0 %v5511
    %6034 = vmatprep.subr.mxu0 %v5516
    %6035 = vmatpush1.msra.mxu0 %v5515
    %6036 = vmatprep.subr.mxu0 %v5520
    %6037 = vmatpush1.msra.mxu0 %v5519
    %6038 = vmatprep.subr.mxu0 %v5524
    %6039 = vmatpush1.msra.mxu0 %v5523
    %6040 = vmatprep.subr.mxu0 %v5528
    %6041 = vmatpush1.msra.mxu0 %v5527
    %6042 = vmatprep.subr.mxu0 %v5532
    %6043 = vmatpush1.msra.mxu0 %v5531
    %6044 = vmatprep.subr.mxu0 %v5536
    %6045 = vmatpush1.msra.mxu0 %v5535
    %6046 = vmatprep.mubr.f32.mxu0 %v5134
    %6047 = vmatmul.mubr.f32.gmra.mrb[0].mxu0 %v5133
    %v6048 = vpop.f32.mrb[0].mxu0
    %v6049 = vadd.f32 %v5960, %v6048
    %v6050 = vpop.f32.mrb[0].mxu0
    %v6051 = vadd.f32 %v5962, %v6050
    %6052 = vmatprep.mubr.f32.mxu0 %v5140
    %6053 = vmatmul.mubr.f32.gmra.mrb[0].mxu0 %v5139
    %v6054 = vpop.f32.mrb[0].mxu0
    %v6055 = vadd.f32 %v5966, %v6054
    %v6056 = vpop.f32.mrb[0].mxu0
    %v6057 = vadd.f32 %v5968, %v6056
    %6058 = vmatprep.mubr.f32.mxu0 %v5146
    %6059 = vmatmul.mubr.f32.gmra.mrb[0].mxu0 %v5145
    %v6060 = vpop.f32.mrb[0].mxu0
    %v6061 = vadd.f32 %v5972, %v6060
    %v6062 = vpop.f32.mrb[0].mxu0
    %v6063 = vadd.f32 %v5974, %v6062
    %6064 = vmatprep.mubr.f32.mxu0 %v5152
    %6065 = vmatmul.mubr.f32.gmra.mrb[0].mxu0 %v5151
    %v6066 = vpop.f32.mrb[0].mxu0
    %v6067 = vadd.f32 %v5978, %v6066
    %v6068 = vpop.f32.mrb[0].mxu0
    %v6069 = vadd.f32 %v5980, %v6068
    %6070 = vdwg.mxu0
    %v6071 = vadd.f32 %v5782, %v5788
    %v6072 = vadd.f32 %v6071, %v5794
    %v6073 = vadd.f32 %v6072, %v5800
    %v6074 = vrot.slane %v6073, 4
    %v6075 = vadd.f32 %v6073, %v6074
    %v6076 = vrot.slane %v6075, 2
    %v6077 = vadd.f32 %v6075, %v6076
    %v6078 = vrot.slane %v6077, 1
    %v6079 = vadd.f32 %v6077, %v6078
    %v6080 = vadd.f32 %v5784, %v5790
    %v6081 = vadd.f32 %v6080, %v5796
    %v6082 = vadd.f32 %v6081, %v5802
    %v6083 = vrot.slane %v6082, 4
    %v6084 = vadd.f32 %v6082, %v6083
    %v6085 = vrot.slane %v6084, 2
    %v6086 = vadd.f32 %v6084, %v6085
    %v6087 = vrot.slane %v6086, 1
    %v6088 = vadd.f32 %v6086, %v6087
    %v6089 = vadd.f32 %v6049, %v6055
    %v6090 = vadd.f32 %v6089, %v6061
    %v6091 = vadd.f32 %v6090, %v6067
    %v6092 = vrot.slane %v6091, 4
    %v6093 = vadd.f32 %v6091, %v6092
    %v6094 = vrot.slane %v6093, 2
    %v6095 = vadd.f32 %v6093, %v6094
    %v6096 = vrot.slane %v6095, 1
    %v6097 = vadd.f32 %v6095, %v6096
    %v6098 = vadd.f32 %v6051, %v6057
    %v6099 = vadd.f32 %v6098, %v6063
    %v6100 = vadd.f32 %v6099, %v6069
    %v6101 = vrot.slane %v6100, 4
    %v6102 = vadd.f32 %v6100, %v6101
    %v6103 = vrot.slane %v6102, 2
    %v6104 = vadd.f32 %v6102, %v6103
    %v6105 = vrot.slane %v6104, 1
    %v6106 = vadd.f32 %v6104, %v6105
    %v6107 = vmul.f32 %v5782, %v5782
    %v6108 = vmul.f32 %v5784, %v5784
    %v6109 = vmul.f32 %v6049, %v6049
    %v6110 = vmul.f32 %v6051, %v6051
    %v6111 = vmul.f32 %v5788, %v5788
    %v6112 = vmul.f32 %v5790, %v5790
    %v6113 = vmul.f32 %v6055, %v6055
    %v6114 = vmul.f32 %v6057, %v6057
    %v6115 = vmul.f32 %v5794, %v5794
    %v6116 = vmul.f32 %v5796, %v5796
    %v6117 = vmul.f32 %v6061, %v6061
    %v6118 = vmul.f32 %v6063, %v6063
    %v6119 = vmul.f32 %v5800, %v5800
    %v6120 = vmul.f32 %v5802, %v5802
    %v6121 = vmul.f32 %v6067, %v6067
    %v6122 = vmul.f32 %v6069, %v6069
    %v6123 = vadd.f32 %v6107, %v6111
    %v6124 = vadd.f32 %v6123, %v6115
    %v6125 = vadd.f32 %v6124, %v6119
    %v6126 = vrot.slane %v6125, 4
    %v6127 = vadd.f32 %v6125, %v6126
    %v6128 = vrot.slane %v6127, 2
    %v6129 = vadd.f32 %v6127, %v6128
    %v6130 = vrot.slane %v6129, 1
    %v6131 = vadd.f32 %v6129, %v6130
    %v6132 = vadd.f32 %v6108, %v6112
    %v6133 = vadd.f32 %v6132, %v6116
    %v6134 = vadd.f32 %v6133, %v6120
    %v6135 = vrot.slane %v6134, 4
    %v6136 = vadd.f32 %v6134, %v6135
    %v6137 = vrot.slane %v6136, 2
    %v6138 = vadd.f32 %v6136, %v6137
    %v6139 = vrot.slane %v6138, 1
    %v6140 = vadd.f32 %v6138, %v6139
    %v6141 = vadd.f32 %v6109, %v6113
    %v6142 = vadd.f32 %v6141, %v6117
    %v6143 = vadd.f32 %v6142, %v6121
    %v6144 = vrot.slane %v6143, 4
    %v6145 = vadd.f32 %v6143, %v6144
    %v6146 = vrot.slane %v6145, 2
    %v6147 = vadd.f32 %v6145, %v6146
    %v6148 = vrot.slane %v6147, 1
    %v6149 = vadd.f32 %v6147, %v6148
    %v6150 = vadd.f32 %v6110, %v6114
    %v6151 = vadd.f32 %v6150, %v6118
    %v6152 = vadd.f32 %v6151, %v6122
    %v6153 = vrot.slane %v6152, 4
    %v6154 = vadd.f32 %v6152, %v6153
    %v6155 = vrot.slane %v6154, 2
    %v6156 = vadd.f32 %v6154, %v6155
    %v6157 = vrot.slane %v6156, 1
    %v6158 = vadd.f32 %v6156, %v6157
    %v6159 = vsel %vm590, %v6079, %v6131
    %v6160 = vsel %vm590, %v6088, %v6140
    %v6161 = vsel %vm590, %v6097, %v6149
    %v6162 = vsel %vm590, %v6106, %v6158
    %v6163 = vld [vmem:[%s15] sm:$0xff]
    %v6164 = vld [vmem:[%s15 + $0x8] sm:$0xff]
    %v6165 = vld [vmem:[%s15 + $0x10] sm:$0xff]
    %v6166 = vld [vmem:[%s15 + $0x18] sm:$0xff]
    %v6167 = vld [vmem:[%s15 + $0x20] sm:$0xff]
    %v6168 = vld [vmem:[%s15 + $0x28] sm:$0xff]
    %v6169 = vld [vmem:[%s15 + $0x30] sm:$0xff]
    %v6170 = vld [vmem:[%s15 + $0x38] sm:$0xff]
    %v6171 = vld [vmem:[%s15 + $0x40] sm:$0xff]
    %v6172 = vld [vmem:[%s15 + $0x48] sm:$0xff]
    %v6173 = vld [vmem:[%s15 + $0x50] sm:$0xff]
    %v6174 = vld [vmem:[%s15 + $0x58] sm:$0xff]
    %v6175 = vld [vmem:[%s15 + $0x60] sm:$0xff]
    %v6176 = vld [vmem:[%s15 + $0x68] sm:$0xff]
    %v6177 = vld [vmem:[%s15 + $0x70] sm:$0xff]
    %v6178 = vld [vmem:[%s15 + $0x78] sm:$0xff]
    %v6179 = vld [vmem:[%s15 + $0x80] sm:$0xff]
    %v6180 = vld [vmem:[%s15 + $0x88] sm:$0xff]
    %v6181 = vld [vmem:[%s15 + $0x90] sm:$0xff]
    %v6182 = vld [vmem:[%s15 + $0x98] sm:$0xff]
    %v6183 = vld [vmem:[%s15 + $0xa0] sm:$0xff]
    %v6184 = vld [vmem:[%s15 + $0xa8] sm:$0xff]
    %v6185 = vld [vmem:[%s15 + $0xb0] sm:$0xff]
    %v6186 = vld [vmem:[%s15 + $0xb8] sm:$0xff]
    %v6187 = vld [vmem:[%s15 + $0xc0] sm:$0xff]
    %v6188 = vld [vmem:[%s15 + $0xc8] sm:$0xff]
    %v6189 = vld [vmem:[%s15 + $0xd0] sm:$0xff]
    %v6190 = vld [vmem:[%s15 + $0xd8] sm:$0xff]
    %v6191 = vld [vmem:[%s15 + $0xe0] sm:$0xff]
    %v6192 = vld [vmem:[%s15 + $0xe8] sm:$0xff]
    %v6193 = vld [vmem:[%s15 + $0xf0] sm:$0xff]
    %v6194 = vld [vmem:[%s15 + $0xf8] sm:$0xff]
    %v6195 = vld [vmem:[%s15 + $0x100] sm:$0xff]
    %v6196 = vld [vmem:[%s15 + $0x108] sm:$0xff]
    %v6197 = vld [vmem:[%s15 + $0x110] sm:$0xff]
    %v6198 = vld [vmem:[%s15 + $0x118] sm:$0xff]
    %v6199 = vld [vmem:[%s15 + $0x120] sm:$0xff]
    %v6200 = vld [vmem:[%s15 + $0x128] sm:$0xff]
    %v6201 = vld [vmem:[%s15 + $0x130] sm:$0xff]
    %v6202 = vld [vmem:[%s15 + $0x138] sm:$0xff]
    %v6203 = vld [vmem:[%s15 + $0x140] sm:$0xff]
    %v6204 = vld [vmem:[%s15 + $0x148] sm:$0xff]
    %v6205 = vld [vmem:[%s15 + $0x150] sm:$0xff]
    %v6206 = vld [vmem:[%s15 + $0x158] sm:$0xff]
    %v6207 = vld [vmem:[%s15 + $0x160] sm:$0xff]
    %v6208 = vld [vmem:[%s15 + $0x168] sm:$0xff]
    %v6209 = vld [vmem:[%s15 + $0x170] sm:$0xff]
    %v6210 = vld [vmem:[%s15 + $0x178] sm:$0xff]
    %v6211 = vld [vmem:[%s15 + $0x180] sm:$0xff]
    %v6212 = vld [vmem:[%s15 + $0x188] sm:$0xff]
    %v6213 = vld [vmem:[%s15 + $0x190] sm:$0xff]
    %v6214 = vld [vmem:[%s15 + $0x198] sm:$0xff]
    %v6215 = vld [vmem:[%s15 + $0x1a0] sm:$0xff]
    %v6216 = vld [vmem:[%s15 + $0x1a8] sm:$0xff]
    %v6217 = vld [vmem:[%s15 + $0x1b0] sm:$0xff]
    %v6218 = vld [vmem:[%s15 + $0x1b8] sm:$0xff]
    %v6219 = vld [vmem:[%s15 + $0x1c0] sm:$0xff]
    %v6220 = vld [vmem:[%s15 + $0x1c8] sm:$0xff]
    %v6221 = vld [vmem:[%s15 + $0x1d0] sm:$0xff]
    %v6222 = vld [vmem:[%s15 + $0x1d8] sm:$0xff]
    %v6223 = vld [vmem:[%s15 + $0x1e0] sm:$0xff]
    %v6224 = vld [vmem:[%s15 + $0x1e8] sm:$0xff]
    %v6225 = vld [vmem:[%s15 + $0x1f0] sm:$0xff]
    %v6226 = vld [vmem:[%s15 + $0x1f8] sm:$0xff]
    %6227 = vmatprep.subr.mxu0 0.0
    %6228 = vmatpush1.msra.mxu0 %v6163
    %6229 = vmatprep.subr.mxu0 0.0
    %6230 = vmatpush1.msra.mxu0 %v6164
    %6231 = vmatprep.subr.mxu0 0.0
    %6232 = vmatpush1.msra.mxu0 %v6165
    %6233 = vmatprep.subr.mxu0 0.0
    %6234 = vmatpush1.msra.mxu0 %v6166
    %6235 = vmatprep.subr.mxu0 0.0
    %6236 = vmatpush1.msra.mxu0 %v6167
    %6237 = vmatprep.subr.mxu0 0.0
    %6238 = vmatpush1.msra.mxu0 %v6168
    %6239 = vmatprep.subr.mxu0 0.0
    %6240 = vmatpush1.msra.mxu0 %v6169
    %6241 = vmatprep.subr.mxu0 0.0
    %6242 = vmatpush1.msra.mxu0 %v6170
    %6243 = vmatprep.subr.mxu0 0.0
    %6244 = vmatpush1.msra.mxu0 %v6171
    %6245 = vmatprep.subr.mxu0 0.0
    %6246 = vmatpush1.msra.mxu0 %v6172
    %6247 = vmatprep.subr.mxu0 0.0
    %6248 = vmatpush1.msra.mxu0 %v6173
    %6249 = vmatprep.subr.mxu0 0.0
    %6250 = vmatpush1.msra.mxu0 %v6174
    %6251 = vmatprep.subr.mxu0 0.0
    %6252 = vmatpush1.msra.mxu0 %v6175
    %6253 = vmatprep.subr.mxu0 0.0
    %6254 = vmatpush1.msra.mxu0 %v6176
    %6255 = vmatprep.subr.mxu0 0.0
    %6256 = vmatpush1.msra.mxu0 %v6177
    %6257 = vmatprep.subr.mxu0 0.0
    %6258 = vmatpush1.msra.mxu0 %v6178
    %6259 = vmatprep.subr.mxu0 0.0
    %6260 = vmatpush1.msra.mxu0 %v6179
    %6261 = vmatprep.subr.mxu0 0.0
    %6262 = vmatpush1.msra.mxu0 %v6180
    %6263 = vmatprep.subr.mxu0 0.0
    %6264 = vmatpush1.msra.mxu0 %v6181
    %6265 = vmatprep.subr.mxu0 0.0
    %6266 = vmatpush1.msra.mxu0 %v6182
    %6267 = vmatprep.subr.mxu0 0.0
    %6268 = vmatpush1.msra.mxu0 %v6183
    %6269 = vmatprep.subr.mxu0 0.0
    %6270 = vmatpush1.msra.mxu0 %v6184
    %6271 = vmatprep.subr.mxu0 0.0
    %6272 = vmatpush1.msra.mxu0 %v6185
    %6273 = vmatprep.subr.mxu0 0.0
    %6274 = vmatpush1.msra.mxu0 %v6186
    %6275 = vmatprep.subr.mxu0 0.0
    %6276 = vmatpush1.msra.mxu0 %v6187
    %6277 = vmatprep.subr.mxu0 0.0
    %6278 = vmatpush1.msra.mxu0 %v6188
    %6279 = vmatprep.subr.mxu0 0.0
    %6280 = vmatpush1.msra.mxu0 %v6189
    %6281 = vmatprep.subr.mxu0 0.0
    %6282 = vmatpush1.msra.mxu0 %v6190
    %6283 = vmatprep.subr.mxu0 0.0
    %6284 = vmatpush1.msra.mxu0 %v6191
    %6285 = vmatprep.subr.mxu0 0.0
    %6286 = vmatpush1.msra.mxu0 %v6192
    %6287 = vmatprep.subr.mxu0 0.0
    %6288 = vmatpush1.msra.mxu0 %v6193
    %6289 = vmatprep.subr.mxu0 0.0
    %6290 = vmatpush1.msra.mxu0 %v6194
    %6291 = vmatprep.mubr.f32.mxu0 %v6160
    %6292 = vmatmul.mubr.f32.gmra.mrb[0].mxu0 %v6159
    %v6293 = vpop.f32.mrb[0].mxu0
    %v6294 = vadd.f32 0.0, %v6293
    %v6295 = vpop.f32.mrb[0].mxu0
    %6296 = vdwg.mxu0
    %6297 = vmatprep.subr.mxu0 0.0
    %6298 = vmatpush1.msra.mxu0 %v6195
    %6299 = vmatprep.subr.mxu0 0.0
    %6300 = vmatpush1.msra.mxu0 %v6196
    %6301 = vmatprep.subr.mxu0 0.0
    %6302 = vmatpush1.msra.mxu0 %v6197
    %6303 = vmatprep.subr.mxu0 0.0
    %6304 = vmatpush1.msra.mxu0 %v6198
    %6305 = vmatprep.subr.mxu0 0.0
    %6306 = vmatpush1.msra.mxu0 %v6199
    %6307 = vmatprep.subr.mxu0 0.0
    %6308 = vmatpush1.msra.mxu0 %v6200
    %6309 = vmatprep.subr.mxu0 0.0
    %6310 = vmatpush1.msra.mxu0 %v6201
    %6311 = vmatprep.subr.mxu0 0.0
    %6312 = vmatpush1.msra.mxu0 %v6202
    %6313 = vmatprep.subr.mxu0 0.0
    %6314 = vmatpush1.msra.mxu0 %v6203
    %6315 = vmatprep.subr.mxu0 0.0
    %6316 = vmatpush1.msra.mxu0 %v6204
    %6317 = vmatprep.subr.mxu0 0.0
    %6318 = vmatpush1.msra.mxu0 %v6205
    %6319 = vmatprep.subr.mxu0 0.0
    %6320 = vmatpush1.msra.mxu0 %v6206
    %6321 = vmatprep.subr.mxu0 0.0
    %6322 = vmatpush1.msra.mxu0 %v6207
    %6323 = vmatprep.subr.mxu0 0.0
    %6324 = vmatpush1.msra.mxu0 %v6208
    %6325 = vmatprep.subr.mxu0 0.0
    %6326 = vmatpush1.msra.mxu0 %v6209
    %6327 = vmatprep.subr.mxu0 0.0
    %6328 = vmatpush1.msra.mxu0 %v6210
    %6329 = vmatprep.subr.mxu0 0.0
    %6330 = vmatpush1.msra.mxu0 %v6211
    %6331 = vmatprep.subr.mxu0 0.0
    %6332 = vmatpush1.msra.mxu0 %v6212
    %6333 = vmatprep.subr.mxu0 0.0
    %6334 = vmatpush1.msra.mxu0 %v6213
    %6335 = vmatprep.subr.mxu0 0.0
    %6336 = vmatpush1.msra.mxu0 %v6214
    %6337 = vmatprep.subr.mxu0 0.0
    %6338 = vmatpush1.msra.mxu0 %v6215
    %6339 = vmatprep.subr.mxu0 0.0
    %6340 = vmatpush1.msra.mxu0 %v6216
    %6341 = vmatprep.subr.mxu0 0.0
    %6342 = vmatpush1.msra.mxu0 %v6217
    %6343 = vmatprep.subr.mxu0 0.0
    %6344 = vmatpush1.msra.mxu0 %v6218
    %6345 = vmatprep.subr.mxu0 0.0
    %6346 = vmatpush1.msra.mxu0 %v6219
    %6347 = vmatprep.subr.mxu0 0.0
    %6348 = vmatpush1.msra.mxu0 %v6220
    %6349 = vmatprep.subr.mxu0 0.0
    %6350 = vmatpush1.msra.mxu0 %v6221
    %6351 = vmatprep.subr.mxu0 0.0
    %6352 = vmatpush1.msra.mxu0 %v6222
    %6353 = vmatprep.subr.mxu0 0.0
    %6354 = vmatpush1.msra.mxu0 %v6223
    %6355 = vmatprep.subr.mxu0 0.0
    %6356 = vmatpush1.msra.mxu0 %v6224
    %6357 = vmatprep.subr.mxu0 0.0
    %6358 = vmatpush1.msra.mxu0 %v6225
    %6359 = vmatprep.subr.mxu0 0.0
    %6360 = vmatpush1.msra.mxu0 %v6226
    %6361 = vmatprep.mubr.f32.mxu0 %v6162
    %6362 = vmatmul.mubr.f32.gmra.mrb[0].mxu0 %v6161
    %v6363 = vpop.f32.mrb[0].mxu0
    %v6364 = vadd.f32 %v6294, %v6363
    %v6365 = vpop.f32.mrb[0].mxu0
    %6366 = vdwg.mxu0
    %v6367 = vmul.f32 %v6364, 0.00048828125
    %v6368 = vmul.f32 %v6367, %v6367
    %v6370 = vrot.slane %v6368, 7
    %v6372 = vsub.f32 %v6367, %v6370
    %v6373 = vld [vmem:[#allocation19] sm:$0x1]
    %v6374 = vadd.f32 %v6372, 1e-05
    %v6375 = vrsqrt.pop %v6374
    %v6377 = vrot.slane %v6375, 1
    %v6379 = vmul.f32 %v6373, %v6377
    %v6380 = vld [vmem:[#allocation19 + $0x1] sm:$0x1]
    %v6381 = vmul.f32 %v6367, %v6379
    %v6382 = vsub.f32 %v6380, %v6381
    %v6383 = vlaneseq
    %v6384 = vshrl.u32 %v6383, 7
    %v6385 = vsub.s32 0, %v6384
    %v6386 = vrot.slane %v6379, %v6385
    %v6387 = vlaneseq
    %v6388 = vshrl.u32 %v6387, 7
    %v6389 = vsub.s32 0, %v6388
    %v6390 = vrot.slane %v6382, %v6389
    %v6391 = vsel %vm590, %v6386, %v6390
    %v6392 = vld [vmem:[%s16] sm:$0xff]
    %v6393 = vld [vmem:[%s16 + $0x8] sm:$0xff]
    %v6394 = vld [vmem:[%s16 + $0x10] sm:$0xff]
    %v6395 = vld [vmem:[%s16 + $0x18] sm:$0xff]
    %vm6396 = vcmask 64512
    %v6398 = vsel %vm6396, %v6391, 0
    %6400 = vmatprep.subr.mxu0 %v6393
    %6401 = vmatpush1.msra.mxu0 %v6392
    %6402 = vmatprep.subr.mxu0 0.0
    %6403 = vmatpush1.msra.mxu0 0.0
    %6404 = vmatprep.subr.mxu0 0.0
    %6405 = vmatpush1.msra.mxu0 0.0
    %6406 = vmatprep.subr.mxu0 0.0
    %6407 = vmatpush1.msra.mxu0 0.0
    %6408 = vmatprep.subr.mxu0 0.0
    %6409 = vmatpush1.msra.mxu0 0.0
    %6410 = vmatprep.subr.mxu0 0.0
    %6411 = vmatpush1.msra.mxu0 0.0
    %6412 = vmatprep.subr.mxu0 0.0
    %6413 = vmatpush1.msra.mxu0 0.0
    %6414 = vmatprep.subr.mxu0 0.0
    %6415 = vmatpush1.msra.mxu0 0.0
    %6416 = vmatprep.subr.mxu0 0.0
    %6417 = vmatpush1.msra.mxu0 0.0
    %6418 = vmatprep.subr.mxu0 0.0
    %6419 = vmatpush1.msra.mxu0 0.0
    %6420 = vmatprep.subr.mxu0 0.0
    %6421 = vmatpush1.msra.mxu0 0.0
    %6422 = vmatprep.subr.mxu0 0.0
    %6423 = vmatpush1.msra.mxu0 0.0
    %6424 = vmatprep.subr.mxu0 0.0
    %6425 = vmatpush1.msra.mxu0 0.0
    %6426 = vmatprep.subr.mxu0 0.0
    %6427 = vmatpush1.msra.mxu0 0.0
    %6428 = vmatprep.subr.mxu0 0.0
    %6429 = vmatpush1.msra.mxu0 0.0
    %6430 = vmatprep.subr.mxu0 0.0
    %6431 = vmatpush1.msra.mxu0 0.0
    %6432 = vmatprep.subr.mxu0 0.0
    %6433 = vmatpush1.msra.mxu0 0.0
    %6434 = vmatprep.subr.mxu0 0.0
    %6435 = vmatpush1.msra.mxu0 0.0
    %6436 = vmatprep.subr.mxu0 0.0
    %6437 = vmatpush1.msra.mxu0 0.0
    %6438 = vmatprep.subr.mxu0 0.0
    %6439 = vmatpush1.msra.mxu0 0.0
    %6440 = vmatprep.subr.mxu0 0.0
    %6441 = vmatpush1.msra.mxu0 0.0
    %6442 = vmatprep.subr.mxu0 0.0
    %6443 = vmatpush1.msra.mxu0 0.0
    %6444 = vmatprep.subr.mxu0 0.0
    %6445 = vmatpush1.msra.mxu0 0.0
    %6446 = vmatprep.subr.mxu0 0.0
    %6447 = vmatpush1.msra.mxu0 0.0
    %6448 = vmatprep.subr.mxu0 0.0
    %6449 = vmatpush1.msra.mxu0 0.0
    %6450 = vmatprep.subr.mxu0 0.0
    %6451 = vmatpush1.msra.mxu0 0.0
    %6452 = vmatprep.subr.mxu0 0.0
    %6453 = vmatpush1.msra.mxu0 0.0
    %6454 = vmatprep.subr.mxu0 0.0
    %6455 = vmatpush1.msra.mxu0 0.0
    %6456 = vmatprep.subr.mxu0 0.0
    %6457 = vmatpush1.msra.mxu0 0.0
    %6458 = vmatprep.subr.mxu0 0.0
    %6459 = vmatpush1.msra.mxu0 0.0
    %6460 = vmatprep.subr.mxu0 0.0
    %6461 = vmatpush1.msra.mxu0 0.0
    %6462 = vmatprep.subr.mxu0 0.0
    %6463 = vmatpush1.msra.mxu0 0.0
    %6464 = vmatprep.mubr.f32.mxu0 0.0
    %6465 = vmatmul.mubr.f32.gmra.mrb[0].mxu0 %v6398
    %v6466 = vpop.f32.mrb[0].mxu0
    %v6467 = vadd.f32 0.0, %v6466
    %v6468 = vpop.f32.mrb[0].mxu0
    %v6469 = vadd.f32 0.0, %v6468
    %6470 = vdwg.mxu0
    %6471 = vmatprep.subr.mxu0 %v6395
    %6472 = vmatpush1.msra.mxu0 %v6394
    %6473 = vmatprep.subr.mxu0 0.0
    %6474 = vmatpush1.msra.mxu0 0.0
    %6475 = vmatprep.subr.mxu0 0.0
    %6476 = vmatpush1.msra.mxu0 0.0
    %6477 = vmatprep.subr.mxu0 0.0
    %6478 = vmatpush1.msra.mxu0 0.0
    %6479 = vmatprep.subr.mxu0 0.0
    %6480 = vmatpush1.msra.mxu0 0.0
    %6481 = vmatprep.subr.mxu0 0.0
    %6482 = vmatpush1.msra.mxu0 0.0
    %6483 = vmatprep.subr.mxu0 0.0
    %6484 = vmatpush1.msra.mxu0 0.0
    %6485 = vmatprep.subr.mxu0 0.0
    %6486 = vmatpush1.msra.mxu0 0.0
    %6487 = vmatprep.subr.mxu0 0.0
    %6488 = vmatpush1.msra.mxu0 0.0
    %6489 = vmatprep.subr.mxu0 0.0
    %6490 = vmatpush1.msra.mxu0 0.0
    %6491 = vmatprep.subr.mxu0 0.0
    %6492 = vmatpush1.msra.mxu0 0.0
    %6493 = vmatprep.subr.mxu0 0.0
    %6494 = vmatpush1.msra.mxu0 0.0
    %6495 = vmatprep.subr.mxu0 0.0
    %6496 = vmatpush1.msra.mxu0 0.0
    %6497 = vmatprep.subr.mxu0 0.0
    %6498 = vmatpush1.msra.mxu0 0.0
    %6499 = vmatprep.subr.mxu0 0.0
    %6500 = vmatpush1.msra.mxu0 0.0
    %6501 = vmatprep.subr.mxu0 0.0
    %6502 = vmatpush1.msra.mxu0 0.0
    %6503 = vmatprep.subr.mxu0 0.0
    %6504 = vmatpush1.msra.mxu0 0.0
    %6505 = vmatprep.subr.mxu0 0.0
    %6506 = vmatpush1.msra.mxu0 0.0
    %6507 = vmatprep.subr.mxu0 0.0
    %6508 = vmatpush1.msra.mxu0 0.0
    %6509 = vmatprep.subr.mxu0 0.0
    %6510 = vmatpush1.msra.mxu0 0.0
    %6511 = vmatprep.subr.mxu0 0.0
    %6512 = vmatpush1.msra.mxu0 0.0
    %6513 = vmatprep.subr.mxu0 0.0
    %6514 = vmatpush1.msra.mxu0 0.0
    %6515 = vmatprep.subr.mxu0 0.0
    %6516 = vmatpush1.msra.mxu0 0.0
    %6517 = vmatprep.subr.mxu0 0.0
    %6518 = vmatpush1.msra.mxu0 0.0
    %6519 = vmatprep.subr.mxu0 0.0
    %6520 = vmatpush1.msra.mxu0 0.0
    %6521 = vmatprep.subr.mxu0 0.0
    %6522 = vmatpush1.msra.mxu0 0.0
    %6523 = vmatprep.subr.mxu0 0.0
    %6524 = vmatpush1.msra.mxu0 0.0
    %6525 = vmatprep.subr.mxu0 0.0
    %6526 = vmatpush1.msra.mxu0 0.0
    %6527 = vmatprep.subr.mxu0 0.0
    %6528 = vmatpush1.msra.mxu0 0.0
    %6529 = vmatprep.subr.mxu0 0.0
    %6530 = vmatpush1.msra.mxu0 0.0
    %6531 = vmatprep.subr.mxu0 0.0
    %6532 = vmatpush1.msra.mxu0 0.0
    %6533 = vmatprep.subr.mxu0 0.0
    %6534 = vmatpush1.msra.mxu0 0.0
    %6535 = vmatprep.mubr.f32.mxu0 0.0
    %6536 = vmatmul.mubr.f32.gmra.mrb[0].mxu0 %v6398
    %v6537 = vpop.f32.mrb[0].mxu0
    %v6538 = vadd.f32 0.0, %v6537
    %v6539 = vpop.f32.mrb[0].mxu0
    %v6540 = vadd.f32 0.0, %v6539
    %6541 = vdwg.mxu0
    %v6542 = vlaneseq
    %v6543 = vshrl.u32 %v6542, 7
    %v6544 = vsub.s32 0, %v6543
    %v6545 = vrot.slane %v6467, %v6544
    %v6546 = vlaneseq
    %v6547 = vshrl.u32 %v6546, 7
    %v6548 = vsub.s32 0, %v6547
    %v6549 = vrot.slane %v6469, %v6548
    %v6550 = vlaneseq
    %v6551 = vshrl.u32 %v6550, 7
    %v6552 = vsub.s32 0, %v6551
    %v6553 = vrot.slane %v6538, %v6552
    %v6554 = vlaneseq
    %v6555 = vshrl.u32 %v6554, 7
    %v6556 = vsub.s32 0, %v6555
    %v6557 = vrot.slane %v6540, %v6556
    %v6558 = vmul.f32 %v5782, %v6545
    %v6559 = vmul.f32 %v5784, %v6549
    %v6560 = vmul.f32 %v6049, %v6553
    %v6561 = vmul.f32 %v6051, %v6557
    %v6562 = vmul.f32 %v5788, %v6545
    %v6563 = vmul.f32 %v5790, %v6549
    %v6564 = vmul.f32 %v6055, %v6553
    %v6565 = vmul.f32 %v6057, %v6557
    %v6566 = vmul.f32 %v5794, %v6545
    %v6567 = vmul.f32 %v5796, %v6549
    %v6568 = vmul.f32 %v6061, %v6553
    %v6569 = vmul.f32 %v6063, %v6557
    %v6570 = vmul.f32 %v5800, %v6545
    %v6571 = vmul.f32 %v5802, %v6549
    %v6572 = vmul.f32 %v6067, %v6553
    %v6573 = vmul.f32 %v6069, %v6557
    %v6574 = vlaneseq
    %v6575 = vshrl.u32 %v6574, 7
    %v6576 = vsub.s32 1, %v6575
    %v6577 = vrot.slane %v6467, %v6576
    %v6578 = vlaneseq
    %v6579 = vshrl.u32 %v6578, 7
    %v6580 = vsub.s32 1, %v6579
    %v6581 = vrot.slane %v6469, %v6580
    %v6582 = vlaneseq
    %v6583 = vshrl.u32 %v6582, 7
    %v6584 = vsub.s32 1, %v6583
    %v6585 = vrot.slane %v6538, %v6584
    %v6586 = vlaneseq
    %v6587 = vshrl.u32 %v6586, 7
    %v6588 = vsub.s32 1, %v6587
    %v6589 = vrot.slane %v6540, %v6588
    %v6590 = vadd.f32 %v6558, %v6577
    %v6591 = vadd.f32 %v6559, %v6581
    %v6592 = vadd.f32 %v6560, %v6585
    %v6593 = vadd.f32 %v6561, %v6589
    %v6594 = vadd.f32 %v6562, %v6577
    %v6595 = vadd.f32 %v6563, %v6581
    %v6596 = vadd.f32 %v6564, %v6585
    %v6597 = vadd.f32 %v6565, %v6589
    %v6598 = vadd.f32 %v6566, %v6577
    %v6599 = vadd.f32 %v6567, %v6581
    %v6600 = vadd.f32 %v6568, %v6585
    %v6601 = vadd.f32 %v6569, %v6589
    %v6602 = vadd.f32 %v6570, %v6577
    %v6603 = vadd.f32 %v6571, %v6581
    %v6604 = vadd.f32 %v6572, %v6585
    %v6605 = vadd.f32 %v6573, %v6589
    %v6606 = vmax.f32 %v6590, 0.0
    %v6607 = vmax.f32 %v6591, 0.0
    %v6608 = vmax.f32 %v6592, 0.0
    %v6609 = vmax.f32 %v6593, 0.0
    %v6610 = vmax.f32 %v6594, 0.0
    %v6611 = vmax.f32 %v6595, 0.0
    %v6612 = vmax.f32 %v6596, 0.0
    %v6613 = vmax.f32 %v6597, 0.0
    %v6614 = vmax.f32 %v6598, 0.0
    %v6615 = vmax.f32 %v6599, 0.0
    %v6616 = vmax.f32 %v6600, 0.0
    %v6617 = vmax.f32 %v6601, 0.0
    %v6618 = vmax.f32 %v6602, 0.0
    %v6619 = vmax.f32 %v6603, 0.0
    %v6620 = vmax.f32 %v6604, 0.0
    %v6621 = vmax.f32 %v6605, 0.0
    %v6630 = vrot.slane %v6606, 1
    %v6631 = vrot.slane %v6610, 1
    %v6632 = vsel %vm3177, %v6630, %v6631
    %v6633 = vrot.slane %v6607, 1
    %v6634 = vrot.slane %v6611, 1
    %v6635 = vsel %vm3177, %v6633, %v6634
    %v6636 = vrot.slane %v6608, 1
    %v6637 = vrot.slane %v6612, 1
    %v6638 = vsel %vm3177, %v6636, %v6637
    %v6639 = vrot.slane %v6609, 1
    %v6640 = vrot.slane %v6613, 1
    %v6641 = vsel %vm3177, %v6639, %v6640
    %6650 = vst [vmem:[#allocation8] sm:$0xff] %v6632
    %6651 = vst [vmem:[#allocation8 + $0x8] sm:$0xff] %v6635
    %6652 = vst [vmem:[#allocation8 + $0x10] sm:$0xff] %v6638
    %6653 = vst [vmem:[#allocation8 + $0x18] sm:$0xff] %v6641
    %6654 = vst [vmem:[#allocation8 + $0x20] sm:$0x3f] %v6631
    %6655 = vst [vmem:[#allocation8 + $0x28] sm:$0x3f] %v6634
    %6656 = vst [vmem:[#allocation8 + $0x30] sm:$0x3f] %v6637
    %6657 = vst [vmem:[#allocation8 + $0x38] sm:$0x3f] %v6640
    %v6666 = vrot.slane %v6614, 3
    %v6667 = vrot.slane %v6615, 3
    %v6668 = vrot.slane %v6616, 3
    %v6669 = vrot.slane %v6617, 3
    %v6670 = vrot.slane %v6618, 3
    %v6671 = vsel %vm1663, %v6666, %v6670
    %v6672 = vrot.slane %v6619, 3
    %v6673 = vsel %vm1663, %v6667, %v6672
    %v6674 = vrot.slane %v6620, 3
    %v6675 = vsel %vm1663, %v6668, %v6674
    %v6676 = vrot.slane %v6621, 3
    %v6677 = vsel %vm1663, %v6669, %v6676
    %6690 = vst [vmem:[#allocation8 + $0x20] sm:$0xc0] %v6666
    %6691 = vst [vmem:[#allocation8 + $0x28] sm:$0xc0] %v6667
    %6692 = vst [vmem:[#allocation8 + $0x30] sm:$0xc0] %v6668
    %6693 = vst [vmem:[#allocation8 + $0x38] sm:$0xc0] %v6669
    %6694 = vst [vmem:[#allocation8 + $0x40] sm:$0xff] %v6671
    %6695 = vst [vmem:[#allocation8 + $0x48] sm:$0xff] %v6673
    %6696 = vst [vmem:[#allocation8 + $0x50] sm:$0xff] %v6675
    %6697 = vst [vmem:[#allocation8 + $0x58] sm:$0xff] %v6677
    %6698 = vst [vmem:[#allocation8 + $0x60] sm:$0xf] %v6670
    %6699 = vst [vmem:[#allocation8 + $0x68] sm:$0xf] %v6672
    %6700 = vst [vmem:[#allocation8 + $0x70] sm:$0xf] %v6674
    %6701 = vst [vmem:[#allocation8 + $0x78] sm:$0xf] %v6676
    %v6702 = vld [vmem:[#allocation8] sm:$0xff]
    %v6703 = vld [vmem:[#allocation8 + $0x8] sm:$0xff]
    %v6704 = vld [vmem:[#allocation8 + $0x10] sm:$0xff]
    %v6705 = vld [vmem:[#allocation8 + $0x18] sm:$0xff]
    %v6706 = vld [vmem:[#allocation8 + $0x20] sm:$0xff]
    %v6707 = vld [vmem:[#allocation8 + $0x28] sm:$0xff]
    %v6708 = vld [vmem:[#allocation8 + $0x30] sm:$0xff]
    %v6709 = vld [vmem:[#allocation8 + $0x38] sm:$0xff]
    %v6710 = vld [vmem:[#allocation8 + $0x40] sm:$0xff]
    %v6711 = vld [vmem:[#allocation8 + $0x48] sm:$0xff]
    %v6712 = vld [vmem:[#allocation8 + $0x50] sm:$0xff]
    %v6713 = vld [vmem:[#allocation8 + $0x58] sm:$0xff]
    %v6714 = vld [vmem:[#allocation8 + $0x60] sm:$0xf]
    %v6715 = vld [vmem:[#allocation8 + $0x68] sm:$0xf]
    %v6716 = vld [vmem:[#allocation8 + $0x70] sm:$0xf]
    %v6717 = vld [vmem:[#allocation8 + $0x78] sm:$0xf]
    %v6718 = vld [vmem:[#allocation20] sm:$0xff]
    %v6719 = vld [vmem:[#allocation20 + $0x8] sm:$0xff]
    %v6720 = vld [vmem:[#allocation20 + $0x10] sm:$0xff]
    %v6721 = vld [vmem:[#allocation20 + $0x18] sm:$0xff]
    %v6722 = vld [vmem:[#allocation20 + $0x20] sm:$0xff]
    %v6723 = vld [vmem:[#allocation20 + $0x28] sm:$0xff]
    %v6724 = vld [vmem:[#allocation20 + $0x30] sm:$0xff]
    %v6725 = vld [vmem:[#allocation20 + $0x38] sm:$0xff]
    %v6726 = vld [vmem:[#allocation20 + $0x40] sm:$0xff]
    %v6727 = vld [vmem:[#allocation20 + $0x48] sm:$0xff]
    %v6728 = vld [vmem:[#allocation20 + $0x50] sm:$0xff]
    %v6729 = vld [vmem:[#allocation20 + $0x58] sm:$0xff]
    %v6730 = vld [vmem:[#allocation20 + $0x60] sm:$0xff]
    %v6731 = vld [vmem:[#allocation20 + $0x68] sm:$0xff]
    %v6732 = vld [vmem:[#allocation20 + $0x70] sm:$0xff]
    %v6733 = vld [vmem:[#allocation20 + $0x78] sm:$0xff]
    %v6734 = vld [vmem:[#allocation20 + $0x80] sm:$0xff]
    %v6735 = vld [vmem:[#allocation20 + $0x88] sm:$0xff]
    %v6736 = vld [vmem:[#allocation20 + $0x90] sm:$0xff]
    %v6737 = vld [vmem:[#allocation20 + $0x98] sm:$0xff]
    %v6738 = vld [vmem:[#allocation20 + $0xa0] sm:$0xff]
    %v6739 = vld [vmem:[#allocation20 + $0xa8] sm:$0xff]
    %v6740 = vld [vmem:[#allocation20 + $0xb0] sm:$0xff]
    %v6741 = vld [vmem:[#allocation20 + $0xb8] sm:$0xff]
    %v6742 = vld [vmem:[#allocation20 + $0xc0] sm:$0xff]
    %v6743 = vld [vmem:[#allocation20 + $0xc8] sm:$0xff]
    %v6744 = vld [vmem:[#allocation20 + $0xd0] sm:$0xff]
    %v6745 = vld [vmem:[#allocation20 + $0xd8] sm:$0xff]
    %v6746 = vld [vmem:[#allocation20 + $0xe0] sm:$0xff]
    %v6747 = vld [vmem:[#allocation20 + $0xe8] sm:$0xff]
    %v6748 = vld [vmem:[#allocation20 + $0xf0] sm:$0xff]
    %v6749 = vld [vmem:[#allocation20 + $0xf8] sm:$0xff]
    %v6750 = vld [vmem:[#allocation20 + $0x100] sm:$0xff]
    %v6751 = vld [vmem:[#allocation20 + $0x108] sm:$0xff]
    %v6752 = vld [vmem:[#allocation20 + $0x110] sm:$0xff]
    %v6753 = vld [vmem:[#allocation20 + $0x118] sm:$0xff]
    %v6754 = vld [vmem:[#allocation20 + $0x120] sm:$0xff]
    %v6755 = vld [vmem:[#allocation20 + $0x128] sm:$0xff]
    %v6756 = vld [vmem:[#allocation20 + $0x130] sm:$0xff]
    %v6757 = vld [vmem:[#allocation20 + $0x138] sm:$0xff]
    %v6758 = vld [vmem:[#allocation20 + $0x140] sm:$0xff]
    %v6759 = vld [vmem:[#allocation20 + $0x148] sm:$0xff]
    %v6760 = vld [vmem:[#allocation20 + $0x150] sm:$0xff]
    %v6761 = vld [vmem:[#allocation20 + $0x158] sm:$0xff]
    %v6762 = vld [vmem:[#allocation20 + $0x160] sm:$0xff]
    %v6763 = vld [vmem:[#allocation20 + $0x168] sm:$0xff]
    %v6764 = vld [vmem:[#allocation20 + $0x170] sm:$0xff]
    %v6765 = vld [vmem:[#allocation20 + $0x178] sm:$0xff]
    %v6766 = vld [vmem:[#allocation20 + $0x180] sm:$0xff]
    %v6767 = vld [vmem:[#allocation20 + $0x188] sm:$0xff]
    %v6768 = vld [vmem:[#allocation20 + $0x190] sm:$0xff]
    %v6769 = vld [vmem:[#allocation20 + $0x198] sm:$0xff]
    %v6770 = vld [vmem:[#allocation20 + $0x1a0] sm:$0xff]
    %v6771 = vld [vmem:[#allocation20 + $0x1a8] sm:$0xff]
    %v6772 = vld [vmem:[#allocation20 + $0x1b0] sm:$0xff]
    %v6773 = vld [vmem:[#allocation20 + $0x1b8] sm:$0xff]
    %v6774 = vld [vmem:[#allocation20 + $0x1c0] sm:$0xff]
    %v6775 = vld [vmem:[#allocation20 + $0x1c8] sm:$0xff]
    %v6776 = vld [vmem:[#allocation20 + $0x1d0] sm:$0xff]
    %v6777 = vld [vmem:[#allocation20 + $0x1d8] sm:$0xff]
    %v6778 = vld [vmem:[#allocation20 + $0x1e0] sm:$0xff]
    %v6779 = vld [vmem:[#allocation20 + $0x1e8] sm:$0xff]
    %v6780 = vld [vmem:[#allocation20 + $0x1f0] sm:$0xff]
    %v6781 = vld [vmem:[#allocation20 + $0x1f8] sm:$0xff]
    %6782 = vmatprep.subr.mxu0 0.0
    %6783 = vmatpush1.msra.mxu0 %v6718
    %6784 = vmatprep.subr.mxu0 0.0
    %6785 = vmatpush1.msra.mxu0 %v6719
    %6786 = vmatprep.subr.mxu0 0.0
    %6787 = vmatpush1.msra.mxu0 %v6720
    %6788 = vmatprep.subr.mxu0 0.0
    %6789 = vmatpush1.msra.mxu0 %v6721
    %6790 = vmatprep.subr.mxu0 0.0
    %6791 = vmatpush1.msra.mxu0 %v6722
    %6792 = vmatprep.subr.mxu0 0.0
    %6793 = vmatpush1.msra.mxu0 %v6723
    %6794 = vmatprep.subr.mxu0 0.0
    %6795 = vmatpush1.msra.mxu0 %v6724
    %6796 = vmatprep.subr.mxu0 0.0
    %6797 = vmatpush1.msra.mxu0 %v6725
    %6798 = vmatprep.subr.mxu0 0.0
    %6799 = vmatpush1.msra.mxu0 %v6726
    %6800 = vmatprep.subr.mxu0 0.0
    %6801 = vmatpush1.msra.mxu0 %v6727
    %6802 = vmatprep.subr.mxu0 0.0
    %6803 = vmatpush1.msra.mxu0 %v6728
    %6804 = vmatprep.subr.mxu0 0.0
    %6805 = vmatpush1.msra.mxu0 %v6729
    %6806 = vmatprep.subr.mxu0 0.0
    %6807 = vmatpush1.msra.mxu0 %v6730
    %6808 = vmatprep.subr.mxu0 0.0
    %6809 = vmatpush1.msra.mxu0 %v6731
    %6810 = vmatprep.subr.mxu0 0.0
    %6811 = vmatpush1.msra.mxu0 %v6732
    %6812 = vmatprep.subr.mxu0 0.0
    %6813 = vmatpush1.msra.mxu0 %v6733
    %6814 = vmatprep.subr.mxu0 0.0
    %6815 = vmatpush1.msra.mxu0 %v6734
    %6816 = vmatprep.subr.mxu0 0.0
    %6817 = vmatpush1.msra.mxu0 %v6735
    %6818 = vmatprep.subr.mxu0 0.0
    %6819 = vmatpush1.msra.mxu0 %v6736
    %6820 = vmatprep.subr.mxu0 0.0
    %6821 = vmatpush1.msra.mxu0 %v6737
    %6822 = vmatprep.subr.mxu0 0.0
    %6823 = vmatpush1.msra.mxu0 %v6738
    %6824 = vmatprep.subr.mxu0 0.0
    %6825 = vmatpush1.msra.mxu0 %v6739
    %6826 = vmatprep.subr.mxu0 0.0
    %6827 = vmatpush1.msra.mxu0 %v6740
    %6828 = vmatprep.subr.mxu0 0.0
    %6829 = vmatpush1.msra.mxu0 %v6741
    %6830 = vmatprep.subr.mxu0 0.0
    %6831 = vmatpush1.msra.mxu0 %v6742
    %6832 = vmatprep.subr.mxu0 0.0
    %6833 = vmatpush1.msra.mxu0 %v6743
    %6834 = vmatprep.subr.mxu0 0.0
    %6835 = vmatpush1.msra.mxu0 %v6744
    %6836 = vmatprep.subr.mxu0 0.0
    %6837 = vmatpush1.msra.mxu0 %v6745
    %6838 = vmatprep.subr.mxu0 0.0
    %6839 = vmatpush1.msra.mxu0 %v6746
    %6840 = vmatprep.subr.mxu0 0.0
    %6841 = vmatpush1.msra.mxu0 %v6747
    %6842 = vmatprep.subr.mxu0 0.0
    %6843 = vmatpush1.msra.mxu0 %v6748
    %6844 = vmatprep.subr.mxu0 0.0
    %6845 = vmatpush1.msra.mxu0 %v6749
    %6846 = vmatprep.mubr.f32.mxu0 %v6703
    %6847 = vmatmul.mubr.f32.gmra.mrb[0].mxu0 %v6702
    %v6848 = vpop.f32.mrb[0].mxu0
    %v6849 = vadd.f32 0.0, %v6848
    %v6850 = vpop.f32.mrb[0].mxu0
    %6851 = vmatprep.mubr.f32.mxu0 %v6707
    %6852 = vmatmul.mubr.f32.gmra.mrb[0].mxu0 %v6706
    %v6853 = vpop.f32.mrb[0].mxu0
    %v6854 = vadd.f32 0.0, %v6853
    %v6855 = vpop.f32.mrb[0].mxu0
    %6856 = vmatprep.mubr.f32.mxu0 %v6711
    %6857 = vmatmul.mubr.f32.gmra.mrb[0].mxu0 %v6710
    %v6858 = vpop.f32.mrb[0].mxu0
    %v6859 = vadd.f32 0.0, %v6858
    %v6860 = vpop.f32.mrb[0].mxu0
    %6861 = vmatprep.mubr.f32.mxu0 %v6715
    %6862 = vmatmul.mubr.f32.gmra.mrb[0].mxu0 %v6714
    %v6863 = vpop.f32.mrb[0].mxu0
    %v6864 = vadd.f32 0.0, %v6863
    %v6865 = vpop.f32.mrb[0].mxu0
    %6866 = vdwg.mxu0
    %6867 = vmatprep.subr.mxu0 0.0
    %6868 = vmatpush1.msra.mxu0 %v6750
    %6869 = vmatprep.subr.mxu0 0.0
    %6870 = vmatpush1.msra.mxu0 %v6751
    %6871 = vmatprep.subr.mxu0 0.0
    %6872 = vmatpush1.msra.mxu0 %v6752
    %6873 = vmatprep.subr.mxu0 0.0
    %6874 = vmatpush1.msra.mxu0 %v6753
    %6875 = vmatprep.subr.mxu0 0.0
    %6876 = vmatpush1.msra.mxu0 %v6754
    %6877 = vmatprep.subr.mxu0 0.0
    %6878 = vmatpush1.msra.mxu0 %v6755
    %6879 = vmatprep.subr.mxu0 0.0
    %6880 = vmatpush1.msra.mxu0 %v6756
    %6881 = vmatprep.subr.mxu0 0.0
    %6882 = vmatpush1.msra.mxu0 %v6757
    %6883 = vmatprep.subr.mxu0 0.0
    %6884 = vmatpush1.msra.mxu0 %v6758
    %6885 = vmatprep.subr.mxu0 0.0
    %6886 = vmatpush1.msra.mxu0 %v6759
    %6887 = vmatprep.subr.mxu0 0.0
    %6888 = vmatpush1.msra.mxu0 %v6760
    %6889 = vmatprep.subr.mxu0 0.0
    %6890 = vmatpush1.msra.mxu0 %v6761
    %6891 = vmatprep.subr.mxu0 0.0
    %6892 = vmatpush1.msra.mxu0 %v6762
    %6893 = vmatprep.subr.mxu0 0.0
    %6894 = vmatpush1.msra.mxu0 %v6763
    %6895 = vmatprep.subr.mxu0 0.0
    %6896 = vmatpush1.msra.mxu0 %v6764
    %6897 = vmatprep.subr.mxu0 0.0
    %6898 = vmatpush1.msra.mxu0 %v6765
    %6899 = vmatprep.subr.mxu0 0.0
    %6900 = vmatpush1.msra.mxu0 %v6766
    %6901 = vmatprep.subr.mxu0 0.0
    %6902 = vmatpush1.msra.mxu0 %v6767
    %6903 = vmatprep.subr.mxu0 0.0
    %6904 = vmatpush1.msra.mxu0 %v6768
    %6905 = vmatprep.subr.mxu0 0.0
    %6906 = vmatpush1.msra.mxu0 %v6769
    %6907 = vmatprep.subr.mxu0 0.0
    %6908 = vmatpush1.msra.mxu0 %v6770
    %6909 = vmatprep.subr.mxu0 0.0
    %6910 = vmatpush1.msra.mxu0 %v6771
    %6911 = vmatprep.subr.mxu0 0.0
    %6912 = vmatpush1.msra.mxu0 %v6772
    %6913 = vmatprep.subr.mxu0 0.0
    %6914 = vmatpush1.msra.mxu0 %v6773
    %6915 = vmatprep.subr.mxu0 0.0
    %6916 = vmatpush1.msra.mxu0 %v6774
    %6917 = vmatprep.subr.mxu0 0.0
    %6918 = vmatpush1.msra.mxu0 %v6775
    %6919 = vmatprep.subr.mxu0 0.0
    %6920 = vmatpush1.msra.mxu0 %v6776
    %6921 = vmatprep.subr.mxu0 0.0
    %6922 = vmatpush1.msra.mxu0 %v6777
    %6923 = vmatprep.subr.mxu0 0.0
    %6924 = vmatpush1.msra.mxu0 %v6778
    %6925 = vmatprep.subr.mxu0 0.0
    %6926 = vmatpush1.msra.mxu0 %v6779
    %6927 = vmatprep.subr.mxu0 0.0
    %6928 = vmatpush1.msra.mxu0 %v6780
    %6929 = vmatprep.subr.mxu0 0.0
    %6930 = vmatpush1.msra.mxu0 %v6781
    %6931 = vmatprep.mubr.f32.mxu0 %v6705
    %6932 = vmatmul.mubr.f32.gmra.mrb[0].mxu0 %v6704
    %v6933 = vpop.f32.mrb[0].mxu0
    %v6934 = vadd.f32 %v6849, %v6933
    %v6935 = vpop.f32.mrb[0].mxu0
    %6936 = vmatprep.mubr.f32.mxu0 %v6709
    %6937 = vmatmul.mubr.f32.gmra.mrb[0].mxu0 %v6708
    %v6938 = vpop.f32.mrb[0].mxu0
    %v6939 = vadd.f32 %v6854, %v6938
    %v6940 = vpop.f32.mrb[0].mxu0
    %6941 = vmatprep.mubr.f32.mxu0 %v6713
    %6942 = vmatmul.mubr.f32.gmra.mrb[0].mxu0 %v6712
    %v6943 = vpop.f32.mrb[0].mxu0
    %v6944 = vadd.f32 %v6859, %v6943
    %v6945 = vpop.f32.mrb[0].mxu0
    %6946 = vmatprep.mubr.f32.mxu0 %v6717
    %6947 = vmatmul.mubr.f32.gmra.mrb[0].mxu0 %v6716
    %v6948 = vpop.f32.mrb[0].mxu0
    %v6949 = vadd.f32 %v6864, %v6948
    %v6950 = vpop.f32.mrb[0].mxu0
    %6951 = vdwg.mxu0
    %v6952 = vtanh.pop %v6934
    %v6953 = vtanh.pop %v6939
    %v6954 = vtanh.pop %v6944
    %v6955 = vtanh.pop %v6949
    %6956 = vst [vmem:[%s18] sm:$0xff] %v6952
    %6957 = vst [vmem:[%s18 + $0x8] sm:$0xff] %v6953
    %6958 = vst [vmem:[%s18 + $0x10] sm:$0xff] %v6954
    %6959 = vst [vmem:[%s18 + $0x18] sm:$0xf] %v6955
    // Predicated region
    $region106: #{generator_forward.1} parent=1 // pred_check
      _
    $region107: #{generator_forward.1} parent=1 // pred_check_branch
      %6961 = sbr.rel (0) target = $region109
    $region108: #{generator_forward.1} parent=1 // pred_region
      _
    $region109: #{generator_forward.1} parent=1 // pred_fallthru
      _
    // Predicated region
    $region110: #{generator_forward.1} parent=1 // pred_check
      _
    $region111: #{generator_forward.1} parent=1 // pred_check_branch
      %6963 = sbr.rel (0) target = $region113
    $region112: #{generator_forward.1} parent=1 // pred_region
      _
    $region113: #{generator_forward.1} parent=1 // pred_fallthru
      _
    %6964 = vsyncpa [#allocation10], 1
    %6965 = vsyncpa [#allocation12], 1
    %6966 = vsyncpa [#allocation15], 1
    %6967 = vsyncpa [#allocation18], 1
    %6968 = vsyncpa [#allocation21], 1

</llo_original>
